<compile_context>
chip_gen: v7x
topology: tpu7x:2x2x1
jax: 0.10.0
libtpu: 0.0.40
codegen_flags: <defaults>
</compile_context>

<pallas_src>
import functools

import jax
import jax.numpy as jnp
from jax.experimental import pallas as pl
from jax.experimental.pallas import tpu as pltpu

BN_EPS = 1e-5


def _round_up(x, m):
    return (x + m - 1) // m * m


def _double_conv_kernel(cin_p, cout_p, x_ref, w1_ref, g1_ref, be1_ref,
                        w2_ref, g2_ref, be2_ref, o_ref, xpad_s, patch_s):
    # x_ref   : (N, H, W, cin_p)             channel-padded NHWC input (MXU dtype)
    # w1_ref  : (3, 3*cin_p, cout_p)         dy-sliced im2col weights (MXU dtype)
    # w2_ref  : (3, 3*cout_p, cout_p)
    # g*/be*  : (1, cout_p)                  BN scale / shift (f32, zero-padded)
    # o_ref   : (N*H*W, cout_p)              lane-dense f32 output slab
    # xpad_s  : (N, H+2, W+2, cmax)          halo-padded activation, MXU dtype
    # patch_s : (N, H, W, 3*cmax)            dy-reused im2col slab, MXU dtype
    N, Hp, Wp, cmax = xpad_s.shape
    H, W = Hp - 2, Wp - 2
    M = N * H * W
    cdt = xpad_s.dtype                       # compute (MXU) dtype

    def conv3x3(cin, w_ref):
        # dy-decomposed im2col: 3 accumulating MXU dots with K = 3*cin.
        acc = jnp.zeros((M, cout_p), jnp.float32)
        for dy in range(3):
            for dx in range(3):
                patch_s[:, :, :, dx * cin:(dx + 1) * cin] = (
                    xpad_s[:, dy:dy + H, dx:dx + W, :cin])
            # Collapse leading dims only once (layout-trivial, last dim kept).
            acc = acc + jnp.dot(
                patch_s[:, :, :, :3 * cin].reshape(M, 3 * cin),
                w_ref[dy],
                preferred_element_type=jnp.float32)
        return acc

    def bn_relu(acc, gamma, beta):
        # Training-mode BatchNorm2d, single-pass batch stats (biased variance),
        # all in f32.
        inv_m = 1.0 / float(M)
        s = jnp.sum(acc, axis=0, keepdims=True)
        ss = jnp.sum(acc * acc, axis=0, keepdims=True)
        mean = s * inv_m
        var = ss * inv_m - mean * mean
        scale = gamma * jax.lax.rsqrt(var + BN_EPS)
        shift = beta - mean * scale
        return jnp.maximum(acc * scale + shift, 0.0)

    # Zero ONLY the 1-pixel halo ring, once; both stages overwrite the interior.
    xpad_s[:, 0:1, :, :] = jnp.zeros((N, 1, Wp, cmax), cdt)
    xpad_s[:, H + 1:H + 2, :, :] = jnp.zeros((N, 1, Wp, cmax), cdt)
    xpad_s[:, :, 0:1, :] = jnp.zeros((N, Hp, 1, cmax), cdt)
    xpad_s[:, :, W + 1:W + 2, :] = jnp.zeros((N, Hp, 1, cmax), cdt)

    # -------- stage 1: conv3x3(pad=1) + BN + ReLU --------
    xpad_s[:, 1:H + 1, 1:W + 1, :cin_p] = x_ref[...]
    y1 = bn_relu(conv3x3(cin_p, w1_ref), g1_ref[...], be1_ref[...])

    # -------- stage 2: intermediate stays in VMEM, single cast to MXU dtype ----
    xpad_s[:, 1:H + 1, 1:W + 1, :cout_p] = (
        y1.reshape(N, H, W, cout_p).astype(cdt))
    y2 = bn_relu(conv3x3(cout_p, w2_ref), g2_ref[...], be2_ref[...])

    o_ref[...] = y2


def _pack_w(w, cin_p, cout_p, dtype):
    """(3,3,Cin,Cout) HWIO weight -> zero-padded (3, 3*cin_p, cout_p), dy-major."""
    kh, kw, cin, cout = w.shape
    w = jnp.pad(w, ((0, 0), (0, 0), (0, cin_p - cin), (0, cout_p - cout)))
    return w.reshape(kh, kw * cin_p, cout_p).astype(dtype)


def _vmem_limit_bytes(footprint_bytes):
    try:
        cap = pltpu.get_tpu_info().vmem_capacity_bytes
    except Exception:                       # pragma: no cover - conservative fallback
        cap = 128 * 1024 * 1024
    # footprint + generous headroom for compiler intermediates, capped per-gen.
    want = 2 * footprint_bytes + (16 << 20)
    return int(min(want, int(cap * 0.9)))


def double_conv_pallas(x_nchw, params, mxu_dtype=jnp.bfloat16):
    """DoubleConv forward. x_nchw: (N, Cin, H, W) -> (N, Cout, H, W) (f32)."""
    N, Cin, H, W = x_nchw.shape
    Cout = params["w1"].shape[-1]
    cin_p = _round_up(Cin, 128)             # lane-dense, padded independently
    cout_p = _round_up(Cout, 128)
    cmax = max(cin_p, cout_p)
    M = N * H * W
    assert M % 8 == 0, "N*H*W must be a multiple of 8 (sublane)"  # TODO(synk): pad M

    # NCHW -> NHWC (channels on lanes), zero-pad channels, cast once to MXU dtype.
    x = jnp.transpose(x_nchw, (0, 2, 3, 1)).astype(mxu_dtype)
    x = jnp.pad(x, ((0, 0), (0, 0), (0, 0), (0, cin_p - Cin)))

    w1 = _pack_w(params["w1"], cin_p, cout_p, mxu_dtype)
    w2 = _pack_w(params["w2"], cout_p, cout_p, mxu_dtype)

    def _pad_vec(v):
        return jnp.pad(v, (0, cout_p - v.shape[0])).reshape(1, cout_p).astype(jnp.float32)

    g1, be1 = _pad_vec(params["g1"]), _pad_vec(params["be1"])
    g2, be2 = _pad_vec(params["g2"]), _pad_vec(params["be2"])
    # Conv biases b1/b2 are intentionally NOT passed: training-mode BatchNorm
    # subtracts the per-channel batch mean, which cancels them exactly.

    isz = jnp.dtype(mxu_dtype).itemsize
    footprint = (N * (H + 2) * (W + 2) * cmax * isz          # halo buffer
                 + M * 3 * cmax * isz                        # im2col slab
                 + x.size * isz + (w1.size + w2.size) * isz  # inputs
                 + M * cout_p * 4 + 4 * cout_p * 4)          # output + BN vecs

    vmem = pl.BlockSpec(memory_space=pltpu.MemorySpace.VMEM)
    kernel = functools.partial(_double_conv_kernel, cin_p, cout_p)
    out = pl.pallas_call(
        kernel,
        out_shape=jax.ShapeDtypeStruct((M, cout_p), jnp.float32),
        in_specs=[vmem] * 7,
        out_specs=vmem,
        scratch_shapes=[
            pltpu.VMEM((N, H + 2, W + 2, cmax), mxu_dtype),   # halo buffer
            pltpu.VMEM((N, H, W, 3 * cmax), mxu_dtype),       # dy-reused im2col slab
        ],
        compiler_params=pltpu.CompilerParams(
            vmem_limit_bytes=_vmem_limit_bytes(footprint)),
        cost_estimate=pl.CostEstimate(
            flops=int(2 * M * (9 * cin_p) * cout_p + 2 * M * (9 * cout_p) * cout_p),
            transcendentals=int(2 * cout_p),
            bytes_accessed=int(footprint)),
    )(x, w1, g1, be1, w2, g2, be2)

    y = out.reshape(N, H, W, cout_p)[:, :, :, :Cout]
    return jnp.transpose(y, (0, 3, 1, 2))   # NHWC -> NCHW


# ---------------- pure-JAX reference (for correctness check) ----------------
def _ref_stage(x_nhwc, w, b, gamma, beta):
    y = jax.lax.conv_general_dilated(
        x_nhwc, w, window_strides=(1, 1), padding="SAME",
        dimension_numbers=("NHWC", "HWIO", "NHWC"))
    y = y + b
    mean = jnp.mean(y, axis=(0, 1, 2), keepdims=True)
    var = jnp.mean((y - mean) ** 2, axis=(0, 1, 2), keepdims=True)
    y = (y - mean) * jax.lax.rsqrt(var + BN_EPS)
    y = y * gamma + beta
    return jnp.maximum(y, 0.0)


def double_conv_ref(x_nchw, params):
    x = jnp.transpose(x_nchw, (0, 2, 3, 1))
    x = _ref_stage(x, params["w1"], params["b1"], params["g1"], params["be1"])
    x = _ref_stage(x, params["w2"], params["b2"], params["g2"], params["be2"])
    return jnp.transpose(x, (0, 3, 1, 2))


if __name__ == "__main__":
    N, Cin, Cout, H, W = 2, 4, 8, 16, 16

    key = jax.random.PRNGKey(0)
    ks = jax.random.split(key, 7)
    x = jax.random.normal(ks[0], (N, Cin, H, W), jnp.float32)

    # Deterministic synthetic parameters (shapes per nn.Conv2d / nn.BatchNorm2d).
    params = {
        "w1": 0.1 * jax.random.normal(ks[1], (3, 3, Cin, Cout), jnp.float32),
        "b1": 0.1 * jax.random.normal(ks[2], (Cout,), jnp.float32),
        "g1": 1.0 + 0.1 * jax.random.normal(ks[3], (Cout,), jnp.float32),
        "be1": 0.1 * jax.random.normal(ks[4], (Cout,), jnp.float32),
        "w2": 0.1 * jax.random.normal(ks[5], (3, 3, Cout, Cout), jnp.float32),
        "b2": 0.1 * jax.random.normal(ks[6], (Cout,), jnp.float32),
        "g2": jnp.ones((Cout,), jnp.float32),
        "be2": jnp.zeros((Cout,), jnp.float32),
    }

    run = jax.jit(double_conv_pallas, static_argnames=("mxu_dtype",))
    ref = jax.block_until_ready(double_conv_ref(x, params))

    # Exact-parity gate: f32 compute path matches the f32 reference.
    out_f32 = jax.block_until_ready(run(x, params, mxu_dtype=jnp.float32))
    assert out_f32.shape == (N, Cout, H, W), out_f32.shape
    assert jnp.allclose(out_f32, ref, rtol=1e-3, atol=1e-3), (
        float(jnp.max(jnp.abs(out_f32 - ref))))

    # bf16 MXU path (the fast path on v5e/v6e/v7x): expected bf16-level error,
    # checked with a relative-norm bound instead of the f32 parity tolerance.
    out_bf16 = jax.block_until_ready(run(x, params, mxu_dtype=jnp.bfloat16))
    rel = jnp.linalg.norm(out_bf16 - ref) / jnp.linalg.norm(ref)
    assert float(rel) < 3e-2, float(rel)

    print("KERNEL_OK")
</pallas_src>

<mosaic_0001>
module attributes {stable_mosaic.version = 11 : i64} {
  func.func @_double_conv_kernel(%arg0: memref<2x16x16x128xf32, #tpu.memory_space<vmem>>, %arg1: memref<3x384x128xf32, #tpu.memory_space<vmem>>, %arg2: memref<1x128xf32, #tpu.memory_space<vmem>>, %arg3: memref<1x128xf32, #tpu.memory_space<vmem>>, %arg4: memref<3x384x128xf32, #tpu.memory_space<vmem>>, %arg5: memref<1x128xf32, #tpu.memory_space<vmem>>, %arg6: memref<1x128xf32, #tpu.memory_space<vmem>>, %arg7: memref<512x128xf32, #tpu.memory_space<vmem>>, %arg8: memref<2x18x18x128xf32, #tpu.memory_space<vmem>>, %arg9: memref<2x16x16x384xf32, #tpu.memory_space<vmem>>) attributes {dimension_semantics = [], scalar_prefetch = 0 : i64, scratch_operands = 2 : i64, tpu.core_type = #tpu.core_type<tc>} {
    %cst = arith.constant 0.000000e+00 : f32
    %0 = vector.broadcast %cst : f32 to vector<2x1x18x128xf32>
    %c0 = arith.constant 0 : index
    %c0_0 = arith.constant 0 : index
    %c0_1 = arith.constant 0 : index
    %c0_2 = arith.constant 0 : index
    %1 = vector.load %arg8[%c0, %c0_0, %c0_1, %c0_2] : memref<2x18x18x128xf32, #tpu.memory_space<vmem>>, vector<2x1x18x128xf32>
    tpu.vector_store %arg8[%c0, %c0_0, %c0_1, %c0_2], %0 {strides = array<i32>} : memref<2x18x18x128xf32, #tpu.memory_space<vmem>>, vector<2x1x18x128xf32>,
    %cst_3 = arith.constant 0.000000e+00 : f32
    %2 = vector.broadcast %cst_3 : f32 to vector<2x1x18x128xf32>
    %c0_4 = arith.constant 0 : index
    %c17 = arith.constant 17 : index
    %c0_5 = arith.constant 0 : index
    %c0_6 = arith.constant 0 : index
    %3 = vector.load %arg8[%c0_4, %c17, %c0_5, %c0_6] : memref<2x18x18x128xf32, #tpu.memory_space<vmem>>, vector<2x1x18x128xf32>
    tpu.vector_store %arg8[%c0_4, %c17, %c0_5, %c0_6], %2 {strides = array<i32>} : memref<2x18x18x128xf32, #tpu.memory_space<vmem>>, vector<2x1x18x128xf32>,
    %cst_7 = arith.constant 0.000000e+00 : f32
    %4 = vector.broadcast %cst_7 : f32 to vector<2x18x1x128xf32>
    %c0_8 = arith.constant 0 : index
    %c0_9 = arith.constant 0 : index
    %c0_10 = arith.constant 0 : index
    %c0_11 = arith.constant 0 : index
    %5 = vector.load %arg8[%c0_8, %c0_9, %c0_10, %c0_11] : memref<2x18x18x128xf32, #tpu.memory_space<vmem>>, vector<2x18x1x128xf32>
    tpu.vector_store %arg8[%c0_8, %c0_9, %c0_10, %c0_11], %4 {strides = array<i32>} : memref<2x18x18x128xf32, #tpu.memory_space<vmem>>, vector<2x18x1x128xf32>,
    %cst_12 = arith.constant 0.000000e+00 : f32
    %6 = vector.broadcast %cst_12 : f32 to vector<2x18x1x128xf32>
    %c0_13 = arith.constant 0 : index
    %c0_14 = arith.constant 0 : index
    %c17_15 = arith.constant 17 : index
    %c0_16 = arith.constant 0 : index
    %7 = vector.load %arg8[%c0_13, %c0_14, %c17_15, %c0_16] : memref<2x18x18x128xf32, #tpu.memory_space<vmem>>, vector<2x18x1x128xf32>
    tpu.vector_store %arg8[%c0_13, %c0_14, %c17_15, %c0_16], %6 {strides = array<i32>} : memref<2x18x18x128xf32, #tpu.memory_space<vmem>>, vector<2x18x1x128xf32>,
    %c0_17 = arith.constant 0 : index
    %c0_18 = arith.constant 0 : index
    %c0_19 = arith.constant 0 : index
    %c0_20 = arith.constant 0 : index
    %8 = vector.load %arg0[%c0_17, %c0_18, %c0_19, %c0_20] : memref<2x16x16x128xf32, #tpu.memory_space<vmem>>, vector<2x16x16x128xf32>
    %c0_21 = arith.constant 0 : index
    %c1 = arith.constant 1 : index
    %c1_22 = arith.constant 1 : index
    %c0_23 = arith.constant 0 : index
    %9 = vector.load %arg8[%c0_21, %c1, %c1_22, %c0_23] : memref<2x18x18x128xf32, #tpu.memory_space<vmem>>, vector<2x16x16x128xf32>
    tpu.vector_store %arg8[%c0_21, %c1, %c1_22, %c0_23], %8 {strides = array<i32>} : memref<2x18x18x128xf32, #tpu.memory_space<vmem>>, vector<2x16x16x128xf32>,
    %cst_24 = arith.constant 0.000000e+00 : f32
    %10 = vector.broadcast %cst_24 : f32 to vector<512x128xf32>
    %c0_25 = arith.constant 0 : index
    %c0_26 = arith.constant 0 : index
    %c0_27 = arith.constant 0 : index
    %c0_28 = arith.constant 0 : index
    %11 = vector.load %arg8[%c0_25, %c0_26, %c0_27, %c0_28] : memref<2x18x18x128xf32, #tpu.memory_space<vmem>>, vector<2x16x16x128xf32>
    %c0_29 = arith.constant 0 : index
    %c0_30 = arith.constant 0 : index
    %c0_31 = arith.constant 0 : index
    %c0_32 = arith.constant 0 : index
    %12 = vector.load %arg9[%c0_29, %c0_30, %c0_31, %c0_32] : memref<2x16x16x384xf32, #tpu.memory_space<vmem>>, vector<2x16x16x128xf32>
    tpu.vector_store %arg9[%c0_29, %c0_30, %c0_31, %c0_32], %11 {strides = array<i32>} : memref<2x16x16x384xf32, #tpu.memory_space<vmem>>, vector<2x16x16x128xf32>,
    %c0_33 = arith.constant 0 : index
    %c0_34 = arith.constant 0 : index
    %c1_35 = arith.constant 1 : index
    %c0_36 = arith.constant 0 : index
    %13 = vector.load %arg8[%c0_33, %c0_34, %c1_35, %c0_36] : memref<2x18x18x128xf32, #tpu.memory_space<vmem>>, vector<2x16x16x128xf32>
    %c0_37 = arith.constant 0 : index
    %c0_38 = arith.constant 0 : index
    %c0_39 = arith.constant 0 : index
    %c128 = arith.constant 128 : index
    %14 = vector.load %arg9[%c0_37, %c0_38, %c0_39, %c128] : memref<2x16x16x384xf32, #tpu.memory_space<vmem>>, vector<2x16x16x128xf32>
    tpu.vector_store %arg9[%c0_37, %c0_38, %c0_39, %c128], %13 {strides = array<i32>} : memref<2x16x16x384xf32, #tpu.memory_space<vmem>>, vector<2x16x16x128xf32>,
    %c0_40 = arith.constant 0 : index
    %c0_41 = arith.constant 0 : index
    %c2 = arith.constant 2 : index
    %c0_42 = arith.constant 0 : index
    %15 = vector.load %arg8[%c0_40, %c0_41, %c2, %c0_42] : memref<2x18x18x128xf32, #tpu.memory_space<vmem>>, vector<2x16x16x128xf32>
    %c0_43 = arith.constant 0 : index
    %c0_44 = arith.constant 0 : index
    %c0_45 = arith.constant 0 : index
    %c256 = arith.constant 256 : index
    %16 = vector.load %arg9[%c0_43, %c0_44, %c0_45, %c256] : memref<2x16x16x384xf32, #tpu.memory_space<vmem>>, vector<2x16x16x128xf32>
    tpu.vector_store %arg9[%c0_43, %c0_44, %c0_45, %c256], %15 {strides = array<i32>} : memref<2x16x16x384xf32, #tpu.memory_space<vmem>>, vector<2x16x16x128xf32>,
    %c0_46 = arith.constant 0 : index
    %c0_47 = arith.constant 0 : index
    %c0_48 = arith.constant 0 : index
    %c0_49 = arith.constant 0 : index
    %17 = vector.load %arg9[%c0_46, %c0_47, %c0_48, %c0_49] : memref<2x16x16x384xf32, #tpu.memory_space<vmem>>, vector<2x16x16x384xf32>
    %18 = vector.shape_cast %17 : vector<2x16x16x384xf32> to vector<512x384xf32>
    %c0_50 = arith.constant 0 : index
    %c0_51 = arith.constant 0 : index
    %c0_52 = arith.constant 0 : index
    %19 = vector.load %arg1[%c0_50, %c0_51, %c0_52] : memref<3x384x128xf32, #tpu.memory_space<vmem>>, vector<1x384x128xf32>
    %20 = vector.shape_cast %19 : vector<1x384x128xf32> to vector<384x128xf32>
    %cst_53 = arith.constant dense<0.000000e+00> : vector<512x128xf32>
    %21 = tpu.matmul %18, %20, %cst_53 {dimension_numbers = #tpu.dot_dimension_numbers<[1], [0], [0], [1], [0, 0, 1, 1], [], []>} : vector<512x384xf32>, vector<384x128xf32>, vector<512x128xf32> -> vector<512x128xf32>
    %22 = arith.addf %10, %21 : vector<512x128xf32>
    %c0_54 = arith.constant 0 : index
    %c1_55 = arith.constant 1 : index
    %c0_56 = arith.constant 0 : index
    %c0_57 = arith.constant 0 : index
    %23 = vector.load %arg8[%c0_54, %c1_55, %c0_56, %c0_57] : memref<2x18x18x128xf32, #tpu.memory_space<vmem>>, vector<2x16x16x128xf32>
    %c0_58 = arith.constant 0 : index
    %c0_59 = arith.constant 0 : index
    %c0_60 = arith.constant 0 : index
    %c0_61 = arith.constant 0 : index
    %24 = vector.load %arg9[%c0_58, %c0_59, %c0_60, %c0_61] : memref<2x16x16x384xf32, #tpu.memory_space<vmem>>, vector<2x16x16x128xf32>
    tpu.vector_store %arg9[%c0_58, %c0_59, %c0_60, %c0_61], %23 {strides = array<i32>} : memref<2x16x16x384xf32, #tpu.memory_space<vmem>>, vector<2x16x16x128xf32>,
    %c0_62 = arith.constant 0 : index
    %c1_63 = arith.constant 1 : index
    %c1_64 = arith.constant 1 : index
    %c0_65 = arith.constant 0 : index
    %25 = vector.load %arg8[%c0_62, %c1_63, %c1_64, %c0_65] : memref<2x18x18x128xf32, #tpu.memory_space<vmem>>, vector<2x16x16x128xf32>
    %c0_66 = arith.constant 0 : index
    %c0_67 = arith.constant 0 : index
    %c0_68 = arith.constant 0 : index
    %c128_69 = arith.constant 128 : index
    %26 = vector.load %arg9[%c0_66, %c0_67, %c0_68, %c128_69] : memref<2x16x16x384xf32, #tpu.memory_space<vmem>>, vector<2x16x16x128xf32>
    tpu.vector_store %arg9[%c0_66, %c0_67, %c0_68, %c128_69], %25 {strides = array<i32>} : memref<2x16x16x384xf32, #tpu.memory_space<vmem>>, vector<2x16x16x128xf32>,
    %c0_70 = arith.constant 0 : index
    %c1_71 = arith.constant 1 : index
    %c2_72 = arith.constant 2 : index
    %c0_73 = arith.constant 0 : index
    %27 = vector.load %arg8[%c0_70, %c1_71, %c2_72, %c0_73] : memref<2x18x18x128xf32, #tpu.memory_space<vmem>>, vector<2x16x16x128xf32>
    %c0_74 = arith.constant 0 : index
    %c0_75 = arith.constant 0 : index
    %c0_76 = arith.constant 0 : index
    %c256_77 = arith.constant 256 : index
    %28 = vector.load %arg9[%c0_74, %c0_75, %c0_76, %c256_77] : memref<2x16x16x384xf32, #tpu.memory_space<vmem>>, vector<2x16x16x128xf32>
    tpu.vector_store %arg9[%c0_74, %c0_75, %c0_76, %c256_77], %27 {strides = array<i32>} : memref<2x16x16x384xf32, #tpu.memory_space<vmem>>, vector<2x16x16x128xf32>,
    %c0_78 = arith.constant 0 : index
    %c0_79 = arith.constant 0 : index
    %c0_80 = arith.constant 0 : index
    %c0_81 = arith.constant 0 : index
    %29 = vector.load %arg9[%c0_78, %c0_79, %c0_80, %c0_81] : memref<2x16x16x384xf32, #tpu.memory_space<vmem>>, vector<2x16x16x384xf32>
    %30 = vector.shape_cast %29 : vector<2x16x16x384xf32> to vector<512x384xf32>
    %c1_82 = arith.constant 1 : index
    %c0_83 = arith.constant 0 : index
    %c0_84 = arith.constant 0 : index
    %31 = vector.load %arg1[%c1_82, %c0_83, %c0_84] : memref<3x384x128xf32, #tpu.memory_space<vmem>>, vector<1x384x128xf32>
    %32 = vector.shape_cast %31 : vector<1x384x128xf32> to vector<384x128xf32>
    %cst_85 = arith.constant dense<0.000000e+00> : vector<512x128xf32>
    %33 = tpu.matmul %30, %32, %cst_85 {dimension_numbers = #tpu.dot_dimension_numbers<[1], [0], [0], [1], [0, 0, 1, 1], [], []>} : vector<512x384xf32>, vector<384x128xf32>, vector<512x128xf32> -> vector<512x128xf32>
    %34 = arith.addf %22, %33 : vector<512x128xf32>
    %c0_86 = arith.constant 0 : index
    %c2_87 = arith.constant 2 : index
    %c0_88 = arith.constant 0 : index
    %c0_89 = arith.constant 0 : index
    %35 = vector.load %arg8[%c0_86, %c2_87, %c0_88, %c0_89] : memref<2x18x18x128xf32, #tpu.memory_space<vmem>>, vector<2x16x16x128xf32>
    %c0_90 = arith.constant 0 : index
    %c0_91 = arith.constant 0 : index
    %c0_92 = arith.constant 0 : index
    %c0_93 = arith.constant 0 : index
    %36 = vector.load %arg9[%c0_90, %c0_91, %c0_92, %c0_93] : memref<2x16x16x384xf32, #tpu.memory_space<vmem>>, vector<2x16x16x128xf32>
    tpu.vector_store %arg9[%c0_90, %c0_91, %c0_92, %c0_93], %35 {strides = array<i32>} : memref<2x16x16x384xf32, #tpu.memory_space<vmem>>, vector<2x16x16x128xf32>,
    %c0_94 = arith.constant 0 : index
    %c2_95 = arith.constant 2 : index
    %c1_96 = arith.constant 1 : index
    %c0_97 = arith.constant 0 : index
    %37 = vector.load %arg8[%c0_94, %c2_95, %c1_96, %c0_97] : memref<2x18x18x128xf32, #tpu.memory_space<vmem>>, vector<2x16x16x128xf32>
    %c0_98 = arith.constant 0 : index
    %c0_99 = arith.constant 0 : index
    %c0_100 = arith.constant 0 : index
    %c128_101 = arith.constant 128 : index
    %38 = vector.load %arg9[%c0_98, %c0_99, %c0_100, %c128_101] : memref<2x16x16x384xf32, #tpu.memory_space<vmem>>, vector<2x16x16x128xf32>
    tpu.vector_store %arg9[%c0_98, %c0_99, %c0_100, %c128_101], %37 {strides = array<i32>} : memref<2x16x16x384xf32, #tpu.memory_space<vmem>>, vector<2x16x16x128xf32>,
    %c0_102 = arith.constant 0 : index
    %c2_103 = arith.constant 2 : index
    %c2_104 = arith.constant 2 : index
    %c0_105 = arith.constant 0 : index
    %39 = vector.load %arg8[%c0_102, %c2_103, %c2_104, %c0_105] : memref<2x18x18x128xf32, #tpu.memory_space<vmem>>, vector<2x16x16x128xf32>
    %c0_106 = arith.constant 0 : index
    %c0_107 = arith.constant 0 : index
    %c0_108 = arith.constant 0 : index
    %c256_109 = arith.constant 256 : index
    %40 = vector.load %arg9[%c0_106, %c0_107, %c0_108, %c256_109] : memref<2x16x16x384xf32, #tpu.memory_space<vmem>>, vector<2x16x16x128xf32>
    tpu.vector_store %arg9[%c0_106, %c0_107, %c0_108, %c256_109], %39 {strides = array<i32>} : memref<2x16x16x384xf32, #tpu.memory_space<vmem>>, vector<2x16x16x128xf32>,
    %c0_110 = arith.constant 0 : index
    %c0_111 = arith.constant 0 : index
    %c0_112 = arith.constant 0 : index
    %c0_113 = arith.constant 0 : index
    %41 = vector.load %arg9[%c0_110, %c0_111, %c0_112, %c0_113] : memref<2x16x16x384xf32, #tpu.memory_space<vmem>>, vector<2x16x16x384xf32>
    %42 = vector.shape_cast %41 : vector<2x16x16x384xf32> to vector<512x384xf32>
    %c2_114 = arith.constant 2 : index
    %c0_115 = arith.constant 0 : index
    %c0_116 = arith.constant 0 : index
    %43 = vector.load %arg1[%c2_114, %c0_115, %c0_116] : memref<3x384x128xf32, #tpu.memory_space<vmem>>, vector<1x384x128xf32>
    %44 = vector.shape_cast %43 : vector<1x384x128xf32> to vector<384x128xf32>
    %cst_117 = arith.constant dense<0.000000e+00> : vector<512x128xf32>
    %45 = tpu.matmul %42, %44, %cst_117 {dimension_numbers = #tpu.dot_dimension_numbers<[1], [0], [0], [1], [0, 0, 1, 1], [], []>} : vector<512x384xf32>, vector<384x128xf32>, vector<512x128xf32> -> vector<512x128xf32>
    %46 = arith.addf %34, %45 : vector<512x128xf32>
    %c0_118 = arith.constant 0 : index
    %c0_119 = arith.constant 0 : index
    %47 = vector.load %arg2[%c0_118, %c0_119] : memref<1x128xf32, #tpu.memory_space<vmem>>, vector<1x128xf32>
    %c0_120 = arith.constant 0 : index
    %c0_121 = arith.constant 0 : index
    %48 = vector.load %arg3[%c0_120, %c0_121] : memref<1x128xf32, #tpu.memory_space<vmem>>, vector<1x128xf32>
    %cst_122 = arith.constant dense<0.000000e+00> : vector<128xf32>
    %49 = vector.multi_reduction <add>, %46, %cst_122 [0] : vector<512x128xf32> to vector<128xf32>
    %50 = vector.shape_cast %49 : vector<128xf32> to vector<1x128xf32>
    %51 = arith.mulf %46, %46 : vector<512x128xf32>
    %cst_123 = arith.constant dense<0.000000e+00> : vector<128xf32>
    %52 = vector.multi_reduction <add>, %51, %cst_123 [0] : vector<512x128xf32> to vector<128xf32>
    %53 = vector.shape_cast %52 : vector<128xf32> to vector<1x128xf32>
    %cst_124 = arith.constant 0.001953125 : f32
    %54 = vector.broadcast %cst_124 : f32 to vector<1x128xf32>
    %55 = arith.mulf %50, %54 : vector<1x128xf32>
    %cst_125 = arith.constant 0.001953125 : f32
    %56 = vector.broadcast %cst_125 : f32 to vector<1x128xf32>
    %57 = arith.mulf %53, %56 : vector<1x128xf32>
    %58 = arith.mulf %55, %55 : vector<1x128xf32>
    %59 = arith.subf %57, %58 : vector<1x128xf32>
    %cst_126 = arith.constant 9.99999974E-6 : f32
    %60 = vector.broadcast %cst_126 : f32 to vector<1x128xf32>
    %61 = arith.addf %59, %60 : vector<1x128xf32>
    %62 = math.rsqrt %61 : vector<1x128xf32>
    %63 = arith.mulf %47, %62 : vector<1x128xf32>
    %64 = arith.mulf %55, %63 : vector<1x128xf32>
    %65 = arith.subf %48, %64 : vector<1x128xf32>
    %66 = vector.broadcast %63 : vector<1x128xf32> to vector<512x128xf32>
    %67 = arith.mulf %46, %66 : vector<512x128xf32>
    %68 = vector.broadcast %65 : vector<1x128xf32> to vector<512x128xf32>
    %69 = arith.addf %67, %68 : vector<512x128xf32>
    %cst_127 = arith.constant 0.000000e+00 : f32
    %70 = vector.broadcast %cst_127 : f32 to vector<512x128xf32>
    %71 = arith.maximumf %69, %70 : vector<512x128xf32>
    %72 = vector.shape_cast %71 : vector<512x128xf32> to vector<2x16x16x128xf32>
    %c0_128 = arith.constant 0 : index
    %c1_129 = arith.constant 1 : index
    %c1_130 = arith.constant 1 : index
    %c0_131 = arith.constant 0 : index
    %73 = vector.load %arg8[%c0_128, %c1_129, %c1_130, %c0_131] : memref<2x18x18x128xf32, #tpu.memory_space<vmem>>, vector<2x16x16x128xf32>
    tpu.vector_store %arg8[%c0_128, %c1_129, %c1_130, %c0_131], %72 {strides = array<i32>} : memref<2x18x18x128xf32, #tpu.memory_space<vmem>>, vector<2x16x16x128xf32>,
    %cst_132 = arith.constant 0.000000e+00 : f32
    %74 = vector.broadcast %cst_132 : f32 to vector<512x128xf32>
    %c0_133 = arith.constant 0 : index
    %c0_134 = arith.constant 0 : index
    %c0_135 = arith.constant 0 : index
    %c0_136 = arith.constant 0 : index
    %75 = vector.load %arg8[%c0_133, %c0_134, %c0_135, %c0_136] : memref<2x18x18x128xf32, #tpu.memory_space<vmem>>, vector<2x16x16x128xf32>
    %c0_137 = arith.constant 0 : index
    %c0_138 = arith.constant 0 : index
    %c0_139 = arith.constant 0 : index
    %c0_140 = arith.constant 0 : index
    %76 = vector.load %arg9[%c0_137, %c0_138, %c0_139, %c0_140] : memref<2x16x16x384xf32, #tpu.memory_space<vmem>>, vector<2x16x16x128xf32>
    tpu.vector_store %arg9[%c0_137, %c0_138, %c0_139, %c0_140], %75 {strides = array<i32>} : memref<2x16x16x384xf32, #tpu.memory_space<vmem>>, vector<2x16x16x128xf32>,
    %c0_141 = arith.constant 0 : index
    %c0_142 = arith.constant 0 : index
    %c1_143 = arith.constant 1 : index
    %c0_144 = arith.constant 0 : index
    %77 = vector.load %arg8[%c0_141, %c0_142, %c1_143, %c0_144] : memref<2x18x18x128xf32, #tpu.memory_space<vmem>>, vector<2x16x16x128xf32>
    %c0_145 = arith.constant 0 : index
    %c0_146 = arith.constant 0 : index
    %c0_147 = arith.constant 0 : index
    %c128_148 = arith.constant 128 : index
    %78 = vector.load %arg9[%c0_145, %c0_146, %c0_147, %c128_148] : memref<2x16x16x384xf32, #tpu.memory_space<vmem>>, vector<2x16x16x128xf32>
    tpu.vector_store %arg9[%c0_145, %c0_146, %c0_147, %c128_148], %77 {strides = array<i32>} : memref<2x16x16x384xf32, #tpu.memory_space<vmem>>, vector<2x16x16x128xf32>,
    %c0_149 = arith.constant 0 : index
    %c0_150 = arith.constant 0 : index
    %c2_151 = arith.constant 2 : index
    %c0_152 = arith.constant 0 : index
    %79 = vector.load %arg8[%c0_149, %c0_150, %c2_151, %c0_152] : memref<2x18x18x128xf32, #tpu.memory_space<vmem>>, vector<2x16x16x128xf32>
    %c0_153 = arith.constant 0 : index
    %c0_154 = arith.constant 0 : index
    %c0_155 = arith.constant 0 : index
    %c256_156 = arith.constant 256 : index
    %80 = vector.load %arg9[%c0_153, %c0_154, %c0_155, %c256_156] : memref<2x16x16x384xf32, #tpu.memory_space<vmem>>, vector<2x16x16x128xf32>
    tpu.vector_store %arg9[%c0_153, %c0_154, %c0_155, %c256_156], %79 {strides = array<i32>} : memref<2x16x16x384xf32, #tpu.memory_space<vmem>>, vector<2x16x16x128xf32>,
    %c0_157 = arith.constant 0 : index
    %c0_158 = arith.constant 0 : index
    %c0_159 = arith.constant 0 : index
    %c0_160 = arith.constant 0 : index
    %81 = vector.load %arg9[%c0_157, %c0_158, %c0_159, %c0_160] : memref<2x16x16x384xf32, #tpu.memory_space<vmem>>, vector<2x16x16x384xf32>
    %82 = vector.shape_cast %81 : vector<2x16x16x384xf32> to vector<512x384xf32>
    %c0_161 = arith.constant 0 : index
    %c0_162 = arith.constant 0 : index
    %c0_163 = arith.constant 0 : index
    %83 = vector.load %arg4[%c0_161, %c0_162, %c0_163] : memref<3x384x128xf32, #tpu.memory_space<vmem>>, vector<1x384x128xf32>
    %84 = vector.shape_cast %83 : vector<1x384x128xf32> to vector<384x128xf32>
    %cst_164 = arith.constant dense<0.000000e+00> : vector<512x128xf32>
    %85 = tpu.matmul %82, %84, %cst_164 {dimension_numbers = #tpu.dot_dimension_numbers<[1], [0], [0], [1], [0, 0, 1, 1], [], []>} : vector<512x384xf32>, vector<384x128xf32>, vector<512x128xf32> -> vector<512x128xf32>
    %86 = arith.addf %74, %85 : vector<512x128xf32>
    %c0_165 = arith.constant 0 : index
    %c1_166 = arith.constant 1 : index
    %c0_167 = arith.constant 0 : index
    %c0_168 = arith.constant 0 : index
    %87 = vector.load %arg8[%c0_165, %c1_166, %c0_167, %c0_168] : memref<2x18x18x128xf32, #tpu.memory_space<vmem>>, vector<2x16x16x128xf32>
    %c0_169 = arith.constant 0 : index
    %c0_170 = arith.constant 0 : index
    %c0_171 = arith.constant 0 : index
    %c0_172 = arith.constant 0 : index
    %88 = vector.load %arg9[%c0_169, %c0_170, %c0_171, %c0_172] : memref<2x16x16x384xf32, #tpu.memory_space<vmem>>, vector<2x16x16x128xf32>
    tpu.vector_store %arg9[%c0_169, %c0_170, %c0_171, %c0_172], %87 {strides = array<i32>} : memref<2x16x16x384xf32, #tpu.memory_space<vmem>>, vector<2x16x16x128xf32>,
    %c0_173 = arith.constant 0 : index
    %c1_174 = arith.constant 1 : index
    %c1_175 = arith.constant 1 : index
    %c0_176 = arith.constant 0 : index
    %89 = vector.load %arg8[%c0_173, %c1_174, %c1_175, %c0_176] : memref<2x18x18x128xf32, #tpu.memory_space<vmem>>, vector<2x16x16x128xf32>
    %c0_177 = arith.constant 0 : index
    %c0_178 = arith.constant 0 : index
    %c0_179 = arith.constant 0 : index
    %c128_180 = arith.constant 128 : index
    %90 = vector.load %arg9[%c0_177, %c0_178, %c0_179, %c128_180] : memref<2x16x16x384xf32, #tpu.memory_space<vmem>>, vector<2x16x16x128xf32>
    tpu.vector_store %arg9[%c0_177, %c0_178, %c0_179, %c128_180], %89 {strides = array<i32>} : memref<2x16x16x384xf32, #tpu.memory_space<vmem>>, vector<2x16x16x128xf32>,
    %c0_181 = arith.constant 0 : index
    %c1_182 = arith.constant 1 : index
    %c2_183 = arith.constant 2 : index
    %c0_184 = arith.constant 0 : index
    %91 = vector.load %arg8[%c0_181, %c1_182, %c2_183, %c0_184] : memref<2x18x18x128xf32, #tpu.memory_space<vmem>>, vector<2x16x16x128xf32>
    %c0_185 = arith.constant 0 : index
    %c0_186 = arith.constant 0 : index
    %c0_187 = arith.constant 0 : index
    %c256_188 = arith.constant 256 : index
    %92 = vector.load %arg9[%c0_185, %c0_186, %c0_187, %c256_188] : memref<2x16x16x384xf32, #tpu.memory_space<vmem>>, vector<2x16x16x128xf32>
    tpu.vector_store %arg9[%c0_185, %c0_186, %c0_187, %c256_188], %91 {strides = array<i32>} : memref<2x16x16x384xf32, #tpu.memory_space<vmem>>, vector<2x16x16x128xf32>,
    %c0_189 = arith.constant 0 : index
    %c0_190 = arith.constant 0 : index
    %c0_191 = arith.constant 0 : index
    %c0_192 = arith.constant 0 : index
    %93 = vector.load %arg9[%c0_189, %c0_190, %c0_191, %c0_192] : memref<2x16x16x384xf32, #tpu.memory_space<vmem>>, vector<2x16x16x384xf32>
    %94 = vector.shape_cast %93 : vector<2x16x16x384xf32> to vector<512x384xf32>
    %c1_193 = arith.constant 1 : index
    %c0_194 = arith.constant 0 : index
    %c0_195 = arith.constant 0 : index
    %95 = vector.load %arg4[%c1_193, %c0_194, %c0_195] : memref<3x384x128xf32, #tpu.memory_space<vmem>>, vector<1x384x128xf32>
    %96 = vector.shape_cast %95 : vector<1x384x128xf32> to vector<384x128xf32>
    %cst_196 = arith.constant dense<0.000000e+00> : vector<512x128xf32>
    %97 = tpu.matmul %94, %96, %cst_196 {dimension_numbers = #tpu.dot_dimension_numbers<[1], [0], [0], [1], [0, 0, 1, 1], [], []>} : vector<512x384xf32>, vector<384x128xf32>, vector<512x128xf32> -> vector<512x128xf32>
    %98 = arith.addf %86, %97 : vector<512x128xf32>
    %c0_197 = arith.constant 0 : index
    %c2_198 = arith.constant 2 : index
    %c0_199 = arith.constant 0 : index
    %c0_200 = arith.constant 0 : index
    %99 = vector.load %arg8[%c0_197, %c2_198, %c0_199, %c0_200] : memref<2x18x18x128xf32, #tpu.memory_space<vmem>>, vector<2x16x16x128xf32>
    %c0_201 = arith.constant 0 : index
    %c0_202 = arith.constant 0 : index
    %c0_203 = arith.constant 0 : index
    %c0_204 = arith.constant 0 : index
    %100 = vector.load %arg9[%c0_201, %c0_202, %c0_203, %c0_204] : memref<2x16x16x384xf32, #tpu.memory_space<vmem>>, vector<2x16x16x128xf32>
    tpu.vector_store %arg9[%c0_201, %c0_202, %c0_203, %c0_204], %99 {strides = array<i32>} : memref<2x16x16x384xf32, #tpu.memory_space<vmem>>, vector<2x16x16x128xf32>,
    %c0_205 = arith.constant 0 : index
    %c2_206 = arith.constant 2 : index
    %c1_207 = arith.constant 1 : index
    %c0_208 = arith.constant 0 : index
    %101 = vector.load %arg8[%c0_205, %c2_206, %c1_207, %c0_208] : memref<2x18x18x128xf32, #tpu.memory_space<vmem>>, vector<2x16x16x128xf32>
    %c0_209 = arith.constant 0 : index
    %c0_210 = arith.constant 0 : index
    %c0_211 = arith.constant 0 : index
    %c128_212 = arith.constant 128 : index
    %102 = vector.load %arg9[%c0_209, %c0_210, %c0_211, %c128_212] : memref<2x16x16x384xf32, #tpu.memory_space<vmem>>, vector<2x16x16x128xf32>
    tpu.vector_store %arg9[%c0_209, %c0_210, %c0_211, %c128_212], %101 {strides = array<i32>} : memref<2x16x16x384xf32, #tpu.memory_space<vmem>>, vector<2x16x16x128xf32>,
    %c0_213 = arith.constant 0 : index
    %c2_214 = arith.constant 2 : index
    %c2_215 = arith.constant 2 : index
    %c0_216 = arith.constant 0 : index
    %103 = vector.load %arg8[%c0_213, %c2_214, %c2_215, %c0_216] : memref<2x18x18x128xf32, #tpu.memory_space<vmem>>, vector<2x16x16x128xf32>
    %c0_217 = arith.constant 0 : index
    %c0_218 = arith.constant 0 : index
    %c0_219 = arith.constant 0 : index
    %c256_220 = arith.constant 256 : index
    %104 = vector.load %arg9[%c0_217, %c0_218, %c0_219, %c256_220] : memref<2x16x16x384xf32, #tpu.memory_space<vmem>>, vector<2x16x16x128xf32>
    tpu.vector_store %arg9[%c0_217, %c0_218, %c0_219, %c256_220], %103 {strides = array<i32>} : memref<2x16x16x384xf32, #tpu.memory_space<vmem>>, vector<2x16x16x128xf32>,
    %c0_221 = arith.constant 0 : index
    %c0_222 = arith.constant 0 : index
    %c0_223 = arith.constant 0 : index
    %c0_224 = arith.constant 0 : index
    %105 = vector.load %arg9[%c0_221, %c0_222, %c0_223, %c0_224] : memref<2x16x16x384xf32, #tpu.memory_space<vmem>>, vector<2x16x16x384xf32>
    %106 = vector.shape_cast %105 : vector<2x16x16x384xf32> to vector<512x384xf32>
    %c2_225 = arith.constant 2 : index
    %c0_226 = arith.constant 0 : index
    %c0_227 = arith.constant 0 : index
    %107 = vector.load %arg4[%c2_225, %c0_226, %c0_227] : memref<3x384x128xf32, #tpu.memory_space<vmem>>, vector<1x384x128xf32>
    %108 = vector.shape_cast %107 : vector<1x384x128xf32> to vector<384x128xf32>
    %cst_228 = arith.constant dense<0.000000e+00> : vector<512x128xf32>
    %109 = tpu.matmul %106, %108, %cst_228 {dimension_numbers = #tpu.dot_dimension_numbers<[1], [0], [0], [1], [0, 0, 1, 1], [], []>} : vector<512x384xf32>, vector<384x128xf32>, vector<512x128xf32> -> vector<512x128xf32>
    %110 = arith.addf %98, %109 : vector<512x128xf32>
    %c0_229 = arith.constant 0 : index
    %c0_230 = arith.constant 0 : index
    %111 = vector.load %arg5[%c0_229, %c0_230] : memref<1x128xf32, #tpu.memory_space<vmem>>, vector<1x128xf32>
    %c0_231 = arith.constant 0 : index
    %c0_232 = arith.constant 0 : index
    %112 = vector.load %arg6[%c0_231, %c0_232] : memref<1x128xf32, #tpu.memory_space<vmem>>, vector<1x128xf32>
    %cst_233 = arith.constant dense<0.000000e+00> : vector<128xf32>
    %113 = vector.multi_reduction <add>, %110, %cst_233 [0] : vector<512x128xf32> to vector<128xf32>
    %114 = vector.shape_cast %113 : vector<128xf32> to vector<1x128xf32>
    %115 = arith.mulf %110, %110 : vector<512x128xf32>
    %cst_234 = arith.constant dense<0.000000e+00> : vector<128xf32>
    %116 = vector.multi_reduction <add>, %115, %cst_234 [0] : vector<512x128xf32> to vector<128xf32>
    %117 = vector.shape_cast %116 : vector<128xf32> to vector<1x128xf32>
    %cst_235 = arith.constant 0.001953125 : f32
    %118 = vector.broadcast %cst_235 : f32 to vector<1x128xf32>
    %119 = arith.mulf %114, %118 : vector<1x128xf32>
    %cst_236 = arith.constant 0.001953125 : f32
    %120 = vector.broadcast %cst_236 : f32 to vector<1x128xf32>
    %121 = arith.mulf %117, %120 : vector<1x128xf32>
    %122 = arith.mulf %119, %119 : vector<1x128xf32>
    %123 = arith.subf %121, %122 : vector<1x128xf32>
    %cst_237 = arith.constant 9.99999974E-6 : f32
    %124 = vector.broadcast %cst_237 : f32 to vector<1x128xf32>
    %125 = arith.addf %123, %124 : vector<1x128xf32>
    %126 = math.rsqrt %125 : vector<1x128xf32>
    %127 = arith.mulf %111, %126 : vector<1x128xf32>
    %128 = arith.mulf %119, %127 : vector<1x128xf32>
    %129 = arith.subf %112, %128 : vector<1x128xf32>
    %130 = vector.broadcast %127 : vector<1x128xf32> to vector<512x128xf32>
    %131 = arith.mulf %110, %130 : vector<512x128xf32>
    %132 = vector.broadcast %129 : vector<1x128xf32> to vector<512x128xf32>
    %133 = arith.addf %131, %132 : vector<512x128xf32>
    %cst_238 = arith.constant 0.000000e+00 : f32
    %134 = vector.broadcast %cst_238 : f32 to vector<512x128xf32>
    %135 = arith.maximumf %133, %134 : vector<512x128xf32>
    %c0_239 = arith.constant 0 : index
    %c0_240 = arith.constant 0 : index
    %136 = vector.load %arg7[%c0_239, %c0_240] : memref<512x128xf32, #tpu.memory_space<vmem>>, vector<512x128xf32>
    tpu.vector_store %arg7[%c0_239, %c0_240], %135 {strides = array<i32>} : memref<512x128xf32, #tpu.memory_space<vmem>>, vector<512x128xf32>,
    return
  }
}

</mosaic_0001>

<llo_original>
// kernel: double_conv_pallas.1
$region0: #{double_conv_pallas.1}
  #allocation0 [shape = 'u32[]', space=smem, size = 0x4, offset = 0x4, fixed_abs, tag = 'smem constant byte address 0x4 - core index']
  #allocation1 [shape = 'u32[144,128]{1,0:T(1,128)}', space=vmem, size = 0x12000, scoped, tag = 'internal scratch']
  #allocation2 [shape = 'f32[2,18,18,128]{3,2,1,0:T(8,128)}', space=vmem, size = 0x6c000, scoped, tag = 'scratch operand']
  #allocation3 [shape = 'f32[2,16,16,384]{3,2,1,0:T(8,128)}', space=vmem, size = 0xc0000, scoped, tag = 'scratch operand']
  %s0 = inlined_call_operand.vmem [shape: f32[2,16,16,128], index: 0, kind: input, shape index: {}]
  %s1 = inlined_call_operand.vmem [shape: f32[3,384,128], index: 1, kind: input, shape index: {}]
  %s2 = inlined_call_operand.vmem [shape: f32[1,128], index: 2, kind: input, shape index: {}]
  %s3 = inlined_call_operand.vmem [shape: f32[1,128], index: 3, kind: input, shape index: {}]
  %s4 = inlined_call_operand.vmem [shape: f32[3,384,128], index: 4, kind: input, shape index: {}]
  %s5 = inlined_call_operand.vmem [shape: f32[1,128], index: 5, kind: input, shape index: {}]
  %s6 = inlined_call_operand.vmem [shape: f32[1,128], index: 6, kind: input, shape index: {}]
  %s7 = inlined_call_operand.vmem [shape: f32[512,128], index: 7, kind: output, shape index: {}]
  %s8 = sld [smem:[#allocation0]]
  $region38: #{double_conv_pallas.1} parent=0
    _
  %s10 = ssub.s32 1, %s8
  %s11 = scalar_select 0, %s10, %s8
  // Predicated region
  $region2: #{double_conv_pallas.1} parent=0 // pred_check
    _
  $region3: #{double_conv_pallas.1} parent=0 // pred_check_branch
    %13 = sbr.rel (0) target = $region5
  $region4: #{double_conv_pallas.1} parent=0 // pred_region
    _
  $region5: #{double_conv_pallas.1} parent=0 // pred_fallthru
    _
  // Predicated region
  $region6: #{double_conv_pallas.1} parent=0 // pred_check
    _
  $region7: #{double_conv_pallas.1} parent=0 // pred_check_branch
    %15 = sbr.rel (0) target = $region9
  $region8: #{double_conv_pallas.1} parent=0 // pred_region
    _
  $region9: #{double_conv_pallas.1} parent=0 // pred_fallthru
    _
  // Predicated region
  $region10: #{double_conv_pallas.1} parent=0 // pred_check
    _
  $region11: #{double_conv_pallas.1} parent=0 // pred_check_branch
    %17 = sbr.rel (0) target = $region13
  $region12: #{double_conv_pallas.1} parent=0 // pred_region
    _
  $region13: #{double_conv_pallas.1} parent=0 // pred_fallthru
    _
  // Predicated region
  $region14: #{double_conv_pallas.1} parent=0 // pred_check
    _
  $region15: #{double_conv_pallas.1} parent=0 // pred_check_branch
    %19 = sbr.rel (0) target = $region17
  $region16: #{double_conv_pallas.1} parent=0 // pred_region
    _
  $region17: #{double_conv_pallas.1} parent=0 // pred_fallthru
    _
  // Predicated region
  $region18: #{double_conv_pallas.1} parent=0 // pred_check
    _
  $region19: #{double_conv_pallas.1} parent=0 // pred_check_branch
    %21 = sbr.rel (0) target = $region21
  $region20: #{double_conv_pallas.1} parent=0 // pred_region
    _
  $region21: #{double_conv_pallas.1} parent=0 // pred_fallthru
    _
  // Predicated region
  $region22: #{double_conv_pallas.1} parent=0 // pred_check
    _
  $region23: #{double_conv_pallas.1} parent=0 // pred_check_branch
    %23 = sbr.rel (0) target = $region25
  $region24: #{double_conv_pallas.1} parent=0 // pred_region
    _
  $region25: #{double_conv_pallas.1} parent=0 // pred_fallthru
    _
  // Predicated region
  $region26: #{double_conv_pallas.1} parent=0 // pred_check
    _
  $region27: #{double_conv_pallas.1} parent=0 // pred_check_branch
    %25 = sbr.rel (0) target = $region29
  $region28: #{double_conv_pallas.1} parent=0 // pred_region
    _
  $region29: #{double_conv_pallas.1} parent=0 // pred_fallthru
    _
  %26 = vst [vmem:[#allocation2] sm:$0xff] 0.0
  %27 = vst [vmem:[#allocation2 + $0x8] sm:$0xff] 0.0
  %28 = vst [vmem:[#allocation2 + $0x10] sm:$0x3] 0.0
  %29 = vst [vmem:[#allocation2 + $0x1b0] sm:$0xff] 0.0
  %30 = vst [vmem:[#allocation2 + $0x1b8] sm:$0xff] 0.0
  %31 = vst [vmem:[#allocation2 + $0x1c0] sm:$0x3] 0.0
  %s32 = scalar_lea.vmem [#allocation2], 408
  %33 = vst [vmem:[%s32] sm:$0xff] 0.0
  %34 = vst [vmem:[%s32 + $0x8] sm:$0xff] 0.0
  %35 = vst [vmem:[%s32 + $0x10] sm:$0x3] 0.0
  %36 = vst [vmem:[%s32 + $0x1b0] sm:$0xff] 0.0
  %37 = vst [vmem:[%s32 + $0x1b8] sm:$0xff] 0.0
  %38 = vst [vmem:[%s32 + $0x1c0] sm:$0x3] 0.0
  %39 = vst [vmem:[#allocation2] sm:$0x1] 0.0
  %40 = vst [vmem:[#allocation2 + $0x18] sm:$0x1] 0.0
  %41 = vst [vmem:[#allocation2 + $0x30] sm:$0x1] 0.0
  %42 = vst [vmem:[#allocation2 + $0x48] sm:$0x1] 0.0
  %43 = vst [vmem:[#allocation2 + $0x60] sm:$0x1] 0.0
  %44 = vst [vmem:[#allocation2 + $0x78] sm:$0x1] 0.0
  %45 = vst [vmem:[#allocation2 + $0x90] sm:$0x1] 0.0
  %46 = vst [vmem:[#allocation2 + $0xa8] sm:$0x1] 0.0
  %47 = vst [vmem:[#allocation2 + $0xc0] sm:$0x1] 0.0
  %48 = vst [vmem:[#allocation2 + $0xd8] sm:$0x1] 0.0
  %49 = vst [vmem:[#allocation2 + $0xf0] sm:$0x1] 0.0
  %50 = vst [vmem:[#allocation2 + $0x108] sm:$0x1] 0.0
  %51 = vst [vmem:[#allocation2 + $0x120] sm:$0x1] 0.0
  %52 = vst [vmem:[#allocation2 + $0x138] sm:$0x1] 0.0
  %53 = vst [vmem:[#allocation2 + $0x150] sm:$0x1] 0.0
  %54 = vst [vmem:[#allocation2 + $0x168] sm:$0x1] 0.0
  %55 = vst [vmem:[#allocation2 + $0x180] sm:$0x1] 0.0
  %56 = vst [vmem:[#allocation2 + $0x198] sm:$0x1] 0.0
  %57 = vst [vmem:[#allocation2 + $0x1b0] sm:$0x1] 0.0
  %58 = vst [vmem:[#allocation2 + $0x1c8] sm:$0x1] 0.0
  %59 = vst [vmem:[#allocation2 + $0x1e0] sm:$0x1] 0.0
  %60 = vst [vmem:[#allocation2 + $0x1f8] sm:$0x1] 0.0
  %61 = vst [vmem:[#allocation2 + $0x210] sm:$0x1] 0.0
  %62 = vst [vmem:[#allocation2 + $0x228] sm:$0x1] 0.0
  %63 = vst [vmem:[#allocation2 + $0x240] sm:$0x1] 0.0
  %64 = vst [vmem:[#allocation2 + $0x258] sm:$0x1] 0.0
  %65 = vst [vmem:[#allocation2 + $0x270] sm:$0x1] 0.0
  %66 = vst [vmem:[#allocation2 + $0x288] sm:$0x1] 0.0
  %67 = vst [vmem:[#allocation2 + $0x2a0] sm:$0x1] 0.0
  %68 = vst [vmem:[#allocation2 + $0x2b8] sm:$0x1] 0.0
  %69 = vst [vmem:[#allocation2 + $0x2d0] sm:$0x1] 0.0
  %70 = vst [vmem:[#allocation2 + $0x2e8] sm:$0x1] 0.0
  %71 = vst [vmem:[#allocation2 + $0x300] sm:$0x1] 0.0
  %72 = vst [vmem:[#allocation2 + $0x318] sm:$0x1] 0.0
  %73 = vst [vmem:[#allocation2 + $0x330] sm:$0x1] 0.0
  %74 = vst [vmem:[#allocation2 + $0x348] sm:$0x1] 0.0
  %75 = vst [vmem:[#allocation2 + $0x11] sm:$0x1] 0.0
  %76 = vst [vmem:[#allocation2 + $0x29] sm:$0x1] 0.0
  %77 = vst [vmem:[#allocation2 + $0x41] sm:$0x1] 0.0
  %78 = vst [vmem:[#allocation2 + $0x59] sm:$0x1] 0.0
  %79 = vst [vmem:[#allocation2 + $0x71] sm:$0x1] 0.0
  %80 = vst [vmem:[#allocation2 + $0x89] sm:$0x1] 0.0
  %81 = vst [vmem:[#allocation2 + $0xa1] sm:$0x1] 0.0
  %82 = vst [vmem:[#allocation2 + $0xb9] sm:$0x1] 0.0
  %83 = vst [vmem:[#allocation2 + $0xd1] sm:$0x1] 0.0
  %84 = vst [vmem:[#allocation2 + $0xe9] sm:$0x1] 0.0
  %85 = vst [vmem:[#allocation2 + $0x101] sm:$0x1] 0.0
  %86 = vst [vmem:[#allocation2 + $0x119] sm:$0x1] 0.0
  %87 = vst [vmem:[#allocation2 + $0x131] sm:$0x1] 0.0
  %88 = vst [vmem:[#allocation2 + $0x149] sm:$0x1] 0.0
  %89 = vst [vmem:[#allocation2 + $0x161] sm:$0x1] 0.0
  %90 = vst [vmem:[#allocation2 + $0x179] sm:$0x1] 0.0
  %91 = vst [vmem:[#allocation2 + $0x191] sm:$0x1] 0.0
  %92 = vst [vmem:[#allocation2 + $0x1a9] sm:$0x1] 0.0
  %93 = vst [vmem:[#allocation2 + $0x1c1] sm:$0x1] 0.0
  %94 = vst [vmem:[#allocation2 + $0x1d9] sm:$0x1] 0.0
  %95 = vst [vmem:[#allocation2 + $0x1f1] sm:$0x1] 0.0
  %96 = vst [vmem:[#allocation2 + $0x209] sm:$0x1] 0.0
  %97 = vst [vmem:[#allocation2 + $0x221] sm:$0x1] 0.0
  %98 = vst [vmem:[#allocation2 + $0x239] sm:$0x1] 0.0
  %99 = vst [vmem:[#allocation2 + $0x251] sm:$0x1] 0.0
  %100 = vst [vmem:[#allocation2 + $0x269] sm:$0x1] 0.0
  %101 = vst [vmem:[#allocation2 + $0x281] sm:$0x1] 0.0
  %102 = vst [vmem:[#allocation2 + $0x299] sm:$0x1] 0.0
  %103 = vst [vmem:[#allocation2 + $0x2b1] sm:$0x1] 0.0
  %104 = vst [vmem:[#allocation2 + $0x2c9] sm:$0x1] 0.0
  %105 = vst [vmem:[#allocation2 + $0x2e1] sm:$0x1] 0.0
  %106 = vst [vmem:[#allocation2 + $0x2f9] sm:$0x1] 0.0
  %107 = vst [vmem:[#allocation2 + $0x311] sm:$0x1] 0.0
  %108 = vst [vmem:[#allocation2 + $0x329] sm:$0x1] 0.0
  %109 = vst [vmem:[#allocation2 + $0x341] sm:$0x1] 0.0
  %110 = vst [vmem:[#allocation2 + $0x359] sm:$0x1] 0.0
  %v111 = vld [vmem:[%s0] sm:$0xff]
  %v112 = vld [vmem:[%s0 + $0x8] sm:$0xff]
  %v113 = vld [vmem:[%s0 + $0x10] sm:$0xff]
  %v114 = vld [vmem:[%s0 + $0x18] sm:$0xff]
  %v115 = vld [vmem:[%s0 + $0x20] sm:$0xff]
  %v116 = vld [vmem:[%s0 + $0x28] sm:$0xff]
  %v117 = vld [vmem:[%s0 + $0x30] sm:$0xff]
  %v118 = vld [vmem:[%s0 + $0x38] sm:$0xff]
  %v119 = vld [vmem:[%s0 + $0x40] sm:$0xff]
  %v120 = vld [vmem:[%s0 + $0x48] sm:$0xff]
  %v121 = vld [vmem:[%s0 + $0x50] sm:$0xff]
  %v122 = vld [vmem:[%s0 + $0x58] sm:$0xff]
  %v123 = vld [vmem:[%s0 + $0x60] sm:$0xff]
  %v124 = vld [vmem:[%s0 + $0x68] sm:$0xff]
  %v125 = vld [vmem:[%s0 + $0x70] sm:$0xff]
  %v126 = vld [vmem:[%s0 + $0x78] sm:$0xff]
  %v127 = vld [vmem:[%s0 + $0x80] sm:$0xff]
  %v128 = vld [vmem:[%s0 + $0x88] sm:$0xff]
  %v129 = vld [vmem:[%s0 + $0x90] sm:$0xff]
  %v130 = vld [vmem:[%s0 + $0x98] sm:$0xff]
  %v131 = vld [vmem:[%s0 + $0xa0] sm:$0xff]
  %v132 = vld [vmem:[%s0 + $0xa8] sm:$0xff]
  %v133 = vld [vmem:[%s0 + $0xb0] sm:$0xff]
  %v134 = vld [vmem:[%s0 + $0xb8] sm:$0xff]
  %v135 = vld [vmem:[%s0 + $0xc0] sm:$0xff]
  %v136 = vld [vmem:[%s0 + $0xc8] sm:$0xff]
  %v137 = vld [vmem:[%s0 + $0xd0] sm:$0xff]
  %v138 = vld [vmem:[%s0 + $0xd8] sm:$0xff]
  %v139 = vld [vmem:[%s0 + $0xe0] sm:$0xff]
  %v140 = vld [vmem:[%s0 + $0xe8] sm:$0xff]
  %v141 = vld [vmem:[%s0 + $0xf0] sm:$0xff]
  %v142 = vld [vmem:[%s0 + $0xf8] sm:$0xff]
  %v143 = vld [vmem:[%s0 + $0x100] sm:$0xff]
  %v144 = vld [vmem:[%s0 + $0x108] sm:$0xff]
  %v145 = vld [vmem:[%s0 + $0x110] sm:$0xff]
  %v146 = vld [vmem:[%s0 + $0x118] sm:$0xff]
  %v147 = vld [vmem:[%s0 + $0x120] sm:$0xff]
  %v148 = vld [vmem:[%s0 + $0x128] sm:$0xff]
  %v149 = vld [vmem:[%s0 + $0x130] sm:$0xff]
  %v150 = vld [vmem:[%s0 + $0x138] sm:$0xff]
  %v151 = vld [vmem:[%s0 + $0x140] sm:$0xff]
  %v152 = vld [vmem:[%s0 + $0x148] sm:$0xff]
  %v153 = vld [vmem:[%s0 + $0x150] sm:$0xff]
  %v154 = vld [vmem:[%s0 + $0x158] sm:$0xff]
  %v155 = vld [vmem:[%s0 + $0x160] sm:$0xff]
  %v156 = vld [vmem:[%s0 + $0x168] sm:$0xff]
  %v157 = vld [vmem:[%s0 + $0x170] sm:$0xff]
  %v158 = vld [vmem:[%s0 + $0x178] sm:$0xff]
  %v159 = vld [vmem:[%s0 + $0x180] sm:$0xff]
  %v160 = vld [vmem:[%s0 + $0x188] sm:$0xff]
  %v161 = vld [vmem:[%s0 + $0x190] sm:$0xff]
  %v162 = vld [vmem:[%s0 + $0x198] sm:$0xff]
  %v163 = vld [vmem:[%s0 + $0x1a0] sm:$0xff]
  %v164 = vld [vmem:[%s0 + $0x1a8] sm:$0xff]
  %v165 = vld [vmem:[%s0 + $0x1b0] sm:$0xff]
  %v166 = vld [vmem:[%s0 + $0x1b8] sm:$0xff]
  %v167 = vld [vmem:[%s0 + $0x1c0] sm:$0xff]
  %v168 = vld [vmem:[%s0 + $0x1c8] sm:$0xff]
  %v169 = vld [vmem:[%s0 + $0x1d0] sm:$0xff]
  %v170 = vld [vmem:[%s0 + $0x1d8] sm:$0xff]
  %v171 = vld [vmem:[%s0 + $0x1e0] sm:$0xff]
  %v172 = vld [vmem:[%s0 + $0x1e8] sm:$0xff]
  %v173 = vld [vmem:[%s0 + $0x1f0] sm:$0xff]
  %v174 = vld [vmem:[%s0 + $0x1f8] sm:$0xff]
  %s175 = scalar_lea.vmem [#allocation2], 24
  %176 = vst [vmem:[%s175 + $0x1] sm:$0xff] %v111
  %177 = vst [vmem:[%s175 + $0x9] sm:$0xff] %v112
  %178 = vst [vmem:[%s175 + $0x19] sm:$0xff] %v113
  %179 = vst [vmem:[%s175 + $0x21] sm:$0xff] %v114
  %180 = vst [vmem:[%s175 + $0x31] sm:$0xff] %v115
  %181 = vst [vmem:[%s175 + $0x39] sm:$0xff] %v116
  %182 = vst [vmem:[%s175 + $0x49] sm:$0xff] %v117
  %183 = vst [vmem:[%s175 + $0x51] sm:$0xff] %v118
  %184 = vst [vmem:[%s175 + $0x61] sm:$0xff] %v119
  %185 = vst [vmem:[%s175 + $0x69] sm:$0xff] %v120
  %186 = vst [vmem:[%s175 + $0x79] sm:$0xff] %v121
  %187 = vst [vmem:[%s175 + $0x81] sm:$0xff] %v122
  %188 = vst [vmem:[%s175 + $0x91] sm:$0xff] %v123
  %189 = vst [vmem:[%s175 + $0x99] sm:$0xff] %v124
  %190 = vst [vmem:[%s175 + $0xa9] sm:$0xff] %v125
  %191 = vst [vmem:[%s175 + $0xb1] sm:$0xff] %v126
  %192 = vst [vmem:[%s175 + $0xc1] sm:$0xff] %v127
  %193 = vst [vmem:[%s175 + $0xc9] sm:$0xff] %v128
  %194 = vst [vmem:[%s175 + $0xd9] sm:$0xff] %v129
  %195 = vst [vmem:[%s175 + $0xe1] sm:$0xff] %v130
  %196 = vst [vmem:[%s175 + $0xf1] sm:$0xff] %v131
  %197 = vst [vmem:[%s175 + $0xf9] sm:$0xff] %v132
  %198 = vst [vmem:[%s175 + $0x109] sm:$0xff] %v133
  %199 = vst [vmem:[%s175 + $0x111] sm:$0xff] %v134
  %200 = vst [vmem:[%s175 + $0x121] sm:$0xff] %v135
  %201 = vst [vmem:[%s175 + $0x129] sm:$0xff] %v136
  %202 = vst [vmem:[%s175 + $0x139] sm:$0xff] %v137
  %203 = vst [vmem:[%s175 + $0x141] sm:$0xff] %v138
  %204 = vst [vmem:[%s175 + $0x151] sm:$0xff] %v139
  %205 = vst [vmem:[%s175 + $0x159] sm:$0xff] %v140
  %206 = vst [vmem:[%s175 + $0x169] sm:$0xff] %v141
  %207 = vst [vmem:[%s175 + $0x171] sm:$0xff] %v142
  %208 = vst [vmem:[%s175 + $0x1b1] sm:$0xff] %v143
  %209 = vst [vmem:[%s175 + $0x1b9] sm:$0xff] %v144
  %210 = vst [vmem:[%s175 + $0x1c9] sm:$0xff] %v145
  %211 = vst [vmem:[%s175 + $0x1d1] sm:$0xff] %v146
  %212 = vst [vmem:[%s175 + $0x1e1] sm:$0xff] %v147
  %213 = vst [vmem:[%s175 + $0x1e9] sm:$0xff] %v148
  %214 = vst [vmem:[%s175 + $0x1f9] sm:$0xff] %v149
  %215 = vst [vmem:[%s175 + $0x201] sm:$0xff] %v150
  %216 = vst [vmem:[%s175 + $0x211] sm:$0xff] %v151
  %217 = vst [vmem:[%s175 + $0x219] sm:$0xff] %v152
  %218 = vst [vmem:[%s175 + $0x229] sm:$0xff] %v153
  %219 = vst [vmem:[%s175 + $0x231] sm:$0xff] %v154
  %220 = vst [vmem:[%s175 + $0x241] sm:$0xff] %v155
  %221 = vst [vmem:[%s175 + $0x249] sm:$0xff] %v156
  %222 = vst [vmem:[%s175 + $0x259] sm:$0xff] %v157
  %223 = vst [vmem:[%s175 + $0x261] sm:$0xff] %v158
  %224 = vst [vmem:[%s175 + $0x271] sm:$0xff] %v159
  %225 = vst [vmem:[%s175 + $0x279] sm:$0xff] %v160
  %226 = vst [vmem:[%s175 + $0x289] sm:$0xff] %v161
  %227 = vst [vmem:[%s175 + $0x291] sm:$0xff] %v162
  %228 = vst [vmem:[%s175 + $0x2a1] sm:$0xff] %v163
  %229 = vst [vmem:[%s175 + $0x2a9] sm:$0xff] %v164
  %230 = vst [vmem:[%s175 + $0x2b9] sm:$0xff] %v165
  %231 = vst [vmem:[%s175 + $0x2c1] sm:$0xff] %v166
  %232 = vst [vmem:[%s175 + $0x2d1] sm:$0xff] %v167
  %233 = vst [vmem:[%s175 + $0x2d9] sm:$0xff] %v168
  %234 = vst [vmem:[%s175 + $0x2e9] sm:$0xff] %v169
  %235 = vst [vmem:[%s175 + $0x2f1] sm:$0xff] %v170
  %236 = vst [vmem:[%s175 + $0x301] sm:$0xff] %v171
  %237 = vst [vmem:[%s175 + $0x309] sm:$0xff] %v172
  %238 = vst [vmem:[%s175 + $0x319] sm:$0xff] %v173
  %239 = vst [vmem:[%s175 + $0x321] sm:$0xff] %v174
  %v240 = vld [vmem:[#allocation2] sm:$0xff]
  %v241 = vld [vmem:[#allocation2 + $0x8] sm:$0xff]
  %v242 = vld [vmem:[#allocation2 + $0x18] sm:$0xff]
  %v243 = vld [vmem:[#allocation2 + $0x20] sm:$0xff]
  %v244 = vld [vmem:[#allocation2 + $0x30] sm:$0xff]
  %v245 = vld [vmem:[#allocation2 + $0x38] sm:$0xff]
  %v246 = vld [vmem:[#allocation2 + $0x48] sm:$0xff]
  %v247 = vld [vmem:[#allocation2 + $0x50] sm:$0xff]
  %v248 = vld [vmem:[#allocation2 + $0x60] sm:$0xff]
  %v249 = vld [vmem:[#allocation2 + $0x68] sm:$0xff]
  %v250 = vld [vmem:[#allocation2 + $0x78] sm:$0xff]
  %v251 = vld [vmem:[#allocation2 + $0x80] sm:$0xff]
  %v252 = vld [vmem:[#allocation2 + $0x90] sm:$0xff]
  %v253 = vld [vmem:[#allocation2 + $0x98] sm:$0xff]
  %v254 = vld [vmem:[#allocation2 + $0xa8] sm:$0xff]
  %v255 = vld [vmem:[#allocation2 + $0xb0] sm:$0xff]
  %v256 = vld [vmem:[#allocation2 + $0xc0] sm:$0xff]
  %v257 = vld [vmem:[#allocation2 + $0xc8] sm:$0xff]
  %v258 = vld [vmem:[#allocation2 + $0xd8] sm:$0xff]
  %v259 = vld [vmem:[#allocation2 + $0xe0] sm:$0xff]
  %v260 = vld [vmem:[#allocation2 + $0xf0] sm:$0xff]
  %v261 = vld [vmem:[#allocation2 + $0xf8] sm:$0xff]
  %v262 = vld [vmem:[#allocation2 + $0x108] sm:$0xff]
  %v263 = vld [vmem:[#allocation2 + $0x110] sm:$0xff]
  %v264 = vld [vmem:[#allocation2 + $0x120] sm:$0xff]
  %v265 = vld [vmem:[#allocation2 + $0x128] sm:$0xff]
  %v266 = vld [vmem:[#allocation2 + $0x138] sm:$0xff]
  %v267 = vld [vmem:[#allocation2 + $0x140] sm:$0xff]
  %v268 = vld [vmem:[#allocation2 + $0x150] sm:$0xff]
  %v269 = vld [vmem:[#allocation2 + $0x158] sm:$0xff]
  %v270 = vld [vmem:[#allocation2 + $0x168] sm:$0xff]
  %v271 = vld [vmem:[#allocation2 + $0x170] sm:$0xff]
  %v272 = vld [vmem:[#allocation2 + $0x1b0] sm:$0xff]
  %v273 = vld [vmem:[#allocation2 + $0x1b8] sm:$0xff]
  %v274 = vld [vmem:[#allocation2 + $0x1c8] sm:$0xff]
  %v275 = vld [vmem:[#allocation2 + $0x1d0] sm:$0xff]
  %v276 = vld [vmem:[#allocation2 + $0x1e0] sm:$0xff]
  %v277 = vld [vmem:[#allocation2 + $0x1e8] sm:$0xff]
  %v278 = vld [vmem:[#allocation2 + $0x1f8] sm:$0xff]
  %v279 = vld [vmem:[#allocation2 + $0x200] sm:$0xff]
  %v280 = vld [vmem:[#allocation2 + $0x210] sm:$0xff]
  %v281 = vld [vmem:[#allocation2 + $0x218] sm:$0xff]
  %v282 = vld [vmem:[#allocation2 + $0x228] sm:$0xff]
  %v283 = vld [vmem:[#allocation2 + $0x230] sm:$0xff]
  %v284 = vld [vmem:[#allocation2 + $0x240] sm:$0xff]
  %v285 = vld [vmem:[#allocation2 + $0x248] sm:$0xff]
  %v286 = vld [vmem:[#allocation2 + $0x258] sm:$0xff]
  %v287 = vld [vmem:[#allocation2 + $0x260] sm:$0xff]
  %v288 = vld [vmem:[#allocation2 + $0x270] sm:$0xff]
  %v289 = vld [vmem:[#allocation2 + $0x278] sm:$0xff]
  %v290 = vld [vmem:[#allocation2 + $0x288] sm:$0xff]
  %v291 = vld [vmem:[#allocation2 + $0x290] sm:$0xff]
  %v292 = vld [vmem:[#allocation2 + $0x2a0] sm:$0xff]
  %v293 = vld [vmem:[#allocation2 + $0x2a8] sm:$0xff]
  %v294 = vld [vmem:[#allocation2 + $0x2b8] sm:$0xff]
  %v295 = vld [vmem:[#allocation2 + $0x2c0] sm:$0xff]
  %v296 = vld [vmem:[#allocation2 + $0x2d0] sm:$0xff]
  %v297 = vld [vmem:[#allocation2 + $0x2d8] sm:$0xff]
  %v298 = vld [vmem:[#allocation2 + $0x2e8] sm:$0xff]
  %v299 = vld [vmem:[#allocation2 + $0x2f0] sm:$0xff]
  %v300 = vld [vmem:[#allocation2 + $0x300] sm:$0xff]
  %v301 = vld [vmem:[#allocation2 + $0x308] sm:$0xff]
  %v302 = vld [vmem:[#allocation2 + $0x318] sm:$0xff]
  %v303 = vld [vmem:[#allocation2 + $0x320] sm:$0xff]
  %304 = vst [vmem:[#allocation3] sm:$0xff] %v240
  %305 = vst [vmem:[#allocation3 + $0x18] sm:$0xff] %v241
  %306 = vst [vmem:[#allocation3 + $0x30] sm:$0xff] %v242
  %307 = vst [vmem:[#allocation3 + $0x48] sm:$0xff] %v243
  %308 = vst [vmem:[#allocation3 + $0x60] sm:$0xff] %v244
  %309 = vst [vmem:[#allocation3 + $0x78] sm:$0xff] %v245
  %310 = vst [vmem:[#allocation3 + $0x90] sm:$0xff] %v246
  %311 = vst [vmem:[#allocation3 + $0xa8] sm:$0xff] %v247
  %312 = vst [vmem:[#allocation3 + $0xc0] sm:$0xff] %v248
  %313 = vst [vmem:[#allocation3 + $0xd8] sm:$0xff] %v249
  %314 = vst [vmem:[#allocation3 + $0xf0] sm:$0xff] %v250
  %315 = vst [vmem:[#allocation3 + $0x108] sm:$0xff] %v251
  %316 = vst [vmem:[#allocation3 + $0x120] sm:$0xff] %v252
  %317 = vst [vmem:[#allocation3 + $0x138] sm:$0xff] %v253
  %318 = vst [vmem:[#allocation3 + $0x150] sm:$0xff] %v254
  %319 = vst [vmem:[#allocation3 + $0x168] sm:$0xff] %v255
  %320 = vst [vmem:[#allocation3 + $0x180] sm:$0xff] %v256
  %321 = vst [vmem:[#allocation3 + $0x198] sm:$0xff] %v257
  %322 = vst [vmem:[#allocation3 + $0x1b0] sm:$0xff] %v258
  %323 = vst [vmem:[#allocation3 + $0x1c8] sm:$0xff] %v259
  %324 = vst [vmem:[#allocation3 + $0x1e0] sm:$0xff] %v260
  %325 = vst [vmem:[#allocation3 + $0x1f8] sm:$0xff] %v261
  %326 = vst [vmem:[#allocation3 + $0x210] sm:$0xff] %v262
  %327 = vst [vmem:[#allocation3 + $0x228] sm:$0xff] %v263
  %328 = vst [vmem:[#allocation3 + $0x240] sm:$0xff] %v264
  %329 = vst [vmem:[#allocation3 + $0x258] sm:$0xff] %v265
  %330 = vst [vmem:[#allocation3 + $0x270] sm:$0xff] %v266
  %331 = vst [vmem:[#allocation3 + $0x288] sm:$0xff] %v267
  %332 = vst [vmem:[#allocation3 + $0x2a0] sm:$0xff] %v268
  %333 = vst [vmem:[#allocation3 + $0x2b8] sm:$0xff] %v269
  %334 = vst [vmem:[#allocation3 + $0x2d0] sm:$0xff] %v270
  %335 = vst [vmem:[#allocation3 + $0x2e8] sm:$0xff] %v271
  %336 = vst [vmem:[#allocation3 + $0x300] sm:$0xff] %v272
  %337 = vst [vmem:[#allocation3 + $0x318] sm:$0xff] %v273
  %338 = vst [vmem:[#allocation3 + $0x330] sm:$0xff] %v274
  %339 = vst [vmem:[#allocation3 + $0x348] sm:$0xff] %v275
  %340 = vst [vmem:[#allocation3 + $0x360] sm:$0xff] %v276
  %341 = vst [vmem:[#allocation3 + $0x378] sm:$0xff] %v277
  %342 = vst [vmem:[#allocation3 + $0x390] sm:$0xff] %v278
  %343 = vst [vmem:[#allocation3 + $0x3a8] sm:$0xff] %v279
  %344 = vst [vmem:[#allocation3 + $0x3c0] sm:$0xff] %v280
  %345 = vst [vmem:[#allocation3 + $0x3d8] sm:$0xff] %v281
  %346 = vst [vmem:[#allocation3 + $0x3f0] sm:$0xff] %v282
  %347 = vst [vmem:[#allocation3 + $0x408] sm:$0xff] %v283
  %348 = vst [vmem:[#allocation3 + $0x420] sm:$0xff] %v284
  %349 = vst [vmem:[#allocation3 + $0x438] sm:$0xff] %v285
  %350 = vst [vmem:[#allocation3 + $0x450] sm:$0xff] %v286
  %351 = vst [vmem:[#allocation3 + $0x468] sm:$0xff] %v287
  %352 = vst [vmem:[#allocation3 + $0x480] sm:$0xff] %v288
  %353 = vst [vmem:[#allocation3 + $0x498] sm:$0xff] %v289
  %354 = vst [vmem:[#allocation3 + $0x4b0] sm:$0xff] %v290
  %355 = vst [vmem:[#allocation3 + $0x4c8] sm:$0xff] %v291
  %356 = vst [vmem:[#allocation3 + $0x4e0] sm:$0xff] %v292
  %357 = vst [vmem:[#allocation3 + $0x4f8] sm:$0xff] %v293
  %358 = vst [vmem:[#allocation3 + $0x510] sm:$0xff] %v294
  %359 = vst [vmem:[#allocation3 + $0x528] sm:$0xff] %v295
  %360 = vst [vmem:[#allocation3 + $0x540] sm:$0xff] %v296
  %361 = vst [vmem:[#allocation3 + $0x558] sm:$0xff] %v297
  %362 = vst [vmem:[#allocation3 + $0x570] sm:$0xff] %v298
  %363 = vst [vmem:[#allocation3 + $0x588] sm:$0xff] %v299
  %364 = vst [vmem:[#allocation3 + $0x5a0] sm:$0xff] %v300
  %365 = vst [vmem:[#allocation3 + $0x5b8] sm:$0xff] %v301
  %366 = vst [vmem:[#allocation3 + $0x5d0] sm:$0xff] %v302
  %367 = vst [vmem:[#allocation3 + $0x5e8] sm:$0xff] %v303
  %v368 = vld [vmem:[#allocation2 + $0x1] sm:$0xff]
  %v369 = vld [vmem:[#allocation2 + $0x9] sm:$0xff]
  %v370 = vld [vmem:[#allocation2 + $0x19] sm:$0xff]
  %v371 = vld [vmem:[#allocation2 + $0x21] sm:$0xff]
  %v372 = vld [vmem:[#allocation2 + $0x31] sm:$0xff]
  %v373 = vld [vmem:[#allocation2 + $0x39] sm:$0xff]
  %v374 = vld [vmem:[#allocation2 + $0x49] sm:$0xff]
  %v375 = vld [vmem:[#allocation2 + $0x51] sm:$0xff]
  %v376 = vld [vmem:[#allocation2 + $0x61] sm:$0xff]
  %v377 = vld [vmem:[#allocation2 + $0x69] sm:$0xff]
  %v378 = vld [vmem:[#allocation2 + $0x79] sm:$0xff]
  %v379 = vld [vmem:[#allocation2 + $0x81] sm:$0xff]
  %v380 = vld [vmem:[#allocation2 + $0x91] sm:$0xff]
  %v381 = vld [vmem:[#allocation2 + $0x99] sm:$0xff]
  %v382 = vld [vmem:[#allocation2 + $0xa9] sm:$0xff]
  %v383 = vld [vmem:[#allocation2 + $0xb1] sm:$0xff]
  %v384 = vld [vmem:[#allocation2 + $0xc1] sm:$0xff]
  %v385 = vld [vmem:[#allocation2 + $0xc9] sm:$0xff]
  %v386 = vld [vmem:[#allocation2 + $0xd9] sm:$0xff]
  %v387 = vld [vmem:[#allocation2 + $0xe1] sm:$0xff]
  %v388 = vld [vmem:[#allocation2 + $0xf1] sm:$0xff]
  %v389 = vld [vmem:[#allocation2 + $0xf9] sm:$0xff]
  %v390 = vld [vmem:[#allocation2 + $0x109] sm:$0xff]
  %v391 = vld [vmem:[#allocation2 + $0x111] sm:$0xff]
  %v392 = vld [vmem:[#allocation2 + $0x121] sm:$0xff]
  %v393 = vld [vmem:[#allocation2 + $0x129] sm:$0xff]
  %v394 = vld [vmem:[#allocation2 + $0x139] sm:$0xff]
  %v395 = vld [vmem:[#allocation2 + $0x141] sm:$0xff]
  %v396 = vld [vmem:[#allocation2 + $0x151] sm:$0xff]
  %v397 = vld [vmem:[#allocation2 + $0x159] sm:$0xff]
  %v398 = vld [vmem:[#allocation2 + $0x169] sm:$0xff]
  %v399 = vld [vmem:[#allocation2 + $0x171] sm:$0xff]
  %v400 = vld [vmem:[#allocation2 + $0x1b1] sm:$0xff]
  %v401 = vld [vmem:[#allocation2 + $0x1b9] sm:$0xff]
  %v402 = vld [vmem:[#allocation2 + $0x1c9] sm:$0xff]
  %v403 = vld [vmem:[#allocation2 + $0x1d1] sm:$0xff]
  %v404 = vld [vmem:[#allocation2 + $0x1e1] sm:$0xff]
  %v405 = vld [vmem:[#allocation2 + $0x1e9] sm:$0xff]
  %v406 = vld [vmem:[#allocation2 + $0x1f9] sm:$0xff]
  %v407 = vld [vmem:[#allocation2 + $0x201] sm:$0xff]
  %v408 = vld [vmem:[#allocation2 + $0x211] sm:$0xff]
  %v409 = vld [vmem:[#allocation2 + $0x219] sm:$0xff]
  %v410 = vld [vmem:[#allocation2 + $0x229] sm:$0xff]
  %v411 = vld [vmem:[#allocation2 + $0x231] sm:$0xff]
  %v412 = vld [vmem:[#allocation2 + $0x241] sm:$0xff]
  %v413 = vld [vmem:[#allocation2 + $0x249] sm:$0xff]
  %v414 = vld [vmem:[#allocation2 + $0x259] sm:$0xff]
  %v415 = vld [vmem:[#allocation2 + $0x261] sm:$0xff]
  %v416 = vld [vmem:[#allocation2 + $0x271] sm:$0xff]
  %v417 = vld [vmem:[#allocation2 + $0x279] sm:$0xff]
  %v418 = vld [vmem:[#allocation2 + $0x289] sm:$0xff]
  %v419 = vld [vmem:[#allocation2 + $0x291] sm:$0xff]
  %v420 = vld [vmem:[#allocation2 + $0x2a1] sm:$0xff]
  %v421 = vld [vmem:[#allocation2 + $0x2a9] sm:$0xff]
  %v422 = vld [vmem:[#allocation2 + $0x2b9] sm:$0xff]
  %v423 = vld [vmem:[#allocation2 + $0x2c1] sm:$0xff]
  %v424 = vld [vmem:[#allocation2 + $0x2d1] sm:$0xff]
  %v425 = vld [vmem:[#allocation2 + $0x2d9] sm:$0xff]
  %v426 = vld [vmem:[#allocation2 + $0x2e9] sm:$0xff]
  %v427 = vld [vmem:[#allocation2 + $0x2f1] sm:$0xff]
  %v428 = vld [vmem:[#allocation2 + $0x301] sm:$0xff]
  %v429 = vld [vmem:[#allocation2 + $0x309] sm:$0xff]
  %v430 = vld [vmem:[#allocation2 + $0x319] sm:$0xff]
  %v431 = vld [vmem:[#allocation2 + $0x321] sm:$0xff]
  %432 = vst [vmem:[#allocation3 + $0x8] sm:$0xff] %v368
  %433 = vst [vmem:[#allocation3 + $0x20] sm:$0xff] %v369
  %434 = vst [vmem:[#allocation3 + $0x38] sm:$0xff] %v370
  %435 = vst [vmem:[#allocation3 + $0x50] sm:$0xff] %v371
  %436 = vst [vmem:[#allocation3 + $0x68] sm:$0xff] %v372
  %437 = vst [vmem:[#allocation3 + $0x80] sm:$0xff] %v373
  %438 = vst [vmem:[#allocation3 + $0x98] sm:$0xff] %v374
  %439 = vst [vmem:[#allocation3 + $0xb0] sm:$0xff] %v375
  %440 = vst [vmem:[#allocation3 + $0xc8] sm:$0xff] %v376
  %441 = vst [vmem:[#allocation3 + $0xe0] sm:$0xff] %v377
  %442 = vst [vmem:[#allocation3 + $0xf8] sm:$0xff] %v378
  %443 = vst [vmem:[#allocation3 + $0x110] sm:$0xff] %v379
  %444 = vst [vmem:[#allocation3 + $0x128] sm:$0xff] %v380
  %445 = vst [vmem:[#allocation3 + $0x140] sm:$0xff] %v381
  %446 = vst [vmem:[#allocation3 + $0x158] sm:$0xff] %v382
  %447 = vst [vmem:[#allocation3 + $0x170] sm:$0xff] %v383
  %448 = vst [vmem:[#allocation3 + $0x188] sm:$0xff] %v384
  %449 = vst [vmem:[#allocation3 + $0x1a0] sm:$0xff] %v385
  %450 = vst [vmem:[#allocation3 + $0x1b8] sm:$0xff] %v386
  %451 = vst [vmem:[#allocation3 + $0x1d0] sm:$0xff] %v387
  %452 = vst [vmem:[#allocation3 + $0x1e8] sm:$0xff] %v388
  %453 = vst [vmem:[#allocation3 + $0x200] sm:$0xff] %v389
  %454 = vst [vmem:[#allocation3 + $0x218] sm:$0xff] %v390
  %455 = vst [vmem:[#allocation3 + $0x230] sm:$0xff] %v391
  %456 = vst [vmem:[#allocation3 + $0x248] sm:$0xff] %v392
  %457 = vst [vmem:[#allocation3 + $0x260] sm:$0xff] %v393
  %458 = vst [vmem:[#allocation3 + $0x278] sm:$0xff] %v394
  %459 = vst [vmem:[#allocation3 + $0x290] sm:$0xff] %v395
  %460 = vst [vmem:[#allocation3 + $0x2a8] sm:$0xff] %v396
  %461 = vst [vmem:[#allocation3 + $0x2c0] sm:$0xff] %v397
  %462 = vst [vmem:[#allocation3 + $0x2d8] sm:$0xff] %v398
  %463 = vst [vmem:[#allocation3 + $0x2f0] sm:$0xff] %v399
  %464 = vst [vmem:[#allocation3 + $0x308] sm:$0xff] %v400
  %465 = vst [vmem:[#allocation3 + $0x320] sm:$0xff] %v401
  %466 = vst [vmem:[#allocation3 + $0x338] sm:$0xff] %v402
  %467 = vst [vmem:[#allocation3 + $0x350] sm:$0xff] %v403
  %468 = vst [vmem:[#allocation3 + $0x368] sm:$0xff] %v404
  %469 = vst [vmem:[#allocation3 + $0x380] sm:$0xff] %v405
  %470 = vst [vmem:[#allocation3 + $0x398] sm:$0xff] %v406
  %471 = vst [vmem:[#allocation3 + $0x3b0] sm:$0xff] %v407
  %472 = vst [vmem:[#allocation3 + $0x3c8] sm:$0xff] %v408
  %473 = vst [vmem:[#allocation3 + $0x3e0] sm:$0xff] %v409
  %474 = vst [vmem:[#allocation3 + $0x3f8] sm:$0xff] %v410
  %475 = vst [vmem:[#allocation3 + $0x410] sm:$0xff] %v411
  %476 = vst [vmem:[#allocation3 + $0x428] sm:$0xff] %v412
  %477 = vst [vmem:[#allocation3 + $0x440] sm:$0xff] %v413
  %478 = vst [vmem:[#allocation3 + $0x458] sm:$0xff] %v414
  %479 = vst [vmem:[#allocation3 + $0x470] sm:$0xff] %v415
  %480 = vst [vmem:[#allocation3 + $0x488] sm:$0xff] %v416
  %481 = vst [vmem:[#allocation3 + $0x4a0] sm:$0xff] %v417
  %482 = vst [vmem:[#allocation3 + $0x4b8] sm:$0xff] %v418
  %483 = vst [vmem:[#allocation3 + $0x4d0] sm:$0xff] %v419
  %484 = vst [vmem:[#allocation3 + $0x4e8] sm:$0xff] %v420
  %485 = vst [vmem:[#allocation3 + $0x500] sm:$0xff] %v421
  %486 = vst [vmem:[#allocation3 + $0x518] sm:$0xff] %v422
  %487 = vst [vmem:[#allocation3 + $0x530] sm:$0xff] %v423
  %488 = vst [vmem:[#allocation3 + $0x548] sm:$0xff] %v424
  %489 = vst [vmem:[#allocation3 + $0x560] sm:$0xff] %v425
  %490 = vst [vmem:[#allocation3 + $0x578] sm:$0xff] %v426
  %491 = vst [vmem:[#allocation3 + $0x590] sm:$0xff] %v427
  %492 = vst [vmem:[#allocation3 + $0x5a8] sm:$0xff] %v428
  %493 = vst [vmem:[#allocation3 + $0x5c0] sm:$0xff] %v429
  %494 = vst [vmem:[#allocation3 + $0x5d8] sm:$0xff] %v430
  %495 = vst [vmem:[#allocation3 + $0x5f0] sm:$0xff] %v431
  %v496 = vld [vmem:[#allocation2 + $0x2] sm:$0xff]
  %v497 = vld [vmem:[#allocation2 + $0xa] sm:$0xff]
  %v498 = vld [vmem:[#allocation2 + $0x1a] sm:$0xff]
  %v499 = vld [vmem:[#allocation2 + $0x22] sm:$0xff]
  %v500 = vld [vmem:[#allocation2 + $0x32] sm:$0xff]
  %v501 = vld [vmem:[#allocation2 + $0x3a] sm:$0xff]
  %v502 = vld [vmem:[#allocation2 + $0x4a] sm:$0xff]
  %v503 = vld [vmem:[#allocation2 + $0x52] sm:$0xff]
  %v504 = vld [vmem:[#allocation2 + $0x62] sm:$0xff]
  %v505 = vld [vmem:[#allocation2 + $0x6a] sm:$0xff]
  %v506 = vld [vmem:[#allocation2 + $0x7a] sm:$0xff]
  %v507 = vld [vmem:[#allocation2 + $0x82] sm:$0xff]
  %v508 = vld [vmem:[#allocation2 + $0x92] sm:$0xff]
  %v509 = vld [vmem:[#allocation2 + $0x9a] sm:$0xff]
  %v510 = vld [vmem:[#allocation2 + $0xaa] sm:$0xff]
  %v511 = vld [vmem:[#allocation2 + $0xb2] sm:$0xff]
  %v512 = vld [vmem:[#allocation2 + $0xc2] sm:$0xff]
  %v513 = vld [vmem:[#allocation2 + $0xca] sm:$0xff]
  %v514 = vld [vmem:[#allocation2 + $0xda] sm:$0xff]
  %v515 = vld [vmem:[#allocation2 + $0xe2] sm:$0xff]
  %v516 = vld [vmem:[#allocation2 + $0xf2] sm:$0xff]
  %v517 = vld [vmem:[#allocation2 + $0xfa] sm:$0xff]
  %v518 = vld [vmem:[#allocation2 + $0x10a] sm:$0xff]
  %v519 = vld [vmem:[#allocation2 + $0x112] sm:$0xff]
  %v520 = vld [vmem:[#allocation2 + $0x122] sm:$0xff]
  %v521 = vld [vmem:[#allocation2 + $0x12a] sm:$0xff]
  %v522 = vld [vmem:[#allocation2 + $0x13a] sm:$0xff]
  %v523 = vld [vmem:[#allocation2 + $0x142] sm:$0xff]
  %v524 = vld [vmem:[#allocation2 + $0x152] sm:$0xff]
  %v525 = vld [vmem:[#allocation2 + $0x15a] sm:$0xff]
  %v526 = vld [vmem:[#allocation2 + $0x16a] sm:$0xff]
  %v527 = vld [vmem:[#allocation2 + $0x172] sm:$0xff]
  %v528 = vld [vmem:[#allocation2 + $0x1b2] sm:$0xff]
  %v529 = vld [vmem:[#allocation2 + $0x1ba] sm:$0xff]
  %v530 = vld [vmem:[#allocation2 + $0x1ca] sm:$0xff]
  %v531 = vld [vmem:[#allocation2 + $0x1d2] sm:$0xff]
  %v532 = vld [vmem:[#allocation2 + $0x1e2] sm:$0xff]
  %v533 = vld [vmem:[#allocation2 + $0x1ea] sm:$0xff]
  %v534 = vld [vmem:[#allocation2 + $0x1fa] sm:$0xff]
  %v535 = vld [vmem:[#allocation2 + $0x202] sm:$0xff]
  %v536 = vld [vmem:[#allocation2 + $0x212] sm:$0xff]
  %v537 = vld [vmem:[#allocation2 + $0x21a] sm:$0xff]
  %v538 = vld [vmem:[#allocation2 + $0x22a] sm:$0xff]
  %v539 = vld [vmem:[#allocation2 + $0x232] sm:$0xff]
  %v540 = vld [vmem:[#allocation2 + $0x242] sm:$0xff]
  %v541 = vld [vmem:[#allocation2 + $0x24a] sm:$0xff]
  %v542 = vld [vmem:[#allocation2 + $0x25a] sm:$0xff]
  %v543 = vld [vmem:[#allocation2 + $0x262] sm:$0xff]
  %v544 = vld [vmem:[#allocation2 + $0x272] sm:$0xff]
  %v545 = vld [vmem:[#allocation2 + $0x27a] sm:$0xff]
  %v546 = vld [vmem:[#allocation2 + $0x28a] sm:$0xff]
  %v547 = vld [vmem:[#allocation2 + $0x292] sm:$0xff]
  %v548 = vld [vmem:[#allocation2 + $0x2a2] sm:$0xff]
  %v549 = vld [vmem:[#allocation2 + $0x2aa] sm:$0xff]
  %v550 = vld [vmem:[#allocation2 + $0x2ba] sm:$0xff]
  %v551 = vld [vmem:[#allocation2 + $0x2c2] sm:$0xff]
  %v552 = vld [vmem:[#allocation2 + $0x2d2] sm:$0xff]
  %v553 = vld [vmem:[#allocation2 + $0x2da] sm:$0xff]
  %v554 = vld [vmem:[#allocation2 + $0x2ea] sm:$0xff]
  %v555 = vld [vmem:[#allocation2 + $0x2f2] sm:$0xff]
  %v556 = vld [vmem:[#allocation2 + $0x302] sm:$0xff]
  %v557 = vld [vmem:[#allocation2 + $0x30a] sm:$0xff]
  %v558 = vld [vmem:[#allocation2 + $0x31a] sm:$0xff]
  %v559 = vld [vmem:[#allocation2 + $0x322] sm:$0xff]
  %560 = vst [vmem:[#allocation3 + $0x10] sm:$0xff] %v496
  %561 = vst [vmem:[#allocation3 + $0x28] sm:$0xff] %v497
  %562 = vst [vmem:[#allocation3 + $0x40] sm:$0xff] %v498
  %563 = vst [vmem:[#allocation3 + $0x58] sm:$0xff] %v499
  %564 = vst [vmem:[#allocation3 + $0x70] sm:$0xff] %v500
  %565 = vst [vmem:[#allocation3 + $0x88] sm:$0xff] %v501
  %566 = vst [vmem:[#allocation3 + $0xa0] sm:$0xff] %v502
  %567 = vst [vmem:[#allocation3 + $0xb8] sm:$0xff] %v503
  %568 = vst [vmem:[#allocation3 + $0xd0] sm:$0xff] %v504
  %569 = vst [vmem:[#allocation3 + $0xe8] sm:$0xff] %v505
  %570 = vst [vmem:[#allocation3 + $0x100] sm:$0xff] %v506
  %571 = vst [vmem:[#allocation3 + $0x118] sm:$0xff] %v507
  %572 = vst [vmem:[#allocation3 + $0x130] sm:$0xff] %v508
  %573 = vst [vmem:[#allocation3 + $0x148] sm:$0xff] %v509
  %574 = vst [vmem:[#allocation3 + $0x160] sm:$0xff] %v510
  %575 = vst [vmem:[#allocation3 + $0x178] sm:$0xff] %v511
  %576 = vst [vmem:[#allocation3 + $0x190] sm:$0xff] %v512
  %577 = vst [vmem:[#allocation3 + $0x1a8] sm:$0xff] %v513
  %578 = vst [vmem:[#allocation3 + $0x1c0] sm:$0xff] %v514
  %579 = vst [vmem:[#allocation3 + $0x1d8] sm:$0xff] %v515
  %580 = vst [vmem:[#allocation3 + $0x1f0] sm:$0xff] %v516
  %581 = vst [vmem:[#allocation3 + $0x208] sm:$0xff] %v517
  %582 = vst [vmem:[#allocation3 + $0x220] sm:$0xff] %v518
  %583 = vst [vmem:[#allocation3 + $0x238] sm:$0xff] %v519
  %584 = vst [vmem:[#allocation3 + $0x250] sm:$0xff] %v520
  %585 = vst [vmem:[#allocation3 + $0x268] sm:$0xff] %v521
  %586 = vst [vmem:[#allocation3 + $0x280] sm:$0xff] %v522
  %587 = vst [vmem:[#allocation3 + $0x298] sm:$0xff] %v523
  %588 = vst [vmem:[#allocation3 + $0x2b0] sm:$0xff] %v524
  %589 = vst [vmem:[#allocation3 + $0x2c8] sm:$0xff] %v525
  %590 = vst [vmem:[#allocation3 + $0x2e0] sm:$0xff] %v526
  %591 = vst [vmem:[#allocation3 + $0x2f8] sm:$0xff] %v527
  %592 = vst [vmem:[#allocation3 + $0x310] sm:$0xff] %v528
  %593 = vst [vmem:[#allocation3 + $0x328] sm:$0xff] %v529
  %594 = vst [vmem:[#allocation3 + $0x340] sm:$0xff] %v530
  %595 = vst [vmem:[#allocation3 + $0x358] sm:$0xff] %v531
  %596 = vst [vmem:[#allocation3 + $0x370] sm:$0xff] %v532
  %597 = vst [vmem:[#allocation3 + $0x388] sm:$0xff] %v533
  %598 = vst [vmem:[#allocation3 + $0x3a0] sm:$0xff] %v534
  %599 = vst [vmem:[#allocation3 + $0x3b8] sm:$0xff] %v535
  %600 = vst [vmem:[#allocation3 + $0x3d0] sm:$0xff] %v536
  %601 = vst [vmem:[#allocation3 + $0x3e8] sm:$0xff] %v537
  %602 = vst [vmem:[#allocation3 + $0x400] sm:$0xff] %v538
  %603 = vst [vmem:[#allocation3 + $0x418] sm:$0xff] %v539
  %604 = vst [vmem:[#allocation3 + $0x430] sm:$0xff] %v540
  %605 = vst [vmem:[#allocation3 + $0x448] sm:$0xff] %v541
  %606 = vst [vmem:[#allocation3 + $0x460] sm:$0xff] %v542
  %607 = vst [vmem:[#allocation3 + $0x478] sm:$0xff] %v543
  %608 = vst [vmem:[#allocation3 + $0x490] sm:$0xff] %v544
  %609 = vst [vmem:[#allocation3 + $0x4a8] sm:$0xff] %v545
  %610 = vst [vmem:[#allocation3 + $0x4c0] sm:$0xff] %v546
  %611 = vst [vmem:[#allocation3 + $0x4d8] sm:$0xff] %v547
  %612 = vst [vmem:[#allocation3 + $0x4f0] sm:$0xff] %v548
  %613 = vst [vmem:[#allocation3 + $0x508] sm:$0xff] %v549
  %614 = vst [vmem:[#allocation3 + $0x520] sm:$0xff] %v550
  %615 = vst [vmem:[#allocation3 + $0x538] sm:$0xff] %v551
  %616 = vst [vmem:[#allocation3 + $0x550] sm:$0xff] %v552
  %617 = vst [vmem:[#allocation3 + $0x568] sm:$0xff] %v553
  %618 = vst [vmem:[#allocation3 + $0x580] sm:$0xff] %v554
  %619 = vst [vmem:[#allocation3 + $0x598] sm:$0xff] %v555
  %620 = vst [vmem:[#allocation3 + $0x5b0] sm:$0xff] %v556
  %621 = vst [vmem:[#allocation3 + $0x5c8] sm:$0xff] %v557
  %622 = vst [vmem:[#allocation3 + $0x5e0] sm:$0xff] %v558
  %623 = vst [vmem:[#allocation3 + $0x5f8] sm:$0xff] %v559
  %v624 = vld [vmem:[#allocation3] sm:$0xff]
  %v625 = vld [vmem:[#allocation3 + $0x8] sm:$0xff]
  %v626 = vld [vmem:[#allocation3 + $0x10] sm:$0xff]
  %v627 = vld [vmem:[#allocation3 + $0x18] sm:$0xff]
  %v628 = vld [vmem:[#allocation3 + $0x20] sm:$0xff]
  %v629 = vld [vmem:[#allocation3 + $0x28] sm:$0xff]
  %v630 = vld [vmem:[#allocation3 + $0x30] sm:$0xff]
  %v631 = vld [vmem:[#allocation3 + $0x38] sm:$0xff]
  %v632 = vld [vmem:[#allocation3 + $0x40] sm:$0xff]
  %v633 = vld [vmem:[#allocation3 + $0x48] sm:$0xff]
  %v634 = vld [vmem:[#allocation3 + $0x50] sm:$0xff]
  %v635 = vld [vmem:[#allocation3 + $0x58] sm:$0xff]
  %v636 = vld [vmem:[#allocation3 + $0x60] sm:$0xff]
  %v637 = vld [vmem:[#allocation3 + $0x68] sm:$0xff]
  %v638 = vld [vmem:[#allocation3 + $0x70] sm:$0xff]
  %v639 = vld [vmem:[#allocation3 + $0x78] sm:$0xff]
  %v640 = vld [vmem:[#allocation3 + $0x80] sm:$0xff]
  %v641 = vld [vmem:[#allocation3 + $0x88] sm:$0xff]
  %v642 = vld [vmem:[#allocation3 + $0x90] sm:$0xff]
  %v643 = vld [vmem:[#allocation3 + $0x98] sm:$0xff]
  %v644 = vld [vmem:[#allocation3 + $0xa0] sm:$0xff]
  %v645 = vld [vmem:[#allocation3 + $0xa8] sm:$0xff]
  %v646 = vld [vmem:[#allocation3 + $0xb0] sm:$0xff]
  %v647 = vld [vmem:[#allocation3 + $0xb8] sm:$0xff]
  %v648 = vld [vmem:[#allocation3 + $0xc0] sm:$0xff]
  %v649 = vld [vmem:[#allocation3 + $0xc8] sm:$0xff]
  %v650 = vld [vmem:[#allocation3 + $0xd0] sm:$0xff]
  %v651 = vld [vmem:[#allocation3 + $0xd8] sm:$0xff]
  %v652 = vld [vmem:[#allocation3 + $0xe0] sm:$0xff]
  %v653 = vld [vmem:[#allocation3 + $0xe8] sm:$0xff]
  %v654 = vld [vmem:[#allocation3 + $0xf0] sm:$0xff]
  %v655 = vld [vmem:[#allocation3 + $0xf8] sm:$0xff]
  %v656 = vld [vmem:[#allocation3 + $0x100] sm:$0xff]
  %v657 = vld [vmem:[#allocation3 + $0x108] sm:$0xff]
  %v658 = vld [vmem:[#allocation3 + $0x110] sm:$0xff]
  %v659 = vld [vmem:[#allocation3 + $0x118] sm:$0xff]
  %v660 = vld [vmem:[#allocation3 + $0x120] sm:$0xff]
  %v661 = vld [vmem:[#allocation3 + $0x128] sm:$0xff]
  %v662 = vld [vmem:[#allocation3 + $0x130] sm:$0xff]
  %v663 = vld [vmem:[#allocation3 + $0x138] sm:$0xff]
  %v664 = vld [vmem:[#allocation3 + $0x140] sm:$0xff]
  %v665 = vld [vmem:[#allocation3 + $0x148] sm:$0xff]
  %v666 = vld [vmem:[#allocation3 + $0x150] sm:$0xff]
  %v667 = vld [vmem:[#allocation3 + $0x158] sm:$0xff]
  %v668 = vld [vmem:[#allocation3 + $0x160] sm:$0xff]
  %v669 = vld [vmem:[#allocation3 + $0x168] sm:$0xff]
  %v670 = vld [vmem:[#allocation3 + $0x170] sm:$0xff]
  %v671 = vld [vmem:[#allocation3 + $0x178] sm:$0xff]
  %v672 = vld [vmem:[#allocation3 + $0x180] sm:$0xff]
  %v673 = vld [vmem:[#allocation3 + $0x188] sm:$0xff]
  %v674 = vld [vmem:[#allocation3 + $0x190] sm:$0xff]
  %v675 = vld [vmem:[#allocation3 + $0x198] sm:$0xff]
  %v676 = vld [vmem:[#allocation3 + $0x1a0] sm:$0xff]
  %v677 = vld [vmem:[#allocation3 + $0x1a8] sm:$0xff]
  %v678 = vld [vmem:[#allocation3 + $0x1b0] sm:$0xff]
  %v679 = vld [vmem:[#allocation3 + $0x1b8] sm:$0xff]
  %v680 = vld [vmem:[#allocation3 + $0x1c0] sm:$0xff]
  %v681 = vld [vmem:[#allocation3 + $0x1c8] sm:$0xff]
  %v682 = vld [vmem:[#allocation3 + $0x1d0] sm:$0xff]
  %v683 = vld [vmem:[#allocation3 + $0x1d8] sm:$0xff]
  %v684 = vld [vmem:[#allocation3 + $0x1e0] sm:$0xff]
  %v685 = vld [vmem:[#allocation3 + $0x1e8] sm:$0xff]
  %v686 = vld [vmem:[#allocation3 + $0x1f0] sm:$0xff]
  %v687 = vld [vmem:[#allocation3 + $0x1f8] sm:$0xff]
  %v688 = vld [vmem:[#allocation3 + $0x200] sm:$0xff]
  %v689 = vld [vmem:[#allocation3 + $0x208] sm:$0xff]
  %v690 = vld [vmem:[#allocation3 + $0x210] sm:$0xff]
  %v691 = vld [vmem:[#allocation3 + $0x218] sm:$0xff]
  %v692 = vld [vmem:[#allocation3 + $0x220] sm:$0xff]
  %v693 = vld [vmem:[#allocation3 + $0x228] sm:$0xff]
  %v694 = vld [vmem:[#allocation3 + $0x230] sm:$0xff]
  %v695 = vld [vmem:[#allocation3 + $0x238] sm:$0xff]
  %v696 = vld [vmem:[#allocation3 + $0x240] sm:$0xff]
  %v697 = vld [vmem:[#allocation3 + $0x248] sm:$0xff]
  %v698 = vld [vmem:[#allocation3 + $0x250] sm:$0xff]
  %v699 = vld [vmem:[#allocation3 + $0x258] sm:$0xff]
  %v700 = vld [vmem:[#allocation3 + $0x260] sm:$0xff]
  %v701 = vld [vmem:[#allocation3 + $0x268] sm:$0xff]
  %v702 = vld [vmem:[#allocation3 + $0x270] sm:$0xff]
  %v703 = vld [vmem:[#allocation3 + $0x278] sm:$0xff]
  %v704 = vld [vmem:[#allocation3 + $0x280] sm:$0xff]
  %v705 = vld [vmem:[#allocation3 + $0x288] sm:$0xff]
  %v706 = vld [vmem:[#allocation3 + $0x290] sm:$0xff]
  %v707 = vld [vmem:[#allocation3 + $0x298] sm:$0xff]
  %v708 = vld [vmem:[#allocation3 + $0x2a0] sm:$0xff]
  %v709 = vld [vmem:[#allocation3 + $0x2a8] sm:$0xff]
  %v710 = vld [vmem:[#allocation3 + $0x2b0] sm:$0xff]
  %v711 = vld [vmem:[#allocation3 + $0x2b8] sm:$0xff]
  %v712 = vld [vmem:[#allocation3 + $0x2c0] sm:$0xff]
  %v713 = vld [vmem:[#allocation3 + $0x2c8] sm:$0xff]
  %v714 = vld [vmem:[#allocation3 + $0x2d0] sm:$0xff]
  %v715 = vld [vmem:[#allocation3 + $0x2d8] sm:$0xff]
  %v716 = vld [vmem:[#allocation3 + $0x2e0] sm:$0xff]
  %v717 = vld [vmem:[#allocation3 + $0x2e8] sm:$0xff]
  %v718 = vld [vmem:[#allocation3 + $0x2f0] sm:$0xff]
  %v719 = vld [vmem:[#allocation3 + $0x2f8] sm:$0xff]
  %v720 = vld [vmem:[#allocation3 + $0x300] sm:$0xff]
  %v721 = vld [vmem:[#allocation3 + $0x308] sm:$0xff]
  %v722 = vld [vmem:[#allocation3 + $0x310] sm:$0xff]
  %v723 = vld [vmem:[#allocation3 + $0x318] sm:$0xff]
  %v724 = vld [vmem:[#allocation3 + $0x320] sm:$0xff]
  %v725 = vld [vmem:[#allocation3 + $0x328] sm:$0xff]
  %v726 = vld [vmem:[#allocation3 + $0x330] sm:$0xff]
  %v727 = vld [vmem:[#allocation3 + $0x338] sm:$0xff]
  %v728 = vld [vmem:[#allocation3 + $0x340] sm:$0xff]
  %v729 = vld [vmem:[#allocation3 + $0x348] sm:$0xff]
  %v730 = vld [vmem:[#allocation3 + $0x350] sm:$0xff]
  %v731 = vld [vmem:[#allocation3 + $0x358] sm:$0xff]
  %v732 = vld [vmem:[#allocation3 + $0x360] sm:$0xff]
  %v733 = vld [vmem:[#allocation3 + $0x368] sm:$0xff]
  %v734 = vld [vmem:[#allocation3 + $0x370] sm:$0xff]
  %v735 = vld [vmem:[#allocation3 + $0x378] sm:$0xff]
  %v736 = vld [vmem:[#allocation3 + $0x380] sm:$0xff]
  %v737 = vld [vmem:[#allocation3 + $0x388] sm:$0xff]
  %v738 = vld [vmem:[#allocation3 + $0x390] sm:$0xff]
  %v739 = vld [vmem:[#allocation3 + $0x398] sm:$0xff]
  %v740 = vld [vmem:[#allocation3 + $0x3a0] sm:$0xff]
  %v741 = vld [vmem:[#allocation3 + $0x3a8] sm:$0xff]
  %v742 = vld [vmem:[#allocation3 + $0x3b0] sm:$0xff]
  %v743 = vld [vmem:[#allocation3 + $0x3b8] sm:$0xff]
  %v744 = vld [vmem:[#allocation3 + $0x3c0] sm:$0xff]
  %v745 = vld [vmem:[#allocation3 + $0x3c8] sm:$0xff]
  %v746 = vld [vmem:[#allocation3 + $0x3d0] sm:$0xff]
  %v747 = vld [vmem:[#allocation3 + $0x3d8] sm:$0xff]
  %v748 = vld [vmem:[#allocation3 + $0x3e0] sm:$0xff]
  %v749 = vld [vmem:[#allocation3 + $0x3e8] sm:$0xff]
  %v750 = vld [vmem:[#allocation3 + $0x3f0] sm:$0xff]
  %v751 = vld [vmem:[#allocation3 + $0x3f8] sm:$0xff]
  %v752 = vld [vmem:[#allocation3 + $0x400] sm:$0xff]
  %v753 = vld [vmem:[#allocation3 + $0x408] sm:$0xff]
  %v754 = vld [vmem:[#allocation3 + $0x410] sm:$0xff]
  %v755 = vld [vmem:[#allocation3 + $0x418] sm:$0xff]
  %v756 = vld [vmem:[#allocation3 + $0x420] sm:$0xff]
  %v757 = vld [vmem:[#allocation3 + $0x428] sm:$0xff]
  %v758 = vld [vmem:[#allocation3 + $0x430] sm:$0xff]
  %v759 = vld [vmem:[#allocation3 + $0x438] sm:$0xff]
  %v760 = vld [vmem:[#allocation3 + $0x440] sm:$0xff]
  %v761 = vld [vmem:[#allocation3 + $0x448] sm:$0xff]
  %v762 = vld [vmem:[#allocation3 + $0x450] sm:$0xff]
  %v763 = vld [vmem:[#allocation3 + $0x458] sm:$0xff]
  %v764 = vld [vmem:[#allocation3 + $0x460] sm:$0xff]
  %v765 = vld [vmem:[#allocation3 + $0x468] sm:$0xff]
  %v766 = vld [vmem:[#allocation3 + $0x470] sm:$0xff]
  %v767 = vld [vmem:[#allocation3 + $0x478] sm:$0xff]
  %v768 = vld [vmem:[#allocation3 + $0x480] sm:$0xff]
  %v769 = vld [vmem:[#allocation3 + $0x488] sm:$0xff]
  %v770 = vld [vmem:[#allocation3 + $0x490] sm:$0xff]
  %v771 = vld [vmem:[#allocation3 + $0x498] sm:$0xff]
  %v772 = vld [vmem:[#allocation3 + $0x4a0] sm:$0xff]
  %v773 = vld [vmem:[#allocation3 + $0x4a8] sm:$0xff]
  %v774 = vld [vmem:[#allocation3 + $0x4b0] sm:$0xff]
  %v775 = vld [vmem:[#allocation3 + $0x4b8] sm:$0xff]
  %v776 = vld [vmem:[#allocation3 + $0x4c0] sm:$0xff]
  %v777 = vld [vmem:[#allocation3 + $0x4c8] sm:$0xff]
  %v778 = vld [vmem:[#allocation3 + $0x4d0] sm:$0xff]
  %v779 = vld [vmem:[#allocation3 + $0x4d8] sm:$0xff]
  %v780 = vld [vmem:[#allocation3 + $0x4e0] sm:$0xff]
  %v781 = vld [vmem:[#allocation3 + $0x4e8] sm:$0xff]
  %v782 = vld [vmem:[#allocation3 + $0x4f0] sm:$0xff]
  %v783 = vld [vmem:[#allocation3 + $0x4f8] sm:$0xff]
  %v784 = vld [vmem:[#allocation3 + $0x500] sm:$0xff]
  %v785 = vld [vmem:[#allocation3 + $0x508] sm:$0xff]
  %v786 = vld [vmem:[#allocation3 + $0x510] sm:$0xff]
  %v787 = vld [vmem:[#allocation3 + $0x518] sm:$0xff]
  %v788 = vld [vmem:[#allocation3 + $0x520] sm:$0xff]
  %v789 = vld [vmem:[#allocation3 + $0x528] sm:$0xff]
  %v790 = vld [vmem:[#allocation3 + $0x530] sm:$0xff]
  %v791 = vld [vmem:[#allocation3 + $0x538] sm:$0xff]
  %v792 = vld [vmem:[#allocation3 + $0x540] sm:$0xff]
  %v793 = vld [vmem:[#allocation3 + $0x548] sm:$0xff]
  %v794 = vld [vmem:[#allocation3 + $0x550] sm:$0xff]
  %v795 = vld [vmem:[#allocation3 + $0x558] sm:$0xff]
  %v796 = vld [vmem:[#allocation3 + $0x560] sm:$0xff]
  %v797 = vld [vmem:[#allocation3 + $0x568] sm:$0xff]
  %v798 = vld [vmem:[#allocation3 + $0x570] sm:$0xff]
  %v799 = vld [vmem:[#allocation3 + $0x578] sm:$0xff]
  %v800 = vld [vmem:[#allocation3 + $0x580] sm:$0xff]
  %v801 = vld [vmem:[#allocation3 + $0x588] sm:$0xff]
  %v802 = vld [vmem:[#allocation3 + $0x590] sm:$0xff]
  %v803 = vld [vmem:[#allocation3 + $0x598] sm:$0xff]
  %v804 = vld [vmem:[#allocation3 + $0x5a0] sm:$0xff]
  %v805 = vld [vmem:[#allocation3 + $0x5a8] sm:$0xff]
  %v806 = vld [vmem:[#allocation3 + $0x5b0] sm:$0xff]
  %v807 = vld [vmem:[#allocation3 + $0x5b8] sm:$0xff]
  %v808 = vld [vmem:[#allocation3 + $0x5c0] sm:$0xff]
  %v809 = vld [vmem:[#allocation3 + $0x5c8] sm:$0xff]
  %v810 = vld [vmem:[#allocation3 + $0x5d0] sm:$0xff]
  %v811 = vld [vmem:[#allocation3 + $0x5d8] sm:$0xff]
  %v812 = vld [vmem:[#allocation3 + $0x5e0] sm:$0xff]
  %v813 = vld [vmem:[#allocation3 + $0x5e8] sm:$0xff]
  %v814 = vld [vmem:[#allocation3 + $0x5f0] sm:$0xff]
  %v815 = vld [vmem:[#allocation3 + $0x5f8] sm:$0xff]
  %v816 = vld [vmem:[%s1] sm:$0xff]
  %v817 = vld [vmem:[%s1 + $0x8] sm:$0xff]
  %v818 = vld [vmem:[%s1 + $0x10] sm:$0xff]
  %v819 = vld [vmem:[%s1 + $0x18] sm:$0xff]
  %v820 = vld [vmem:[%s1 + $0x20] sm:$0xff]
  %v821 = vld [vmem:[%s1 + $0x28] sm:$0xff]
  %v822 = vld [vmem:[%s1 + $0x30] sm:$0xff]
  %v823 = vld [vmem:[%s1 + $0x38] sm:$0xff]
  %v824 = vld [vmem:[%s1 + $0x40] sm:$0xff]
  %v825 = vld [vmem:[%s1 + $0x48] sm:$0xff]
  %v826 = vld [vmem:[%s1 + $0x50] sm:$0xff]
  %v827 = vld [vmem:[%s1 + $0x58] sm:$0xff]
  %v828 = vld [vmem:[%s1 + $0x60] sm:$0xff]
  %v829 = vld [vmem:[%s1 + $0x68] sm:$0xff]
  %v830 = vld [vmem:[%s1 + $0x70] sm:$0xff]
  %v831 = vld [vmem:[%s1 + $0x78] sm:$0xff]
  %v832 = vld [vmem:[%s1 + $0x80] sm:$0xff]
  %v833 = vld [vmem:[%s1 + $0x88] sm:$0xff]
  %v834 = vld [vmem:[%s1 + $0x90] sm:$0xff]
  %v835 = vld [vmem:[%s1 + $0x98] sm:$0xff]
  %v836 = vld [vmem:[%s1 + $0xa0] sm:$0xff]
  %v837 = vld [vmem:[%s1 + $0xa8] sm:$0xff]
  %v838 = vld [vmem:[%s1 + $0xb0] sm:$0xff]
  %v839 = vld [vmem:[%s1 + $0xb8] sm:$0xff]
  %v840 = vld [vmem:[%s1 + $0xc0] sm:$0xff]
  %v841 = vld [vmem:[%s1 + $0xc8] sm:$0xff]
  %v842 = vld [vmem:[%s1 + $0xd0] sm:$0xff]
  %v843 = vld [vmem:[%s1 + $0xd8] sm:$0xff]
  %v844 = vld [vmem:[%s1 + $0xe0] sm:$0xff]
  %v845 = vld [vmem:[%s1 + $0xe8] sm:$0xff]
  %v846 = vld [vmem:[%s1 + $0xf0] sm:$0xff]
  %v847 = vld [vmem:[%s1 + $0xf8] sm:$0xff]
  %v848 = vld [vmem:[%s1 + $0x100] sm:$0xff]
  %v849 = vld [vmem:[%s1 + $0x108] sm:$0xff]
  %v850 = vld [vmem:[%s1 + $0x110] sm:$0xff]
  %v851 = vld [vmem:[%s1 + $0x118] sm:$0xff]
  %v852 = vld [vmem:[%s1 + $0x120] sm:$0xff]
  %v853 = vld [vmem:[%s1 + $0x128] sm:$0xff]
  %v854 = vld [vmem:[%s1 + $0x130] sm:$0xff]
  %v855 = vld [vmem:[%s1 + $0x138] sm:$0xff]
  %v856 = vld [vmem:[%s1 + $0x140] sm:$0xff]
  %v857 = vld [vmem:[%s1 + $0x148] sm:$0xff]
  %v858 = vld [vmem:[%s1 + $0x150] sm:$0xff]
  %v859 = vld [vmem:[%s1 + $0x158] sm:$0xff]
  %v860 = vld [vmem:[%s1 + $0x160] sm:$0xff]
  %v861 = vld [vmem:[%s1 + $0x168] sm:$0xff]
  %v862 = vld [vmem:[%s1 + $0x170] sm:$0xff]
  %v863 = vld [vmem:[%s1 + $0x178] sm:$0xff]
  %v864 = vld [vmem:[%s175] sm:$0xff]
  %v865 = vld [vmem:[%s175 + $0x8] sm:$0xff]
  %v866 = vld [vmem:[%s175 + $0x18] sm:$0xff]
  %v867 = vld [vmem:[%s175 + $0x20] sm:$0xff]
  %v868 = vld [vmem:[%s175 + $0x30] sm:$0xff]
  %v869 = vld [vmem:[%s175 + $0x38] sm:$0xff]
  %v870 = vld [vmem:[%s175 + $0x48] sm:$0xff]
  %v871 = vld [vmem:[%s175 + $0x50] sm:$0xff]
  %v872 = vld [vmem:[%s175 + $0x60] sm:$0xff]
  %v873 = vld [vmem:[%s175 + $0x68] sm:$0xff]
  %v874 = vld [vmem:[%s175 + $0x78] sm:$0xff]
  %v875 = vld [vmem:[%s175 + $0x80] sm:$0xff]
  %v876 = vld [vmem:[%s175 + $0x90] sm:$0xff]
  %v877 = vld [vmem:[%s175 + $0x98] sm:$0xff]
  %v878 = vld [vmem:[%s175 + $0xa8] sm:$0xff]
  %v879 = vld [vmem:[%s175 + $0xb0] sm:$0xff]
  %v880 = vld [vmem:[%s175 + $0xc0] sm:$0xff]
  %v881 = vld [vmem:[%s175 + $0xc8] sm:$0xff]
  %v882 = vld [vmem:[%s175 + $0xd8] sm:$0xff]
  %v883 = vld [vmem:[%s175 + $0xe0] sm:$0xff]
  %v884 = vld [vmem:[%s175 + $0xf0] sm:$0xff]
  %v885 = vld [vmem:[%s175 + $0xf8] sm:$0xff]
  %v886 = vld [vmem:[%s175 + $0x108] sm:$0xff]
  %v887 = vld [vmem:[%s175 + $0x110] sm:$0xff]
  %v888 = vld [vmem:[%s175 + $0x120] sm:$0xff]
  %v889 = vld [vmem:[%s175 + $0x128] sm:$0xff]
  %v890 = vld [vmem:[%s175 + $0x138] sm:$0xff]
  %v891 = vld [vmem:[%s175 + $0x140] sm:$0xff]
  %v892 = vld [vmem:[%s175 + $0x150] sm:$0xff]
  %v893 = vld [vmem:[%s175 + $0x158] sm:$0xff]
  %v894 = vld [vmem:[%s175 + $0x168] sm:$0xff]
  %v895 = vld [vmem:[%s175 + $0x170] sm:$0xff]
  %v896 = vld [vmem:[%s175 + $0x1b0] sm:$0xff]
  %v897 = vld [vmem:[%s175 + $0x1b8] sm:$0xff]
  %v898 = vld [vmem:[%s175 + $0x1c8] sm:$0xff]
  %v899 = vld [vmem:[%s175 + $0x1d0] sm:$0xff]
  %v900 = vld [vmem:[%s175 + $0x1e0] sm:$0xff]
  %v901 = vld [vmem:[%s175 + $0x1e8] sm:$0xff]
  %v902 = vld [vmem:[%s175 + $0x1f8] sm:$0xff]
  %v903 = vld [vmem:[%s175 + $0x200] sm:$0xff]
  %v904 = vld [vmem:[%s175 + $0x210] sm:$0xff]
  %v905 = vld [vmem:[%s175 + $0x218] sm:$0xff]
  %v906 = vld [vmem:[%s175 + $0x228] sm:$0xff]
  %v907 = vld [vmem:[%s175 + $0x230] sm:$0xff]
  %v908 = vld [vmem:[%s175 + $0x240] sm:$0xff]
  %v909 = vld [vmem:[%s175 + $0x248] sm:$0xff]
  %v910 = vld [vmem:[%s175 + $0x258] sm:$0xff]
  %v911 = vld [vmem:[%s175 + $0x260] sm:$0xff]
  %v912 = vld [vmem:[%s175 + $0x270] sm:$0xff]
  %v913 = vld [vmem:[%s175 + $0x278] sm:$0xff]
  %v914 = vld [vmem:[%s175 + $0x288] sm:$0xff]
  %v915 = vld [vmem:[%s175 + $0x290] sm:$0xff]
  %v916 = vld [vmem:[%s175 + $0x2a0] sm:$0xff]
  %v917 = vld [vmem:[%s175 + $0x2a8] sm:$0xff]
  %v918 = vld [vmem:[%s175 + $0x2b8] sm:$0xff]
  %v919 = vld [vmem:[%s175 + $0x2c0] sm:$0xff]
  %v920 = vld [vmem:[%s175 + $0x2d0] sm:$0xff]
  %v921 = vld [vmem:[%s175 + $0x2d8] sm:$0xff]
  %v922 = vld [vmem:[%s175 + $0x2e8] sm:$0xff]
  %v923 = vld [vmem:[%s175 + $0x2f0] sm:$0xff]
  %v924 = vld [vmem:[%s175 + $0x300] sm:$0xff]
  %v925 = vld [vmem:[%s175 + $0x308] sm:$0xff]
  %v926 = vld [vmem:[%s175 + $0x318] sm:$0xff]
  %v927 = vld [vmem:[%s175 + $0x320] sm:$0xff]
  %928 = vst [vmem:[#allocation3] sm:$0xff] %v864
  %929 = vst [vmem:[#allocation3 + $0x18] sm:$0xff] %v865
  %930 = vst [vmem:[#allocation3 + $0x30] sm:$0xff] %v866
  %931 = vst [vmem:[#allocation3 + $0x48] sm:$0xff] %v867
  %932 = vst [vmem:[#allocation3 + $0x60] sm:$0xff] %v868
  %933 = vst [vmem:[#allocation3 + $0x78] sm:$0xff] %v869
  %934 = vst [vmem:[#allocation3 + $0x90] sm:$0xff] %v870
  %935 = vst [vmem:[#allocation3 + $0xa8] sm:$0xff] %v871
  %936 = vst [vmem:[#allocation3 + $0xc0] sm:$0xff] %v872
  %937 = vst [vmem:[#allocation3 + $0xd8] sm:$0xff] %v873
  %938 = vst [vmem:[#allocation3 + $0xf0] sm:$0xff] %v874
  %939 = vst [vmem:[#allocation3 + $0x108] sm:$0xff] %v875
  %940 = vst [vmem:[#allocation3 + $0x120] sm:$0xff] %v876
  %941 = vst [vmem:[#allocation3 + $0x138] sm:$0xff] %v877
  %942 = vst [vmem:[#allocation3 + $0x150] sm:$0xff] %v878
  %943 = vst [vmem:[#allocation3 + $0x168] sm:$0xff] %v879
  %944 = vst [vmem:[#allocation3 + $0x180] sm:$0xff] %v880
  %945 = vst [vmem:[#allocation3 + $0x198] sm:$0xff] %v881
  %946 = vst [vmem:[#allocation3 + $0x1b0] sm:$0xff] %v882
  %947 = vst [vmem:[#allocation3 + $0x1c8] sm:$0xff] %v883
  %948 = vst [vmem:[#allocation3 + $0x1e0] sm:$0xff] %v884
  %949 = vst [vmem:[#allocation3 + $0x1f8] sm:$0xff] %v885
  %950 = vst [vmem:[#allocation3 + $0x210] sm:$0xff] %v886
  %951 = vst [vmem:[#allocation3 + $0x228] sm:$0xff] %v887
  %952 = vst [vmem:[#allocation3 + $0x240] sm:$0xff] %v888
  %953 = vst [vmem:[#allocation3 + $0x258] sm:$0xff] %v889
  %954 = vst [vmem:[#allocation3 + $0x270] sm:$0xff] %v890
  %955 = vst [vmem:[#allocation3 + $0x288] sm:$0xff] %v891
  %956 = vst [vmem:[#allocation3 + $0x2a0] sm:$0xff] %v892
  %957 = vst [vmem:[#allocation3 + $0x2b8] sm:$0xff] %v893
  %958 = vst [vmem:[#allocation3 + $0x2d0] sm:$0xff] %v894
  %959 = vst [vmem:[#allocation3 + $0x2e8] sm:$0xff] %v895
  %960 = vst [vmem:[#allocation3 + $0x300] sm:$0xff] %v896
  %961 = vst [vmem:[#allocation3 + $0x318] sm:$0xff] %v897
  %962 = vst [vmem:[#allocation3 + $0x330] sm:$0xff] %v898
  %963 = vst [vmem:[#allocation3 + $0x348] sm:$0xff] %v899
  %964 = vst [vmem:[#allocation3 + $0x360] sm:$0xff] %v900
  %965 = vst [vmem:[#allocation3 + $0x378] sm:$0xff] %v901
  %966 = vst [vmem:[#allocation3 + $0x390] sm:$0xff] %v902
  %967 = vst [vmem:[#allocation3 + $0x3a8] sm:$0xff] %v903
  %968 = vst [vmem:[#allocation3 + $0x3c0] sm:$0xff] %v904
  %969 = vst [vmem:[#allocation3 + $0x3d8] sm:$0xff] %v905
  %970 = vst [vmem:[#allocation3 + $0x3f0] sm:$0xff] %v906
  %971 = vst [vmem:[#allocation3 + $0x408] sm:$0xff] %v907
  %972 = vst [vmem:[#allocation3 + $0x420] sm:$0xff] %v908
  %973 = vst [vmem:[#allocation3 + $0x438] sm:$0xff] %v909
  %974 = vst [vmem:[#allocation3 + $0x450] sm:$0xff] %v910
  %975 = vst [vmem:[#allocation3 + $0x468] sm:$0xff] %v911
  %976 = vst [vmem:[#allocation3 + $0x480] sm:$0xff] %v912
  %977 = vst [vmem:[#allocation3 + $0x498] sm:$0xff] %v913
  %978 = vst [vmem:[#allocation3 + $0x4b0] sm:$0xff] %v914
  %979 = vst [vmem:[#allocation3 + $0x4c8] sm:$0xff] %v915
  %980 = vst [vmem:[#allocation3 + $0x4e0] sm:$0xff] %v916
  %981 = vst [vmem:[#allocation3 + $0x4f8] sm:$0xff] %v917
  %982 = vst [vmem:[#allocation3 + $0x510] sm:$0xff] %v918
  %983 = vst [vmem:[#allocation3 + $0x528] sm:$0xff] %v919
  %984 = vst [vmem:[#allocation3 + $0x540] sm:$0xff] %v920
  %985 = vst [vmem:[#allocation3 + $0x558] sm:$0xff] %v921
  %986 = vst [vmem:[#allocation3 + $0x570] sm:$0xff] %v922
  %987 = vst [vmem:[#allocation3 + $0x588] sm:$0xff] %v923
  %988 = vst [vmem:[#allocation3 + $0x5a0] sm:$0xff] %v924
  %989 = vst [vmem:[#allocation3 + $0x5b8] sm:$0xff] %v925
  %990 = vst [vmem:[#allocation3 + $0x5d0] sm:$0xff] %v926
  %991 = vst [vmem:[#allocation3 + $0x5e8] sm:$0xff] %v927
  %v992 = vld [vmem:[%s175 + $0x1] sm:$0xff]
  %v993 = vld [vmem:[%s175 + $0x9] sm:$0xff]
  %v994 = vld [vmem:[%s175 + $0x19] sm:$0xff]
  %v995 = vld [vmem:[%s175 + $0x21] sm:$0xff]
  %v996 = vld [vmem:[%s175 + $0x31] sm:$0xff]
  %v997 = vld [vmem:[%s175 + $0x39] sm:$0xff]
  %v998 = vld [vmem:[%s175 + $0x49] sm:$0xff]
  %v999 = vld [vmem:[%s175 + $0x51] sm:$0xff]
  %v1000 = vld [vmem:[%s175 + $0x61] sm:$0xff]
  %v1001 = vld [vmem:[%s175 + $0x69] sm:$0xff]
  %v1002 = vld [vmem:[%s175 + $0x79] sm:$0xff]
  %v1003 = vld [vmem:[%s175 + $0x81] sm:$0xff]
  %v1004 = vld [vmem:[%s175 + $0x91] sm:$0xff]
  %v1005 = vld [vmem:[%s175 + $0x99] sm:$0xff]
  %v1006 = vld [vmem:[%s175 + $0xa9] sm:$0xff]
  %v1007 = vld [vmem:[%s175 + $0xb1] sm:$0xff]
  %v1008 = vld [vmem:[%s175 + $0xc1] sm:$0xff]
  %v1009 = vld [vmem:[%s175 + $0xc9] sm:$0xff]
  %v1010 = vld [vmem:[%s175 + $0xd9] sm:$0xff]
  %v1011 = vld [vmem:[%s175 + $0xe1] sm:$0xff]
  %v1012 = vld [vmem:[%s175 + $0xf1] sm:$0xff]
  %v1013 = vld [vmem:[%s175 + $0xf9] sm:$0xff]
  %v1014 = vld [vmem:[%s175 + $0x109] sm:$0xff]
  %v1015 = vld [vmem:[%s175 + $0x111] sm:$0xff]
  %v1016 = vld [vmem:[%s175 + $0x121] sm:$0xff]
  %v1017 = vld [vmem:[%s175 + $0x129] sm:$0xff]
  %v1018 = vld [vmem:[%s175 + $0x139] sm:$0xff]
  %v1019 = vld [vmem:[%s175 + $0x141] sm:$0xff]
  %v1020 = vld [vmem:[%s175 + $0x151] sm:$0xff]
  %v1021 = vld [vmem:[%s175 + $0x159] sm:$0xff]
  %v1022 = vld [vmem:[%s175 + $0x169] sm:$0xff]
  %v1023 = vld [vmem:[%s175 + $0x171] sm:$0xff]
  %v1024 = vld [vmem:[%s175 + $0x1b1] sm:$0xff]
  %v1025 = vld [vmem:[%s175 + $0x1b9] sm:$0xff]
  %v1026 = vld [vmem:[%s175 + $0x1c9] sm:$0xff]
  %v1027 = vld [vmem:[%s175 + $0x1d1] sm:$0xff]
  %v1028 = vld [vmem:[%s175 + $0x1e1] sm:$0xff]
  %v1029 = vld [vmem:[%s175 + $0x1e9] sm:$0xff]
  %v1030 = vld [vmem:[%s175 + $0x1f9] sm:$0xff]
  %v1031 = vld [vmem:[%s175 + $0x201] sm:$0xff]
  %v1032 = vld [vmem:[%s175 + $0x211] sm:$0xff]
  %v1033 = vld [vmem:[%s175 + $0x219] sm:$0xff]
  %v1034 = vld [vmem:[%s175 + $0x229] sm:$0xff]
  %v1035 = vld [vmem:[%s175 + $0x231] sm:$0xff]
  %v1036 = vld [vmem:[%s175 + $0x241] sm:$0xff]
  %v1037 = vld [vmem:[%s175 + $0x249] sm:$0xff]
  %v1038 = vld [vmem:[%s175 + $0x259] sm:$0xff]
  %v1039 = vld [vmem:[%s175 + $0x261] sm:$0xff]
  %v1040 = vld [vmem:[%s175 + $0x271] sm:$0xff]
  %v1041 = vld [vmem:[%s175 + $0x279] sm:$0xff]
  %v1042 = vld [vmem:[%s175 + $0x289] sm:$0xff]
  %v1043 = vld [vmem:[%s175 + $0x291] sm:$0xff]
  %v1044 = vld [vmem:[%s175 + $0x2a1] sm:$0xff]
  %v1045 = vld [vmem:[%s175 + $0x2a9] sm:$0xff]
  %v1046 = vld [vmem:[%s175 + $0x2b9] sm:$0xff]
  %v1047 = vld [vmem:[%s175 + $0x2c1] sm:$0xff]
  %v1048 = vld [vmem:[%s175 + $0x2d1] sm:$0xff]
  %v1049 = vld [vmem:[%s175 + $0x2d9] sm:$0xff]
  %v1050 = vld [vmem:[%s175 + $0x2e9] sm:$0xff]
  %v1051 = vld [vmem:[%s175 + $0x2f1] sm:$0xff]
  %v1052 = vld [vmem:[%s175 + $0x301] sm:$0xff]
  %v1053 = vld [vmem:[%s175 + $0x309] sm:$0xff]
  %v1054 = vld [vmem:[%s175 + $0x319] sm:$0xff]
  %v1055 = vld [vmem:[%s175 + $0x321] sm:$0xff]
  %1056 = vst [vmem:[#allocation3 + $0x8] sm:$0xff] %v992
  %1057 = vst [vmem:[#allocation3 + $0x20] sm:$0xff] %v993
  %1058 = vst [vmem:[#allocation3 + $0x38] sm:$0xff] %v994
  %1059 = vst [vmem:[#allocation3 + $0x50] sm:$0xff] %v995
  %1060 = vst [vmem:[#allocation3 + $0x68] sm:$0xff] %v996
  %1061 = vst [vmem:[#allocation3 + $0x80] sm:$0xff] %v997
  %1062 = vst [vmem:[#allocation3 + $0x98] sm:$0xff] %v998
  %1063 = vst [vmem:[#allocation3 + $0xb0] sm:$0xff] %v999
  %1064 = vst [vmem:[#allocation3 + $0xc8] sm:$0xff] %v1000
  %1065 = vst [vmem:[#allocation3 + $0xe0] sm:$0xff] %v1001
  %1066 = vst [vmem:[#allocation3 + $0xf8] sm:$0xff] %v1002
  %1067 = vst [vmem:[#allocation3 + $0x110] sm:$0xff] %v1003
  %1068 = vst [vmem:[#allocation3 + $0x128] sm:$0xff] %v1004
  %1069 = vst [vmem:[#allocation3 + $0x140] sm:$0xff] %v1005
  %1070 = vst [vmem:[#allocation3 + $0x158] sm:$0xff] %v1006
  %1071 = vst [vmem:[#allocation3 + $0x170] sm:$0xff] %v1007
  %1072 = vst [vmem:[#allocation3 + $0x188] sm:$0xff] %v1008
  %1073 = vst [vmem:[#allocation3 + $0x1a0] sm:$0xff] %v1009
  %1074 = vst [vmem:[#allocation3 + $0x1b8] sm:$0xff] %v1010
  %1075 = vst [vmem:[#allocation3 + $0x1d0] sm:$0xff] %v1011
  %1076 = vst [vmem:[#allocation3 + $0x1e8] sm:$0xff] %v1012
  %1077 = vst [vmem:[#allocation3 + $0x200] sm:$0xff] %v1013
  %1078 = vst [vmem:[#allocation3 + $0x218] sm:$0xff] %v1014
  %1079 = vst [vmem:[#allocation3 + $0x230] sm:$0xff] %v1015
  %1080 = vst [vmem:[#allocation3 + $0x248] sm:$0xff] %v1016
  %1081 = vst [vmem:[#allocation3 + $0x260] sm:$0xff] %v1017
  %1082 = vst [vmem:[#allocation3 + $0x278] sm:$0xff] %v1018
  %1083 = vst [vmem:[#allocation3 + $0x290] sm:$0xff] %v1019
  %1084 = vst [vmem:[#allocation3 + $0x2a8] sm:$0xff] %v1020
  %1085 = vst [vmem:[#allocation3 + $0x2c0] sm:$0xff] %v1021
  %1086 = vst [vmem:[#allocation3 + $0x2d8] sm:$0xff] %v1022
  %1087 = vst [vmem:[#allocation3 + $0x2f0] sm:$0xff] %v1023
  %1088 = vst [vmem:[#allocation3 + $0x308] sm:$0xff] %v1024
  %1089 = vst [vmem:[#allocation3 + $0x320] sm:$0xff] %v1025
  %1090 = vst [vmem:[#allocation3 + $0x338] sm:$0xff] %v1026
  %1091 = vst [vmem:[#allocation3 + $0x350] sm:$0xff] %v1027
  %1092 = vst [vmem:[#allocation3 + $0x368] sm:$0xff] %v1028
  %1093 = vst [vmem:[#allocation3 + $0x380] sm:$0xff] %v1029
  %1094 = vst [vmem:[#allocation3 + $0x398] sm:$0xff] %v1030
  %1095 = vst [vmem:[#allocation3 + $0x3b0] sm:$0xff] %v1031
  %1096 = vst [vmem:[#allocation3 + $0x3c8] sm:$0xff] %v1032
  %1097 = vst [vmem:[#allocation3 + $0x3e0] sm:$0xff] %v1033
  %1098 = vst [vmem:[#allocation3 + $0x3f8] sm:$0xff] %v1034
  %1099 = vst [vmem:[#allocation3 + $0x410] sm:$0xff] %v1035
  %1100 = vst [vmem:[#allocation3 + $0x428] sm:$0xff] %v1036
  %1101 = vst [vmem:[#allocation3 + $0x440] sm:$0xff] %v1037
  %1102 = vst [vmem:[#allocation3 + $0x458] sm:$0xff] %v1038
  %1103 = vst [vmem:[#allocation3 + $0x470] sm:$0xff] %v1039
  %1104 = vst [vmem:[#allocation3 + $0x488] sm:$0xff] %v1040
  %1105 = vst [vmem:[#allocation3 + $0x4a0] sm:$0xff] %v1041
  %1106 = vst [vmem:[#allocation3 + $0x4b8] sm:$0xff] %v1042
  %1107 = vst [vmem:[#allocation3 + $0x4d0] sm:$0xff] %v1043
  %1108 = vst [vmem:[#allocation3 + $0x4e8] sm:$0xff] %v1044
  %1109 = vst [vmem:[#allocation3 + $0x500] sm:$0xff] %v1045
  %1110 = vst [vmem:[#allocation3 + $0x518] sm:$0xff] %v1046
  %1111 = vst [vmem:[#allocation3 + $0x530] sm:$0xff] %v1047
  %1112 = vst [vmem:[#allocation3 + $0x548] sm:$0xff] %v1048
  %1113 = vst [vmem:[#allocation3 + $0x560] sm:$0xff] %v1049
  %1114 = vst [vmem:[#allocation3 + $0x578] sm:$0xff] %v1050
  %1115 = vst [vmem:[#allocation3 + $0x590] sm:$0xff] %v1051
  %1116 = vst [vmem:[#allocation3 + $0x5a8] sm:$0xff] %v1052
  %1117 = vst [vmem:[#allocation3 + $0x5c0] sm:$0xff] %v1053
  %1118 = vst [vmem:[#allocation3 + $0x5d8] sm:$0xff] %v1054
  %1119 = vst [vmem:[#allocation3 + $0x5f0] sm:$0xff] %v1055
  %v1120 = vld [vmem:[%s175 + $0x2] sm:$0xff]
  %v1121 = vld [vmem:[%s175 + $0xa] sm:$0xff]
  %v1122 = vld [vmem:[%s175 + $0x1a] sm:$0xff]
  %v1123 = vld [vmem:[%s175 + $0x22] sm:$0xff]
  %v1124 = vld [vmem:[%s175 + $0x32] sm:$0xff]
  %v1125 = vld [vmem:[%s175 + $0x3a] sm:$0xff]
  %v1126 = vld [vmem:[%s175 + $0x4a] sm:$0xff]
  %v1127 = vld [vmem:[%s175 + $0x52] sm:$0xff]
  %v1128 = vld [vmem:[%s175 + $0x62] sm:$0xff]
  %v1129 = vld [vmem:[%s175 + $0x6a] sm:$0xff]
  %v1130 = vld [vmem:[%s175 + $0x7a] sm:$0xff]
  %v1131 = vld [vmem:[%s175 + $0x82] sm:$0xff]
  %v1132 = vld [vmem:[%s175 + $0x92] sm:$0xff]
  %v1133 = vld [vmem:[%s175 + $0x9a] sm:$0xff]
  %v1134 = vld [vmem:[%s175 + $0xaa] sm:$0xff]
  %v1135 = vld [vmem:[%s175 + $0xb2] sm:$0xff]
  %v1136 = vld [vmem:[%s175 + $0xc2] sm:$0xff]
  %v1137 = vld [vmem:[%s175 + $0xca] sm:$0xff]
  %v1138 = vld [vmem:[%s175 + $0xda] sm:$0xff]
  %v1139 = vld [vmem:[%s175 + $0xe2] sm:$0xff]
  %v1140 = vld [vmem:[%s175 + $0xf2] sm:$0xff]
  %v1141 = vld [vmem:[%s175 + $0xfa] sm:$0xff]
  %v1142 = vld [vmem:[%s175 + $0x10a] sm:$0xff]
  %v1143 = vld [vmem:[%s175 + $0x112] sm:$0xff]
  %v1144 = vld [vmem:[%s175 + $0x122] sm:$0xff]
  %v1145 = vld [vmem:[%s175 + $0x12a] sm:$0xff]
  %v1146 = vld [vmem:[%s175 + $0x13a] sm:$0xff]
  %v1147 = vld [vmem:[%s175 + $0x142] sm:$0xff]
  %v1148 = vld [vmem:[%s175 + $0x152] sm:$0xff]
  %v1149 = vld [vmem:[%s175 + $0x15a] sm:$0xff]
  %v1150 = vld [vmem:[%s175 + $0x16a] sm:$0xff]
  %v1151 = vld [vmem:[%s175 + $0x172] sm:$0xff]
  %v1152 = vld [vmem:[%s175 + $0x1b2] sm:$0xff]
  %v1153 = vld [vmem:[%s175 + $0x1ba] sm:$0xff]
  %v1154 = vld [vmem:[%s175 + $0x1ca] sm:$0xff]
  %v1155 = vld [vmem:[%s175 + $0x1d2] sm:$0xff]
  %v1156 = vld [vmem:[%s175 + $0x1e2] sm:$0xff]
  %v1157 = vld [vmem:[%s175 + $0x1ea] sm:$0xff]
  %v1158 = vld [vmem:[%s175 + $0x1fa] sm:$0xff]
  %v1159 = vld [vmem:[%s175 + $0x202] sm:$0xff]
  %v1160 = vld [vmem:[%s175 + $0x212] sm:$0xff]
  %v1161 = vld [vmem:[%s175 + $0x21a] sm:$0xff]
  %v1162 = vld [vmem:[%s175 + $0x22a] sm:$0xff]
  %v1163 = vld [vmem:[%s175 + $0x232] sm:$0xff]
  %v1164 = vld [vmem:[%s175 + $0x242] sm:$0xff]
  %v1165 = vld [vmem:[%s175 + $0x24a] sm:$0xff]
  %v1166 = vld [vmem:[%s175 + $0x25a] sm:$0xff]
  %v1167 = vld [vmem:[%s175 + $0x262] sm:$0xff]
  %v1168 = vld [vmem:[%s175 + $0x272] sm:$0xff]
  %v1169 = vld [vmem:[%s175 + $0x27a] sm:$0xff]
  %v1170 = vld [vmem:[%s175 + $0x28a] sm:$0xff]
  %v1171 = vld [vmem:[%s175 + $0x292] sm:$0xff]
  %v1172 = vld [vmem:[%s175 + $0x2a2] sm:$0xff]
  %v1173 = vld [vmem:[%s175 + $0x2aa] sm:$0xff]
  %v1174 = vld [vmem:[%s175 + $0x2ba] sm:$0xff]
  %v1175 = vld [vmem:[%s175 + $0x2c2] sm:$0xff]
  %v1176 = vld [vmem:[%s175 + $0x2d2] sm:$0xff]
  %v1177 = vld [vmem:[%s175 + $0x2da] sm:$0xff]
  %v1178 = vld [vmem:[%s175 + $0x2ea] sm:$0xff]
  %v1179 = vld [vmem:[%s175 + $0x2f2] sm:$0xff]
  %v1180 = vld [vmem:[%s175 + $0x302] sm:$0xff]
  %v1181 = vld [vmem:[%s175 + $0x30a] sm:$0xff]
  %v1182 = vld [vmem:[%s175 + $0x31a] sm:$0xff]
  %v1183 = vld [vmem:[%s175 + $0x322] sm:$0xff]
  %1184 = vst [vmem:[#allocation3 + $0x10] sm:$0xff] %v1120
  %1185 = vst [vmem:[#allocation3 + $0x28] sm:$0xff] %v1121
  %1186 = vst [vmem:[#allocation3 + $0x40] sm:$0xff] %v1122
  %1187 = vst [vmem:[#allocation3 + $0x58] sm:$0xff] %v1123
  %1188 = vst [vmem:[#allocation3 + $0x70] sm:$0xff] %v1124
  %1189 = vst [vmem:[#allocation3 + $0x88] sm:$0xff] %v1125
  %1190 = vst [vmem:[#allocation3 + $0xa0] sm:$0xff] %v1126
  %1191 = vst [vmem:[#allocation3 + $0xb8] sm:$0xff] %v1127
  %1192 = vst [vmem:[#allocation3 + $0xd0] sm:$0xff] %v1128
  %1193 = vst [vmem:[#allocation3 + $0xe8] sm:$0xff] %v1129
  %1194 = vst [vmem:[#allocation3 + $0x100] sm:$0xff] %v1130
  %1195 = vst [vmem:[#allocation3 + $0x118] sm:$0xff] %v1131
  %1196 = vst [vmem:[#allocation3 + $0x130] sm:$0xff] %v1132
  %1197 = vst [vmem:[#allocation3 + $0x148] sm:$0xff] %v1133
  %1198 = vst [vmem:[#allocation3 + $0x160] sm:$0xff] %v1134
  %1199 = vst [vmem:[#allocation3 + $0x178] sm:$0xff] %v1135
  %1200 = vst [vmem:[#allocation3 + $0x190] sm:$0xff] %v1136
  %1201 = vst [vmem:[#allocation3 + $0x1a8] sm:$0xff] %v1137
  %1202 = vst [vmem:[#allocation3 + $0x1c0] sm:$0xff] %v1138
  %1203 = vst [vmem:[#allocation3 + $0x1d8] sm:$0xff] %v1139
  %1204 = vst [vmem:[#allocation3 + $0x1f0] sm:$0xff] %v1140
  %1205 = vst [vmem:[#allocation3 + $0x208] sm:$0xff] %v1141
  %1206 = vst [vmem:[#allocation3 + $0x220] sm:$0xff] %v1142
  %1207 = vst [vmem:[#allocation3 + $0x238] sm:$0xff] %v1143
  %1208 = vst [vmem:[#allocation3 + $0x250] sm:$0xff] %v1144
  %1209 = vst [vmem:[#allocation3 + $0x268] sm:$0xff] %v1145
  %1210 = vst [vmem:[#allocation3 + $0x280] sm:$0xff] %v1146
  %1211 = vst [vmem:[#allocation3 + $0x298] sm:$0xff] %v1147
  %1212 = vst [vmem:[#allocation3 + $0x2b0] sm:$0xff] %v1148
  %1213 = vst [vmem:[#allocation3 + $0x2c8] sm:$0xff] %v1149
  %1214 = vst [vmem:[#allocation3 + $0x2e0] sm:$0xff] %v1150
  %1215 = vst [vmem:[#allocation3 + $0x2f8] sm:$0xff] %v1151
  %1216 = vst [vmem:[#allocation3 + $0x310] sm:$0xff] %v1152
  %1217 = vst [vmem:[#allocation3 + $0x328] sm:$0xff] %v1153
  %1218 = vst [vmem:[#allocation3 + $0x340] sm:$0xff] %v1154
  %1219 = vst [vmem:[#allocation3 + $0x358] sm:$0xff] %v1155
  %1220 = vst [vmem:[#allocation3 + $0x370] sm:$0xff] %v1156
  %1221 = vst [vmem:[#allocation3 + $0x388] sm:$0xff] %v1157
  %1222 = vst [vmem:[#allocation3 + $0x3a0] sm:$0xff] %v1158
  %1223 = vst [vmem:[#allocation3 + $0x3b8] sm:$0xff] %v1159
  %1224 = vst [vmem:[#allocation3 + $0x3d0] sm:$0xff] %v1160
  %1225 = vst [vmem:[#allocation3 + $0x3e8] sm:$0xff] %v1161
  %1226 = vst [vmem:[#allocation3 + $0x400] sm:$0xff] %v1162
  %1227 = vst [vmem:[#allocation3 + $0x418] sm:$0xff] %v1163
  %1228 = vst [vmem:[#allocation3 + $0x430] sm:$0xff] %v1164
  %1229 = vst [vmem:[#allocation3 + $0x448] sm:$0xff] %v1165
  %1230 = vst [vmem:[#allocation3 + $0x460] sm:$0xff] %v1166
  %1231 = vst [vmem:[#allocation3 + $0x478] sm:$0xff] %v1167
  %1232 = vst [vmem:[#allocation3 + $0x490] sm:$0xff] %v1168
  %1233 = vst [vmem:[#allocation3 + $0x4a8] sm:$0xff] %v1169
  %1234 = vst [vmem:[#allocation3 + $0x4c0] sm:$0xff] %v1170
  %1235 = vst [vmem:[#allocation3 + $0x4d8] sm:$0xff] %v1171
  %1236 = vst [vmem:[#allocation3 + $0x4f0] sm:$0xff] %v1172
  %1237 = vst [vmem:[#allocation3 + $0x508] sm:$0xff] %v1173
  %1238 = vst [vmem:[#allocation3 + $0x520] sm:$0xff] %v1174
  %1239 = vst [vmem:[#allocation3 + $0x538] sm:$0xff] %v1175
  %1240 = vst [vmem:[#allocation3 + $0x550] sm:$0xff] %v1176
  %1241 = vst [vmem:[#allocation3 + $0x568] sm:$0xff] %v1177
  %1242 = vst [vmem:[#allocation3 + $0x580] sm:$0xff] %v1178
  %1243 = vst [vmem:[#allocation3 + $0x598] sm:$0xff] %v1179
  %1244 = vst [vmem:[#allocation3 + $0x5b0] sm:$0xff] %v1180
  %1245 = vst [vmem:[#allocation3 + $0x5c8] sm:$0xff] %v1181
  %1246 = vst [vmem:[#allocation3 + $0x5e0] sm:$0xff] %v1182
  %1247 = vst [vmem:[#allocation3 + $0x5f8] sm:$0xff] %v1183
  %v1248 = vld [vmem:[#allocation3] sm:$0xff]
  %v1249 = vld [vmem:[#allocation3 + $0x8] sm:$0xff]
  %v1250 = vld [vmem:[#allocation3 + $0x10] sm:$0xff]
  %v1251 = vld [vmem:[#allocation3 + $0x18] sm:$0xff]
  %v1252 = vld [vmem:[#allocation3 + $0x20] sm:$0xff]
  %v1253 = vld [vmem:[#allocation3 + $0x28] sm:$0xff]
  %v1254 = vld [vmem:[#allocation3 + $0x30] sm:$0xff]
  %v1255 = vld [vmem:[#allocation3 + $0x38] sm:$0xff]
  %v1256 = vld [vmem:[#allocation3 + $0x40] sm:$0xff]
  %v1257 = vld [vmem:[#allocation3 + $0x48] sm:$0xff]
  %v1258 = vld [vmem:[#allocation3 + $0x50] sm:$0xff]
  %v1259 = vld [vmem:[#allocation3 + $0x58] sm:$0xff]
  %v1260 = vld [vmem:[#allocation3 + $0x60] sm:$0xff]
  %v1261 = vld [vmem:[#allocation3 + $0x68] sm:$0xff]
  %v1262 = vld [vmem:[#allocation3 + $0x70] sm:$0xff]
  %v1263 = vld [vmem:[#allocation3 + $0x78] sm:$0xff]
  %v1264 = vld [vmem:[#allocation3 + $0x80] sm:$0xff]
  %v1265 = vld [vmem:[#allocation3 + $0x88] sm:$0xff]
  %v1266 = vld [vmem:[#allocation3 + $0x90] sm:$0xff]
  %v1267 = vld [vmem:[#allocation3 + $0x98] sm:$0xff]
  %v1268 = vld [vmem:[#allocation3 + $0xa0] sm:$0xff]
  %v1269 = vld [vmem:[#allocation3 + $0xa8] sm:$0xff]
  %v1270 = vld [vmem:[#allocation3 + $0xb0] sm:$0xff]
  %v1271 = vld [vmem:[#allocation3 + $0xb8] sm:$0xff]
  %v1272 = vld [vmem:[#allocation3 + $0xc0] sm:$0xff]
  %v1273 = vld [vmem:[#allocation3 + $0xc8] sm:$0xff]
  %v1274 = vld [vmem:[#allocation3 + $0xd0] sm:$0xff]
  %v1275 = vld [vmem:[#allocation3 + $0xd8] sm:$0xff]
  %v1276 = vld [vmem:[#allocation3 + $0xe0] sm:$0xff]
  %v1277 = vld [vmem:[#allocation3 + $0xe8] sm:$0xff]
  %v1278 = vld [vmem:[#allocation3 + $0xf0] sm:$0xff]
  %v1279 = vld [vmem:[#allocation3 + $0xf8] sm:$0xff]
  %v1280 = vld [vmem:[#allocation3 + $0x100] sm:$0xff]
  %v1281 = vld [vmem:[#allocation3 + $0x108] sm:$0xff]
  %v1282 = vld [vmem:[#allocation3 + $0x110] sm:$0xff]
  %v1283 = vld [vmem:[#allocation3 + $0x118] sm:$0xff]
  %v1284 = vld [vmem:[#allocation3 + $0x120] sm:$0xff]
  %v1285 = vld [vmem:[#allocation3 + $0x128] sm:$0xff]
  %v1286 = vld [vmem:[#allocation3 + $0x130] sm:$0xff]
  %v1287 = vld [vmem:[#allocation3 + $0x138] sm:$0xff]
  %v1288 = vld [vmem:[#allocation3 + $0x140] sm:$0xff]
  %v1289 = vld [vmem:[#allocation3 + $0x148] sm:$0xff]
  %v1290 = vld [vmem:[#allocation3 + $0x150] sm:$0xff]
  %v1291 = vld [vmem:[#allocation3 + $0x158] sm:$0xff]
  %v1292 = vld [vmem:[#allocation3 + $0x160] sm:$0xff]
  %v1293 = vld [vmem:[#allocation3 + $0x168] sm:$0xff]
  %v1294 = vld [vmem:[#allocation3 + $0x170] sm:$0xff]
  %v1295 = vld [vmem:[#allocation3 + $0x178] sm:$0xff]
  %v1296 = vld [vmem:[#allocation3 + $0x180] sm:$0xff]
  %v1297 = vld [vmem:[#allocation3 + $0x188] sm:$0xff]
  %v1298 = vld [vmem:[#allocation3 + $0x190] sm:$0xff]
  %v1299 = vld [vmem:[#allocation3 + $0x198] sm:$0xff]
  %v1300 = vld [vmem:[#allocation3 + $0x1a0] sm:$0xff]
  %v1301 = vld [vmem:[#allocation3 + $0x1a8] sm:$0xff]
  %v1302 = vld [vmem:[#allocation3 + $0x1b0] sm:$0xff]
  %v1303 = vld [vmem:[#allocation3 + $0x1b8] sm:$0xff]
  %v1304 = vld [vmem:[#allocation3 + $0x1c0] sm:$0xff]
  %v1305 = vld [vmem:[#allocation3 + $0x1c8] sm:$0xff]
  %v1306 = vld [vmem:[#allocation3 + $0x1d0] sm:$0xff]
  %v1307 = vld [vmem:[#allocation3 + $0x1d8] sm:$0xff]
  %v1308 = vld [vmem:[#allocation3 + $0x1e0] sm:$0xff]
  %v1309 = vld [vmem:[#allocation3 + $0x1e8] sm:$0xff]
  %v1310 = vld [vmem:[#allocation3 + $0x1f0] sm:$0xff]
  %v1311 = vld [vmem:[#allocation3 + $0x1f8] sm:$0xff]
  %v1312 = vld [vmem:[#allocation3 + $0x200] sm:$0xff]
  %v1313 = vld [vmem:[#allocation3 + $0x208] sm:$0xff]
  %v1314 = vld [vmem:[#allocation3 + $0x210] sm:$0xff]
  %v1315 = vld [vmem:[#allocation3 + $0x218] sm:$0xff]
  %v1316 = vld [vmem:[#allocation3 + $0x220] sm:$0xff]
  %v1317 = vld [vmem:[#allocation3 + $0x228] sm:$0xff]
  %v1318 = vld [vmem:[#allocation3 + $0x230] sm:$0xff]
  %v1319 = vld [vmem:[#allocation3 + $0x238] sm:$0xff]
  %v1320 = vld [vmem:[#allocation3 + $0x240] sm:$0xff]
  %v1321 = vld [vmem:[#allocation3 + $0x248] sm:$0xff]
  %v1322 = vld [vmem:[#allocation3 + $0x250] sm:$0xff]
  %v1323 = vld [vmem:[#allocation3 + $0x258] sm:$0xff]
  %v1324 = vld [vmem:[#allocation3 + $0x260] sm:$0xff]
  %v1325 = vld [vmem:[#allocation3 + $0x268] sm:$0xff]
  %v1326 = vld [vmem:[#allocation3 + $0x270] sm:$0xff]
  %v1327 = vld [vmem:[#allocation3 + $0x278] sm:$0xff]
  %v1328 = vld [vmem:[#allocation3 + $0x280] sm:$0xff]
  %v1329 = vld [vmem:[#allocation3 + $0x288] sm:$0xff]
  %v1330 = vld [vmem:[#allocation3 + $0x290] sm:$0xff]
  %v1331 = vld [vmem:[#allocation3 + $0x298] sm:$0xff]
  %v1332 = vld [vmem:[#allocation3 + $0x2a0] sm:$0xff]
  %v1333 = vld [vmem:[#allocation3 + $0x2a8] sm:$0xff]
  %v1334 = vld [vmem:[#allocation3 + $0x2b0] sm:$0xff]
  %v1335 = vld [vmem:[#allocation3 + $0x2b8] sm:$0xff]
  %v1336 = vld [vmem:[#allocation3 + $0x2c0] sm:$0xff]
  %v1337 = vld [vmem:[#allocation3 + $0x2c8] sm:$0xff]
  %v1338 = vld [vmem:[#allocation3 + $0x2d0] sm:$0xff]
  %v1339 = vld [vmem:[#allocation3 + $0x2d8] sm:$0xff]
  %v1340 = vld [vmem:[#allocation3 + $0x2e0] sm:$0xff]
  %v1341 = vld [vmem:[#allocation3 + $0x2e8] sm:$0xff]
  %v1342 = vld [vmem:[#allocation3 + $0x2f0] sm:$0xff]
  %v1343 = vld [vmem:[#allocation3 + $0x2f8] sm:$0xff]
  %v1344 = vld [vmem:[#allocation3 + $0x300] sm:$0xff]
  %v1345 = vld [vmem:[#allocation3 + $0x308] sm:$0xff]
  %v1346 = vld [vmem:[#allocation3 + $0x310] sm:$0xff]
  %v1347 = vld [vmem:[#allocation3 + $0x318] sm:$0xff]
  %v1348 = vld [vmem:[#allocation3 + $0x320] sm:$0xff]
  %v1349 = vld [vmem:[#allocation3 + $0x328] sm:$0xff]
  %v1350 = vld [vmem:[#allocation3 + $0x330] sm:$0xff]
  %v1351 = vld [vmem:[#allocation3 + $0x338] sm:$0xff]
  %v1352 = vld [vmem:[#allocation3 + $0x340] sm:$0xff]
  %v1353 = vld [vmem:[#allocation3 + $0x348] sm:$0xff]
  %v1354 = vld [vmem:[#allocation3 + $0x350] sm:$0xff]
  %v1355 = vld [vmem:[#allocation3 + $0x358] sm:$0xff]
  %v1356 = vld [vmem:[#allocation3 + $0x360] sm:$0xff]
  %v1357 = vld [vmem:[#allocation3 + $0x368] sm:$0xff]
  %v1358 = vld [vmem:[#allocation3 + $0x370] sm:$0xff]
  %v1359 = vld [vmem:[#allocation3 + $0x378] sm:$0xff]
  %v1360 = vld [vmem:[#allocation3 + $0x380] sm:$0xff]
  %v1361 = vld [vmem:[#allocation3 + $0x388] sm:$0xff]
  %v1362 = vld [vmem:[#allocation3 + $0x390] sm:$0xff]
  %v1363 = vld [vmem:[#allocation3 + $0x398] sm:$0xff]
  %v1364 = vld [vmem:[#allocation3 + $0x3a0] sm:$0xff]
  %v1365 = vld [vmem:[#allocation3 + $0x3a8] sm:$0xff]
  %v1366 = vld [vmem:[#allocation3 + $0x3b0] sm:$0xff]
  %v1367 = vld [vmem:[#allocation3 + $0x3b8] sm:$0xff]
  %v1368 = vld [vmem:[#allocation3 + $0x3c0] sm:$0xff]
  %v1369 = vld [vmem:[#allocation3 + $0x3c8] sm:$0xff]
  %v1370 = vld [vmem:[#allocation3 + $0x3d0] sm:$0xff]
  %v1371 = vld [vmem:[#allocation3 + $0x3d8] sm:$0xff]
  %v1372 = vld [vmem:[#allocation3 + $0x3e0] sm:$0xff]
  %v1373 = vld [vmem:[#allocation3 + $0x3e8] sm:$0xff]
  %v1374 = vld [vmem:[#allocation3 + $0x3f0] sm:$0xff]
  %v1375 = vld [vmem:[#allocation3 + $0x3f8] sm:$0xff]
  %v1376 = vld [vmem:[#allocation3 + $0x400] sm:$0xff]
  %v1377 = vld [vmem:[#allocation3 + $0x408] sm:$0xff]
  %v1378 = vld [vmem:[#allocation3 + $0x410] sm:$0xff]
  %v1379 = vld [vmem:[#allocation3 + $0x418] sm:$0xff]
  %v1380 = vld [vmem:[#allocation3 + $0x420] sm:$0xff]
  %v1381 = vld [vmem:[#allocation3 + $0x428] sm:$0xff]
  %v1382 = vld [vmem:[#allocation3 + $0x430] sm:$0xff]
  %v1383 = vld [vmem:[#allocation3 + $0x438] sm:$0xff]
  %v1384 = vld [vmem:[#allocation3 + $0x440] sm:$0xff]
  %v1385 = vld [vmem:[#allocation3 + $0x448] sm:$0xff]
  %v1386 = vld [vmem:[#allocation3 + $0x450] sm:$0xff]
  %v1387 = vld [vmem:[#allocation3 + $0x458] sm:$0xff]
  %v1388 = vld [vmem:[#allocation3 + $0x460] sm:$0xff]
  %v1389 = vld [vmem:[#allocation3 + $0x468] sm:$0xff]
  %v1390 = vld [vmem:[#allocation3 + $0x470] sm:$0xff]
  %v1391 = vld [vmem:[#allocation3 + $0x478] sm:$0xff]
  %v1392 = vld [vmem:[#allocation3 + $0x480] sm:$0xff]
  %v1393 = vld [vmem:[#allocation3 + $0x488] sm:$0xff]
  %v1394 = vld [vmem:[#allocation3 + $0x490] sm:$0xff]
  %v1395 = vld [vmem:[#allocation3 + $0x498] sm:$0xff]
  %v1396 = vld [vmem:[#allocation3 + $0x4a0] sm:$0xff]
  %v1397 = vld [vmem:[#allocation3 + $0x4a8] sm:$0xff]
  %v1398 = vld [vmem:[#allocation3 + $0x4b0] sm:$0xff]
  %v1399 = vld [vmem:[#allocation3 + $0x4b8] sm:$0xff]
  %v1400 = vld [vmem:[#allocation3 + $0x4c0] sm:$0xff]
  %v1401 = vld [vmem:[#allocation3 + $0x4c8] sm:$0xff]
  %v1402 = vld [vmem:[#allocation3 + $0x4d0] sm:$0xff]
  %v1403 = vld [vmem:[#allocation3 + $0x4d8] sm:$0xff]
  %v1404 = vld [vmem:[#allocation3 + $0x4e0] sm:$0xff]
  %v1405 = vld [vmem:[#allocation3 + $0x4e8] sm:$0xff]
  %v1406 = vld [vmem:[#allocation3 + $0x4f0] sm:$0xff]
  %v1407 = vld [vmem:[#allocation3 + $0x4f8] sm:$0xff]
  %v1408 = vld [vmem:[#allocation3 + $0x500] sm:$0xff]
  %v1409 = vld [vmem:[#allocation3 + $0x508] sm:$0xff]
  %v1410 = vld [vmem:[#allocation3 + $0x510] sm:$0xff]
  %v1411 = vld [vmem:[#allocation3 + $0x518] sm:$0xff]
  %v1412 = vld [vmem:[#allocation3 + $0x520] sm:$0xff]
  %v1413 = vld [vmem:[#allocation3 + $0x528] sm:$0xff]
  %v1414 = vld [vmem:[#allocation3 + $0x530] sm:$0xff]
  %v1415 = vld [vmem:[#allocation3 + $0x538] sm:$0xff]
  %v1416 = vld [vmem:[#allocation3 + $0x540] sm:$0xff]
  %v1417 = vld [vmem:[#allocation3 + $0x548] sm:$0xff]
  %v1418 = vld [vmem:[#allocation3 + $0x550] sm:$0xff]
  %v1419 = vld [vmem:[#allocation3 + $0x558] sm:$0xff]
  %v1420 = vld [vmem:[#allocation3 + $0x560] sm:$0xff]
  %v1421 = vld [vmem:[#allocation3 + $0x568] sm:$0xff]
  %v1422 = vld [vmem:[#allocation3 + $0x570] sm:$0xff]
  %v1423 = vld [vmem:[#allocation3 + $0x578] sm:$0xff]
  %v1424 = vld [vmem:[#allocation3 + $0x580] sm:$0xff]
  %v1425 = vld [vmem:[#allocation3 + $0x588] sm:$0xff]
  %v1426 = vld [vmem:[#allocation3 + $0x590] sm:$0xff]
  %v1427 = vld [vmem:[#allocation3 + $0x598] sm:$0xff]
  %v1428 = vld [vmem:[#allocation3 + $0x5a0] sm:$0xff]
  %v1429 = vld [vmem:[#allocation3 + $0x5a8] sm:$0xff]
  %v1430 = vld [vmem:[#allocation3 + $0x5b0] sm:$0xff]
  %v1431 = vld [vmem:[#allocation3 + $0x5b8] sm:$0xff]
  %v1432 = vld [vmem:[#allocation3 + $0x5c0] sm:$0xff]
  %v1433 = vld [vmem:[#allocation3 + $0x5c8] sm:$0xff]
  %v1434 = vld [vmem:[#allocation3 + $0x5d0] sm:$0xff]
  %v1435 = vld [vmem:[#allocation3 + $0x5d8] sm:$0xff]
  %v1436 = vld [vmem:[#allocation3 + $0x5e0] sm:$0xff]
  %v1437 = vld [vmem:[#allocation3 + $0x5e8] sm:$0xff]
  %v1438 = vld [vmem:[#allocation3 + $0x5f0] sm:$0xff]
  %v1439 = vld [vmem:[#allocation3 + $0x5f8] sm:$0xff]
  %s1440 = scalar_lea.vmem %s1, 384
  %v1441 = vld [vmem:[%s1440] sm:$0xff]
  %v1442 = vld [vmem:[%s1440 + $0x8] sm:$0xff]
  %v1443 = vld [vmem:[%s1440 + $0x10] sm:$0xff]
  %v1444 = vld [vmem:[%s1440 + $0x18] sm:$0xff]
  %v1445 = vld [vmem:[%s1440 + $0x20] sm:$0xff]
  %v1446 = vld [vmem:[%s1440 + $0x28] sm:$0xff]
  %v1447 = vld [vmem:[%s1440 + $0x30] sm:$0xff]
  %v1448 = vld [vmem:[%s1440 + $0x38] sm:$0xff]
  %v1449 = vld [vmem:[%s1440 + $0x40] sm:$0xff]
  %v1450 = vld [vmem:[%s1440 + $0x48] sm:$0xff]
  %v1451 = vld [vmem:[%s1440 + $0x50] sm:$0xff]
  %v1452 = vld [vmem:[%s1440 + $0x58] sm:$0xff]
  %v1453 = vld [vmem:[%s1440 + $0x60] sm:$0xff]
  %v1454 = vld [vmem:[%s1440 + $0x68] sm:$0xff]
  %v1455 = vld [vmem:[%s1440 + $0x70] sm:$0xff]
  %v1456 = vld [vmem:[%s1440 + $0x78] sm:$0xff]
  %v1457 = vld [vmem:[%s1440 + $0x80] sm:$0xff]
  %v1458 = vld [vmem:[%s1440 + $0x88] sm:$0xff]
  %v1459 = vld [vmem:[%s1440 + $0x90] sm:$0xff]
  %v1460 = vld [vmem:[%s1440 + $0x98] sm:$0xff]
  %v1461 = vld [vmem:[%s1440 + $0xa0] sm:$0xff]
  %v1462 = vld [vmem:[%s1440 + $0xa8] sm:$0xff]
  %v1463 = vld [vmem:[%s1440 + $0xb0] sm:$0xff]
  %v1464 = vld [vmem:[%s1440 + $0xb8] sm:$0xff]
  %v1465 = vld [vmem:[%s1440 + $0xc0] sm:$0xff]
  %v1466 = vld [vmem:[%s1440 + $0xc8] sm:$0xff]
  %v1467 = vld [vmem:[%s1440 + $0xd0] sm:$0xff]
  %v1468 = vld [vmem:[%s1440 + $0xd8] sm:$0xff]
  %v1469 = vld [vmem:[%s1440 + $0xe0] sm:$0xff]
  %v1470 = vld [vmem:[%s1440 + $0xe8] sm:$0xff]
  %v1471 = vld [vmem:[%s1440 + $0xf0] sm:$0xff]
  %v1472 = vld [vmem:[%s1440 + $0xf8] sm:$0xff]
  %v1473 = vld [vmem:[%s1440 + $0x100] sm:$0xff]
  %v1474 = vld [vmem:[%s1440 + $0x108] sm:$0xff]
  %v1475 = vld [vmem:[%s1440 + $0x110] sm:$0xff]
  %v1476 = vld [vmem:[%s1440 + $0x118] sm:$0xff]
  %v1477 = vld [vmem:[%s1440 + $0x120] sm:$0xff]
  %v1478 = vld [vmem:[%s1440 + $0x128] sm:$0xff]
  %v1479 = vld [vmem:[%s1440 + $0x130] sm:$0xff]
  %v1480 = vld [vmem:[%s1440 + $0x138] sm:$0xff]
  %v1481 = vld [vmem:[%s1440 + $0x140] sm:$0xff]
  %v1482 = vld [vmem:[%s1440 + $0x148] sm:$0xff]
  %v1483 = vld [vmem:[%s1440 + $0x150] sm:$0xff]
  %v1484 = vld [vmem:[%s1440 + $0x158] sm:$0xff]
  %v1485 = vld [vmem:[%s1440 + $0x160] sm:$0xff]
  %v1486 = vld [vmem:[%s1440 + $0x168] sm:$0xff]
  %v1487 = vld [vmem:[%s1440 + $0x170] sm:$0xff]
  %v1488 = vld [vmem:[%s1440 + $0x178] sm:$0xff]
  %1489 = vmatprep.subr.mxu0 0.0
  %1490 = vmatpush1.msra.mxu0 %v1441
  %1491 = vmatprep.subr.mxu0 0.0
  %1492 = vmatpush1.msra.mxu0 %v1442
  %1493 = vmatprep.subr.mxu0 0.0
  %1494 = vmatpush1.msra.mxu0 %v1443
  %1495 = vmatprep.subr.mxu0 0.0
  %1496 = vmatpush1.msra.mxu0 %v1444
  %1497 = vmatprep.subr.mxu0 0.0
  %1498 = vmatpush1.msra.mxu0 %v1445
  %1499 = vmatprep.subr.mxu0 0.0
  %1500 = vmatpush1.msra.mxu0 %v1446
  %1501 = vmatprep.subr.mxu0 0.0
  %1502 = vmatpush1.msra.mxu0 %v1447
  %1503 = vmatprep.subr.mxu0 0.0
  %1504 = vmatpush1.msra.mxu0 %v1448
  %1505 = vmatprep.subr.mxu0 0.0
  %1506 = vmatpush1.msra.mxu0 %v1449
  %1507 = vmatprep.subr.mxu0 0.0
  %1508 = vmatpush1.msra.mxu0 %v1450
  %1509 = vmatprep.subr.mxu0 0.0
  %1510 = vmatpush1.msra.mxu0 %v1451
  %1511 = vmatprep.subr.mxu0 0.0
  %1512 = vmatpush1.msra.mxu0 %v1452
  %1513 = vmatprep.subr.mxu0 0.0
  %1514 = vmatpush1.msra.mxu0 %v1453
  %1515 = vmatprep.subr.mxu0 0.0
  %1516 = vmatpush1.msra.mxu0 %v1454
  %1517 = vmatprep.subr.mxu0 0.0
  %1518 = vmatpush1.msra.mxu0 %v1455
  %1519 = vmatprep.subr.mxu0 0.0
  %1520 = vmatpush1.msra.mxu0 %v1456
  %1521 = vmatprep.subr.mxu0 0.0
  %1522 = vmatpush1.msra.mxu0 %v1457
  %1523 = vmatprep.subr.mxu0 0.0
  %1524 = vmatpush1.msra.mxu0 %v1458
  %1525 = vmatprep.subr.mxu0 0.0
  %1526 = vmatpush1.msra.mxu0 %v1459
  %1527 = vmatprep.subr.mxu0 0.0
  %1528 = vmatpush1.msra.mxu0 %v1460
  %1529 = vmatprep.subr.mxu0 0.0
  %1530 = vmatpush1.msra.mxu0 %v1461
  %1531 = vmatprep.subr.mxu0 0.0
  %1532 = vmatpush1.msra.mxu0 %v1462
  %1533 = vmatprep.subr.mxu0 0.0
  %1534 = vmatpush1.msra.mxu0 %v1463
  %1535 = vmatprep.subr.mxu0 0.0
  %1536 = vmatpush1.msra.mxu0 %v1464
  %1537 = vmatprep.subr.mxu0 0.0
  %1538 = vmatpush1.msra.mxu0 %v1465
  %1539 = vmatprep.subr.mxu0 0.0
  %1540 = vmatpush1.msra.mxu0 %v1466
  %1541 = vmatprep.subr.mxu0 0.0
  %1542 = vmatpush1.msra.mxu0 %v1467
  %1543 = vmatprep.subr.mxu0 0.0
  %1544 = vmatpush1.msra.mxu0 %v1468
  %1545 = vmatprep.subr.mxu0 0.0
  %1546 = vmatpush1.msra.mxu0 %v1469
  %1547 = vmatprep.subr.mxu0 0.0
  %1548 = vmatpush1.msra.mxu0 %v1470
  %1549 = vmatprep.subr.mxu0 0.0
  %1550 = vmatpush1.msra.mxu0 %v1471
  %1551 = vmatprep.subr.mxu0 0.0
  %1552 = vmatpush1.msra.mxu0 %v1472
  %1553 = vmatprep.mubr.f32.mxu0 %v1249
  %1554 = vmatmul.mubr.f32.gmra.mrb[0].mxu0 %v1248
  %v1555 = vpop.f32.mrb[0].mxu0
  %v1556 = vadd.f32 0.0, %v1555
  %v1557 = vpop.f32.mrb[0].mxu0
  %1558 = vmatprep.mubr.f32.mxu0 %v1252
  %1559 = vmatmul.mubr.f32.gmra.mrb[0].mxu0 %v1251
  %v1560 = vpop.f32.mrb[0].mxu0
  %v1561 = vadd.f32 0.0, %v1560
  %v1562 = vpop.f32.mrb[0].mxu0
  %1563 = vmatprep.mubr.f32.mxu0 %v1255
  %1564 = vmatmul.mubr.f32.gmra.mrb[0].mxu0 %v1254
  %v1565 = vpop.f32.mrb[0].mxu0
  %v1566 = vadd.f32 0.0, %v1565
  %v1567 = vpop.f32.mrb[0].mxu0
  %1568 = vmatprep.mubr.f32.mxu0 %v1258
  %1569 = vmatmul.mubr.f32.gmra.mrb[0].mxu0 %v1257
  %v1570 = vpop.f32.mrb[0].mxu0
  %v1571 = vadd.f32 0.0, %v1570
  %v1572 = vpop.f32.mrb[0].mxu0
  %1573 = vmatprep.mubr.f32.mxu0 %v1261
  %1574 = vmatmul.mubr.f32.gmra.mrb[0].mxu0 %v1260
  %v1575 = vpop.f32.mrb[0].mxu0
  %v1576 = vadd.f32 0.0, %v1575
  %v1577 = vpop.f32.mrb[0].mxu0
  %1578 = vmatprep.mubr.f32.mxu0 %v1264
  %1579 = vmatmul.mubr.f32.gmra.mrb[0].mxu0 %v1263
  %v1580 = vpop.f32.mrb[0].mxu0
  %v1581 = vadd.f32 0.0, %v1580
  %v1582 = vpop.f32.mrb[0].mxu0
  %1583 = vmatprep.mubr.f32.mxu0 %v1267
  %1584 = vmatmul.mubr.f32.gmra.mrb[0].mxu0 %v1266
  %v1585 = vpop.f32.mrb[0].mxu0
  %v1586 = vadd.f32 0.0, %v1585
  %v1587 = vpop.f32.mrb[0].mxu0
  %1588 = vmatprep.mubr.f32.mxu0 %v1270
  %1589 = vmatmul.mubr.f32.gmra.mrb[0].mxu0 %v1269
  %v1590 = vpop.f32.mrb[0].mxu0
  %v1591 = vadd.f32 0.0, %v1590
  %v1592 = vpop.f32.mrb[0].mxu0
  %1593 = vmatprep.mubr.f32.mxu0 %v1273
  %1594 = vmatmul.mubr.f32.gmra.mrb[0].mxu0 %v1272
  %v1595 = vpop.f32.mrb[0].mxu0
  %v1596 = vadd.f32 0.0, %v1595
  %v1597 = vpop.f32.mrb[0].mxu0
  %1598 = vmatprep.mubr.f32.mxu0 %v1276
  %1599 = vmatmul.mubr.f32.gmra.mrb[0].mxu0 %v1275
  %v1600 = vpop.f32.mrb[0].mxu0
  %v1601 = vadd.f32 0.0, %v1600
  %v1602 = vpop.f32.mrb[0].mxu0
  %1603 = vmatprep.mubr.f32.mxu0 %v1279
  %1604 = vmatmul.mubr.f32.gmra.mrb[0].mxu0 %v1278
  %v1605 = vpop.f32.mrb[0].mxu0
  %v1606 = vadd.f32 0.0, %v1605
  %v1607 = vpop.f32.mrb[0].mxu0
  %1608 = vmatprep.mubr.f32.mxu0 %v1282
  %1609 = vmatmul.mubr.f32.gmra.mrb[0].mxu0 %v1281
  %v1610 = vpop.f32.mrb[0].mxu0
  %v1611 = vadd.f32 0.0, %v1610
  %v1612 = vpop.f32.mrb[0].mxu0
  %1613 = vmatprep.mubr.f32.mxu0 %v1285
  %1614 = vmatmul.mubr.f32.gmra.mrb[0].mxu0 %v1284
  %v1615 = vpop.f32.mrb[0].mxu0
  %v1616 = vadd.f32 0.0, %v1615
  %v1617 = vpop.f32.mrb[0].mxu0
  %1618 = vmatprep.mubr.f32.mxu0 %v1288
  %1619 = vmatmul.mubr.f32.gmra.mrb[0].mxu0 %v1287
  %v1620 = vpop.f32.mrb[0].mxu0
  %v1621 = vadd.f32 0.0, %v1620
  %v1622 = vpop.f32.mrb[0].mxu0
  %1623 = vmatprep.mubr.f32.mxu0 %v1291
  %1624 = vmatmul.mubr.f32.gmra.mrb[0].mxu0 %v1290
  %v1625 = vpop.f32.mrb[0].mxu0
  %v1626 = vadd.f32 0.0, %v1625
  %v1627 = vpop.f32.mrb[0].mxu0
  %1628 = vmatprep.mubr.f32.mxu0 %v1294
  %1629 = vmatmul.mubr.f32.gmra.mrb[0].mxu0 %v1293
  %v1630 = vpop.f32.mrb[0].mxu0
  %v1631 = vadd.f32 0.0, %v1630
  %v1632 = vpop.f32.mrb[0].mxu0
  %1633 = vmatprep.mubr.f32.mxu0 %v1297
  %1634 = vmatmul.mubr.f32.gmra.mrb[0].mxu0 %v1296
  %v1635 = vpop.f32.mrb[0].mxu0
  %v1636 = vadd.f32 0.0, %v1635
  %v1637 = vpop.f32.mrb[0].mxu0
  %1638 = vmatprep.mubr.f32.mxu0 %v1300
  %1639 = vmatmul.mubr.f32.gmra.mrb[0].mxu0 %v1299
  %v1640 = vpop.f32.mrb[0].mxu0
  %v1641 = vadd.f32 0.0, %v1640
  %v1642 = vpop.f32.mrb[0].mxu0
  %1643 = vmatprep.mubr.f32.mxu0 %v1303
  %1644 = vmatmul.mubr.f32.gmra.mrb[0].mxu0 %v1302
  %v1645 = vpop.f32.mrb[0].mxu0
  %v1646 = vadd.f32 0.0, %v1645
  %v1647 = vpop.f32.mrb[0].mxu0
  %1648 = vmatprep.mubr.f32.mxu0 %v1306
  %1649 = vmatmul.mubr.f32.gmra.mrb[0].mxu0 %v1305
  %v1650 = vpop.f32.mrb[0].mxu0
  %v1651 = vadd.f32 0.0, %v1650
  %v1652 = vpop.f32.mrb[0].mxu0
  %1653 = vmatprep.mubr.f32.mxu0 %v1309
  %1654 = vmatmul.mubr.f32.gmra.mrb[0].mxu0 %v1308
  %v1655 = vpop.f32.mrb[0].mxu0
  %v1656 = vadd.f32 0.0, %v1655
  %v1657 = vpop.f32.mrb[0].mxu0
  %1658 = vmatprep.mubr.f32.mxu0 %v1312
  %1659 = vmatmul.mubr.f32.gmra.mrb[0].mxu0 %v1311
  %v1660 = vpop.f32.mrb[0].mxu0
  %v1661 = vadd.f32 0.0, %v1660
  %v1662 = vpop.f32.mrb[0].mxu0
  %1663 = vmatprep.mubr.f32.mxu0 %v1315
  %1664 = vmatmul.mubr.f32.gmra.mrb[0].mxu0 %v1314
  %v1665 = vpop.f32.mrb[0].mxu0
  %v1666 = vadd.f32 0.0, %v1665
  %v1667 = vpop.f32.mrb[0].mxu0
  %1668 = vmatprep.mubr.f32.mxu0 %v1318
  %1669 = vmatmul.mubr.f32.gmra.mrb[0].mxu0 %v1317
  %v1670 = vpop.f32.mrb[0].mxu0
  %v1671 = vadd.f32 0.0, %v1670
  %v1672 = vpop.f32.mrb[0].mxu0
  %1673 = vmatprep.mubr.f32.mxu0 %v1321
  %1674 = vmatmul.mubr.f32.gmra.mrb[0].mxu0 %v1320
  %v1675 = vpop.f32.mrb[0].mxu0
  %v1676 = vadd.f32 0.0, %v1675
  %v1677 = vpop.f32.mrb[0].mxu0
  %1678 = vmatprep.mubr.f32.mxu0 %v1324
  %1679 = vmatmul.mubr.f32.gmra.mrb[0].mxu0 %v1323
  %v1680 = vpop.f32.mrb[0].mxu0
  %v1681 = vadd.f32 0.0, %v1680
  %v1682 = vpop.f32.mrb[0].mxu0
  %1683 = vmatprep.mubr.f32.mxu0 %v1327
  %1684 = vmatmul.mubr.f32.gmra.mrb[0].mxu0 %v1326
  %v1685 = vpop.f32.mrb[0].mxu0
  %v1686 = vadd.f32 0.0, %v1685
  %v1687 = vpop.f32.mrb[0].mxu0
  %1688 = vmatprep.mubr.f32.mxu0 %v1330
  %1689 = vmatmul.mubr.f32.gmra.mrb[0].mxu0 %v1329
  %v1690 = vpop.f32.mrb[0].mxu0
  %v1691 = vadd.f32 0.0, %v1690
  %v1692 = vpop.f32.mrb[0].mxu0
  %1693 = vmatprep.mubr.f32.mxu0 %v1333
  %1694 = vmatmul.mubr.f32.gmra.mrb[0].mxu0 %v1332
  %v1695 = vpop.f32.mrb[0].mxu0
  %v1696 = vadd.f32 0.0, %v1695
  %v1697 = vpop.f32.mrb[0].mxu0
  %1698 = vmatprep.mubr.f32.mxu0 %v1336
  %1699 = vmatmul.mubr.f32.gmra.mrb[0].mxu0 %v1335
  %v1700 = vpop.f32.mrb[0].mxu0
  %v1701 = vadd.f32 0.0, %v1700
  %v1702 = vpop.f32.mrb[0].mxu0
  %1703 = vmatprep.mubr.f32.mxu0 %v1339
  %1704 = vmatmul.mubr.f32.gmra.mrb[0].mxu0 %v1338
  %v1705 = vpop.f32.mrb[0].mxu0
  %v1706 = vadd.f32 0.0, %v1705
  %v1707 = vpop.f32.mrb[0].mxu0
  %1708 = vmatprep.mubr.f32.mxu0 %v1342
  %1709 = vmatmul.mubr.f32.gmra.mrb[0].mxu0 %v1341
  %v1710 = vpop.f32.mrb[0].mxu0
  %v1711 = vadd.f32 0.0, %v1710
  %v1712 = vpop.f32.mrb[0].mxu0
  %1713 = vmatprep.mubr.f32.mxu0 %v1345
  %1714 = vmatmul.mubr.f32.gmra.mrb[0].mxu0 %v1344
  %v1715 = vpop.f32.mrb[0].mxu0
  %v1716 = vadd.f32 0.0, %v1715
  %v1717 = vpop.f32.mrb[0].mxu0
  %1718 = vmatprep.mubr.f32.mxu0 %v1348
  %1719 = vmatmul.mubr.f32.gmra.mrb[0].mxu0 %v1347
  %v1720 = vpop.f32.mrb[0].mxu0
  %v1721 = vadd.f32 0.0, %v1720
  %v1722 = vpop.f32.mrb[0].mxu0
  %1723 = vmatprep.mubr.f32.mxu0 %v1351
  %1724 = vmatmul.mubr.f32.gmra.mrb[0].mxu0 %v1350
  %v1725 = vpop.f32.mrb[0].mxu0
  %v1726 = vadd.f32 0.0, %v1725
  %v1727 = vpop.f32.mrb[0].mxu0
  %1728 = vmatprep.mubr.f32.mxu0 %v1354
  %1729 = vmatmul.mubr.f32.gmra.mrb[0].mxu0 %v1353
  %v1730 = vpop.f32.mrb[0].mxu0
  %v1731 = vadd.f32 0.0, %v1730
  %v1732 = vpop.f32.mrb[0].mxu0
  %1733 = vmatprep.mubr.f32.mxu0 %v1357
  %1734 = vmatmul.mubr.f32.gmra.mrb[0].mxu0 %v1356
  %v1735 = vpop.f32.mrb[0].mxu0
  %v1736 = vadd.f32 0.0, %v1735
  %v1737 = vpop.f32.mrb[0].mxu0
  %1738 = vmatprep.mubr.f32.mxu0 %v1360
  %1739 = vmatmul.mubr.f32.gmra.mrb[0].mxu0 %v1359
  %v1740 = vpop.f32.mrb[0].mxu0
  %v1741 = vadd.f32 0.0, %v1740
  %v1742 = vpop.f32.mrb[0].mxu0
  %1743 = vmatprep.mubr.f32.mxu0 %v1363
  %1744 = vmatmul.mubr.f32.gmra.mrb[0].mxu0 %v1362
  %v1745 = vpop.f32.mrb[0].mxu0
  %v1746 = vadd.f32 0.0, %v1745
  %v1747 = vpop.f32.mrb[0].mxu0
  %1748 = vmatprep.mubr.f32.mxu0 %v1366
  %1749 = vmatmul.mubr.f32.gmra.mrb[0].mxu0 %v1365
  %v1750 = vpop.f32.mrb[0].mxu0
  %v1751 = vadd.f32 0.0, %v1750
  %v1752 = vpop.f32.mrb[0].mxu0
  %1753 = vmatprep.mubr.f32.mxu0 %v1369
  %1754 = vmatmul.mubr.f32.gmra.mrb[0].mxu0 %v1368
  %v1755 = vpop.f32.mrb[0].mxu0
  %v1756 = vadd.f32 0.0, %v1755
  %v1757 = vpop.f32.mrb[0].mxu0
  %1758 = vmatprep.mubr.f32.mxu0 %v1372
  %1759 = vmatmul.mubr.f32.gmra.mrb[0].mxu0 %v1371
  %v1760 = vpop.f32.mrb[0].mxu0
  %v1761 = vadd.f32 0.0, %v1760
  %v1762 = vpop.f32.mrb[0].mxu0
  %1763 = vmatprep.mubr.f32.mxu0 %v1375
  %1764 = vmatmul.mubr.f32.gmra.mrb[0].mxu0 %v1374
  %v1765 = vpop.f32.mrb[0].mxu0
  %v1766 = vadd.f32 0.0, %v1765
  %v1767 = vpop.f32.mrb[0].mxu0
  %1768 = vmatprep.mubr.f32.mxu0 %v1378
  %1769 = vmatmul.mubr.f32.gmra.mrb[0].mxu0 %v1377
  %v1770 = vpop.f32.mrb[0].mxu0
  %v1771 = vadd.f32 0.0, %v1770
  %v1772 = vpop.f32.mrb[0].mxu0
  %1773 = vmatprep.mubr.f32.mxu0 %v1381
  %1774 = vmatmul.mubr.f32.gmra.mrb[0].mxu0 %v1380
  %v1775 = vpop.f32.mrb[0].mxu0
  %v1776 = vadd.f32 0.0, %v1775
  %v1777 = vpop.f32.mrb[0].mxu0
  %1778 = vmatprep.mubr.f32.mxu0 %v1384
  %1779 = vmatmul.mubr.f32.gmra.mrb[0].mxu0 %v1383
  %v1780 = vpop.f32.mrb[0].mxu0
  %v1781 = vadd.f32 0.0, %v1780
  %v1782 = vpop.f32.mrb[0].mxu0
  %1783 = vmatprep.mubr.f32.mxu0 %v1387
  %1784 = vmatmul.mubr.f32.gmra.mrb[0].mxu0 %v1386
  %v1785 = vpop.f32.mrb[0].mxu0
  %v1786 = vadd.f32 0.0, %v1785
  %v1787 = vpop.f32.mrb[0].mxu0
  %1788 = vmatprep.mubr.f32.mxu0 %v1390
  %1789 = vmatmul.mubr.f32.gmra.mrb[0].mxu0 %v1389
  %v1790 = vpop.f32.mrb[0].mxu0
  %v1791 = vadd.f32 0.0, %v1790
  %v1792 = vpop.f32.mrb[0].mxu0
  %1793 = vmatprep.mubr.f32.mxu0 %v1393
  %1794 = vmatmul.mubr.f32.gmra.mrb[0].mxu0 %v1392
  %v1795 = vpop.f32.mrb[0].mxu0
  %v1796 = vadd.f32 0.0, %v1795
  %v1797 = vpop.f32.mrb[0].mxu0
  %1798 = vmatprep.mubr.f32.mxu0 %v1396
  %1799 = vmatmul.mubr.f32.gmra.mrb[0].mxu0 %v1395
  %v1800 = vpop.f32.mrb[0].mxu0
  %v1801 = vadd.f32 0.0, %v1800
  %v1802 = vpop.f32.mrb[0].mxu0
  %1803 = vmatprep.mubr.f32.mxu0 %v1399
  %1804 = vmatmul.mubr.f32.gmra.mrb[0].mxu0 %v1398
  %v1805 = vpop.f32.mrb[0].mxu0
  %v1806 = vadd.f32 0.0, %v1805
  %v1807 = vpop.f32.mrb[0].mxu0
  %1808 = vmatprep.mubr.f32.mxu0 %v1402
  %1809 = vmatmul.mubr.f32.gmra.mrb[0].mxu0 %v1401
  %v1810 = vpop.f32.mrb[0].mxu0
  %v1811 = vadd.f32 0.0, %v1810
  %v1812 = vpop.f32.mrb[0].mxu0
  %1813 = vmatprep.mubr.f32.mxu0 %v1405
  %1814 = vmatmul.mubr.f32.gmra.mrb[0].mxu0 %v1404
  %v1815 = vpop.f32.mrb[0].mxu0
  %v1816 = vadd.f32 0.0, %v1815
  %v1817 = vpop.f32.mrb[0].mxu0
  %1818 = vmatprep.mubr.f32.mxu0 %v1408
  %1819 = vmatmul.mubr.f32.gmra.mrb[0].mxu0 %v1407
  %v1820 = vpop.f32.mrb[0].mxu0
  %v1821 = vadd.f32 0.0, %v1820
  %v1822 = vpop.f32.mrb[0].mxu0
  %1823 = vmatprep.mubr.f32.mxu0 %v1411
  %1824 = vmatmul.mubr.f32.gmra.mrb[0].mxu0 %v1410
  %v1825 = vpop.f32.mrb[0].mxu0
  %v1826 = vadd.f32 0.0, %v1825
  %v1827 = vpop.f32.mrb[0].mxu0
  %1828 = vmatprep.mubr.f32.mxu0 %v1414
  %1829 = vmatmul.mubr.f32.gmra.mrb[0].mxu0 %v1413
  %v1830 = vpop.f32.mrb[0].mxu0
  %v1831 = vadd.f32 0.0, %v1830
  %v1832 = vpop.f32.mrb[0].mxu0
  %1833 = vmatprep.mubr.f32.mxu0 %v1417
  %1834 = vmatmul.mubr.f32.gmra.mrb[0].mxu0 %v1416
  %v1835 = vpop.f32.mrb[0].mxu0
  %v1836 = vadd.f32 0.0, %v1835
  %v1837 = vpop.f32.mrb[0].mxu0
  %1838 = vmatprep.mubr.f32.mxu0 %v1420
  %1839 = vmatmul.mubr.f32.gmra.mrb[0].mxu0 %v1419
  %v1840 = vpop.f32.mrb[0].mxu0
  %v1841 = vadd.f32 0.0, %v1840
  %v1842 = vpop.f32.mrb[0].mxu0
  %1843 = vmatprep.mubr.f32.mxu0 %v1423
  %1844 = vmatmul.mubr.f32.gmra.mrb[0].mxu0 %v1422
  %v1845 = vpop.f32.mrb[0].mxu0
  %v1846 = vadd.f32 0.0, %v1845
  %v1847 = vpop.f32.mrb[0].mxu0
  %1848 = vmatprep.mubr.f32.mxu0 %v1426
  %1849 = vmatmul.mubr.f32.gmra.mrb[0].mxu0 %v1425
  %v1850 = vpop.f32.mrb[0].mxu0
  %v1851 = vadd.f32 0.0, %v1850
  %v1852 = vpop.f32.mrb[0].mxu0
  %1853 = vmatprep.mubr.f32.mxu0 %v1429
  %1854 = vmatmul.mubr.f32.gmra.mrb[0].mxu0 %v1428
  %v1855 = vpop.f32.mrb[0].mxu0
  %v1856 = vadd.f32 0.0, %v1855
  %v1857 = vpop.f32.mrb[0].mxu0
  %1858 = vmatprep.mubr.f32.mxu0 %v1432
  %1859 = vmatmul.mubr.f32.gmra.mrb[0].mxu0 %v1431
  %v1860 = vpop.f32.mrb[0].mxu0
  %v1861 = vadd.f32 0.0, %v1860
  %v1862 = vpop.f32.mrb[0].mxu0
  %1863 = vmatprep.mubr.f32.mxu0 %v1435
  %1864 = vmatmul.mubr.f32.gmra.mrb[0].mxu0 %v1434
  %v1865 = vpop.f32.mrb[0].mxu0
  %v1866 = vadd.f32 0.0, %v1865
  %v1867 = vpop.f32.mrb[0].mxu0
  %1868 = vmatprep.mubr.f32.mxu0 %v1438
  %1869 = vmatmul.mubr.f32.gmra.mrb[0].mxu0 %v1437
  %v1870 = vpop.f32.mrb[0].mxu0
  %v1871 = vadd.f32 0.0, %v1870
  %v1872 = vpop.f32.mrb[0].mxu0
  %1873 = vdwg.mxu0
  %1874 = vmatprep.subr.mxu0 0.0
  %1875 = vmatpush1.msra.mxu0 %v1473
  %1876 = vmatprep.subr.mxu0 0.0
  %1877 = vmatpush1.msra.mxu0 %v1474
  %1878 = vmatprep.subr.mxu0 0.0
  %1879 = vmatpush1.msra.mxu0 %v1475
  %1880 = vmatprep.subr.mxu0 0.0
  %1881 = vmatpush1.msra.mxu0 %v1476
  %1882 = vmatprep.subr.mxu0 0.0
  %1883 = vmatpush1.msra.mxu0 %v1477
  %1884 = vmatprep.subr.mxu0 0.0
  %1885 = vmatpush1.msra.mxu0 %v1478
  %1886 = vmatprep.subr.mxu0 0.0
  %1887 = vmatpush1.msra.mxu0 %v1479
  %1888 = vmatprep.subr.mxu0 0.0
  %1889 = vmatpush1.msra.mxu0 %v1480
  %1890 = vmatprep.subr.mxu0 0.0
  %1891 = vmatpush1.msra.mxu0 %v1481
  %1892 = vmatprep.subr.mxu0 0.0
  %1893 = vmatpush1.msra.mxu0 %v1482
  %1894 = vmatprep.subr.mxu0 0.0
  %1895 = vmatpush1.msra.mxu0 %v1483
  %1896 = vmatprep.subr.mxu0 0.0
  %1897 = vmatpush1.msra.mxu0 %v1484
  %1898 = vmatprep.subr.mxu0 0.0
  %1899 = vmatpush1.msra.mxu0 %v1485
  %1900 = vmatprep.subr.mxu0 0.0
  %1901 = vmatpush1.msra.mxu0 %v1486
  %1902 = vmatprep.subr.mxu0 0.0
  %1903 = vmatpush1.msra.mxu0 %v1487
  %1904 = vmatprep.subr.mxu0 0.0
  %1905 = vmatpush1.msra.mxu0 %v1488
  %1906 = vmatprep.subr.mxu0 0.0
  %1907 = vmatpush1.msra.mxu0 0.0
  %1908 = vmatprep.subr.mxu0 0.0
  %1909 = vmatpush1.msra.mxu0 0.0
  %1910 = vmatprep.subr.mxu0 0.0
  %1911 = vmatpush1.msra.mxu0 0.0
  %1912 = vmatprep.subr.mxu0 0.0
  %1913 = vmatpush1.msra.mxu0 0.0
  %1914 = vmatprep.subr.mxu0 0.0
  %1915 = vmatpush1.msra.mxu0 0.0
  %1916 = vmatprep.subr.mxu0 0.0
  %1917 = vmatpush1.msra.mxu0 0.0
  %1918 = vmatprep.subr.mxu0 0.0
  %1919 = vmatpush1.msra.mxu0 0.0
  %1920 = vmatprep.subr.mxu0 0.0
  %1921 = vmatpush1.msra.mxu0 0.0
  %1922 = vmatprep.subr.mxu0 0.0
  %1923 = vmatpush1.msra.mxu0 0.0
  %1924 = vmatprep.subr.mxu0 0.0
  %1925 = vmatpush1.msra.mxu0 0.0
  %1926 = vmatprep.subr.mxu0 0.0
  %1927 = vmatpush1.msra.mxu0 0.0
  %1928 = vmatprep.subr.mxu0 0.0
  %1929 = vmatpush1.msra.mxu0 0.0
  %1930 = vmatprep.subr.mxu0 0.0
  %1931 = vmatpush1.msra.mxu0 0.0
  %1932 = vmatprep.subr.mxu0 0.0
  %1933 = vmatpush1.msra.mxu0 0.0
  %1934 = vmatprep.subr.mxu0 0.0
  %1935 = vmatpush1.msra.mxu0 0.0
  %1936 = vmatprep.subr.mxu0 0.0
  %1937 = vmatpush1.msra.mxu0 0.0
  %1938 = vmatprep.mubr.f32.mxu0 0.0
  %1939 = vmatmul.mubr.f32.gmra.mrb[0].mxu0 %v1250
  %v1940 = vpop.f32.mrb[0].mxu0
  %v1941 = vadd.f32 %v1556, %v1940
  %v1942 = vpop.f32.mrb[0].mxu0
  %1943 = vmatprep.mubr.f32.mxu0 0.0
  %1944 = vmatmul.mubr.f32.gmra.mrb[0].mxu0 %v1253
  %v1945 = vpop.f32.mrb[0].mxu0
  %v1946 = vadd.f32 %v1561, %v1945
  %v1947 = vpop.f32.mrb[0].mxu0
  %1948 = vmatprep.mubr.f32.mxu0 0.0
  %1949 = vmatmul.mubr.f32.gmra.mrb[0].mxu0 %v1256
  %v1950 = vpop.f32.mrb[0].mxu0
  %v1951 = vadd.f32 %v1566, %v1950
  %v1952 = vpop.f32.mrb[0].mxu0
  %1953 = vmatprep.mubr.f32.mxu0 0.0
  %1954 = vmatmul.mubr.f32.gmra.mrb[0].mxu0 %v1259
  %v1955 = vpop.f32.mrb[0].mxu0
  %v1956 = vadd.f32 %v1571, %v1955
  %v1957 = vpop.f32.mrb[0].mxu0
  %1958 = vmatprep.mubr.f32.mxu0 0.0
  %1959 = vmatmul.mubr.f32.gmra.mrb[0].mxu0 %v1262
  %v1960 = vpop.f32.mrb[0].mxu0
  %v1961 = vadd.f32 %v1576, %v1960
  %v1962 = vpop.f32.mrb[0].mxu0
  %1963 = vmatprep.mubr.f32.mxu0 0.0
  %1964 = vmatmul.mubr.f32.gmra.mrb[0].mxu0 %v1265
  %v1965 = vpop.f32.mrb[0].mxu0
  %v1966 = vadd.f32 %v1581, %v1965
  %v1967 = vpop.f32.mrb[0].mxu0
  %1968 = vmatprep.mubr.f32.mxu0 0.0
  %1969 = vmatmul.mubr.f32.gmra.mrb[0].mxu0 %v1268
  %v1970 = vpop.f32.mrb[0].mxu0
  %v1971 = vadd.f32 %v1586, %v1970
  %v1972 = vpop.f32.mrb[0].mxu0
  %1973 = vmatprep.mubr.f32.mxu0 0.0
  %1974 = vmatmul.mubr.f32.gmra.mrb[0].mxu0 %v1271
  %v1975 = vpop.f32.mrb[0].mxu0
  %v1976 = vadd.f32 %v1591, %v1975
  %v1977 = vpop.f32.mrb[0].mxu0
  %1978 = vmatprep.mubr.f32.mxu0 0.0
  %1979 = vmatmul.mubr.f32.gmra.mrb[0].mxu0 %v1274
  %v1980 = vpop.f32.mrb[0].mxu0
  %v1981 = vadd.f32 %v1596, %v1980
  %v1982 = vpop.f32.mrb[0].mxu0
  %1983 = vmatprep.mubr.f32.mxu0 0.0
  %1984 = vmatmul.mubr.f32.gmra.mrb[0].mxu0 %v1277
  %v1985 = vpop.f32.mrb[0].mxu0
  %v1986 = vadd.f32 %v1601, %v1985
  %v1987 = vpop.f32.mrb[0].mxu0
  %1988 = vmatprep.mubr.f32.mxu0 0.0
  %1989 = vmatmul.mubr.f32.gmra.mrb[0].mxu0 %v1280
  %v1990 = vpop.f32.mrb[0].mxu0
  %v1991 = vadd.f32 %v1606, %v1990
  %v1992 = vpop.f32.mrb[0].mxu0
  %1993 = vmatprep.mubr.f32.mxu0 0.0
  %1994 = vmatmul.mubr.f32.gmra.mrb[0].mxu0 %v1283
  %v1995 = vpop.f32.mrb[0].mxu0
  %v1996 = vadd.f32 %v1611, %v1995
  %v1997 = vpop.f32.mrb[0].mxu0
  %1998 = vmatprep.mubr.f32.mxu0 0.0
  %1999 = vmatmul.mubr.f32.gmra.mrb[0].mxu0 %v1286
  %v2000 = vpop.f32.mrb[0].mxu0
  %v2001 = vadd.f32 %v1616, %v2000
  %v2002 = vpop.f32.mrb[0].mxu0
  %2003 = vmatprep.mubr.f32.mxu0 0.0
  %2004 = vmatmul.mubr.f32.gmra.mrb[0].mxu0 %v1289
  %v2005 = vpop.f32.mrb[0].mxu0
  %v2006 = vadd.f32 %v1621, %v2005
  %v2007 = vpop.f32.mrb[0].mxu0
  %2008 = vmatprep.mubr.f32.mxu0 0.0
  %2009 = vmatmul.mubr.f32.gmra.mrb[0].mxu0 %v1292
  %v2010 = vpop.f32.mrb[0].mxu0
  %v2011 = vadd.f32 %v1626, %v2010
  %v2012 = vpop.f32.mrb[0].mxu0
  %2013 = vmatprep.mubr.f32.mxu0 0.0
  %2014 = vmatmul.mubr.f32.gmra.mrb[0].mxu0 %v1295
  %v2015 = vpop.f32.mrb[0].mxu0
  %v2016 = vadd.f32 %v1631, %v2015
  %v2017 = vpop.f32.mrb[0].mxu0
  %2018 = vmatprep.mubr.f32.mxu0 0.0
  %2019 = vmatmul.mubr.f32.gmra.mrb[0].mxu0 %v1298
  %v2020 = vpop.f32.mrb[0].mxu0
  %v2021 = vadd.f32 %v1636, %v2020
  %v2022 = vpop.f32.mrb[0].mxu0
  %2023 = vmatprep.mubr.f32.mxu0 0.0
  %2024 = vmatmul.mubr.f32.gmra.mrb[0].mxu0 %v1301
  %v2025 = vpop.f32.mrb[0].mxu0
  %v2026 = vadd.f32 %v1641, %v2025
  %v2027 = vpop.f32.mrb[0].mxu0
  %2028 = vmatprep.mubr.f32.mxu0 0.0
  %2029 = vmatmul.mubr.f32.gmra.mrb[0].mxu0 %v1304
  %v2030 = vpop.f32.mrb[0].mxu0
  %v2031 = vadd.f32 %v1646, %v2030
  %v2032 = vpop.f32.mrb[0].mxu0
  %2033 = vmatprep.mubr.f32.mxu0 0.0
  %2034 = vmatmul.mubr.f32.gmra.mrb[0].mxu0 %v1307
  %v2035 = vpop.f32.mrb[0].mxu0
  %v2036 = vadd.f32 %v1651, %v2035
  %v2037 = vpop.f32.mrb[0].mxu0
  %2038 = vmatprep.mubr.f32.mxu0 0.0
  %2039 = vmatmul.mubr.f32.gmra.mrb[0].mxu0 %v1310
  %v2040 = vpop.f32.mrb[0].mxu0
  %v2041 = vadd.f32 %v1656, %v2040
  %v2042 = vpop.f32.mrb[0].mxu0
  %2043 = vmatprep.mubr.f32.mxu0 0.0
  %2044 = vmatmul.mubr.f32.gmra.mrb[0].mxu0 %v1313
  %v2045 = vpop.f32.mrb[0].mxu0
  %v2046 = vadd.f32 %v1661, %v2045
  %v2047 = vpop.f32.mrb[0].mxu0
  %2048 = vmatprep.mubr.f32.mxu0 0.0
  %2049 = vmatmul.mubr.f32.gmra.mrb[0].mxu0 %v1316
  %v2050 = vpop.f32.mrb[0].mxu0
  %v2051 = vadd.f32 %v1666, %v2050
  %v2052 = vpop.f32.mrb[0].mxu0
  %2053 = vmatprep.mubr.f32.mxu0 0.0
  %2054 = vmatmul.mubr.f32.gmra.mrb[0].mxu0 %v1319
  %v2055 = vpop.f32.mrb[0].mxu0
  %v2056 = vadd.f32 %v1671, %v2055
  %v2057 = vpop.f32.mrb[0].mxu0
  %2058 = vmatprep.mubr.f32.mxu0 0.0
  %2059 = vmatmul.mubr.f32.gmra.mrb[0].mxu0 %v1322
  %v2060 = vpop.f32.mrb[0].mxu0
  %v2061 = vadd.f32 %v1676, %v2060
  %v2062 = vpop.f32.mrb[0].mxu0
  %2063 = vmatprep.mubr.f32.mxu0 0.0
  %2064 = vmatmul.mubr.f32.gmra.mrb[0].mxu0 %v1325
  %v2065 = vpop.f32.mrb[0].mxu0
  %v2066 = vadd.f32 %v1681, %v2065
  %v2067 = vpop.f32.mrb[0].mxu0
  %2068 = vmatprep.mubr.f32.mxu0 0.0
  %2069 = vmatmul.mubr.f32.gmra.mrb[0].mxu0 %v1328
  %v2070 = vpop.f32.mrb[0].mxu0
  %v2071 = vadd.f32 %v1686, %v2070
  %v2072 = vpop.f32.mrb[0].mxu0
  %2073 = vmatprep.mubr.f32.mxu0 0.0
  %2074 = vmatmul.mubr.f32.gmra.mrb[0].mxu0 %v1331
  %v2075 = vpop.f32.mrb[0].mxu0
  %v2076 = vadd.f32 %v1691, %v2075
  %v2077 = vpop.f32.mrb[0].mxu0
  %2078 = vmatprep.mubr.f32.mxu0 0.0
  %2079 = vmatmul.mubr.f32.gmra.mrb[0].mxu0 %v1334
  %v2080 = vpop.f32.mrb[0].mxu0
  %v2081 = vadd.f32 %v1696, %v2080
  %v2082 = vpop.f32.mrb[0].mxu0
  %2083 = vmatprep.mubr.f32.mxu0 0.0
  %2084 = vmatmul.mubr.f32.gmra.mrb[0].mxu0 %v1337
  %v2085 = vpop.f32.mrb[0].mxu0
  %v2086 = vadd.f32 %v1701, %v2085
  %v2087 = vpop.f32.mrb[0].mxu0
  %2088 = vmatprep.mubr.f32.mxu0 0.0
  %2089 = vmatmul.mubr.f32.gmra.mrb[0].mxu0 %v1340
  %v2090 = vpop.f32.mrb[0].mxu0
  %v2091 = vadd.f32 %v1706, %v2090
  %v2092 = vpop.f32.mrb[0].mxu0
  %2093 = vmatprep.mubr.f32.mxu0 0.0
  %2094 = vmatmul.mubr.f32.gmra.mrb[0].mxu0 %v1343
  %v2095 = vpop.f32.mrb[0].mxu0
  %v2096 = vadd.f32 %v1711, %v2095
  %v2097 = vpop.f32.mrb[0].mxu0
  %2098 = vmatprep.mubr.f32.mxu0 0.0
  %2099 = vmatmul.mubr.f32.gmra.mrb[0].mxu0 %v1346
  %v2100 = vpop.f32.mrb[0].mxu0
  %v2101 = vadd.f32 %v1716, %v2100
  %v2102 = vpop.f32.mrb[0].mxu0
  %2103 = vmatprep.mubr.f32.mxu0 0.0
  %2104 = vmatmul.mubr.f32.gmra.mrb[0].mxu0 %v1349
  %v2105 = vpop.f32.mrb[0].mxu0
  %v2106 = vadd.f32 %v1721, %v2105
  %v2107 = vpop.f32.mrb[0].mxu0
  %2108 = vmatprep.mubr.f32.mxu0 0.0
  %2109 = vmatmul.mubr.f32.gmra.mrb[0].mxu0 %v1352
  %v2110 = vpop.f32.mrb[0].mxu0
  %v2111 = vadd.f32 %v1726, %v2110
  %v2112 = vpop.f32.mrb[0].mxu0
  %2113 = vmatprep.mubr.f32.mxu0 0.0
  %2114 = vmatmul.mubr.f32.gmra.mrb[0].mxu0 %v1355
  %v2115 = vpop.f32.mrb[0].mxu0
  %v2116 = vadd.f32 %v1731, %v2115
  %v2117 = vpop.f32.mrb[0].mxu0
  %2118 = vmatprep.mubr.f32.mxu0 0.0
  %2119 = vmatmul.mubr.f32.gmra.mrb[0].mxu0 %v1358
  %v2120 = vpop.f32.mrb[0].mxu0
  %v2121 = vadd.f32 %v1736, %v2120
  %v2122 = vpop.f32.mrb[0].mxu0
  %2123 = vmatprep.mubr.f32.mxu0 0.0
  %2124 = vmatmul.mubr.f32.gmra.mrb[0].mxu0 %v1361
  %v2125 = vpop.f32.mrb[0].mxu0
  %v2126 = vadd.f32 %v1741, %v2125
  %v2127 = vpop.f32.mrb[0].mxu0
  %2128 = vmatprep.mubr.f32.mxu0 0.0
  %2129 = vmatmul.mubr.f32.gmra.mrb[0].mxu0 %v1364
  %v2130 = vpop.f32.mrb[0].mxu0
  %v2131 = vadd.f32 %v1746, %v2130
  %v2132 = vpop.f32.mrb[0].mxu0
  %2133 = vmatprep.mubr.f32.mxu0 0.0
  %2134 = vmatmul.mubr.f32.gmra.mrb[0].mxu0 %v1367
  %v2135 = vpop.f32.mrb[0].mxu0
  %v2136 = vadd.f32 %v1751, %v2135
  %v2137 = vpop.f32.mrb[0].mxu0
  %2138 = vmatprep.mubr.f32.mxu0 0.0
  %2139 = vmatmul.mubr.f32.gmra.mrb[0].mxu0 %v1370
  %v2140 = vpop.f32.mrb[0].mxu0
  %v2141 = vadd.f32 %v1756, %v2140
  %v2142 = vpop.f32.mrb[0].mxu0
  %2143 = vmatprep.mubr.f32.mxu0 0.0
  %2144 = vmatmul.mubr.f32.gmra.mrb[0].mxu0 %v1373
  %v2145 = vpop.f32.mrb[0].mxu0
  %v2146 = vadd.f32 %v1761, %v2145
  %v2147 = vpop.f32.mrb[0].mxu0
  %2148 = vmatprep.mubr.f32.mxu0 0.0
  %2149 = vmatmul.mubr.f32.gmra.mrb[0].mxu0 %v1376
  %v2150 = vpop.f32.mrb[0].mxu0
  %v2151 = vadd.f32 %v1766, %v2150
  %v2152 = vpop.f32.mrb[0].mxu0
  %2153 = vmatprep.mubr.f32.mxu0 0.0
  %2154 = vmatmul.mubr.f32.gmra.mrb[0].mxu0 %v1379
  %v2155 = vpop.f32.mrb[0].mxu0
  %v2156 = vadd.f32 %v1771, %v2155
  %v2157 = vpop.f32.mrb[0].mxu0
  %2158 = vmatprep.mubr.f32.mxu0 0.0
  %2159 = vmatmul.mubr.f32.gmra.mrb[0].mxu0 %v1382
  %v2160 = vpop.f32.mrb[0].mxu0
  %v2161 = vadd.f32 %v1776, %v2160
  %v2162 = vpop.f32.mrb[0].mxu0
  %2163 = vmatprep.mubr.f32.mxu0 0.0
  %2164 = vmatmul.mubr.f32.gmra.mrb[0].mxu0 %v1385
  %v2165 = vpop.f32.mrb[0].mxu0
  %v2166 = vadd.f32 %v1781, %v2165
  %v2167 = vpop.f32.mrb[0].mxu0
  %2168 = vmatprep.mubr.f32.mxu0 0.0
  %2169 = vmatmul.mubr.f32.gmra.mrb[0].mxu0 %v1388
  %v2170 = vpop.f32.mrb[0].mxu0
  %v2171 = vadd.f32 %v1786, %v2170
  %v2172 = vpop.f32.mrb[0].mxu0
  %2173 = vmatprep.mubr.f32.mxu0 0.0
  %2174 = vmatmul.mubr.f32.gmra.mrb[0].mxu0 %v1391
  %v2175 = vpop.f32.mrb[0].mxu0
  %v2176 = vadd.f32 %v1791, %v2175
  %v2177 = vpop.f32.mrb[0].mxu0
  %2178 = vmatprep.mubr.f32.mxu0 0.0
  %2179 = vmatmul.mubr.f32.gmra.mrb[0].mxu0 %v1394
  %v2180 = vpop.f32.mrb[0].mxu0
  %v2181 = vadd.f32 %v1796, %v2180
  %v2182 = vpop.f32.mrb[0].mxu0
  %2183 = vmatprep.mubr.f32.mxu0 0.0
  %2184 = vmatmul.mubr.f32.gmra.mrb[0].mxu0 %v1397
  %v2185 = vpop.f32.mrb[0].mxu0
  %v2186 = vadd.f32 %v1801, %v2185
  %v2187 = vpop.f32.mrb[0].mxu0
  %2188 = vmatprep.mubr.f32.mxu0 0.0
  %2189 = vmatmul.mubr.f32.gmra.mrb[0].mxu0 %v1400
  %v2190 = vpop.f32.mrb[0].mxu0
  %v2191 = vadd.f32 %v1806, %v2190
  %v2192 = vpop.f32.mrb[0].mxu0
  %2193 = vmatprep.mubr.f32.mxu0 0.0
  %2194 = vmatmul.mubr.f32.gmra.mrb[0].mxu0 %v1403
  %v2195 = vpop.f32.mrb[0].mxu0
  %v2196 = vadd.f32 %v1811, %v2195
  %v2197 = vpop.f32.mrb[0].mxu0
  %2198 = vmatprep.mubr.f32.mxu0 0.0
  %2199 = vmatmul.mubr.f32.gmra.mrb[0].mxu0 %v1406
  %v2200 = vpop.f32.mrb[0].mxu0
  %v2201 = vadd.f32 %v1816, %v2200
  %v2202 = vpop.f32.mrb[0].mxu0
  %2203 = vmatprep.mubr.f32.mxu0 0.0
  %2204 = vmatmul.mubr.f32.gmra.mrb[0].mxu0 %v1409
  %v2205 = vpop.f32.mrb[0].mxu0
  %v2206 = vadd.f32 %v1821, %v2205
  %v2207 = vpop.f32.mrb[0].mxu0
  %2208 = vmatprep.mubr.f32.mxu0 0.0
  %2209 = vmatmul.mubr.f32.gmra.mrb[0].mxu0 %v1412
  %v2210 = vpop.f32.mrb[0].mxu0
  %v2211 = vadd.f32 %v1826, %v2210
  %v2212 = vpop.f32.mrb[0].mxu0
  %2213 = vmatprep.mubr.f32.mxu0 0.0
  %2214 = vmatmul.mubr.f32.gmra.mrb[0].mxu0 %v1415
  %v2215 = vpop.f32.mrb[0].mxu0
  %v2216 = vadd.f32 %v1831, %v2215
  %v2217 = vpop.f32.mrb[0].mxu0
  %2218 = vmatprep.mubr.f32.mxu0 0.0
  %2219 = vmatmul.mubr.f32.gmra.mrb[0].mxu0 %v1418
  %v2220 = vpop.f32.mrb[0].mxu0
  %v2221 = vadd.f32 %v1836, %v2220
  %v2222 = vpop.f32.mrb[0].mxu0
  %2223 = vmatprep.mubr.f32.mxu0 0.0
  %2224 = vmatmul.mubr.f32.gmra.mrb[0].mxu0 %v1421
  %v2225 = vpop.f32.mrb[0].mxu0
  %v2226 = vadd.f32 %v1841, %v2225
  %v2227 = vpop.f32.mrb[0].mxu0
  %2228 = vmatprep.mubr.f32.mxu0 0.0
  %2229 = vmatmul.mubr.f32.gmra.mrb[0].mxu0 %v1424
  %v2230 = vpop.f32.mrb[0].mxu0
  %v2231 = vadd.f32 %v1846, %v2230
  %v2232 = vpop.f32.mrb[0].mxu0
  %2233 = vmatprep.mubr.f32.mxu0 0.0
  %2234 = vmatmul.mubr.f32.gmra.mrb[0].mxu0 %v1427
  %v2235 = vpop.f32.mrb[0].mxu0
  %v2236 = vadd.f32 %v1851, %v2235
  %v2237 = vpop.f32.mrb[0].mxu0
  %2238 = vmatprep.mubr.f32.mxu0 0.0
  %2239 = vmatmul.mubr.f32.gmra.mrb[0].mxu0 %v1430
  %v2240 = vpop.f32.mrb[0].mxu0
  %v2241 = vadd.f32 %v1856, %v2240
  %v2242 = vpop.f32.mrb[0].mxu0
  %2243 = vmatprep.mubr.f32.mxu0 0.0
  %2244 = vmatmul.mubr.f32.gmra.mrb[0].mxu0 %v1433
  %v2245 = vpop.f32.mrb[0].mxu0
  %v2246 = vadd.f32 %v1861, %v2245
  %v2247 = vpop.f32.mrb[0].mxu0
  %2248 = vmatprep.mubr.f32.mxu0 0.0
  %2249 = vmatmul.mubr.f32.gmra.mrb[0].mxu0 %v1436
  %v2250 = vpop.f32.mrb[0].mxu0
  %v2251 = vadd.f32 %v1866, %v2250
  %v2252 = vpop.f32.mrb[0].mxu0
  %2253 = vmatprep.mubr.f32.mxu0 0.0
  %2254 = vmatmul.mubr.f32.gmra.mrb[0].mxu0 %v1439
  %v2255 = vpop.f32.mrb[0].mxu0
  %v2256 = vadd.f32 %v1871, %v2255
  %v2257 = vpop.f32.mrb[0].mxu0
  %2258 = vdwg.mxu0
  %2259 = vmatprep.subr.mxu0 0.0
  %2260 = vmatpush1.msra.mxu0 %v816
  %2261 = vmatprep.subr.mxu0 0.0
  %2262 = vmatpush1.msra.mxu0 %v817
  %2263 = vmatprep.subr.mxu0 0.0
  %2264 = vmatpush1.msra.mxu0 %v818
  %2265 = vmatprep.subr.mxu0 0.0
  %2266 = vmatpush1.msra.mxu0 %v819
  %2267 = vmatprep.subr.mxu0 0.0
  %2268 = vmatpush1.msra.mxu0 %v820
  %2269 = vmatprep.subr.mxu0 0.0
  %2270 = vmatpush1.msra.mxu0 %v821
  %2271 = vmatprep.subr.mxu0 0.0
  %2272 = vmatpush1.msra.mxu0 %v822
  %2273 = vmatprep.subr.mxu0 0.0
  %2274 = vmatpush1.msra.mxu0 %v823
  %2275 = vmatprep.subr.mxu0 0.0
  %2276 = vmatpush1.msra.mxu0 %v824
  %2277 = vmatprep.subr.mxu0 0.0
  %2278 = vmatpush1.msra.mxu0 %v825
  %2279 = vmatprep.subr.mxu0 0.0
  %2280 = vmatpush1.msra.mxu0 %v826
  %2281 = vmatprep.subr.mxu0 0.0
  %2282 = vmatpush1.msra.mxu0 %v827
  %2283 = vmatprep.subr.mxu0 0.0
  %2284 = vmatpush1.msra.mxu0 %v828
  %2285 = vmatprep.subr.mxu0 0.0
  %2286 = vmatpush1.msra.mxu0 %v829
  %2287 = vmatprep.subr.mxu0 0.0
  %2288 = vmatpush1.msra.mxu0 %v830
  %2289 = vmatprep.subr.mxu0 0.0
  %2290 = vmatpush1.msra.mxu0 %v831
  %2291 = vmatprep.subr.mxu0 0.0
  %2292 = vmatpush1.msra.mxu0 %v832
  %2293 = vmatprep.subr.mxu0 0.0
  %2294 = vmatpush1.msra.mxu0 %v833
  %2295 = vmatprep.subr.mxu0 0.0
  %2296 = vmatpush1.msra.mxu0 %v834
  %2297 = vmatprep.subr.mxu0 0.0
  %2298 = vmatpush1.msra.mxu0 %v835
  %2299 = vmatprep.subr.mxu0 0.0
  %2300 = vmatpush1.msra.mxu0 %v836
  %2301 = vmatprep.subr.mxu0 0.0
  %2302 = vmatpush1.msra.mxu0 %v837
  %2303 = vmatprep.subr.mxu0 0.0
  %2304 = vmatpush1.msra.mxu0 %v838
  %2305 = vmatprep.subr.mxu0 0.0
  %2306 = vmatpush1.msra.mxu0 %v839
  %2307 = vmatprep.subr.mxu0 0.0
  %2308 = vmatpush1.msra.mxu0 %v840
  %2309 = vmatprep.subr.mxu0 0.0
  %2310 = vmatpush1.msra.mxu0 %v841
  %2311 = vmatprep.subr.mxu0 0.0
  %2312 = vmatpush1.msra.mxu0 %v842
  %2313 = vmatprep.subr.mxu0 0.0
  %2314 = vmatpush1.msra.mxu0 %v843
  %2315 = vmatprep.subr.mxu0 0.0
  %2316 = vmatpush1.msra.mxu0 %v844
  %2317 = vmatprep.subr.mxu0 0.0
  %2318 = vmatpush1.msra.mxu0 %v845
  %2319 = vmatprep.subr.mxu0 0.0
  %2320 = vmatpush1.msra.mxu0 %v846
  %2321 = vmatprep.subr.mxu0 0.0
  %2322 = vmatpush1.msra.mxu0 %v847
  %2323 = vmatprep.mubr.f32.mxu0 %v625
  %2324 = vmatmul.mubr.f32.gmra.mrb[0].mxu0 %v624
  %v2325 = vpop.f32.mrb[0].mxu0
  %v2326 = vadd.f32 %v1941, %v2325
  %v2327 = vpop.f32.mrb[0].mxu0
  %2328 = vmatprep.mubr.f32.mxu0 %v628
  %2329 = vmatmul.mubr.f32.gmra.mrb[0].mxu0 %v627
  %v2330 = vpop.f32.mrb[0].mxu0
  %v2331 = vadd.f32 %v1946, %v2330
  %v2332 = vpop.f32.mrb[0].mxu0
  %2333 = vmatprep.mubr.f32.mxu0 %v631
  %2334 = vmatmul.mubr.f32.gmra.mrb[0].mxu0 %v630
  %v2335 = vpop.f32.mrb[0].mxu0
  %v2336 = vadd.f32 %v1951, %v2335
  %v2337 = vpop.f32.mrb[0].mxu0
  %2338 = vmatprep.mubr.f32.mxu0 %v634
  %2339 = vmatmul.mubr.f32.gmra.mrb[0].mxu0 %v633
  %v2340 = vpop.f32.mrb[0].mxu0
  %v2341 = vadd.f32 %v1956, %v2340
  %v2342 = vpop.f32.mrb[0].mxu0
  %2343 = vmatprep.mubr.f32.mxu0 %v637
  %2344 = vmatmul.mubr.f32.gmra.mrb[0].mxu0 %v636
  %v2345 = vpop.f32.mrb[0].mxu0
  %v2346 = vadd.f32 %v1961, %v2345
  %v2347 = vpop.f32.mrb[0].mxu0
  %2348 = vmatprep.mubr.f32.mxu0 %v640
  %2349 = vmatmul.mubr.f32.gmra.mrb[0].mxu0 %v639
  %v2350 = vpop.f32.mrb[0].mxu0
  %v2351 = vadd.f32 %v1966, %v2350
  %v2352 = vpop.f32.mrb[0].mxu0
  %2353 = vmatprep.mubr.f32.mxu0 %v643
  %2354 = vmatmul.mubr.f32.gmra.mrb[0].mxu0 %v642
  %v2355 = vpop.f32.mrb[0].mxu0
  %v2356 = vadd.f32 %v1971, %v2355
  %v2357 = vpop.f32.mrb[0].mxu0
  %2358 = vmatprep.mubr.f32.mxu0 %v646
  %2359 = vmatmul.mubr.f32.gmra.mrb[0].mxu0 %v645
  %v2360 = vpop.f32.mrb[0].mxu0
  %v2361 = vadd.f32 %v1976, %v2360
  %v2362 = vpop.f32.mrb[0].mxu0
  %2363 = vmatprep.mubr.f32.mxu0 %v649
  %2364 = vmatmul.mubr.f32.gmra.mrb[0].mxu0 %v648
  %v2365 = vpop.f32.mrb[0].mxu0
  %v2366 = vadd.f32 %v1981, %v2365
  %v2367 = vpop.f32.mrb[0].mxu0
  %2368 = vmatprep.mubr.f32.mxu0 %v652
  %2369 = vmatmul.mubr.f32.gmra.mrb[0].mxu0 %v651
  %v2370 = vpop.f32.mrb[0].mxu0
  %v2371 = vadd.f32 %v1986, %v2370
  %v2372 = vpop.f32.mrb[0].mxu0
  %2373 = vmatprep.mubr.f32.mxu0 %v655
  %2374 = vmatmul.mubr.f32.gmra.mrb[0].mxu0 %v654
  %v2375 = vpop.f32.mrb[0].mxu0
  %v2376 = vadd.f32 %v1991, %v2375
  %v2377 = vpop.f32.mrb[0].mxu0
  %2378 = vmatprep.mubr.f32.mxu0 %v658
  %2379 = vmatmul.mubr.f32.gmra.mrb[0].mxu0 %v657
  %v2380 = vpop.f32.mrb[0].mxu0
  %v2381 = vadd.f32 %v1996, %v2380
  %v2382 = vpop.f32.mrb[0].mxu0
  %2383 = vmatprep.mubr.f32.mxu0 %v661
  %2384 = vmatmul.mubr.f32.gmra.mrb[0].mxu0 %v660
  %v2385 = vpop.f32.mrb[0].mxu0
  %v2386 = vadd.f32 %v2001, %v2385
  %v2387 = vpop.f32.mrb[0].mxu0
  %2388 = vmatprep.mubr.f32.mxu0 %v664
  %2389 = vmatmul.mubr.f32.gmra.mrb[0].mxu0 %v663
  %v2390 = vpop.f32.mrb[0].mxu0
  %v2391 = vadd.f32 %v2006, %v2390
  %v2392 = vpop.f32.mrb[0].mxu0
  %2393 = vmatprep.mubr.f32.mxu0 %v667
  %2394 = vmatmul.mubr.f32.gmra.mrb[0].mxu0 %v666
  %v2395 = vpop.f32.mrb[0].mxu0
  %v2396 = vadd.f32 %v2011, %v2395
  %v2397 = vpop.f32.mrb[0].mxu0
  %2398 = vmatprep.mubr.f32.mxu0 %v670
  %2399 = vmatmul.mubr.f32.gmra.mrb[0].mxu0 %v669
  %v2400 = vpop.f32.mrb[0].mxu0
  %v2401 = vadd.f32 %v2016, %v2400
  %v2402 = vpop.f32.mrb[0].mxu0
  %2403 = vmatprep.mubr.f32.mxu0 %v673
  %2404 = vmatmul.mubr.f32.gmra.mrb[0].mxu0 %v672
  %v2405 = vpop.f32.mrb[0].mxu0
  %v2406 = vadd.f32 %v2021, %v2405
  %v2407 = vpop.f32.mrb[0].mxu0
  %2408 = vmatprep.mubr.f32.mxu0 %v676
  %2409 = vmatmul.mubr.f32.gmra.mrb[0].mxu0 %v675
  %v2410 = vpop.f32.mrb[0].mxu0
  %v2411 = vadd.f32 %v2026, %v2410
  %v2412 = vpop.f32.mrb[0].mxu0
  %2413 = vmatprep.mubr.f32.mxu0 %v679
  %2414 = vmatmul.mubr.f32.gmra.mrb[0].mxu0 %v678
  %v2415 = vpop.f32.mrb[0].mxu0
  %v2416 = vadd.f32 %v2031, %v2415
  %v2417 = vpop.f32.mrb[0].mxu0
  %2418 = vmatprep.mubr.f32.mxu0 %v682
  %2419 = vmatmul.mubr.f32.gmra.mrb[0].mxu0 %v681
  %v2420 = vpop.f32.mrb[0].mxu0
  %v2421 = vadd.f32 %v2036, %v2420
  %v2422 = vpop.f32.mrb[0].mxu0
  %2423 = vmatprep.mubr.f32.mxu0 %v685
  %2424 = vmatmul.mubr.f32.gmra.mrb[0].mxu0 %v684
  %v2425 = vpop.f32.mrb[0].mxu0
  %v2426 = vadd.f32 %v2041, %v2425
  %v2427 = vpop.f32.mrb[0].mxu0
  %2428 = vmatprep.mubr.f32.mxu0 %v688
  %2429 = vmatmul.mubr.f32.gmra.mrb[0].mxu0 %v687
  %v2430 = vpop.f32.mrb[0].mxu0
  %v2431 = vadd.f32 %v2046, %v2430
  %v2432 = vpop.f32.mrb[0].mxu0
  %2433 = vmatprep.mubr.f32.mxu0 %v691
  %2434 = vmatmul.mubr.f32.gmra.mrb[0].mxu0 %v690
  %v2435 = vpop.f32.mrb[0].mxu0
  %v2436 = vadd.f32 %v2051, %v2435
  %v2437 = vpop.f32.mrb[0].mxu0
  %2438 = vmatprep.mubr.f32.mxu0 %v694
  %2439 = vmatmul.mubr.f32.gmra.mrb[0].mxu0 %v693
  %v2440 = vpop.f32.mrb[0].mxu0
  %v2441 = vadd.f32 %v2056, %v2440
  %v2442 = vpop.f32.mrb[0].mxu0
  %2443 = vmatprep.mubr.f32.mxu0 %v697
  %2444 = vmatmul.mubr.f32.gmra.mrb[0].mxu0 %v696
  %v2445 = vpop.f32.mrb[0].mxu0
  %v2446 = vadd.f32 %v2061, %v2445
  %v2447 = vpop.f32.mrb[0].mxu0
  %2448 = vmatprep.mubr.f32.mxu0 %v700
  %2449 = vmatmul.mubr.f32.gmra.mrb[0].mxu0 %v699
  %v2450 = vpop.f32.mrb[0].mxu0
  %v2451 = vadd.f32 %v2066, %v2450
  %v2452 = vpop.f32.mrb[0].mxu0
  %2453 = vmatprep.mubr.f32.mxu0 %v703
  %2454 = vmatmul.mubr.f32.gmra.mrb[0].mxu0 %v702
  %v2455 = vpop.f32.mrb[0].mxu0
  %v2456 = vadd.f32 %v2071, %v2455
  %v2457 = vpop.f32.mrb[0].mxu0
  %2458 = vmatprep.mubr.f32.mxu0 %v706
  %2459 = vmatmul.mubr.f32.gmra.mrb[0].mxu0 %v705
  %v2460 = vpop.f32.mrb[0].mxu0
  %v2461 = vadd.f32 %v2076, %v2460
  %v2462 = vpop.f32.mrb[0].mxu0
  %2463 = vmatprep.mubr.f32.mxu0 %v709
  %2464 = vmatmul.mubr.f32.gmra.mrb[0].mxu0 %v708
  %v2465 = vpop.f32.mrb[0].mxu0
  %v2466 = vadd.f32 %v2081, %v2465
  %v2467 = vpop.f32.mrb[0].mxu0
  %2468 = vmatprep.mubr.f32.mxu0 %v712
  %2469 = vmatmul.mubr.f32.gmra.mrb[0].mxu0 %v711
  %v2470 = vpop.f32.mrb[0].mxu0
  %v2471 = vadd.f32 %v2086, %v2470
  %v2472 = vpop.f32.mrb[0].mxu0
  %2473 = vmatprep.mubr.f32.mxu0 %v715
  %2474 = vmatmul.mubr.f32.gmra.mrb[0].mxu0 %v714
  %v2475 = vpop.f32.mrb[0].mxu0
  %v2476 = vadd.f32 %v2091, %v2475
  %v2477 = vpop.f32.mrb[0].mxu0
  %2478 = vmatprep.mubr.f32.mxu0 %v718
  %2479 = vmatmul.mubr.f32.gmra.mrb[0].mxu0 %v717
  %v2480 = vpop.f32.mrb[0].mxu0
  %v2481 = vadd.f32 %v2096, %v2480
  %v2482 = vpop.f32.mrb[0].mxu0
  %2483 = vmatprep.mubr.f32.mxu0 %v721
  %2484 = vmatmul.mubr.f32.gmra.mrb[0].mxu0 %v720
  %v2485 = vpop.f32.mrb[0].mxu0
  %v2486 = vadd.f32 %v2101, %v2485
  %v2487 = vpop.f32.mrb[0].mxu0
  %2488 = vmatprep.mubr.f32.mxu0 %v724
  %2489 = vmatmul.mubr.f32.gmra.mrb[0].mxu0 %v723
  %v2490 = vpop.f32.mrb[0].mxu0
  %v2491 = vadd.f32 %v2106, %v2490
  %v2492 = vpop.f32.mrb[0].mxu0
  %2493 = vmatprep.mubr.f32.mxu0 %v727
  %2494 = vmatmul.mubr.f32.gmra.mrb[0].mxu0 %v726
  %v2495 = vpop.f32.mrb[0].mxu0
  %v2496 = vadd.f32 %v2111, %v2495
  %v2497 = vpop.f32.mrb[0].mxu0
  %2498 = vmatprep.mubr.f32.mxu0 %v730
  %2499 = vmatmul.mubr.f32.gmra.mrb[0].mxu0 %v729
  %v2500 = vpop.f32.mrb[0].mxu0
  %v2501 = vadd.f32 %v2116, %v2500
  %v2502 = vpop.f32.mrb[0].mxu0
  %2503 = vmatprep.mubr.f32.mxu0 %v733
  %2504 = vmatmul.mubr.f32.gmra.mrb[0].mxu0 %v732
  %v2505 = vpop.f32.mrb[0].mxu0
  %v2506 = vadd.f32 %v2121, %v2505
  %v2507 = vpop.f32.mrb[0].mxu0
  %2508 = vmatprep.mubr.f32.mxu0 %v736
  %2509 = vmatmul.mubr.f32.gmra.mrb[0].mxu0 %v735
  %v2510 = vpop.f32.mrb[0].mxu0
  %v2511 = vadd.f32 %v2126, %v2510
  %v2512 = vpop.f32.mrb[0].mxu0
  %2513 = vmatprep.mubr.f32.mxu0 %v739
  %2514 = vmatmul.mubr.f32.gmra.mrb[0].mxu0 %v738
  %v2515 = vpop.f32.mrb[0].mxu0
  %v2516 = vadd.f32 %v2131, %v2515
  %v2517 = vpop.f32.mrb[0].mxu0
  %2518 = vmatprep.mubr.f32.mxu0 %v742
  %2519 = vmatmul.mubr.f32.gmra.mrb[0].mxu0 %v741
  %v2520 = vpop.f32.mrb[0].mxu0
  %v2521 = vadd.f32 %v2136, %v2520
  %v2522 = vpop.f32.mrb[0].mxu0
  %2523 = vmatprep.mubr.f32.mxu0 %v745
  %2524 = vmatmul.mubr.f32.gmra.mrb[0].mxu0 %v744
  %v2525 = vpop.f32.mrb[0].mxu0
  %v2526 = vadd.f32 %v2141, %v2525
  %v2527 = vpop.f32.mrb[0].mxu0
  %2528 = vmatprep.mubr.f32.mxu0 %v748
  %2529 = vmatmul.mubr.f32.gmra.mrb[0].mxu0 %v747
  %v2530 = vpop.f32.mrb[0].mxu0
  %v2531 = vadd.f32 %v2146, %v2530
  %v2532 = vpop.f32.mrb[0].mxu0
  %2533 = vmatprep.mubr.f32.mxu0 %v751
  %2534 = vmatmul.mubr.f32.gmra.mrb[0].mxu0 %v750
  %v2535 = vpop.f32.mrb[0].mxu0
  %v2536 = vadd.f32 %v2151, %v2535
  %v2537 = vpop.f32.mrb[0].mxu0
  %2538 = vmatprep.mubr.f32.mxu0 %v754
  %2539 = vmatmul.mubr.f32.gmra.mrb[0].mxu0 %v753
  %v2540 = vpop.f32.mrb[0].mxu0
  %v2541 = vadd.f32 %v2156, %v2540
  %v2542 = vpop.f32.mrb[0].mxu0
  %2543 = vmatprep.mubr.f32.mxu0 %v757
  %2544 = vmatmul.mubr.f32.gmra.mrb[0].mxu0 %v756
  %v2545 = vpop.f32.mrb[0].mxu0
  %v2546 = vadd.f32 %v2161, %v2545
  %v2547 = vpop.f32.mrb[0].mxu0
  %2548 = vmatprep.mubr.f32.mxu0 %v760
  %2549 = vmatmul.mubr.f32.gmra.mrb[0].mxu0 %v759
  %v2550 = vpop.f32.mrb[0].mxu0
  %v2551 = vadd.f32 %v2166, %v2550
  %v2552 = vpop.f32.mrb[0].mxu0
  %2553 = vmatprep.mubr.f32.mxu0 %v763
  %2554 = vmatmul.mubr.f32.gmra.mrb[0].mxu0 %v762
  %v2555 = vpop.f32.mrb[0].mxu0
  %v2556 = vadd.f32 %v2171, %v2555
  %v2557 = vpop.f32.mrb[0].mxu0
  %2558 = vmatprep.mubr.f32.mxu0 %v766
  %2559 = vmatmul.mubr.f32.gmra.mrb[0].mxu0 %v765
  %v2560 = vpop.f32.mrb[0].mxu0
  %v2561 = vadd.f32 %v2176, %v2560
  %v2562 = vpop.f32.mrb[0].mxu0
  %2563 = vmatprep.mubr.f32.mxu0 %v769
  %2564 = vmatmul.mubr.f32.gmra.mrb[0].mxu0 %v768
  %v2565 = vpop.f32.mrb[0].mxu0
  %v2566 = vadd.f32 %v2181, %v2565
  %v2567 = vpop.f32.mrb[0].mxu0
  %2568 = vmatprep.mubr.f32.mxu0 %v772
  %2569 = vmatmul.mubr.f32.gmra.mrb[0].mxu0 %v771
  %v2570 = vpop.f32.mrb[0].mxu0
  %v2571 = vadd.f32 %v2186, %v2570
  %v2572 = vpop.f32.mrb[0].mxu0
  %2573 = vmatprep.mubr.f32.mxu0 %v775
  %2574 = vmatmul.mubr.f32.gmra.mrb[0].mxu0 %v774
  %v2575 = vpop.f32.mrb[0].mxu0
  %v2576 = vadd.f32 %v2191, %v2575
  %v2577 = vpop.f32.mrb[0].mxu0
  %2578 = vmatprep.mubr.f32.mxu0 %v778
  %2579 = vmatmul.mubr.f32.gmra.mrb[0].mxu0 %v777
  %v2580 = vpop.f32.mrb[0].mxu0
  %v2581 = vadd.f32 %v2196, %v2580
  %v2582 = vpop.f32.mrb[0].mxu0
  %2583 = vmatprep.mubr.f32.mxu0 %v781
  %2584 = vmatmul.mubr.f32.gmra.mrb[0].mxu0 %v780
  %v2585 = vpop.f32.mrb[0].mxu0
  %v2586 = vadd.f32 %v2201, %v2585
  %v2587 = vpop.f32.mrb[0].mxu0
  %2588 = vmatprep.mubr.f32.mxu0 %v784
  %2589 = vmatmul.mubr.f32.gmra.mrb[0].mxu0 %v783
  %v2590 = vpop.f32.mrb[0].mxu0
  %v2591 = vadd.f32 %v2206, %v2590
  %v2592 = vpop.f32.mrb[0].mxu0
  %2593 = vmatprep.mubr.f32.mxu0 %v787
  %2594 = vmatmul.mubr.f32.gmra.mrb[0].mxu0 %v786
  %v2595 = vpop.f32.mrb[0].mxu0
  %v2596 = vadd.f32 %v2211, %v2595
  %v2597 = vpop.f32.mrb[0].mxu0
  %2598 = vmatprep.mubr.f32.mxu0 %v790
  %2599 = vmatmul.mubr.f32.gmra.mrb[0].mxu0 %v789
  %v2600 = vpop.f32.mrb[0].mxu0
  %v2601 = vadd.f32 %v2216, %v2600
  %v2602 = vpop.f32.mrb[0].mxu0
  %2603 = vmatprep.mubr.f32.mxu0 %v793
  %2604 = vmatmul.mubr.f32.gmra.mrb[0].mxu0 %v792
  %v2605 = vpop.f32.mrb[0].mxu0
  %v2606 = vadd.f32 %v2221, %v2605
  %v2607 = vpop.f32.mrb[0].mxu0
  %2608 = vmatprep.mubr.f32.mxu0 %v796
  %2609 = vmatmul.mubr.f32.gmra.mrb[0].mxu0 %v795
  %v2610 = vpop.f32.mrb[0].mxu0
  %v2611 = vadd.f32 %v2226, %v2610
  %v2612 = vpop.f32.mrb[0].mxu0
  %2613 = vmatprep.mubr.f32.mxu0 %v799
  %2614 = vmatmul.mubr.f32.gmra.mrb[0].mxu0 %v798
  %v2615 = vpop.f32.mrb[0].mxu0
  %v2616 = vadd.f32 %v2231, %v2615
  %v2617 = vpop.f32.mrb[0].mxu0
  %2618 = vmatprep.mubr.f32.mxu0 %v802
  %2619 = vmatmul.mubr.f32.gmra.mrb[0].mxu0 %v801
  %v2620 = vpop.f32.mrb[0].mxu0
  %v2621 = vadd.f32 %v2236, %v2620
  %v2622 = vpop.f32.mrb[0].mxu0
  %2623 = vmatprep.mubr.f32.mxu0 %v805
  %2624 = vmatmul.mubr.f32.gmra.mrb[0].mxu0 %v804
  %v2625 = vpop.f32.mrb[0].mxu0
  %v2626 = vadd.f32 %v2241, %v2625
  %v2627 = vpop.f32.mrb[0].mxu0
  %2628 = vmatprep.mubr.f32.mxu0 %v808
  %2629 = vmatmul.mubr.f32.gmra.mrb[0].mxu0 %v807
  %v2630 = vpop.f32.mrb[0].mxu0
  %v2631 = vadd.f32 %v2246, %v2630
  %v2632 = vpop.f32.mrb[0].mxu0
  %2633 = vmatprep.mubr.f32.mxu0 %v811
  %2634 = vmatmul.mubr.f32.gmra.mrb[0].mxu0 %v810
  %v2635 = vpop.f32.mrb[0].mxu0
  %v2636 = vadd.f32 %v2251, %v2635
  %v2637 = vpop.f32.mrb[0].mxu0
  %2638 = vmatprep.mubr.f32.mxu0 %v814
  %2639 = vmatmul.mubr.f32.gmra.mrb[0].mxu0 %v813
  %v2640 = vpop.f32.mrb[0].mxu0
  %v2641 = vadd.f32 %v2256, %v2640
  %v2642 = vpop.f32.mrb[0].mxu0
  %2643 = vdwg.mxu0
  %2644 = vmatprep.subr.mxu0 0.0
  %2645 = vmatpush1.msra.mxu0 %v848
  %2646 = vmatprep.subr.mxu0 0.0
  %2647 = vmatpush1.msra.mxu0 %v849
  %2648 = vmatprep.subr.mxu0 0.0
  %2649 = vmatpush1.msra.mxu0 %v850
  %2650 = vmatprep.subr.mxu0 0.0
  %2651 = vmatpush1.msra.mxu0 %v851
  %2652 = vmatprep.subr.mxu0 0.0
  %2653 = vmatpush1.msra.mxu0 %v852
  %2654 = vmatprep.subr.mxu0 0.0
  %2655 = vmatpush1.msra.mxu0 %v853
  %2656 = vmatprep.subr.mxu0 0.0
  %2657 = vmatpush1.msra.mxu0 %v854
  %2658 = vmatprep.subr.mxu0 0.0
  %2659 = vmatpush1.msra.mxu0 %v855
  %2660 = vmatprep.subr.mxu0 0.0
  %2661 = vmatpush1.msra.mxu0 %v856
  %2662 = vmatprep.subr.mxu0 0.0
  %2663 = vmatpush1.msra.mxu0 %v857
  %2664 = vmatprep.subr.mxu0 0.0
  %2665 = vmatpush1.msra.mxu0 %v858
  %2666 = vmatprep.subr.mxu0 0.0
  %2667 = vmatpush1.msra.mxu0 %v859
  %2668 = vmatprep.subr.mxu0 0.0
  %2669 = vmatpush1.msra.mxu0 %v860
  %2670 = vmatprep.subr.mxu0 0.0
  %2671 = vmatpush1.msra.mxu0 %v861
  %2672 = vmatprep.subr.mxu0 0.0
  %2673 = vmatpush1.msra.mxu0 %v862
  %2674 = vmatprep.subr.mxu0 0.0
  %2675 = vmatpush1.msra.mxu0 %v863
  %2676 = vmatprep.subr.mxu0 0.0
  %2677 = vmatpush1.msra.mxu0 0.0
  %2678 = vmatprep.subr.mxu0 0.0
  %2679 = vmatpush1.msra.mxu0 0.0
  %2680 = vmatprep.subr.mxu0 0.0
  %2681 = vmatpush1.msra.mxu0 0.0
  %2682 = vmatprep.subr.mxu0 0.0
  %2683 = vmatpush1.msra.mxu0 0.0
  %2684 = vmatprep.subr.mxu0 0.0
  %2685 = vmatpush1.msra.mxu0 0.0
  %2686 = vmatprep.subr.mxu0 0.0
  %2687 = vmatpush1.msra.mxu0 0.0
  %2688 = vmatprep.subr.mxu0 0.0
  %2689 = vmatpush1.msra.mxu0 0.0
  %2690 = vmatprep.subr.mxu0 0.0
  %2691 = vmatpush1.msra.mxu0 0.0
  %2692 = vmatprep.subr.mxu0 0.0
  %2693 = vmatpush1.msra.mxu0 0.0
  %2694 = vmatprep.subr.mxu0 0.0
  %2695 = vmatpush1.msra.mxu0 0.0
  %2696 = vmatprep.subr.mxu0 0.0
  %2697 = vmatpush1.msra.mxu0 0.0
  %2698 = vmatprep.subr.mxu0 0.0
  %2699 = vmatpush1.msra.mxu0 0.0
  %2700 = vmatprep.subr.mxu0 0.0
  %2701 = vmatpush1.msra.mxu0 0.0
  %2702 = vmatprep.subr.mxu0 0.0
  %2703 = vmatpush1.msra.mxu0 0.0
  %2704 = vmatprep.subr.mxu0 0.0
  %2705 = vmatpush1.msra.mxu0 0.0
  %2706 = vmatprep.subr.mxu0 0.0
  %2707 = vmatpush1.msra.mxu0 0.0
  %2708 = vmatprep.mubr.f32.mxu0 0.0
  %2709 = vmatmul.mubr.f32.gmra.mrb[0].mxu0 %v626
  %v2710 = vpop.f32.mrb[0].mxu0
  %v2711 = vadd.f32 %v2326, %v2710
  %v2712 = vpop.f32.mrb[0].mxu0
  %2713 = vmatprep.mubr.f32.mxu0 0.0
  %2714 = vmatmul.mubr.f32.gmra.mrb[0].mxu0 %v629
  %v2715 = vpop.f32.mrb[0].mxu0
  %v2716 = vadd.f32 %v2331, %v2715
  %v2717 = vpop.f32.mrb[0].mxu0
  %2718 = vmatprep.mubr.f32.mxu0 0.0
  %2719 = vmatmul.mubr.f32.gmra.mrb[0].mxu0 %v632
  %v2720 = vpop.f32.mrb[0].mxu0
  %v2721 = vadd.f32 %v2336, %v2720
  %v2722 = vpop.f32.mrb[0].mxu0
  %2723 = vmatprep.mubr.f32.mxu0 0.0
  %2724 = vmatmul.mubr.f32.gmra.mrb[0].mxu0 %v635
  %v2725 = vpop.f32.mrb[0].mxu0
  %v2726 = vadd.f32 %v2341, %v2725
  %v2727 = vpop.f32.mrb[0].mxu0
  %2728 = vmatprep.mubr.f32.mxu0 0.0
  %2729 = vmatmul.mubr.f32.gmra.mrb[0].mxu0 %v638
  %v2730 = vpop.f32.mrb[0].mxu0
  %v2731 = vadd.f32 %v2346, %v2730
  %v2732 = vpop.f32.mrb[0].mxu0
  %2733 = vmatprep.mubr.f32.mxu0 0.0
  %2734 = vmatmul.mubr.f32.gmra.mrb[0].mxu0 %v641
  %v2735 = vpop.f32.mrb[0].mxu0
  %v2736 = vadd.f32 %v2351, %v2735
  %v2737 = vpop.f32.mrb[0].mxu0
  %2738 = vmatprep.mubr.f32.mxu0 0.0
  %2739 = vmatmul.mubr.f32.gmra.mrb[0].mxu0 %v644
  %v2740 = vpop.f32.mrb[0].mxu0
  %v2741 = vadd.f32 %v2356, %v2740
  %v2742 = vpop.f32.mrb[0].mxu0
  %2743 = vmatprep.mubr.f32.mxu0 0.0
  %2744 = vmatmul.mubr.f32.gmra.mrb[0].mxu0 %v647
  %v2745 = vpop.f32.mrb[0].mxu0
  %v2746 = vadd.f32 %v2361, %v2745
  %v2747 = vpop.f32.mrb[0].mxu0
  %2748 = vmatprep.mubr.f32.mxu0 0.0
  %2749 = vmatmul.mubr.f32.gmra.mrb[0].mxu0 %v650
  %v2750 = vpop.f32.mrb[0].mxu0
  %v2751 = vadd.f32 %v2366, %v2750
  %v2752 = vpop.f32.mrb[0].mxu0
  %2753 = vmatprep.mubr.f32.mxu0 0.0
  %2754 = vmatmul.mubr.f32.gmra.mrb[0].mxu0 %v653
  %v2755 = vpop.f32.mrb[0].mxu0
  %v2756 = vadd.f32 %v2371, %v2755
  %v2757 = vpop.f32.mrb[0].mxu0
  %2758 = vmatprep.mubr.f32.mxu0 0.0
  %2759 = vmatmul.mubr.f32.gmra.mrb[0].mxu0 %v656
  %v2760 = vpop.f32.mrb[0].mxu0
  %v2761 = vadd.f32 %v2376, %v2760
  %v2762 = vpop.f32.mrb[0].mxu0
  %2763 = vmatprep.mubr.f32.mxu0 0.0
  %2764 = vmatmul.mubr.f32.gmra.mrb[0].mxu0 %v659
  %v2765 = vpop.f32.mrb[0].mxu0
  %v2766 = vadd.f32 %v2381, %v2765
  %v2767 = vpop.f32.mrb[0].mxu0
  %2768 = vmatprep.mubr.f32.mxu0 0.0
  %2769 = vmatmul.mubr.f32.gmra.mrb[0].mxu0 %v662
  %v2770 = vpop.f32.mrb[0].mxu0
  %v2771 = vadd.f32 %v2386, %v2770
  %v2772 = vpop.f32.mrb[0].mxu0
  %2773 = vmatprep.mubr.f32.mxu0 0.0
  %2774 = vmatmul.mubr.f32.gmra.mrb[0].mxu0 %v665
  %v2775 = vpop.f32.mrb[0].mxu0
  %v2776 = vadd.f32 %v2391, %v2775
  %v2777 = vpop.f32.mrb[0].mxu0
  %2778 = vmatprep.mubr.f32.mxu0 0.0
  %2779 = vmatmul.mubr.f32.gmra.mrb[0].mxu0 %v668
  %v2780 = vpop.f32.mrb[0].mxu0
  %v2781 = vadd.f32 %v2396, %v2780
  %v2782 = vpop.f32.mrb[0].mxu0
  %2783 = vmatprep.mubr.f32.mxu0 0.0
  %2784 = vmatmul.mubr.f32.gmra.mrb[0].mxu0 %v671
  %v2785 = vpop.f32.mrb[0].mxu0
  %v2786 = vadd.f32 %v2401, %v2785
  %v2787 = vpop.f32.mrb[0].mxu0
  %2788 = vmatprep.mubr.f32.mxu0 0.0
  %2789 = vmatmul.mubr.f32.gmra.mrb[0].mxu0 %v674
  %v2790 = vpop.f32.mrb[0].mxu0
  %v2791 = vadd.f32 %v2406, %v2790
  %v2792 = vpop.f32.mrb[0].mxu0
  %2793 = vmatprep.mubr.f32.mxu0 0.0
  %2794 = vmatmul.mubr.f32.gmra.mrb[0].mxu0 %v677
  %v2795 = vpop.f32.mrb[0].mxu0
  %v2796 = vadd.f32 %v2411, %v2795
  %v2797 = vpop.f32.mrb[0].mxu0
  %2798 = vmatprep.mubr.f32.mxu0 0.0
  %2799 = vmatmul.mubr.f32.gmra.mrb[0].mxu0 %v680
  %v2800 = vpop.f32.mrb[0].mxu0
  %v2801 = vadd.f32 %v2416, %v2800
  %v2802 = vpop.f32.mrb[0].mxu0
  %2803 = vmatprep.mubr.f32.mxu0 0.0
  %2804 = vmatmul.mubr.f32.gmra.mrb[0].mxu0 %v683
  %v2805 = vpop.f32.mrb[0].mxu0
  %v2806 = vadd.f32 %v2421, %v2805
  %v2807 = vpop.f32.mrb[0].mxu0
  %2808 = vmatprep.mubr.f32.mxu0 0.0
  %2809 = vmatmul.mubr.f32.gmra.mrb[0].mxu0 %v686
  %v2810 = vpop.f32.mrb[0].mxu0
  %v2811 = vadd.f32 %v2426, %v2810
  %v2812 = vpop.f32.mrb[0].mxu0
  %2813 = vmatprep.mubr.f32.mxu0 0.0
  %2814 = vmatmul.mubr.f32.gmra.mrb[0].mxu0 %v689
  %v2815 = vpop.f32.mrb[0].mxu0
  %v2816 = vadd.f32 %v2431, %v2815
  %v2817 = vpop.f32.mrb[0].mxu0
  %2818 = vmatprep.mubr.f32.mxu0 0.0
  %2819 = vmatmul.mubr.f32.gmra.mrb[0].mxu0 %v692
  %v2820 = vpop.f32.mrb[0].mxu0
  %v2821 = vadd.f32 %v2436, %v2820
  %v2822 = vpop.f32.mrb[0].mxu0
  %2823 = vmatprep.mubr.f32.mxu0 0.0
  %2824 = vmatmul.mubr.f32.gmra.mrb[0].mxu0 %v695
  %v2825 = vpop.f32.mrb[0].mxu0
  %v2826 = vadd.f32 %v2441, %v2825
  %v2827 = vpop.f32.mrb[0].mxu0
  %2828 = vmatprep.mubr.f32.mxu0 0.0
  %2829 = vmatmul.mubr.f32.gmra.mrb[0].mxu0 %v698
  %v2830 = vpop.f32.mrb[0].mxu0
  %v2831 = vadd.f32 %v2446, %v2830
  %v2832 = vpop.f32.mrb[0].mxu0
  %2833 = vmatprep.mubr.f32.mxu0 0.0
  %2834 = vmatmul.mubr.f32.gmra.mrb[0].mxu0 %v701
  %v2835 = vpop.f32.mrb[0].mxu0
  %v2836 = vadd.f32 %v2451, %v2835
  %v2837 = vpop.f32.mrb[0].mxu0
  %2838 = vmatprep.mubr.f32.mxu0 0.0
  %2839 = vmatmul.mubr.f32.gmra.mrb[0].mxu0 %v704
  %v2840 = vpop.f32.mrb[0].mxu0
  %v2841 = vadd.f32 %v2456, %v2840
  %v2842 = vpop.f32.mrb[0].mxu0
  %2843 = vmatprep.mubr.f32.mxu0 0.0
  %2844 = vmatmul.mubr.f32.gmra.mrb[0].mxu0 %v707
  %v2845 = vpop.f32.mrb[0].mxu0
  %v2846 = vadd.f32 %v2461, %v2845
  %v2847 = vpop.f32.mrb[0].mxu0
  %2848 = vmatprep.mubr.f32.mxu0 0.0
  %2849 = vmatmul.mubr.f32.gmra.mrb[0].mxu0 %v710
  %v2850 = vpop.f32.mrb[0].mxu0
  %v2851 = vadd.f32 %v2466, %v2850
  %v2852 = vpop.f32.mrb[0].mxu0
  %2853 = vmatprep.mubr.f32.mxu0 0.0
  %2854 = vmatmul.mubr.f32.gmra.mrb[0].mxu0 %v713
  %v2855 = vpop.f32.mrb[0].mxu0
  %v2856 = vadd.f32 %v2471, %v2855
  %v2857 = vpop.f32.mrb[0].mxu0
  %2858 = vmatprep.mubr.f32.mxu0 0.0
  %2859 = vmatmul.mubr.f32.gmra.mrb[0].mxu0 %v716
  %v2860 = vpop.f32.mrb[0].mxu0
  %v2861 = vadd.f32 %v2476, %v2860
  %v2862 = vpop.f32.mrb[0].mxu0
  %2863 = vmatprep.mubr.f32.mxu0 0.0
  %2864 = vmatmul.mubr.f32.gmra.mrb[0].mxu0 %v719
  %v2865 = vpop.f32.mrb[0].mxu0
  %v2866 = vadd.f32 %v2481, %v2865
  %v2867 = vpop.f32.mrb[0].mxu0
  %2868 = vmatprep.mubr.f32.mxu0 0.0
  %2869 = vmatmul.mubr.f32.gmra.mrb[0].mxu0 %v722
  %v2870 = vpop.f32.mrb[0].mxu0
  %v2871 = vadd.f32 %v2486, %v2870
  %v2872 = vpop.f32.mrb[0].mxu0
  %2873 = vmatprep.mubr.f32.mxu0 0.0
  %2874 = vmatmul.mubr.f32.gmra.mrb[0].mxu0 %v725
  %v2875 = vpop.f32.mrb[0].mxu0
  %v2876 = vadd.f32 %v2491, %v2875
  %v2877 = vpop.f32.mrb[0].mxu0
  %2878 = vmatprep.mubr.f32.mxu0 0.0
  %2879 = vmatmul.mubr.f32.gmra.mrb[0].mxu0 %v728
  %v2880 = vpop.f32.mrb[0].mxu0
  %v2881 = vadd.f32 %v2496, %v2880
  %v2882 = vpop.f32.mrb[0].mxu0
  %2883 = vmatprep.mubr.f32.mxu0 0.0
  %2884 = vmatmul.mubr.f32.gmra.mrb[0].mxu0 %v731
  %v2885 = vpop.f32.mrb[0].mxu0
  %v2886 = vadd.f32 %v2501, %v2885
  %v2887 = vpop.f32.mrb[0].mxu0
  %2888 = vmatprep.mubr.f32.mxu0 0.0
  %2889 = vmatmul.mubr.f32.gmra.mrb[0].mxu0 %v734
  %v2890 = vpop.f32.mrb[0].mxu0
  %v2891 = vadd.f32 %v2506, %v2890
  %v2892 = vpop.f32.mrb[0].mxu0
  %2893 = vmatprep.mubr.f32.mxu0 0.0
  %2894 = vmatmul.mubr.f32.gmra.mrb[0].mxu0 %v737
  %v2895 = vpop.f32.mrb[0].mxu0
  %v2896 = vadd.f32 %v2511, %v2895
  %v2897 = vpop.f32.mrb[0].mxu0
  %2898 = vmatprep.mubr.f32.mxu0 0.0
  %2899 = vmatmul.mubr.f32.gmra.mrb[0].mxu0 %v740
  %v2900 = vpop.f32.mrb[0].mxu0
  %v2901 = vadd.f32 %v2516, %v2900
  %v2902 = vpop.f32.mrb[0].mxu0
  %2903 = vmatprep.mubr.f32.mxu0 0.0
  %2904 = vmatmul.mubr.f32.gmra.mrb[0].mxu0 %v743
  %v2905 = vpop.f32.mrb[0].mxu0
  %v2906 = vadd.f32 %v2521, %v2905
  %v2907 = vpop.f32.mrb[0].mxu0
  %2908 = vmatprep.mubr.f32.mxu0 0.0
  %2909 = vmatmul.mubr.f32.gmra.mrb[0].mxu0 %v746
  %v2910 = vpop.f32.mrb[0].mxu0
  %v2911 = vadd.f32 %v2526, %v2910
  %v2912 = vpop.f32.mrb[0].mxu0
  %2913 = vmatprep.mubr.f32.mxu0 0.0
  %2914 = vmatmul.mubr.f32.gmra.mrb[0].mxu0 %v749
  %v2915 = vpop.f32.mrb[0].mxu0
  %v2916 = vadd.f32 %v2531, %v2915
  %v2917 = vpop.f32.mrb[0].mxu0
  %2918 = vmatprep.mubr.f32.mxu0 0.0
  %2919 = vmatmul.mubr.f32.gmra.mrb[0].mxu0 %v752
  %v2920 = vpop.f32.mrb[0].mxu0
  %v2921 = vadd.f32 %v2536, %v2920
  %v2922 = vpop.f32.mrb[0].mxu0
  %2923 = vmatprep.mubr.f32.mxu0 0.0
  %2924 = vmatmul.mubr.f32.gmra.mrb[0].mxu0 %v755
  %v2925 = vpop.f32.mrb[0].mxu0
  %v2926 = vadd.f32 %v2541, %v2925
  %v2927 = vpop.f32.mrb[0].mxu0
  %2928 = vmatprep.mubr.f32.mxu0 0.0
  %2929 = vmatmul.mubr.f32.gmra.mrb[0].mxu0 %v758
  %v2930 = vpop.f32.mrb[0].mxu0
  %v2931 = vadd.f32 %v2546, %v2930
  %v2932 = vpop.f32.mrb[0].mxu0
  %2933 = vmatprep.mubr.f32.mxu0 0.0
  %2934 = vmatmul.mubr.f32.gmra.mrb[0].mxu0 %v761
  %v2935 = vpop.f32.mrb[0].mxu0
  %v2936 = vadd.f32 %v2551, %v2935
  %v2937 = vpop.f32.mrb[0].mxu0
  %2938 = vmatprep.mubr.f32.mxu0 0.0
  %2939 = vmatmul.mubr.f32.gmra.mrb[0].mxu0 %v764
  %v2940 = vpop.f32.mrb[0].mxu0
  %v2941 = vadd.f32 %v2556, %v2940
  %v2942 = vpop.f32.mrb[0].mxu0
  %2943 = vmatprep.mubr.f32.mxu0 0.0
  %2944 = vmatmul.mubr.f32.gmra.mrb[0].mxu0 %v767
  %v2945 = vpop.f32.mrb[0].mxu0
  %v2946 = vadd.f32 %v2561, %v2945
  %v2947 = vpop.f32.mrb[0].mxu0
  %2948 = vmatprep.mubr.f32.mxu0 0.0
  %2949 = vmatmul.mubr.f32.gmra.mrb[0].mxu0 %v770
  %v2950 = vpop.f32.mrb[0].mxu0
  %v2951 = vadd.f32 %v2566, %v2950
  %v2952 = vpop.f32.mrb[0].mxu0
  %2953 = vmatprep.mubr.f32.mxu0 0.0
  %2954 = vmatmul.mubr.f32.gmra.mrb[0].mxu0 %v773
  %v2955 = vpop.f32.mrb[0].mxu0
  %v2956 = vadd.f32 %v2571, %v2955
  %v2957 = vpop.f32.mrb[0].mxu0
  %2958 = vmatprep.mubr.f32.mxu0 0.0
  %2959 = vmatmul.mubr.f32.gmra.mrb[0].mxu0 %v776
  %v2960 = vpop.f32.mrb[0].mxu0
  %v2961 = vadd.f32 %v2576, %v2960
  %v2962 = vpop.f32.mrb[0].mxu0
  %2963 = vmatprep.mubr.f32.mxu0 0.0
  %2964 = vmatmul.mubr.f32.gmra.mrb[0].mxu0 %v779
  %v2965 = vpop.f32.mrb[0].mxu0
  %v2966 = vadd.f32 %v2581, %v2965
  %v2967 = vpop.f32.mrb[0].mxu0
  %2968 = vmatprep.mubr.f32.mxu0 0.0
  %2969 = vmatmul.mubr.f32.gmra.mrb[0].mxu0 %v782
  %v2970 = vpop.f32.mrb[0].mxu0
  %v2971 = vadd.f32 %v2586, %v2970
  %v2972 = vpop.f32.mrb[0].mxu0
  %2973 = vmatprep.mubr.f32.mxu0 0.0
  %2974 = vmatmul.mubr.f32.gmra.mrb[0].mxu0 %v785
  %v2975 = vpop.f32.mrb[0].mxu0
  %v2976 = vadd.f32 %v2591, %v2975
  %v2977 = vpop.f32.mrb[0].mxu0
  %2978 = vmatprep.mubr.f32.mxu0 0.0
  %2979 = vmatmul.mubr.f32.gmra.mrb[0].mxu0 %v788
  %v2980 = vpop.f32.mrb[0].mxu0
  %v2981 = vadd.f32 %v2596, %v2980
  %v2982 = vpop.f32.mrb[0].mxu0
  %2983 = vmatprep.mubr.f32.mxu0 0.0
  %2984 = vmatmul.mubr.f32.gmra.mrb[0].mxu0 %v791
  %v2985 = vpop.f32.mrb[0].mxu0
  %v2986 = vadd.f32 %v2601, %v2985
  %v2987 = vpop.f32.mrb[0].mxu0
  %2988 = vmatprep.mubr.f32.mxu0 0.0
  %2989 = vmatmul.mubr.f32.gmra.mrb[0].mxu0 %v794
  %v2990 = vpop.f32.mrb[0].mxu0
  %v2991 = vadd.f32 %v2606, %v2990
  %v2992 = vpop.f32.mrb[0].mxu0
  %2993 = vmatprep.mubr.f32.mxu0 0.0
  %2994 = vmatmul.mubr.f32.gmra.mrb[0].mxu0 %v797
  %v2995 = vpop.f32.mrb[0].mxu0
  %v2996 = vadd.f32 %v2611, %v2995
  %v2997 = vpop.f32.mrb[0].mxu0
  %2998 = vmatprep.mubr.f32.mxu0 0.0
  %2999 = vmatmul.mubr.f32.gmra.mrb[0].mxu0 %v800
  %v3000 = vpop.f32.mrb[0].mxu0
  %v3001 = vadd.f32 %v2616, %v3000
  %v3002 = vpop.f32.mrb[0].mxu0
  %3003 = vmatprep.mubr.f32.mxu0 0.0
  %3004 = vmatmul.mubr.f32.gmra.mrb[0].mxu0 %v803
  %v3005 = vpop.f32.mrb[0].mxu0
  %v3006 = vadd.f32 %v2621, %v3005
  %v3007 = vpop.f32.mrb[0].mxu0
  %3008 = vmatprep.mubr.f32.mxu0 0.0
  %3009 = vmatmul.mubr.f32.gmra.mrb[0].mxu0 %v806
  %v3010 = vpop.f32.mrb[0].mxu0
  %v3011 = vadd.f32 %v2626, %v3010
  %v3012 = vpop.f32.mrb[0].mxu0
  %3013 = vmatprep.mubr.f32.mxu0 0.0
  %3014 = vmatmul.mubr.f32.gmra.mrb[0].mxu0 %v809
  %v3015 = vpop.f32.mrb[0].mxu0
  %v3016 = vadd.f32 %v2631, %v3015
  %v3017 = vpop.f32.mrb[0].mxu0
  %3018 = vmatprep.mubr.f32.mxu0 0.0
  %3019 = vmatmul.mubr.f32.gmra.mrb[0].mxu0 %v812
  %v3020 = vpop.f32.mrb[0].mxu0
  %v3021 = vadd.f32 %v2636, %v3020
  %v3022 = vpop.f32.mrb[0].mxu0
  %3023 = vmatprep.mubr.f32.mxu0 0.0
  %3024 = vmatmul.mubr.f32.gmra.mrb[0].mxu0 %v815
  %v3025 = vpop.f32.mrb[0].mxu0
  %v3026 = vadd.f32 %v2641, %v3025
  %v3027 = vpop.f32.mrb[0].mxu0
  %3028 = vdwg.mxu0
  %s3029 = scalar_lea.vmem [#allocation2], 48
  %v3030 = vld [vmem:[%s3029] sm:$0xff]
  %v3031 = vld [vmem:[%s3029 + $0x8] sm:$0xff]
  %v3032 = vld [vmem:[%s3029 + $0x18] sm:$0xff]
  %v3033 = vld [vmem:[%s3029 + $0x20] sm:$0xff]
  %v3034 = vld [vmem:[%s3029 + $0x30] sm:$0xff]
  %v3035 = vld [vmem:[%s3029 + $0x38] sm:$0xff]
  %v3036 = vld [vmem:[%s3029 + $0x48] sm:$0xff]
  %v3037 = vld [vmem:[%s3029 + $0x50] sm:$0xff]
  %v3038 = vld [vmem:[%s3029 + $0x60] sm:$0xff]
  %v3039 = vld [vmem:[%s3029 + $0x68] sm:$0xff]
  %v3040 = vld [vmem:[%s3029 + $0x78] sm:$0xff]
  %v3041 = vld [vmem:[%s3029 + $0x80] sm:$0xff]
  %v3042 = vld [vmem:[%s3029 + $0x90] sm:$0xff]
  %v3043 = vld [vmem:[%s3029 + $0x98] sm:$0xff]
  %v3044 = vld [vmem:[%s3029 + $0xa8] sm:$0xff]
  %v3045 = vld [vmem:[%s3029 + $0xb0] sm:$0xff]
  %v3046 = vld [vmem:[%s3029 + $0xc0] sm:$0xff]
  %v3047 = vld [vmem:[%s3029 + $0xc8] sm:$0xff]
  %v3048 = vld [vmem:[%s3029 + $0xd8] sm:$0xff]
  %v3049 = vld [vmem:[%s3029 + $0xe0] sm:$0xff]
  %v3050 = vld [vmem:[%s3029 + $0xf0] sm:$0xff]
  %v3051 = vld [vmem:[%s3029 + $0xf8] sm:$0xff]
  %v3052 = vld [vmem:[%s3029 + $0x108] sm:$0xff]
  %v3053 = vld [vmem:[%s3029 + $0x110] sm:$0xff]
  %v3054 = vld [vmem:[%s3029 + $0x120] sm:$0xff]
  %v3055 = vld [vmem:[%s3029 + $0x128] sm:$0xff]
  %v3056 = vld [vmem:[%s3029 + $0x138] sm:$0xff]
  %v3057 = vld [vmem:[%s3029 + $0x140] sm:$0xff]
  %v3058 = vld [vmem:[%s3029 + $0x150] sm:$0xff]
  %v3059 = vld [vmem:[%s3029 + $0x158] sm:$0xff]
  %v3060 = vld [vmem:[%s3029 + $0x168] sm:$0xff]
  %v3061 = vld [vmem:[%s3029 + $0x170] sm:$0xff]
  %v3062 = vld [vmem:[%s3029 + $0x1b0] sm:$0xff]
  %v3063 = vld [vmem:[%s3029 + $0x1b8] sm:$0xff]
  %v3064 = vld [vmem:[%s3029 + $0x1c8] sm:$0xff]
  %v3065 = vld [vmem:[%s3029 + $0x1d0] sm:$0xff]
  %v3066 = vld [vmem:[%s3029 + $0x1e0] sm:$0xff]
  %v3067 = vld [vmem:[%s3029 + $0x1e8] sm:$0xff]
  %v3068 = vld [vmem:[%s3029 + $0x1f8] sm:$0xff]
  %v3069 = vld [vmem:[%s3029 + $0x200] sm:$0xff]
  %v3070 = vld [vmem:[%s3029 + $0x210] sm:$0xff]
  %v3071 = vld [vmem:[%s3029 + $0x218] sm:$0xff]
  %v3072 = vld [vmem:[%s3029 + $0x228] sm:$0xff]
  %v3073 = vld [vmem:[%s3029 + $0x230] sm:$0xff]
  %v3074 = vld [vmem:[%s3029 + $0x240] sm:$0xff]
  %v3075 = vld [vmem:[%s3029 + $0x248] sm:$0xff]
  %v3076 = vld [vmem:[%s3029 + $0x258] sm:$0xff]
  %v3077 = vld [vmem:[%s3029 + $0x260] sm:$0xff]
  %v3078 = vld [vmem:[%s3029 + $0x270] sm:$0xff]
  %v3079 = vld [vmem:[%s3029 + $0x278] sm:$0xff]
  %v3080 = vld [vmem:[%s3029 + $0x288] sm:$0xff]
  %v3081 = vld [vmem:[%s3029 + $0x290] sm:$0xff]
  %v3082 = vld [vmem:[%s3029 + $0x2a0] sm:$0xff]
  %v3083 = vld [vmem:[%s3029 + $0x2a8] sm:$0xff]
  %v3084 = vld [vmem:[%s3029 + $0x2b8] sm:$0xff]
  %v3085 = vld [vmem:[%s3029 + $0x2c0] sm:$0xff]
  %v3086 = vld [vmem:[%s3029 + $0x2d0] sm:$0xff]
  %v3087 = vld [vmem:[%s3029 + $0x2d8] sm:$0xff]
  %v3088 = vld [vmem:[%s3029 + $0x2e8] sm:$0xff]
  %v3089 = vld [vmem:[%s3029 + $0x2f0] sm:$0xff]
  %v3090 = vld [vmem:[%s3029 + $0x300] sm:$0xff]
  %v3091 = vld [vmem:[%s3029 + $0x308] sm:$0xff]
  %v3092 = vld [vmem:[%s3029 + $0x318] sm:$0xff]
  %v3093 = vld [vmem:[%s3029 + $0x320] sm:$0xff]
  %3094 = vst [vmem:[#allocation3] sm:$0xff] %v3030
  %3095 = vst [vmem:[#allocation3 + $0x18] sm:$0xff] %v3031
  %3096 = vst [vmem:[#allocation3 + $0x30] sm:$0xff] %v3032
  %3097 = vst [vmem:[#allocation3 + $0x48] sm:$0xff] %v3033
  %3098 = vst [vmem:[#allocation3 + $0x60] sm:$0xff] %v3034
  %3099 = vst [vmem:[#allocation3 + $0x78] sm:$0xff] %v3035
  %3100 = vst [vmem:[#allocation3 + $0x90] sm:$0xff] %v3036
  %3101 = vst [vmem:[#allocation3 + $0xa8] sm:$0xff] %v3037
  %3102 = vst [vmem:[#allocation3 + $0xc0] sm:$0xff] %v3038
  %3103 = vst [vmem:[#allocation3 + $0xd8] sm:$0xff] %v3039
  %3104 = vst [vmem:[#allocation3 + $0xf0] sm:$0xff] %v3040
  %3105 = vst [vmem:[#allocation3 + $0x108] sm:$0xff] %v3041
  %3106 = vst [vmem:[#allocation3 + $0x120] sm:$0xff] %v3042
  %3107 = vst [vmem:[#allocation3 + $0x138] sm:$0xff] %v3043
  %3108 = vst [vmem:[#allocation3 + $0x150] sm:$0xff] %v3044
  %3109 = vst [vmem:[#allocation3 + $0x168] sm:$0xff] %v3045
  %3110 = vst [vmem:[#allocation3 + $0x180] sm:$0xff] %v3046
  %3111 = vst [vmem:[#allocation3 + $0x198] sm:$0xff] %v3047
  %3112 = vst [vmem:[#allocation3 + $0x1b0] sm:$0xff] %v3048
  %3113 = vst [vmem:[#allocation3 + $0x1c8] sm:$0xff] %v3049
  %3114 = vst [vmem:[#allocation3 + $0x1e0] sm:$0xff] %v3050
  %3115 = vst [vmem:[#allocation3 + $0x1f8] sm:$0xff] %v3051
  %3116 = vst [vmem:[#allocation3 + $0x210] sm:$0xff] %v3052
  %3117 = vst [vmem:[#allocation3 + $0x228] sm:$0xff] %v3053
  %3118 = vst [vmem:[#allocation3 + $0x240] sm:$0xff] %v3054
  %3119 = vst [vmem:[#allocation3 + $0x258] sm:$0xff] %v3055
  %3120 = vst [vmem:[#allocation3 + $0x270] sm:$0xff] %v3056
  %3121 = vst [vmem:[#allocation3 + $0x288] sm:$0xff] %v3057
  %3122 = vst [vmem:[#allocation3 + $0x2a0] sm:$0xff] %v3058
  %3123 = vst [vmem:[#allocation3 + $0x2b8] sm:$0xff] %v3059
  %3124 = vst [vmem:[#allocation3 + $0x2d0] sm:$0xff] %v3060
  %3125 = vst [vmem:[#allocation3 + $0x2e8] sm:$0xff] %v3061
  %3126 = vst [vmem:[#allocation3 + $0x300] sm:$0xff] %v3062
  %3127 = vst [vmem:[#allocation3 + $0x318] sm:$0xff] %v3063
  %3128 = vst [vmem:[#allocation3 + $0x330] sm:$0xff] %v3064
  %3129 = vst [vmem:[#allocation3 + $0x348] sm:$0xff] %v3065
  %3130 = vst [vmem:[#allocation3 + $0x360] sm:$0xff] %v3066
  %3131 = vst [vmem:[#allocation3 + $0x378] sm:$0xff] %v3067
  %3132 = vst [vmem:[#allocation3 + $0x390] sm:$0xff] %v3068
  %3133 = vst [vmem:[#allocation3 + $0x3a8] sm:$0xff] %v3069
  %3134 = vst [vmem:[#allocation3 + $0x3c0] sm:$0xff] %v3070
  %3135 = vst [vmem:[#allocation3 + $0x3d8] sm:$0xff] %v3071
  %3136 = vst [vmem:[#allocation3 + $0x3f0] sm:$0xff] %v3072
  %3137 = vst [vmem:[#allocation3 + $0x408] sm:$0xff] %v3073
  %3138 = vst [vmem:[#allocation3 + $0x420] sm:$0xff] %v3074
  %3139 = vst [vmem:[#allocation3 + $0x438] sm:$0xff] %v3075
  %3140 = vst [vmem:[#allocation3 + $0x450] sm:$0xff] %v3076
  %3141 = vst [vmem:[#allocation3 + $0x468] sm:$0xff] %v3077
  %3142 = vst [vmem:[#allocation3 + $0x480] sm:$0xff] %v3078
  %3143 = vst [vmem:[#allocation3 + $0x498] sm:$0xff] %v3079
  %3144 = vst [vmem:[#allocation3 + $0x4b0] sm:$0xff] %v3080
  %3145 = vst [vmem:[#allocation3 + $0x4c8] sm:$0xff] %v3081
  %3146 = vst [vmem:[#allocation3 + $0x4e0] sm:$0xff] %v3082
  %3147 = vst [vmem:[#allocation3 + $0x4f8] sm:$0xff] %v3083
  %3148 = vst [vmem:[#allocation3 + $0x510] sm:$0xff] %v3084
  %3149 = vst [vmem:[#allocation3 + $0x528] sm:$0xff] %v3085
  %3150 = vst [vmem:[#allocation3 + $0x540] sm:$0xff] %v3086
  %3151 = vst [vmem:[#allocation3 + $0x558] sm:$0xff] %v3087
  %3152 = vst [vmem:[#allocation3 + $0x570] sm:$0xff] %v3088
  %3153 = vst [vmem:[#allocation3 + $0x588] sm:$0xff] %v3089
  %3154 = vst [vmem:[#allocation3 + $0x5a0] sm:$0xff] %v3090
  %3155 = vst [vmem:[#allocation3 + $0x5b8] sm:$0xff] %v3091
  %3156 = vst [vmem:[#allocation3 + $0x5d0] sm:$0xff] %v3092
  %3157 = vst [vmem:[#allocation3 + $0x5e8] sm:$0xff] %v3093
  %v3158 = vld [vmem:[%s3029 + $0x1] sm:$0xff]
  %v3159 = vld [vmem:[%s3029 + $0x9] sm:$0xff]
  %v3160 = vld [vmem:[%s3029 + $0x19] sm:$0xff]
  %v3161 = vld [vmem:[%s3029 + $0x21] sm:$0xff]
  %v3162 = vld [vmem:[%s3029 + $0x31] sm:$0xff]
  %v3163 = vld [vmem:[%s3029 + $0x39] sm:$0xff]
  %v3164 = vld [vmem:[%s3029 + $0x49] sm:$0xff]
  %v3165 = vld [vmem:[%s3029 + $0x51] sm:$0xff]
  %v3166 = vld [vmem:[%s3029 + $0x61] sm:$0xff]
  %v3167 = vld [vmem:[%s3029 + $0x69] sm:$0xff]
  %v3168 = vld [vmem:[%s3029 + $0x79] sm:$0xff]
  %v3169 = vld [vmem:[%s3029 + $0x81] sm:$0xff]
  %v3170 = vld [vmem:[%s3029 + $0x91] sm:$0xff]
  %v3171 = vld [vmem:[%s3029 + $0x99] sm:$0xff]
  %v3172 = vld [vmem:[%s3029 + $0xa9] sm:$0xff]
  %v3173 = vld [vmem:[%s3029 + $0xb1] sm:$0xff]
  %v3174 = vld [vmem:[%s3029 + $0xc1] sm:$0xff]
  %v3175 = vld [vmem:[%s3029 + $0xc9] sm:$0xff]
  %v3176 = vld [vmem:[%s3029 + $0xd9] sm:$0xff]
  %v3177 = vld [vmem:[%s3029 + $0xe1] sm:$0xff]
  %v3178 = vld [vmem:[%s3029 + $0xf1] sm:$0xff]
  %v3179 = vld [vmem:[%s3029 + $0xf9] sm:$0xff]
  %v3180 = vld [vmem:[%s3029 + $0x109] sm:$0xff]
  %v3181 = vld [vmem:[%s3029 + $0x111] sm:$0xff]
  %v3182 = vld [vmem:[%s3029 + $0x121] sm:$0xff]
  %v3183 = vld [vmem:[%s3029 + $0x129] sm:$0xff]
  %v3184 = vld [vmem:[%s3029 + $0x139] sm:$0xff]
  %v3185 = vld [vmem:[%s3029 + $0x141] sm:$0xff]
  %v3186 = vld [vmem:[%s3029 + $0x151] sm:$0xff]
  %v3187 = vld [vmem:[%s3029 + $0x159] sm:$0xff]
  %v3188 = vld [vmem:[%s3029 + $0x169] sm:$0xff]
  %v3189 = vld [vmem:[%s3029 + $0x171] sm:$0xff]
  %v3190 = vld [vmem:[%s3029 + $0x1b1] sm:$0xff]
  %v3191 = vld [vmem:[%s3029 + $0x1b9] sm:$0xff]
  %v3192 = vld [vmem:[%s3029 + $0x1c9] sm:$0xff]
  %v3193 = vld [vmem:[%s3029 + $0x1d1] sm:$0xff]
  %v3194 = vld [vmem:[%s3029 + $0x1e1] sm:$0xff]
  %v3195 = vld [vmem:[%s3029 + $0x1e9] sm:$0xff]
  %v3196 = vld [vmem:[%s3029 + $0x1f9] sm:$0xff]
  %v3197 = vld [vmem:[%s3029 + $0x201] sm:$0xff]
  %v3198 = vld [vmem:[%s3029 + $0x211] sm:$0xff]
  %v3199 = vld [vmem:[%s3029 + $0x219] sm:$0xff]
  %v3200 = vld [vmem:[%s3029 + $0x229] sm:$0xff]
  %v3201 = vld [vmem:[%s3029 + $0x231] sm:$0xff]
  %v3202 = vld [vmem:[%s3029 + $0x241] sm:$0xff]
  %v3203 = vld [vmem:[%s3029 + $0x249] sm:$0xff]
  %v3204 = vld [vmem:[%s3029 + $0x259] sm:$0xff]
  %v3205 = vld [vmem:[%s3029 + $0x261] sm:$0xff]
  %v3206 = vld [vmem:[%s3029 + $0x271] sm:$0xff]
  %v3207 = vld [vmem:[%s3029 + $0x279] sm:$0xff]
  %v3208 = vld [vmem:[%s3029 + $0x289] sm:$0xff]
  %v3209 = vld [vmem:[%s3029 + $0x291] sm:$0xff]
  %v3210 = vld [vmem:[%s3029 + $0x2a1] sm:$0xff]
  %v3211 = vld [vmem:[%s3029 + $0x2a9] sm:$0xff]
  %v3212 = vld [vmem:[%s3029 + $0x2b9] sm:$0xff]
  %v3213 = vld [vmem:[%s3029 + $0x2c1] sm:$0xff]
  %v3214 = vld [vmem:[%s3029 + $0x2d1] sm:$0xff]
  %v3215 = vld [vmem:[%s3029 + $0x2d9] sm:$0xff]
  %v3216 = vld [vmem:[%s3029 + $0x2e9] sm:$0xff]
  %v3217 = vld [vmem:[%s3029 + $0x2f1] sm:$0xff]
  %v3218 = vld [vmem:[%s3029 + $0x301] sm:$0xff]
  %v3219 = vld [vmem:[%s3029 + $0x309] sm:$0xff]
  %v3220 = vld [vmem:[%s3029 + $0x319] sm:$0xff]
  %v3221 = vld [vmem:[%s3029 + $0x321] sm:$0xff]
  %3222 = vst [vmem:[#allocation3 + $0x8] sm:$0xff] %v3158
  %3223 = vst [vmem:[#allocation3 + $0x20] sm:$0xff] %v3159
  %3224 = vst [vmem:[#allocation3 + $0x38] sm:$0xff] %v3160
  %3225 = vst [vmem:[#allocation3 + $0x50] sm:$0xff] %v3161
  %3226 = vst [vmem:[#allocation3 + $0x68] sm:$0xff] %v3162
  %3227 = vst [vmem:[#allocation3 + $0x80] sm:$0xff] %v3163
  %3228 = vst [vmem:[#allocation3 + $0x98] sm:$0xff] %v3164
  %3229 = vst [vmem:[#allocation3 + $0xb0] sm:$0xff] %v3165
  %3230 = vst [vmem:[#allocation3 + $0xc8] sm:$0xff] %v3166
  %3231 = vst [vmem:[#allocation3 + $0xe0] sm:$0xff] %v3167
  %3232 = vst [vmem:[#allocation3 + $0xf8] sm:$0xff] %v3168
  %3233 = vst [vmem:[#allocation3 + $0x110] sm:$0xff] %v3169
  %3234 = vst [vmem:[#allocation3 + $0x128] sm:$0xff] %v3170
  %3235 = vst [vmem:[#allocation3 + $0x140] sm:$0xff] %v3171
  %3236 = vst [vmem:[#allocation3 + $0x158] sm:$0xff] %v3172
  %3237 = vst [vmem:[#allocation3 + $0x170] sm:$0xff] %v3173
  %3238 = vst [vmem:[#allocation3 + $0x188] sm:$0xff] %v3174
  %3239 = vst [vmem:[#allocation3 + $0x1a0] sm:$0xff] %v3175
  %3240 = vst [vmem:[#allocation3 + $0x1b8] sm:$0xff] %v3176
  %3241 = vst [vmem:[#allocation3 + $0x1d0] sm:$0xff] %v3177
  %3242 = vst [vmem:[#allocation3 + $0x1e8] sm:$0xff] %v3178
  %3243 = vst [vmem:[#allocation3 + $0x200] sm:$0xff] %v3179
  %3244 = vst [vmem:[#allocation3 + $0x218] sm:$0xff] %v3180
  %3245 = vst [vmem:[#allocation3 + $0x230] sm:$0xff] %v3181
  %3246 = vst [vmem:[#allocation3 + $0x248] sm:$0xff] %v3182
  %3247 = vst [vmem:[#allocation3 + $0x260] sm:$0xff] %v3183
  %3248 = vst [vmem:[#allocation3 + $0x278] sm:$0xff] %v3184
  %3249 = vst [vmem:[#allocation3 + $0x290] sm:$0xff] %v3185
  %3250 = vst [vmem:[#allocation3 + $0x2a8] sm:$0xff] %v3186
  %3251 = vst [vmem:[#allocation3 + $0x2c0] sm:$0xff] %v3187
  %3252 = vst [vmem:[#allocation3 + $0x2d8] sm:$0xff] %v3188
  %3253 = vst [vmem:[#allocation3 + $0x2f0] sm:$0xff] %v3189
  %3254 = vst [vmem:[#allocation3 + $0x308] sm:$0xff] %v3190
  %3255 = vst [vmem:[#allocation3 + $0x320] sm:$0xff] %v3191
  %3256 = vst [vmem:[#allocation3 + $0x338] sm:$0xff] %v3192
  %3257 = vst [vmem:[#allocation3 + $0x350] sm:$0xff] %v3193
  %3258 = vst [vmem:[#allocation3 + $0x368] sm:$0xff] %v3194
  %3259 = vst [vmem:[#allocation3 + $0x380] sm:$0xff] %v3195
  %3260 = vst [vmem:[#allocation3 + $0x398] sm:$0xff] %v3196
  %3261 = vst [vmem:[#allocation3 + $0x3b0] sm:$0xff] %v3197
  %3262 = vst [vmem:[#allocation3 + $0x3c8] sm:$0xff] %v3198
  %3263 = vst [vmem:[#allocation3 + $0x3e0] sm:$0xff] %v3199
  %3264 = vst [vmem:[#allocation3 + $0x3f8] sm:$0xff] %v3200
  %3265 = vst [vmem:[#allocation3 + $0x410] sm:$0xff] %v3201
  %3266 = vst [vmem:[#allocation3 + $0x428] sm:$0xff] %v3202
  %3267 = vst [vmem:[#allocation3 + $0x440] sm:$0xff] %v3203
  %3268 = vst [vmem:[#allocation3 + $0x458] sm:$0xff] %v3204
  %3269 = vst [vmem:[#allocation3 + $0x470] sm:$0xff] %v3205
  %3270 = vst [vmem:[#allocation3 + $0x488] sm:$0xff] %v3206
  %3271 = vst [vmem:[#allocation3 + $0x4a0] sm:$0xff] %v3207
  %3272 = vst [vmem:[#allocation3 + $0x4b8] sm:$0xff] %v3208
  %3273 = vst [vmem:[#allocation3 + $0x4d0] sm:$0xff] %v3209
  %3274 = vst [vmem:[#allocation3 + $0x4e8] sm:$0xff] %v3210
  %3275 = vst [vmem:[#allocation3 + $0x500] sm:$0xff] %v3211
  %3276 = vst [vmem:[#allocation3 + $0x518] sm:$0xff] %v3212
  %3277 = vst [vmem:[#allocation3 + $0x530] sm:$0xff] %v3213
  %3278 = vst [vmem:[#allocation3 + $0x548] sm:$0xff] %v3214
  %3279 = vst [vmem:[#allocation3 + $0x560] sm:$0xff] %v3215
  %3280 = vst [vmem:[#allocation3 + $0x578] sm:$0xff] %v3216
  %3281 = vst [vmem:[#allocation3 + $0x590] sm:$0xff] %v3217
  %3282 = vst [vmem:[#allocation3 + $0x5a8] sm:$0xff] %v3218
  %3283 = vst [vmem:[#allocation3 + $0x5c0] sm:$0xff] %v3219
  %3284 = vst [vmem:[#allocation3 + $0x5d8] sm:$0xff] %v3220
  %3285 = vst [vmem:[#allocation3 + $0x5f0] sm:$0xff] %v3221
  %v3286 = vld [vmem:[%s3029 + $0x2] sm:$0xff]
  %v3287 = vld [vmem:[%s3029 + $0xa] sm:$0xff]
  %v3288 = vld [vmem:[%s3029 + $0x1a] sm:$0xff]
  %v3289 = vld [vmem:[%s3029 + $0x22] sm:$0xff]
  %v3290 = vld [vmem:[%s3029 + $0x32] sm:$0xff]
  %v3291 = vld [vmem:[%s3029 + $0x3a] sm:$0xff]
  %v3292 = vld [vmem:[%s3029 + $0x4a] sm:$0xff]
  %v3293 = vld [vmem:[%s3029 + $0x52] sm:$0xff]
  %v3294 = vld [vmem:[%s3029 + $0x62] sm:$0xff]
  %v3295 = vld [vmem:[%s3029 + $0x6a] sm:$0xff]
  %v3296 = vld [vmem:[%s3029 + $0x7a] sm:$0xff]
  %v3297 = vld [vmem:[%s3029 + $0x82] sm:$0xff]
  %v3298 = vld [vmem:[%s3029 + $0x92] sm:$0xff]
  %v3299 = vld [vmem:[%s3029 + $0x9a] sm:$0xff]
  %v3300 = vld [vmem:[%s3029 + $0xaa] sm:$0xff]
  %v3301 = vld [vmem:[%s3029 + $0xb2] sm:$0xff]
  %v3302 = vld [vmem:[%s3029 + $0xc2] sm:$0xff]
  %v3303 = vld [vmem:[%s3029 + $0xca] sm:$0xff]
  %v3304 = vld [vmem:[%s3029 + $0xda] sm:$0xff]
  %v3305 = vld [vmem:[%s3029 + $0xe2] sm:$0xff]
  %v3306 = vld [vmem:[%s3029 + $0xf2] sm:$0xff]
  %v3307 = vld [vmem:[%s3029 + $0xfa] sm:$0xff]
  %v3308 = vld [vmem:[%s3029 + $0x10a] sm:$0xff]
  %v3309 = vld [vmem:[%s3029 + $0x112] sm:$0xff]
  %v3310 = vld [vmem:[%s3029 + $0x122] sm:$0xff]
  %v3311 = vld [vmem:[%s3029 + $0x12a] sm:$0xff]
  %v3312 = vld [vmem:[%s3029 + $0x13a] sm:$0xff]
  %v3313 = vld [vmem:[%s3029 + $0x142] sm:$0xff]
  %v3314 = vld [vmem:[%s3029 + $0x152] sm:$0xff]
  %v3315 = vld [vmem:[%s3029 + $0x15a] sm:$0xff]
  %v3316 = vld [vmem:[%s3029 + $0x16a] sm:$0xff]
  %v3317 = vld [vmem:[%s3029 + $0x172] sm:$0xff]
  %v3318 = vld [vmem:[%s3029 + $0x1b2] sm:$0xff]
  %v3319 = vld [vmem:[%s3029 + $0x1ba] sm:$0xff]
  %v3320 = vld [vmem:[%s3029 + $0x1ca] sm:$0xff]
  %v3321 = vld [vmem:[%s3029 + $0x1d2] sm:$0xff]
  %v3322 = vld [vmem:[%s3029 + $0x1e2] sm:$0xff]
  %v3323 = vld [vmem:[%s3029 + $0x1ea] sm:$0xff]
  %v3324 = vld [vmem:[%s3029 + $0x1fa] sm:$0xff]
  %v3325 = vld [vmem:[%s3029 + $0x202] sm:$0xff]
  %v3326 = vld [vmem:[%s3029 + $0x212] sm:$0xff]
  %v3327 = vld [vmem:[%s3029 + $0x21a] sm:$0xff]
  %v3328 = vld [vmem:[%s3029 + $0x22a] sm:$0xff]
  %v3329 = vld [vmem:[%s3029 + $0x232] sm:$0xff]
  %v3330 = vld [vmem:[%s3029 + $0x242] sm:$0xff]
  %v3331 = vld [vmem:[%s3029 + $0x24a] sm:$0xff]
  %v3332 = vld [vmem:[%s3029 + $0x25a] sm:$0xff]
  %v3333 = vld [vmem:[%s3029 + $0x262] sm:$0xff]
  %v3334 = vld [vmem:[%s3029 + $0x272] sm:$0xff]
  %v3335 = vld [vmem:[%s3029 + $0x27a] sm:$0xff]
  %v3336 = vld [vmem:[%s3029 + $0x28a] sm:$0xff]
  %v3337 = vld [vmem:[%s3029 + $0x292] sm:$0xff]
  %v3338 = vld [vmem:[%s3029 + $0x2a2] sm:$0xff]
  %v3339 = vld [vmem:[%s3029 + $0x2aa] sm:$0xff]
  %v3340 = vld [vmem:[%s3029 + $0x2ba] sm:$0xff]
  %v3341 = vld [vmem:[%s3029 + $0x2c2] sm:$0xff]
  %v3342 = vld [vmem:[%s3029 + $0x2d2] sm:$0xff]
  %v3343 = vld [vmem:[%s3029 + $0x2da] sm:$0xff]
  %v3344 = vld [vmem:[%s3029 + $0x2ea] sm:$0xff]
  %v3345 = vld [vmem:[%s3029 + $0x2f2] sm:$0xff]
  %v3346 = vld [vmem:[%s3029 + $0x302] sm:$0xff]
  %v3347 = vld [vmem:[%s3029 + $0x30a] sm:$0xff]
  %v3348 = vld [vmem:[%s3029 + $0x31a] sm:$0xff]
  %v3349 = vld [vmem:[%s3029 + $0x322] sm:$0xff]
  %3350 = vst [vmem:[#allocation3 + $0x10] sm:$0xff] %v3286
  %3351 = vst [vmem:[#allocation3 + $0x28] sm:$0xff] %v3287
  %3352 = vst [vmem:[#allocation3 + $0x40] sm:$0xff] %v3288
  %3353 = vst [vmem:[#allocation3 + $0x58] sm:$0xff] %v3289
  %3354 = vst [vmem:[#allocation3 + $0x70] sm:$0xff] %v3290
  %3355 = vst [vmem:[#allocation3 + $0x88] sm:$0xff] %v3291
  %3356 = vst [vmem:[#allocation3 + $0xa0] sm:$0xff] %v3292
  %3357 = vst [vmem:[#allocation3 + $0xb8] sm:$0xff] %v3293
  %3358 = vst [vmem:[#allocation3 + $0xd0] sm:$0xff] %v3294
  %3359 = vst [vmem:[#allocation3 + $0xe8] sm:$0xff] %v3295
  %3360 = vst [vmem:[#allocation3 + $0x100] sm:$0xff] %v3296
  %3361 = vst [vmem:[#allocation3 + $0x118] sm:$0xff] %v3297
  %3362 = vst [vmem:[#allocation3 + $0x130] sm:$0xff] %v3298
  %3363 = vst [vmem:[#allocation3 + $0x148] sm:$0xff] %v3299
  %3364 = vst [vmem:[#allocation3 + $0x160] sm:$0xff] %v3300
  %3365 = vst [vmem:[#allocation3 + $0x178] sm:$0xff] %v3301
  %3366 = vst [vmem:[#allocation3 + $0x190] sm:$0xff] %v3302
  %3367 = vst [vmem:[#allocation3 + $0x1a8] sm:$0xff] %v3303
  %3368 = vst [vmem:[#allocation3 + $0x1c0] sm:$0xff] %v3304
  %3369 = vst [vmem:[#allocation3 + $0x1d8] sm:$0xff] %v3305
  %3370 = vst [vmem:[#allocation3 + $0x1f0] sm:$0xff] %v3306
  %3371 = vst [vmem:[#allocation3 + $0x208] sm:$0xff] %v3307
  %3372 = vst [vmem:[#allocation3 + $0x220] sm:$0xff] %v3308
  %3373 = vst [vmem:[#allocation3 + $0x238] sm:$0xff] %v3309
  %3374 = vst [vmem:[#allocation3 + $0x250] sm:$0xff] %v3310
  %3375 = vst [vmem:[#allocation3 + $0x268] sm:$0xff] %v3311
  %3376 = vst [vmem:[#allocation3 + $0x280] sm:$0xff] %v3312
  %3377 = vst [vmem:[#allocation3 + $0x298] sm:$0xff] %v3313
  %3378 = vst [vmem:[#allocation3 + $0x2b0] sm:$0xff] %v3314
  %3379 = vst [vmem:[#allocation3 + $0x2c8] sm:$0xff] %v3315
  %3380 = vst [vmem:[#allocation3 + $0x2e0] sm:$0xff] %v3316
  %3381 = vst [vmem:[#allocation3 + $0x2f8] sm:$0xff] %v3317
  %3382 = vst [vmem:[#allocation3 + $0x310] sm:$0xff] %v3318
  %3383 = vst [vmem:[#allocation3 + $0x328] sm:$0xff] %v3319
  %3384 = vst [vmem:[#allocation3 + $0x340] sm:$0xff] %v3320
  %3385 = vst [vmem:[#allocation3 + $0x358] sm:$0xff] %v3321
  %3386 = vst [vmem:[#allocation3 + $0x370] sm:$0xff] %v3322
  %3387 = vst [vmem:[#allocation3 + $0x388] sm:$0xff] %v3323
  %3388 = vst [vmem:[#allocation3 + $0x3a0] sm:$0xff] %v3324
  %3389 = vst [vmem:[#allocation3 + $0x3b8] sm:$0xff] %v3325
  %3390 = vst [vmem:[#allocation3 + $0x3d0] sm:$0xff] %v3326
  %3391 = vst [vmem:[#allocation3 + $0x3e8] sm:$0xff] %v3327
  %3392 = vst [vmem:[#allocation3 + $0x400] sm:$0xff] %v3328
  %3393 = vst [vmem:[#allocation3 + $0x418] sm:$0xff] %v3329
  %3394 = vst [vmem:[#allocation3 + $0x430] sm:$0xff] %v3330
  %3395 = vst [vmem:[#allocation3 + $0x448] sm:$0xff] %v3331
  %3396 = vst [vmem:[#allocation3 + $0x460] sm:$0xff] %v3332
  %3397 = vst [vmem:[#allocation3 + $0x478] sm:$0xff] %v3333
  %3398 = vst [vmem:[#allocation3 + $0x490] sm:$0xff] %v3334
  %3399 = vst [vmem:[#allocation3 + $0x4a8] sm:$0xff] %v3335
  %3400 = vst [vmem:[#allocation3 + $0x4c0] sm:$0xff] %v3336
  %3401 = vst [vmem:[#allocation3 + $0x4d8] sm:$0xff] %v3337
  %3402 = vst [vmem:[#allocation3 + $0x4f0] sm:$0xff] %v3338
  %3403 = vst [vmem:[#allocation3 + $0x508] sm:$0xff] %v3339
  %3404 = vst [vmem:[#allocation3 + $0x520] sm:$0xff] %v3340
  %3405 = vst [vmem:[#allocation3 + $0x538] sm:$0xff] %v3341
  %3406 = vst [vmem:[#allocation3 + $0x550] sm:$0xff] %v3342
  %3407 = vst [vmem:[#allocation3 + $0x568] sm:$0xff] %v3343
  %3408 = vst [vmem:[#allocation3 + $0x580] sm:$0xff] %v3344
  %3409 = vst [vmem:[#allocation3 + $0x598] sm:$0xff] %v3345
  %3410 = vst [vmem:[#allocation3 + $0x5b0] sm:$0xff] %v3346
  %3411 = vst [vmem:[#allocation3 + $0x5c8] sm:$0xff] %v3347
  %3412 = vst [vmem:[#allocation3 + $0x5e0] sm:$0xff] %v3348
  %3413 = vst [vmem:[#allocation3 + $0x5f8] sm:$0xff] %v3349
  %v3414 = vld [vmem:[#allocation3] sm:$0xff]
  %v3415 = vld [vmem:[#allocation3 + $0x8] sm:$0xff]
  %v3416 = vld [vmem:[#allocation3 + $0x10] sm:$0xff]
  %v3417 = vld [vmem:[#allocation3 + $0x18] sm:$0xff]
  %v3418 = vld [vmem:[#allocation3 + $0x20] sm:$0xff]
  %v3419 = vld [vmem:[#allocation3 + $0x28] sm:$0xff]
  %v3420 = vld [vmem:[#allocation3 + $0x30] sm:$0xff]
  %v3421 = vld [vmem:[#allocation3 + $0x38] sm:$0xff]
  %v3422 = vld [vmem:[#allocation3 + $0x40] sm:$0xff]
  %v3423 = vld [vmem:[#allocation3 + $0x48] sm:$0xff]
  %v3424 = vld [vmem:[#allocation3 + $0x50] sm:$0xff]
  %v3425 = vld [vmem:[#allocation3 + $0x58] sm:$0xff]
  %v3426 = vld [vmem:[#allocation3 + $0x60] sm:$0xff]
  %v3427 = vld [vmem:[#allocation3 + $0x68] sm:$0xff]
  %v3428 = vld [vmem:[#allocation3 + $0x70] sm:$0xff]
  %v3429 = vld [vmem:[#allocation3 + $0x78] sm:$0xff]
  %v3430 = vld [vmem:[#allocation3 + $0x80] sm:$0xff]
  %v3431 = vld [vmem:[#allocation3 + $0x88] sm:$0xff]
  %v3432 = vld [vmem:[#allocation3 + $0x90] sm:$0xff]
  %v3433 = vld [vmem:[#allocation3 + $0x98] sm:$0xff]
  %v3434 = vld [vmem:[#allocation3 + $0xa0] sm:$0xff]
  %v3435 = vld [vmem:[#allocation3 + $0xa8] sm:$0xff]
  %v3436 = vld [vmem:[#allocation3 + $0xb0] sm:$0xff]
  %v3437 = vld [vmem:[#allocation3 + $0xb8] sm:$0xff]
  %v3438 = vld [vmem:[#allocation3 + $0xc0] sm:$0xff]
  %v3439 = vld [vmem:[#allocation3 + $0xc8] sm:$0xff]
  %v3440 = vld [vmem:[#allocation3 + $0xd0] sm:$0xff]
  %v3441 = vld [vmem:[#allocation3 + $0xd8] sm:$0xff]
  %v3442 = vld [vmem:[#allocation3 + $0xe0] sm:$0xff]
  %v3443 = vld [vmem:[#allocation3 + $0xe8] sm:$0xff]
  %v3444 = vld [vmem:[#allocation3 + $0xf0] sm:$0xff]
  %v3445 = vld [vmem:[#allocation3 + $0xf8] sm:$0xff]
  %v3446 = vld [vmem:[#allocation3 + $0x100] sm:$0xff]
  %v3447 = vld [vmem:[#allocation3 + $0x108] sm:$0xff]
  %v3448 = vld [vmem:[#allocation3 + $0x110] sm:$0xff]
  %v3449 = vld [vmem:[#allocation3 + $0x118] sm:$0xff]
  %v3450 = vld [vmem:[#allocation3 + $0x120] sm:$0xff]
  %v3451 = vld [vmem:[#allocation3 + $0x128] sm:$0xff]
  %v3452 = vld [vmem:[#allocation3 + $0x130] sm:$0xff]
  %v3453 = vld [vmem:[#allocation3 + $0x138] sm:$0xff]
  %v3454 = vld [vmem:[#allocation3 + $0x140] sm:$0xff]
  %v3455 = vld [vmem:[#allocation3 + $0x148] sm:$0xff]
  %v3456 = vld [vmem:[#allocation3 + $0x150] sm:$0xff]
  %v3457 = vld [vmem:[#allocation3 + $0x158] sm:$0xff]
  %v3458 = vld [vmem:[#allocation3 + $0x160] sm:$0xff]
  %v3459 = vld [vmem:[#allocation3 + $0x168] sm:$0xff]
  %v3460 = vld [vmem:[#allocation3 + $0x170] sm:$0xff]
  %v3461 = vld [vmem:[#allocation3 + $0x178] sm:$0xff]
  %v3462 = vld [vmem:[#allocation3 + $0x180] sm:$0xff]
  %v3463 = vld [vmem:[#allocation3 + $0x188] sm:$0xff]
  %v3464 = vld [vmem:[#allocation3 + $0x190] sm:$0xff]
  %v3465 = vld [vmem:[#allocation3 + $0x198] sm:$0xff]
  %v3466 = vld [vmem:[#allocation3 + $0x1a0] sm:$0xff]
  %v3467 = vld [vmem:[#allocation3 + $0x1a8] sm:$0xff]
  %v3468 = vld [vmem:[#allocation3 + $0x1b0] sm:$0xff]
  %v3469 = vld [vmem:[#allocation3 + $0x1b8] sm:$0xff]
  %v3470 = vld [vmem:[#allocation3 + $0x1c0] sm:$0xff]
  %v3471 = vld [vmem:[#allocation3 + $0x1c8] sm:$0xff]
  %v3472 = vld [vmem:[#allocation3 + $0x1d0] sm:$0xff]
  %v3473 = vld [vmem:[#allocation3 + $0x1d8] sm:$0xff]
  %v3474 = vld [vmem:[#allocation3 + $0x1e0] sm:$0xff]
  %v3475 = vld [vmem:[#allocation3 + $0x1e8] sm:$0xff]
  %v3476 = vld [vmem:[#allocation3 + $0x1f0] sm:$0xff]
  %v3477 = vld [vmem:[#allocation3 + $0x1f8] sm:$0xff]
  %v3478 = vld [vmem:[#allocation3 + $0x200] sm:$0xff]
  %v3479 = vld [vmem:[#allocation3 + $0x208] sm:$0xff]
  %v3480 = vld [vmem:[#allocation3 + $0x210] sm:$0xff]
  %v3481 = vld [vmem:[#allocation3 + $0x218] sm:$0xff]
  %v3482 = vld [vmem:[#allocation3 + $0x220] sm:$0xff]
  %v3483 = vld [vmem:[#allocation3 + $0x228] sm:$0xff]
  %v3484 = vld [vmem:[#allocation3 + $0x230] sm:$0xff]
  %v3485 = vld [vmem:[#allocation3 + $0x238] sm:$0xff]
  %v3486 = vld [vmem:[#allocation3 + $0x240] sm:$0xff]
  %v3487 = vld [vmem:[#allocation3 + $0x248] sm:$0xff]
  %v3488 = vld [vmem:[#allocation3 + $0x250] sm:$0xff]
  %v3489 = vld [vmem:[#allocation3 + $0x258] sm:$0xff]
  %v3490 = vld [vmem:[#allocation3 + $0x260] sm:$0xff]
  %v3491 = vld [vmem:[#allocation3 + $0x268] sm:$0xff]
  %v3492 = vld [vmem:[#allocation3 + $0x270] sm:$0xff]
  %v3493 = vld [vmem:[#allocation3 + $0x278] sm:$0xff]
  %v3494 = vld [vmem:[#allocation3 + $0x280] sm:$0xff]
  %v3495 = vld [vmem:[#allocation3 + $0x288] sm:$0xff]
  %v3496 = vld [vmem:[#allocation3 + $0x290] sm:$0xff]
  %v3497 = vld [vmem:[#allocation3 + $0x298] sm:$0xff]
  %v3498 = vld [vmem:[#allocation3 + $0x2a0] sm:$0xff]
  %v3499 = vld [vmem:[#allocation3 + $0x2a8] sm:$0xff]
  %v3500 = vld [vmem:[#allocation3 + $0x2b0] sm:$0xff]
  %v3501 = vld [vmem:[#allocation3 + $0x2b8] sm:$0xff]
  %v3502 = vld [vmem:[#allocation3 + $0x2c0] sm:$0xff]
  %v3503 = vld [vmem:[#allocation3 + $0x2c8] sm:$0xff]
  %v3504 = vld [vmem:[#allocation3 + $0x2d0] sm:$0xff]
  %v3505 = vld [vmem:[#allocation3 + $0x2d8] sm:$0xff]
  %v3506 = vld [vmem:[#allocation3 + $0x2e0] sm:$0xff]
  %v3507 = vld [vmem:[#allocation3 + $0x2e8] sm:$0xff]
  %v3508 = vld [vmem:[#allocation3 + $0x2f0] sm:$0xff]
  %v3509 = vld [vmem:[#allocation3 + $0x2f8] sm:$0xff]
  %v3510 = vld [vmem:[#allocation3 + $0x300] sm:$0xff]
  %v3511 = vld [vmem:[#allocation3 + $0x308] sm:$0xff]
  %v3512 = vld [vmem:[#allocation3 + $0x310] sm:$0xff]
  %v3513 = vld [vmem:[#allocation3 + $0x318] sm:$0xff]
  %v3514 = vld [vmem:[#allocation3 + $0x320] sm:$0xff]
  %v3515 = vld [vmem:[#allocation3 + $0x328] sm:$0xff]
  %v3516 = vld [vmem:[#allocation3 + $0x330] sm:$0xff]
  %v3517 = vld [vmem:[#allocation3 + $0x338] sm:$0xff]
  %v3518 = vld [vmem:[#allocation3 + $0x340] sm:$0xff]
  %v3519 = vld [vmem:[#allocation3 + $0x348] sm:$0xff]
  %v3520 = vld [vmem:[#allocation3 + $0x350] sm:$0xff]
  %v3521 = vld [vmem:[#allocation3 + $0x358] sm:$0xff]
  %v3522 = vld [vmem:[#allocation3 + $0x360] sm:$0xff]
  %v3523 = vld [vmem:[#allocation3 + $0x368] sm:$0xff]
  %v3524 = vld [vmem:[#allocation3 + $0x370] sm:$0xff]
  %v3525 = vld [vmem:[#allocation3 + $0x378] sm:$0xff]
  %v3526 = vld [vmem:[#allocation3 + $0x380] sm:$0xff]
  %v3527 = vld [vmem:[#allocation3 + $0x388] sm:$0xff]
  %v3528 = vld [vmem:[#allocation3 + $0x390] sm:$0xff]
  %v3529 = vld [vmem:[#allocation3 + $0x398] sm:$0xff]
  %v3530 = vld [vmem:[#allocation3 + $0x3a0] sm:$0xff]
  %v3531 = vld [vmem:[#allocation3 + $0x3a8] sm:$0xff]
  %v3532 = vld [vmem:[#allocation3 + $0x3b0] sm:$0xff]
  %v3533 = vld [vmem:[#allocation3 + $0x3b8] sm:$0xff]
  %v3534 = vld [vmem:[#allocation3 + $0x3c0] sm:$0xff]
  %v3535 = vld [vmem:[#allocation3 + $0x3c8] sm:$0xff]
  %v3536 = vld [vmem:[#allocation3 + $0x3d0] sm:$0xff]
  %v3537 = vld [vmem:[#allocation3 + $0x3d8] sm:$0xff]
  %v3538 = vld [vmem:[#allocation3 + $0x3e0] sm:$0xff]
  %v3539 = vld [vmem:[#allocation3 + $0x3e8] sm:$0xff]
  %v3540 = vld [vmem:[#allocation3 + $0x3f0] sm:$0xff]
  %v3541 = vld [vmem:[#allocation3 + $0x3f8] sm:$0xff]
  %v3542 = vld [vmem:[#allocation3 + $0x400] sm:$0xff]
  %v3543 = vld [vmem:[#allocation3 + $0x408] sm:$0xff]
  %v3544 = vld [vmem:[#allocation3 + $0x410] sm:$0xff]
  %v3545 = vld [vmem:[#allocation3 + $0x418] sm:$0xff]
  %v3546 = vld [vmem:[#allocation3 + $0x420] sm:$0xff]
  %v3547 = vld [vmem:[#allocation3 + $0x428] sm:$0xff]
  %v3548 = vld [vmem:[#allocation3 + $0x430] sm:$0xff]
  %v3549 = vld [vmem:[#allocation3 + $0x438] sm:$0xff]
  %v3550 = vld [vmem:[#allocation3 + $0x440] sm:$0xff]
  %v3551 = vld [vmem:[#allocation3 + $0x448] sm:$0xff]
  %v3552 = vld [vmem:[#allocation3 + $0x450] sm:$0xff]
  %v3553 = vld [vmem:[#allocation3 + $0x458] sm:$0xff]
  %v3554 = vld [vmem:[#allocation3 + $0x460] sm:$0xff]
  %v3555 = vld [vmem:[#allocation3 + $0x468] sm:$0xff]
  %v3556 = vld [vmem:[#allocation3 + $0x470] sm:$0xff]
  %v3557 = vld [vmem:[#allocation3 + $0x478] sm:$0xff]
  %v3558 = vld [vmem:[#allocation3 + $0x480] sm:$0xff]
  %v3559 = vld [vmem:[#allocation3 + $0x488] sm:$0xff]
  %v3560 = vld [vmem:[#allocation3 + $0x490] sm:$0xff]
  %v3561 = vld [vmem:[#allocation3 + $0x498] sm:$0xff]
  %v3562 = vld [vmem:[#allocation3 + $0x4a0] sm:$0xff]
  %v3563 = vld [vmem:[#allocation3 + $0x4a8] sm:$0xff]
  %v3564 = vld [vmem:[#allocation3 + $0x4b0] sm:$0xff]
  %v3565 = vld [vmem:[#allocation3 + $0x4b8] sm:$0xff]
  %v3566 = vld [vmem:[#allocation3 + $0x4c0] sm:$0xff]
  %v3567 = vld [vmem:[#allocation3 + $0x4c8] sm:$0xff]
  %v3568 = vld [vmem:[#allocation3 + $0x4d0] sm:$0xff]
  %v3569 = vld [vmem:[#allocation3 + $0x4d8] sm:$0xff]
  %v3570 = vld [vmem:[#allocation3 + $0x4e0] sm:$0xff]
  %v3571 = vld [vmem:[#allocation3 + $0x4e8] sm:$0xff]
  %v3572 = vld [vmem:[#allocation3 + $0x4f0] sm:$0xff]
  %v3573 = vld [vmem:[#allocation3 + $0x4f8] sm:$0xff]
  %v3574 = vld [vmem:[#allocation3 + $0x500] sm:$0xff]
  %v3575 = vld [vmem:[#allocation3 + $0x508] sm:$0xff]
  %v3576 = vld [vmem:[#allocation3 + $0x510] sm:$0xff]
  %v3577 = vld [vmem:[#allocation3 + $0x518] sm:$0xff]
  %v3578 = vld [vmem:[#allocation3 + $0x520] sm:$0xff]
  %v3579 = vld [vmem:[#allocation3 + $0x528] sm:$0xff]
  %v3580 = vld [vmem:[#allocation3 + $0x530] sm:$0xff]
  %v3581 = vld [vmem:[#allocation3 + $0x538] sm:$0xff]
  %v3582 = vld [vmem:[#allocation3 + $0x540] sm:$0xff]
  %v3583 = vld [vmem:[#allocation3 + $0x548] sm:$0xff]
  %v3584 = vld [vmem:[#allocation3 + $0x550] sm:$0xff]
  %v3585 = vld [vmem:[#allocation3 + $0x558] sm:$0xff]
  %v3586 = vld [vmem:[#allocation3 + $0x560] sm:$0xff]
  %v3587 = vld [vmem:[#allocation3 + $0x568] sm:$0xff]
  %v3588 = vld [vmem:[#allocation3 + $0x570] sm:$0xff]
  %v3589 = vld [vmem:[#allocation3 + $0x578] sm:$0xff]
  %v3590 = vld [vmem:[#allocation3 + $0x580] sm:$0xff]
  %v3591 = vld [vmem:[#allocation3 + $0x588] sm:$0xff]
  %v3592 = vld [vmem:[#allocation3 + $0x590] sm:$0xff]
  %v3593 = vld [vmem:[#allocation3 + $0x598] sm:$0xff]
  %v3594 = vld [vmem:[#allocation3 + $0x5a0] sm:$0xff]
  %v3595 = vld [vmem:[#allocation3 + $0x5a8] sm:$0xff]
  %v3596 = vld [vmem:[#allocation3 + $0x5b0] sm:$0xff]
  %v3597 = vld [vmem:[#allocation3 + $0x5b8] sm:$0xff]
  %v3598 = vld [vmem:[#allocation3 + $0x5c0] sm:$0xff]
  %v3599 = vld [vmem:[#allocation3 + $0x5c8] sm:$0xff]
  %v3600 = vld [vmem:[#allocation3 + $0x5d0] sm:$0xff]
  %v3601 = vld [vmem:[#allocation3 + $0x5d8] sm:$0xff]
  %v3602 = vld [vmem:[#allocation3 + $0x5e0] sm:$0xff]
  %v3603 = vld [vmem:[#allocation3 + $0x5e8] sm:$0xff]
  %v3604 = vld [vmem:[#allocation3 + $0x5f0] sm:$0xff]
  %v3605 = vld [vmem:[#allocation3 + $0x5f8] sm:$0xff]
  %s3606 = scalar_lea.vmem %s1, 768
  %v3607 = vld [vmem:[%s3606] sm:$0xff]
  %v3608 = vld [vmem:[%s3606 + $0x8] sm:$0xff]
  %v3609 = vld [vmem:[%s3606 + $0x10] sm:$0xff]
  %v3610 = vld [vmem:[%s3606 + $0x18] sm:$0xff]
  %v3611 = vld [vmem:[%s3606 + $0x20] sm:$0xff]
  %v3612 = vld [vmem:[%s3606 + $0x28] sm:$0xff]
  %v3613 = vld [vmem:[%s3606 + $0x30] sm:$0xff]
  %v3614 = vld [vmem:[%s3606 + $0x38] sm:$0xff]
  %v3615 = vld [vmem:[%s3606 + $0x40] sm:$0xff]
  %v3616 = vld [vmem:[%s3606 + $0x48] sm:$0xff]
  %v3617 = vld [vmem:[%s3606 + $0x50] sm:$0xff]
  %v3618 = vld [vmem:[%s3606 + $0x58] sm:$0xff]
  %v3619 = vld [vmem:[%s3606 + $0x60] sm:$0xff]
  %v3620 = vld [vmem:[%s3606 + $0x68] sm:$0xff]
  %v3621 = vld [vmem:[%s3606 + $0x70] sm:$0xff]
  %v3622 = vld [vmem:[%s3606 + $0x78] sm:$0xff]
  %v3623 = vld [vmem:[%s3606 + $0x80] sm:$0xff]
  %v3624 = vld [vmem:[%s3606 + $0x88] sm:$0xff]
  %v3625 = vld [vmem:[%s3606 + $0x90] sm:$0xff]
  %v3626 = vld [vmem:[%s3606 + $0x98] sm:$0xff]
  %v3627 = vld [vmem:[%s3606 + $0xa0] sm:$0xff]
  %v3628 = vld [vmem:[%s3606 + $0xa8] sm:$0xff]
  %v3629 = vld [vmem:[%s3606 + $0xb0] sm:$0xff]
  %v3630 = vld [vmem:[%s3606 + $0xb8] sm:$0xff]
  %v3631 = vld [vmem:[%s3606 + $0xc0] sm:$0xff]
  %v3632 = vld [vmem:[%s3606 + $0xc8] sm:$0xff]
  %v3633 = vld [vmem:[%s3606 + $0xd0] sm:$0xff]
  %v3634 = vld [vmem:[%s3606 + $0xd8] sm:$0xff]
  %v3635 = vld [vmem:[%s3606 + $0xe0] sm:$0xff]
  %v3636 = vld [vmem:[%s3606 + $0xe8] sm:$0xff]
  %v3637 = vld [vmem:[%s3606 + $0xf0] sm:$0xff]
  %v3638 = vld [vmem:[%s3606 + $0xf8] sm:$0xff]
  %v3639 = vld [vmem:[%s3606 + $0x100] sm:$0xff]
  %v3640 = vld [vmem:[%s3606 + $0x108] sm:$0xff]
  %v3641 = vld [vmem:[%s3606 + $0x110] sm:$0xff]
  %v3642 = vld [vmem:[%s3606 + $0x118] sm:$0xff]
  %v3643 = vld [vmem:[%s3606 + $0x120] sm:$0xff]
  %v3644 = vld [vmem:[%s3606 + $0x128] sm:$0xff]
  %v3645 = vld [vmem:[%s3606 + $0x130] sm:$0xff]
  %v3646 = vld [vmem:[%s3606 + $0x138] sm:$0xff]
  %v3647 = vld [vmem:[%s3606 + $0x140] sm:$0xff]
  %v3648 = vld [vmem:[%s3606 + $0x148] sm:$0xff]
  %v3649 = vld [vmem:[%s3606 + $0x150] sm:$0xff]
  %v3650 = vld [vmem:[%s3606 + $0x158] sm:$0xff]
  %v3651 = vld [vmem:[%s3606 + $0x160] sm:$0xff]
  %v3652 = vld [vmem:[%s3606 + $0x168] sm:$0xff]
  %v3653 = vld [vmem:[%s3606 + $0x170] sm:$0xff]
  %v3654 = vld [vmem:[%s3606 + $0x178] sm:$0xff]
  %3655 = vmatprep.subr.mxu0 0.0
  %3656 = vmatpush1.msra.mxu0 %v3607
  %3657 = vmatprep.subr.mxu0 0.0
  %3658 = vmatpush1.msra.mxu0 %v3608
  %3659 = vmatprep.subr.mxu0 0.0
  %3660 = vmatpush1.msra.mxu0 %v3609
  %3661 = vmatprep.subr.mxu0 0.0
  %3662 = vmatpush1.msra.mxu0 %v3610
  %3663 = vmatprep.subr.mxu0 0.0
  %3664 = vmatpush1.msra.mxu0 %v3611
  %3665 = vmatprep.subr.mxu0 0.0
  %3666 = vmatpush1.msra.mxu0 %v3612
  %3667 = vmatprep.subr.mxu0 0.0
  %3668 = vmatpush1.msra.mxu0 %v3613
  %3669 = vmatprep.subr.mxu0 0.0
  %3670 = vmatpush1.msra.mxu0 %v3614
  %3671 = vmatprep.subr.mxu0 0.0
  %3672 = vmatpush1.msra.mxu0 %v3615
  %3673 = vmatprep.subr.mxu0 0.0
  %3674 = vmatpush1.msra.mxu0 %v3616
  %3675 = vmatprep.subr.mxu0 0.0
  %3676 = vmatpush1.msra.mxu0 %v3617
  %3677 = vmatprep.subr.mxu0 0.0
  %3678 = vmatpush1.msra.mxu0 %v3618
  %3679 = vmatprep.subr.mxu0 0.0
  %3680 = vmatpush1.msra.mxu0 %v3619
  %3681 = vmatprep.subr.mxu0 0.0
  %3682 = vmatpush1.msra.mxu0 %v3620
  %3683 = vmatprep.subr.mxu0 0.0
  %3684 = vmatpush1.msra.mxu0 %v3621
  %3685 = vmatprep.subr.mxu0 0.0
  %3686 = vmatpush1.msra.mxu0 %v3622
  %3687 = vmatprep.subr.mxu0 0.0
  %3688 = vmatpush1.msra.mxu0 %v3623
  %3689 = vmatprep.subr.mxu0 0.0
  %3690 = vmatpush1.msra.mxu0 %v3624
  %3691 = vmatprep.subr.mxu0 0.0
  %3692 = vmatpush1.msra.mxu0 %v3625
  %3693 = vmatprep.subr.mxu0 0.0
  %3694 = vmatpush1.msra.mxu0 %v3626
  %3695 = vmatprep.subr.mxu0 0.0
  %3696 = vmatpush1.msra.mxu0 %v3627
  %3697 = vmatprep.subr.mxu0 0.0
  %3698 = vmatpush1.msra.mxu0 %v3628
  %3699 = vmatprep.subr.mxu0 0.0
  %3700 = vmatpush1.msra.mxu0 %v3629
  %3701 = vmatprep.subr.mxu0 0.0
  %3702 = vmatpush1.msra.mxu0 %v3630
  %3703 = vmatprep.subr.mxu0 0.0
  %3704 = vmatpush1.msra.mxu0 %v3631
  %3705 = vmatprep.subr.mxu0 0.0
  %3706 = vmatpush1.msra.mxu0 %v3632
  %3707 = vmatprep.subr.mxu0 0.0
  %3708 = vmatpush1.msra.mxu0 %v3633
  %3709 = vmatprep.subr.mxu0 0.0
  %3710 = vmatpush1.msra.mxu0 %v3634
  %3711 = vmatprep.subr.mxu0 0.0
  %3712 = vmatpush1.msra.mxu0 %v3635
  %3713 = vmatprep.subr.mxu0 0.0
  %3714 = vmatpush1.msra.mxu0 %v3636
  %3715 = vmatprep.subr.mxu0 0.0
  %3716 = vmatpush1.msra.mxu0 %v3637
  %3717 = vmatprep.subr.mxu0 0.0
  %3718 = vmatpush1.msra.mxu0 %v3638
  %3719 = vmatprep.mubr.f32.mxu0 %v3415
  %3720 = vmatmul.mubr.f32.gmra.mrb[0].mxu0 %v3414
  %v3721 = vpop.f32.mrb[0].mxu0
  %v3722 = vadd.f32 0.0, %v3721
  %v3723 = vpop.f32.mrb[0].mxu0
  %3724 = vmatprep.mubr.f32.mxu0 %v3418
  %3725 = vmatmul.mubr.f32.gmra.mrb[0].mxu0 %v3417
  %v3726 = vpop.f32.mrb[0].mxu0
  %v3727 = vadd.f32 0.0, %v3726
  %v3728 = vpop.f32.mrb[0].mxu0
  %3729 = vmatprep.mubr.f32.mxu0 %v3421
  %3730 = vmatmul.mubr.f32.gmra.mrb[0].mxu0 %v3420
  %v3731 = vpop.f32.mrb[0].mxu0
  %v3732 = vadd.f32 0.0, %v3731
  %v3733 = vpop.f32.mrb[0].mxu0
  %3734 = vmatprep.mubr.f32.mxu0 %v3424
  %3735 = vmatmul.mubr.f32.gmra.mrb[0].mxu0 %v3423
  %v3736 = vpop.f32.mrb[0].mxu0
  %v3737 = vadd.f32 0.0, %v3736
  %v3738 = vpop.f32.mrb[0].mxu0
  %3739 = vmatprep.mubr.f32.mxu0 %v3427
  %3740 = vmatmul.mubr.f32.gmra.mrb[0].mxu0 %v3426
  %v3741 = vpop.f32.mrb[0].mxu0
  %v3742 = vadd.f32 0.0, %v3741
  %v3743 = vpop.f32.mrb[0].mxu0
  %3744 = vmatprep.mubr.f32.mxu0 %v3430
  %3745 = vmatmul.mubr.f32.gmra.mrb[0].mxu0 %v3429
  %v3746 = vpop.f32.mrb[0].mxu0
  %v3747 = vadd.f32 0.0, %v3746
  %v3748 = vpop.f32.mrb[0].mxu0
  %3749 = vmatprep.mubr.f32.mxu0 %v3433
  %3750 = vmatmul.mubr.f32.gmra.mrb[0].mxu0 %v3432
  %v3751 = vpop.f32.mrb[0].mxu0
  %v3752 = vadd.f32 0.0, %v3751
  %v3753 = vpop.f32.mrb[0].mxu0
  %3754 = vmatprep.mubr.f32.mxu0 %v3436
  %3755 = vmatmul.mubr.f32.gmra.mrb[0].mxu0 %v3435
  %v3756 = vpop.f32.mrb[0].mxu0
  %v3757 = vadd.f32 0.0, %v3756
  %v3758 = vpop.f32.mrb[0].mxu0
  %3759 = vmatprep.mubr.f32.mxu0 %v3439
  %3760 = vmatmul.mubr.f32.gmra.mrb[0].mxu0 %v3438
  %v3761 = vpop.f32.mrb[0].mxu0
  %v3762 = vadd.f32 0.0, %v3761
  %v3763 = vpop.f32.mrb[0].mxu0
  %3764 = vmatprep.mubr.f32.mxu0 %v3442
  %3765 = vmatmul.mubr.f32.gmra.mrb[0].mxu0 %v3441
  %v3766 = vpop.f32.mrb[0].mxu0
  %v3767 = vadd.f32 0.0, %v3766
  %v3768 = vpop.f32.mrb[0].mxu0
  %3769 = vmatprep.mubr.f32.mxu0 %v3445
  %3770 = vmatmul.mubr.f32.gmra.mrb[0].mxu0 %v3444
  %v3771 = vpop.f32.mrb[0].mxu0
  %v3772 = vadd.f32 0.0, %v3771
  %v3773 = vpop.f32.mrb[0].mxu0
  %3774 = vmatprep.mubr.f32.mxu0 %v3448
  %3775 = vmatmul.mubr.f32.gmra.mrb[0].mxu0 %v3447
  %v3776 = vpop.f32.mrb[0].mxu0
  %v3777 = vadd.f32 0.0, %v3776
  %v3778 = vpop.f32.mrb[0].mxu0
  %3779 = vmatprep.mubr.f32.mxu0 %v3451
  %3780 = vmatmul.mubr.f32.gmra.mrb[0].mxu0 %v3450
  %v3781 = vpop.f32.mrb[0].mxu0
  %v3782 = vadd.f32 0.0, %v3781
  %v3783 = vpop.f32.mrb[0].mxu0
  %3784 = vmatprep.mubr.f32.mxu0 %v3454
  %3785 = vmatmul.mubr.f32.gmra.mrb[0].mxu0 %v3453
  %v3786 = vpop.f32.mrb[0].mxu0
  %v3787 = vadd.f32 0.0, %v3786
  %v3788 = vpop.f32.mrb[0].mxu0
  %3789 = vmatprep.mubr.f32.mxu0 %v3457
  %3790 = vmatmul.mubr.f32.gmra.mrb[0].mxu0 %v3456
  %v3791 = vpop.f32.mrb[0].mxu0
  %v3792 = vadd.f32 0.0, %v3791
  %v3793 = vpop.f32.mrb[0].mxu0
  %3794 = vmatprep.mubr.f32.mxu0 %v3460
  %3795 = vmatmul.mubr.f32.gmra.mrb[0].mxu0 %v3459
  %v3796 = vpop.f32.mrb[0].mxu0
  %v3797 = vadd.f32 0.0, %v3796
  %v3798 = vpop.f32.mrb[0].mxu0
  %3799 = vmatprep.mubr.f32.mxu0 %v3463
  %3800 = vmatmul.mubr.f32.gmra.mrb[0].mxu0 %v3462
  %v3801 = vpop.f32.mrb[0].mxu0
  %v3802 = vadd.f32 0.0, %v3801
  %v3803 = vpop.f32.mrb[0].mxu0
  %3804 = vmatprep.mubr.f32.mxu0 %v3466
  %3805 = vmatmul.mubr.f32.gmra.mrb[0].mxu0 %v3465
  %v3806 = vpop.f32.mrb[0].mxu0
  %v3807 = vadd.f32 0.0, %v3806
  %v3808 = vpop.f32.mrb[0].mxu0
  %3809 = vmatprep.mubr.f32.mxu0 %v3469
  %3810 = vmatmul.mubr.f32.gmra.mrb[0].mxu0 %v3468
  %v3811 = vpop.f32.mrb[0].mxu0
  %v3812 = vadd.f32 0.0, %v3811
  %v3813 = vpop.f32.mrb[0].mxu0
  %3814 = vmatprep.mubr.f32.mxu0 %v3472
  %3815 = vmatmul.mubr.f32.gmra.mrb[0].mxu0 %v3471
  %v3816 = vpop.f32.mrb[0].mxu0
  %v3817 = vadd.f32 0.0, %v3816
  %v3818 = vpop.f32.mrb[0].mxu0
  %3819 = vmatprep.mubr.f32.mxu0 %v3475
  %3820 = vmatmul.mubr.f32.gmra.mrb[0].mxu0 %v3474
  %v3821 = vpop.f32.mrb[0].mxu0
  %v3822 = vadd.f32 0.0, %v3821
  %v3823 = vpop.f32.mrb[0].mxu0
  %3824 = vmatprep.mubr.f32.mxu0 %v3478
  %3825 = vmatmul.mubr.f32.gmra.mrb[0].mxu0 %v3477
  %v3826 = vpop.f32.mrb[0].mxu0
  %v3827 = vadd.f32 0.0, %v3826
  %v3828 = vpop.f32.mrb[0].mxu0
  %3829 = vmatprep.mubr.f32.mxu0 %v3481
  %3830 = vmatmul.mubr.f32.gmra.mrb[0].mxu0 %v3480
  %v3831 = vpop.f32.mrb[0].mxu0
  %v3832 = vadd.f32 0.0, %v3831
  %v3833 = vpop.f32.mrb[0].mxu0
  %3834 = vmatprep.mubr.f32.mxu0 %v3484
  %3835 = vmatmul.mubr.f32.gmra.mrb[0].mxu0 %v3483
  %v3836 = vpop.f32.mrb[0].mxu0
  %v3837 = vadd.f32 0.0, %v3836
  %v3838 = vpop.f32.mrb[0].mxu0
  %3839 = vmatprep.mubr.f32.mxu0 %v3487
  %3840 = vmatmul.mubr.f32.gmra.mrb[0].mxu0 %v3486
  %v3841 = vpop.f32.mrb[0].mxu0
  %v3842 = vadd.f32 0.0, %v3841
  %v3843 = vpop.f32.mrb[0].mxu0
  %3844 = vmatprep.mubr.f32.mxu0 %v3490
  %3845 = vmatmul.mubr.f32.gmra.mrb[0].mxu0 %v3489
  %v3846 = vpop.f32.mrb[0].mxu0
  %v3847 = vadd.f32 0.0, %v3846
  %v3848 = vpop.f32.mrb[0].mxu0
  %3849 = vmatprep.mubr.f32.mxu0 %v3493
  %3850 = vmatmul.mubr.f32.gmra.mrb[0].mxu0 %v3492
  %v3851 = vpop.f32.mrb[0].mxu0
  %v3852 = vadd.f32 0.0, %v3851
  %v3853 = vpop.f32.mrb[0].mxu0
  %3854 = vmatprep.mubr.f32.mxu0 %v3496
  %3855 = vmatmul.mubr.f32.gmra.mrb[0].mxu0 %v3495
  %v3856 = vpop.f32.mrb[0].mxu0
  %v3857 = vadd.f32 0.0, %v3856
  %v3858 = vpop.f32.mrb[0].mxu0
  %3859 = vmatprep.mubr.f32.mxu0 %v3499
  %3860 = vmatmul.mubr.f32.gmra.mrb[0].mxu0 %v3498
  %v3861 = vpop.f32.mrb[0].mxu0
  %v3862 = vadd.f32 0.0, %v3861
  %v3863 = vpop.f32.mrb[0].mxu0
  %3864 = vmatprep.mubr.f32.mxu0 %v3502
  %3865 = vmatmul.mubr.f32.gmra.mrb[0].mxu0 %v3501
  %v3866 = vpop.f32.mrb[0].mxu0
  %v3867 = vadd.f32 0.0, %v3866
  %v3868 = vpop.f32.mrb[0].mxu0
  %3869 = vmatprep.mubr.f32.mxu0 %v3505
  %3870 = vmatmul.mubr.f32.gmra.mrb[0].mxu0 %v3504
  %v3871 = vpop.f32.mrb[0].mxu0
  %v3872 = vadd.f32 0.0, %v3871
  %v3873 = vpop.f32.mrb[0].mxu0
  %3874 = vmatprep.mubr.f32.mxu0 %v3508
  %3875 = vmatmul.mubr.f32.gmra.mrb[0].mxu0 %v3507
  %v3876 = vpop.f32.mrb[0].mxu0
  %v3877 = vadd.f32 0.0, %v3876
  %v3878 = vpop.f32.mrb[0].mxu0
  %3879 = vmatprep.mubr.f32.mxu0 %v3511
  %3880 = vmatmul.mubr.f32.gmra.mrb[0].mxu0 %v3510
  %v3881 = vpop.f32.mrb[0].mxu0
  %v3882 = vadd.f32 0.0, %v3881
  %v3883 = vpop.f32.mrb[0].mxu0
  %3884 = vmatprep.mubr.f32.mxu0 %v3514
  %3885 = vmatmul.mubr.f32.gmra.mrb[0].mxu0 %v3513
  %v3886 = vpop.f32.mrb[0].mxu0
  %v3887 = vadd.f32 0.0, %v3886
  %v3888 = vpop.f32.mrb[0].mxu0
  %3889 = vmatprep.mubr.f32.mxu0 %v3517
  %3890 = vmatmul.mubr.f32.gmra.mrb[0].mxu0 %v3516
  %v3891 = vpop.f32.mrb[0].mxu0
  %v3892 = vadd.f32 0.0, %v3891
  %v3893 = vpop.f32.mrb[0].mxu0
  %3894 = vmatprep.mubr.f32.mxu0 %v3520
  %3895 = vmatmul.mubr.f32.gmra.mrb[0].mxu0 %v3519
  %v3896 = vpop.f32.mrb[0].mxu0
  %v3897 = vadd.f32 0.0, %v3896
  %v3898 = vpop.f32.mrb[0].mxu0
  %3899 = vmatprep.mubr.f32.mxu0 %v3523
  %3900 = vmatmul.mubr.f32.gmra.mrb[0].mxu0 %v3522
  %v3901 = vpop.f32.mrb[0].mxu0
  %v3902 = vadd.f32 0.0, %v3901
  %v3903 = vpop.f32.mrb[0].mxu0
  %3904 = vmatprep.mubr.f32.mxu0 %v3526
  %3905 = vmatmul.mubr.f32.gmra.mrb[0].mxu0 %v3525
  %v3906 = vpop.f32.mrb[0].mxu0
  %v3907 = vadd.f32 0.0, %v3906
  %v3908 = vpop.f32.mrb[0].mxu0
  %3909 = vmatprep.mubr.f32.mxu0 %v3529
  %3910 = vmatmul.mubr.f32.gmra.mrb[0].mxu0 %v3528
  %v3911 = vpop.f32.mrb[0].mxu0
  %v3912 = vadd.f32 0.0, %v3911
  %v3913 = vpop.f32.mrb[0].mxu0
  %3914 = vmatprep.mubr.f32.mxu0 %v3532
  %3915 = vmatmul.mubr.f32.gmra.mrb[0].mxu0 %v3531
  %v3916 = vpop.f32.mrb[0].mxu0
  %v3917 = vadd.f32 0.0, %v3916
  %v3918 = vpop.f32.mrb[0].mxu0
  %3919 = vmatprep.mubr.f32.mxu0 %v3535
  %3920 = vmatmul.mubr.f32.gmra.mrb[0].mxu0 %v3534
  %v3921 = vpop.f32.mrb[0].mxu0
  %v3922 = vadd.f32 0.0, %v3921
  %v3923 = vpop.f32.mrb[0].mxu0
  %3924 = vmatprep.mubr.f32.mxu0 %v3538
  %3925 = vmatmul.mubr.f32.gmra.mrb[0].mxu0 %v3537
  %v3926 = vpop.f32.mrb[0].mxu0
  %v3927 = vadd.f32 0.0, %v3926
  %v3928 = vpop.f32.mrb[0].mxu0
  %3929 = vmatprep.mubr.f32.mxu0 %v3541
  %3930 = vmatmul.mubr.f32.gmra.mrb[0].mxu0 %v3540
  %v3931 = vpop.f32.mrb[0].mxu0
  %v3932 = vadd.f32 0.0, %v3931
  %v3933 = vpop.f32.mrb[0].mxu0
  %3934 = vmatprep.mubr.f32.mxu0 %v3544
  %3935 = vmatmul.mubr.f32.gmra.mrb[0].mxu0 %v3543
  %v3936 = vpop.f32.mrb[0].mxu0
  %v3937 = vadd.f32 0.0, %v3936
  %v3938 = vpop.f32.mrb[0].mxu0
  %3939 = vmatprep.mubr.f32.mxu0 %v3547
  %3940 = vmatmul.mubr.f32.gmra.mrb[0].mxu0 %v3546
  %v3941 = vpop.f32.mrb[0].mxu0
  %v3942 = vadd.f32 0.0, %v3941
  %v3943 = vpop.f32.mrb[0].mxu0
  %3944 = vmatprep.mubr.f32.mxu0 %v3550
  %3945 = vmatmul.mubr.f32.gmra.mrb[0].mxu0 %v3549
  %v3946 = vpop.f32.mrb[0].mxu0
  %v3947 = vadd.f32 0.0, %v3946
  %v3948 = vpop.f32.mrb[0].mxu0
  %3949 = vmatprep.mubr.f32.mxu0 %v3553
  %3950 = vmatmul.mubr.f32.gmra.mrb[0].mxu0 %v3552
  %v3951 = vpop.f32.mrb[0].mxu0
  %v3952 = vadd.f32 0.0, %v3951
  %v3953 = vpop.f32.mrb[0].mxu0
  %3954 = vmatprep.mubr.f32.mxu0 %v3556
  %3955 = vmatmul.mubr.f32.gmra.mrb[0].mxu0 %v3555
  %v3956 = vpop.f32.mrb[0].mxu0
  %v3957 = vadd.f32 0.0, %v3956
  %v3958 = vpop.f32.mrb[0].mxu0
  %3959 = vmatprep.mubr.f32.mxu0 %v3559
  %3960 = vmatmul.mubr.f32.gmra.mrb[0].mxu0 %v3558
  %v3961 = vpop.f32.mrb[0].mxu0
  %v3962 = vadd.f32 0.0, %v3961
  %v3963 = vpop.f32.mrb[0].mxu0
  %3964 = vmatprep.mubr.f32.mxu0 %v3562
  %3965 = vmatmul.mubr.f32.gmra.mrb[0].mxu0 %v3561
  %v3966 = vpop.f32.mrb[0].mxu0
  %v3967 = vadd.f32 0.0, %v3966
  %v3968 = vpop.f32.mrb[0].mxu0
  %3969 = vmatprep.mubr.f32.mxu0 %v3565
  %3970 = vmatmul.mubr.f32.gmra.mrb[0].mxu0 %v3564
  %v3971 = vpop.f32.mrb[0].mxu0
  %v3972 = vadd.f32 0.0, %v3971
  %v3973 = vpop.f32.mrb[0].mxu0
  %3974 = vmatprep.mubr.f32.mxu0 %v3568
  %3975 = vmatmul.mubr.f32.gmra.mrb[0].mxu0 %v3567
  %v3976 = vpop.f32.mrb[0].mxu0
  %v3977 = vadd.f32 0.0, %v3976
  %v3978 = vpop.f32.mrb[0].mxu0
  %3979 = vmatprep.mubr.f32.mxu0 %v3571
  %3980 = vmatmul.mubr.f32.gmra.mrb[0].mxu0 %v3570
  %v3981 = vpop.f32.mrb[0].mxu0
  %v3982 = vadd.f32 0.0, %v3981
  %v3983 = vpop.f32.mrb[0].mxu0
  %3984 = vmatprep.mubr.f32.mxu0 %v3574
  %3985 = vmatmul.mubr.f32.gmra.mrb[0].mxu0 %v3573
  %v3986 = vpop.f32.mrb[0].mxu0
  %v3987 = vadd.f32 0.0, %v3986
  %v3988 = vpop.f32.mrb[0].mxu0
  %3989 = vmatprep.mubr.f32.mxu0 %v3577
  %3990 = vmatmul.mubr.f32.gmra.mrb[0].mxu0 %v3576
  %v3991 = vpop.f32.mrb[0].mxu0
  %v3992 = vadd.f32 0.0, %v3991
  %v3993 = vpop.f32.mrb[0].mxu0
  %3994 = vmatprep.mubr.f32.mxu0 %v3580
  %3995 = vmatmul.mubr.f32.gmra.mrb[0].mxu0 %v3579
  %v3996 = vpop.f32.mrb[0].mxu0
  %v3997 = vadd.f32 0.0, %v3996
  %v3998 = vpop.f32.mrb[0].mxu0
  %3999 = vmatprep.mubr.f32.mxu0 %v3583
  %4000 = vmatmul.mubr.f32.gmra.mrb[0].mxu0 %v3582
  %v4001 = vpop.f32.mrb[0].mxu0
  %v4002 = vadd.f32 0.0, %v4001
  %v4003 = vpop.f32.mrb[0].mxu0
  %4004 = vmatprep.mubr.f32.mxu0 %v3586
  %4005 = vmatmul.mubr.f32.gmra.mrb[0].mxu0 %v3585
  %v4006 = vpop.f32.mrb[0].mxu0
  %v4007 = vadd.f32 0.0, %v4006
  %v4008 = vpop.f32.mrb[0].mxu0
  %4009 = vmatprep.mubr.f32.mxu0 %v3589
  %4010 = vmatmul.mubr.f32.gmra.mrb[0].mxu0 %v3588
  %v4011 = vpop.f32.mrb[0].mxu0
  %v4012 = vadd.f32 0.0, %v4011
  %v4013 = vpop.f32.mrb[0].mxu0
  %4014 = vmatprep.mubr.f32.mxu0 %v3592
  %4015 = vmatmul.mubr.f32.gmra.mrb[0].mxu0 %v3591
  %v4016 = vpop.f32.mrb[0].mxu0
  %v4017 = vadd.f32 0.0, %v4016
  %v4018 = vpop.f32.mrb[0].mxu0
  %4019 = vmatprep.mubr.f32.mxu0 %v3595
  %4020 = vmatmul.mubr.f32.gmra.mrb[0].mxu0 %v3594
  %v4021 = vpop.f32.mrb[0].mxu0
  %v4022 = vadd.f32 0.0, %v4021
  %v4023 = vpop.f32.mrb[0].mxu0
  %4024 = vmatprep.mubr.f32.mxu0 %v3598
  %4025 = vmatmul.mubr.f32.gmra.mrb[0].mxu0 %v3597
  %v4026 = vpop.f32.mrb[0].mxu0
  %v4027 = vadd.f32 0.0, %v4026
  %v4028 = vpop.f32.mrb[0].mxu0
  %4029 = vmatprep.mubr.f32.mxu0 %v3601
  %4030 = vmatmul.mubr.f32.gmra.mrb[0].mxu0 %v3600
  %v4031 = vpop.f32.mrb[0].mxu0
  %v4032 = vadd.f32 0.0, %v4031
  %v4033 = vpop.f32.mrb[0].mxu0
  %4034 = vmatprep.mubr.f32.mxu0 %v3604
  %4035 = vmatmul.mubr.f32.gmra.mrb[0].mxu0 %v3603
  %v4036 = vpop.f32.mrb[0].mxu0
  %v4037 = vadd.f32 0.0, %v4036
  %v4038 = vpop.f32.mrb[0].mxu0
  %4039 = vdwg.mxu0
  %4040 = vmatprep.subr.mxu0 0.0
  %4041 = vmatpush1.msra.mxu0 %v3639
  %4042 = vmatprep.subr.mxu0 0.0
  %4043 = vmatpush1.msra.mxu0 %v3640
  %4044 = vmatprep.subr.mxu0 0.0
  %4045 = vmatpush1.msra.mxu0 %v3641
  %4046 = vmatprep.subr.mxu0 0.0
  %4047 = vmatpush1.msra.mxu0 %v3642
  %4048 = vmatprep.subr.mxu0 0.0
  %4049 = vmatpush1.msra.mxu0 %v3643
  %4050 = vmatprep.subr.mxu0 0.0
  %4051 = vmatpush1.msra.mxu0 %v3644
  %4052 = vmatprep.subr.mxu0 0.0
  %4053 = vmatpush1.msra.mxu0 %v3645
  %4054 = vmatprep.subr.mxu0 0.0
  %4055 = vmatpush1.msra.mxu0 %v3646
  %4056 = vmatprep.subr.mxu0 0.0
  %4057 = vmatpush1.msra.mxu0 %v3647
  %4058 = vmatprep.subr.mxu0 0.0
  %4059 = vmatpush1.msra.mxu0 %v3648
  %4060 = vmatprep.subr.mxu0 0.0
  %4061 = vmatpush1.msra.mxu0 %v3649
  %4062 = vmatprep.subr.mxu0 0.0
  %4063 = vmatpush1.msra.mxu0 %v3650
  %4064 = vmatprep.subr.mxu0 0.0
  %4065 = vmatpush1.msra.mxu0 %v3651
  %4066 = vmatprep.subr.mxu0 0.0
  %4067 = vmatpush1.msra.mxu0 %v3652
  %4068 = vmatprep.subr.mxu0 0.0
  %4069 = vmatpush1.msra.mxu0 %v3653
  %4070 = vmatprep.subr.mxu0 0.0
  %4071 = vmatpush1.msra.mxu0 %v3654
  %4072 = vmatprep.subr.mxu0 0.0
  %4073 = vmatpush1.msra.mxu0 0.0
  %4074 = vmatprep.subr.mxu0 0.0
  %4075 = vmatpush1.msra.mxu0 0.0
  %4076 = vmatprep.subr.mxu0 0.0
  %4077 = vmatpush1.msra.mxu0 0.0
  %4078 = vmatprep.subr.mxu0 0.0
  %4079 = vmatpush1.msra.mxu0 0.0
  %4080 = vmatprep.subr.mxu0 0.0
  %4081 = vmatpush1.msra.mxu0 0.0
  %4082 = vmatprep.subr.mxu0 0.0
  %4083 = vmatpush1.msra.mxu0 0.0
  %4084 = vmatprep.subr.mxu0 0.0
  %4085 = vmatpush1.msra.mxu0 0.0
  %4086 = vmatprep.subr.mxu0 0.0
  %4087 = vmatpush1.msra.mxu0 0.0
  %4088 = vmatprep.subr.mxu0 0.0
  %4089 = vmatpush1.msra.mxu0 0.0
  %4090 = vmatprep.subr.mxu0 0.0
  %4091 = vmatpush1.msra.mxu0 0.0
  %4092 = vmatprep.subr.mxu0 0.0
  %4093 = vmatpush1.msra.mxu0 0.0
  %4094 = vmatprep.subr.mxu0 0.0
  %4095 = vmatpush1.msra.mxu0 0.0
  %4096 = vmatprep.subr.mxu0 0.0
  %4097 = vmatpush1.msra.mxu0 0.0
  %4098 = vmatprep.subr.mxu0 0.0
  %4099 = vmatpush1.msra.mxu0 0.0
  %4100 = vmatprep.subr.mxu0 0.0
  %4101 = vmatpush1.msra.mxu0 0.0
  %4102 = vmatprep.subr.mxu0 0.0
  %4103 = vmatpush1.msra.mxu0 0.0
  %4104 = vmatprep.mubr.f32.mxu0 0.0
  %4105 = vmatmul.mubr.f32.gmra.mrb[0].mxu0 %v3416
  %v4106 = vpop.f32.mrb[0].mxu0
  %v4107 = vadd.f32 %v3722, %v4106
  %v4108 = vpop.f32.mrb[0].mxu0
  %4109 = vmatprep.mubr.f32.mxu0 0.0
  %4110 = vmatmul.mubr.f32.gmra.mrb[0].mxu0 %v3419
  %v4111 = vpop.f32.mrb[0].mxu0
  %v4112 = vadd.f32 %v3727, %v4111
  %v4113 = vpop.f32.mrb[0].mxu0
  %4114 = vmatprep.mubr.f32.mxu0 0.0
  %4115 = vmatmul.mubr.f32.gmra.mrb[0].mxu0 %v3422
  %v4116 = vpop.f32.mrb[0].mxu0
  %v4117 = vadd.f32 %v3732, %v4116
  %v4118 = vpop.f32.mrb[0].mxu0
  %4119 = vmatprep.mubr.f32.mxu0 0.0
  %4120 = vmatmul.mubr.f32.gmra.mrb[0].mxu0 %v3425
  %v4121 = vpop.f32.mrb[0].mxu0
  %v4122 = vadd.f32 %v3737, %v4121
  %v4123 = vpop.f32.mrb[0].mxu0
  %4124 = vmatprep.mubr.f32.mxu0 0.0
  %4125 = vmatmul.mubr.f32.gmra.mrb[0].mxu0 %v3428
  %v4126 = vpop.f32.mrb[0].mxu0
  %v4127 = vadd.f32 %v3742, %v4126
  %v4128 = vpop.f32.mrb[0].mxu0
  %4129 = vmatprep.mubr.f32.mxu0 0.0
  %4130 = vmatmul.mubr.f32.gmra.mrb[0].mxu0 %v3431
  %v4131 = vpop.f32.mrb[0].mxu0
  %v4132 = vadd.f32 %v3747, %v4131
  %v4133 = vpop.f32.mrb[0].mxu0
  %4134 = vmatprep.mubr.f32.mxu0 0.0
  %4135 = vmatmul.mubr.f32.gmra.mrb[0].mxu0 %v3434
  %v4136 = vpop.f32.mrb[0].mxu0
  %v4137 = vadd.f32 %v3752, %v4136
  %v4138 = vpop.f32.mrb[0].mxu0
  %4139 = vmatprep.mubr.f32.mxu0 0.0
  %4140 = vmatmul.mubr.f32.gmra.mrb[0].mxu0 %v3437
  %v4141 = vpop.f32.mrb[0].mxu0
  %v4142 = vadd.f32 %v3757, %v4141
  %v4143 = vpop.f32.mrb[0].mxu0
  %4144 = vmatprep.mubr.f32.mxu0 0.0
  %4145 = vmatmul.mubr.f32.gmra.mrb[0].mxu0 %v3440
  %v4146 = vpop.f32.mrb[0].mxu0
  %v4147 = vadd.f32 %v3762, %v4146
  %v4148 = vpop.f32.mrb[0].mxu0
  %4149 = vmatprep.mubr.f32.mxu0 0.0
  %4150 = vmatmul.mubr.f32.gmra.mrb[0].mxu0 %v3443
  %v4151 = vpop.f32.mrb[0].mxu0
  %v4152 = vadd.f32 %v3767, %v4151
  %v4153 = vpop.f32.mrb[0].mxu0
  %4154 = vmatprep.mubr.f32.mxu0 0.0
  %4155 = vmatmul.mubr.f32.gmra.mrb[0].mxu0 %v3446
  %v4156 = vpop.f32.mrb[0].mxu0
  %v4157 = vadd.f32 %v3772, %v4156
  %v4158 = vpop.f32.mrb[0].mxu0
  %4159 = vmatprep.mubr.f32.mxu0 0.0
  %4160 = vmatmul.mubr.f32.gmra.mrb[0].mxu0 %v3449
  %v4161 = vpop.f32.mrb[0].mxu0
  %v4162 = vadd.f32 %v3777, %v4161
  %v4163 = vpop.f32.mrb[0].mxu0
  %4164 = vmatprep.mubr.f32.mxu0 0.0
  %4165 = vmatmul.mubr.f32.gmra.mrb[0].mxu0 %v3452
  %v4166 = vpop.f32.mrb[0].mxu0
  %v4167 = vadd.f32 %v3782, %v4166
  %v4168 = vpop.f32.mrb[0].mxu0
  %4169 = vmatprep.mubr.f32.mxu0 0.0
  %4170 = vmatmul.mubr.f32.gmra.mrb[0].mxu0 %v3455
  %v4171 = vpop.f32.mrb[0].mxu0
  %v4172 = vadd.f32 %v3787, %v4171
  %v4173 = vpop.f32.mrb[0].mxu0
  %4174 = vmatprep.mubr.f32.mxu0 0.0
  %4175 = vmatmul.mubr.f32.gmra.mrb[0].mxu0 %v3458
  %v4176 = vpop.f32.mrb[0].mxu0
  %v4177 = vadd.f32 %v3792, %v4176
  %v4178 = vpop.f32.mrb[0].mxu0
  %4179 = vmatprep.mubr.f32.mxu0 0.0
  %4180 = vmatmul.mubr.f32.gmra.mrb[0].mxu0 %v3461
  %v4181 = vpop.f32.mrb[0].mxu0
  %v4182 = vadd.f32 %v3797, %v4181
  %v4183 = vpop.f32.mrb[0].mxu0
  %4184 = vmatprep.mubr.f32.mxu0 0.0
  %4185 = vmatmul.mubr.f32.gmra.mrb[0].mxu0 %v3464
  %v4186 = vpop.f32.mrb[0].mxu0
  %v4187 = vadd.f32 %v3802, %v4186
  %v4188 = vpop.f32.mrb[0].mxu0
  %4189 = vmatprep.mubr.f32.mxu0 0.0
  %4190 = vmatmul.mubr.f32.gmra.mrb[0].mxu0 %v3467
  %v4191 = vpop.f32.mrb[0].mxu0
  %v4192 = vadd.f32 %v3807, %v4191
  %v4193 = vpop.f32.mrb[0].mxu0
  %4194 = vmatprep.mubr.f32.mxu0 0.0
  %4195 = vmatmul.mubr.f32.gmra.mrb[0].mxu0 %v3470
  %v4196 = vpop.f32.mrb[0].mxu0
  %v4197 = vadd.f32 %v3812, %v4196
  %v4198 = vpop.f32.mrb[0].mxu0
  %4199 = vmatprep.mubr.f32.mxu0 0.0
  %4200 = vmatmul.mubr.f32.gmra.mrb[0].mxu0 %v3473
  %v4201 = vpop.f32.mrb[0].mxu0
  %v4202 = vadd.f32 %v3817, %v4201
  %v4203 = vpop.f32.mrb[0].mxu0
  %4204 = vmatprep.mubr.f32.mxu0 0.0
  %4205 = vmatmul.mubr.f32.gmra.mrb[0].mxu0 %v3476
  %v4206 = vpop.f32.mrb[0].mxu0
  %v4207 = vadd.f32 %v3822, %v4206
  %v4208 = vpop.f32.mrb[0].mxu0
  %4209 = vmatprep.mubr.f32.mxu0 0.0
  %4210 = vmatmul.mubr.f32.gmra.mrb[0].mxu0 %v3479
  %v4211 = vpop.f32.mrb[0].mxu0
  %v4212 = vadd.f32 %v3827, %v4211
  %v4213 = vpop.f32.mrb[0].mxu0
  %4214 = vmatprep.mubr.f32.mxu0 0.0
  %4215 = vmatmul.mubr.f32.gmra.mrb[0].mxu0 %v3482
  %v4216 = vpop.f32.mrb[0].mxu0
  %v4217 = vadd.f32 %v3832, %v4216
  %v4218 = vpop.f32.mrb[0].mxu0
  %4219 = vmatprep.mubr.f32.mxu0 0.0
  %4220 = vmatmul.mubr.f32.gmra.mrb[0].mxu0 %v3485
  %v4221 = vpop.f32.mrb[0].mxu0
  %v4222 = vadd.f32 %v3837, %v4221
  %v4223 = vpop.f32.mrb[0].mxu0
  %4224 = vmatprep.mubr.f32.mxu0 0.0
  %4225 = vmatmul.mubr.f32.gmra.mrb[0].mxu0 %v3488
  %v4226 = vpop.f32.mrb[0].mxu0
  %v4227 = vadd.f32 %v3842, %v4226
  %v4228 = vpop.f32.mrb[0].mxu0
  %4229 = vmatprep.mubr.f32.mxu0 0.0
  %4230 = vmatmul.mubr.f32.gmra.mrb[0].mxu0 %v3491
  %v4231 = vpop.f32.mrb[0].mxu0
  %v4232 = vadd.f32 %v3847, %v4231
  %v4233 = vpop.f32.mrb[0].mxu0
  %4234 = vmatprep.mubr.f32.mxu0 0.0
  %4235 = vmatmul.mubr.f32.gmra.mrb[0].mxu0 %v3494
  %v4236 = vpop.f32.mrb[0].mxu0
  %v4237 = vadd.f32 %v3852, %v4236
  %v4238 = vpop.f32.mrb[0].mxu0
  %4239 = vmatprep.mubr.f32.mxu0 0.0
  %4240 = vmatmul.mubr.f32.gmra.mrb[0].mxu0 %v3497
  %v4241 = vpop.f32.mrb[0].mxu0
  %v4242 = vadd.f32 %v3857, %v4241
  %v4243 = vpop.f32.mrb[0].mxu0
  %4244 = vmatprep.mubr.f32.mxu0 0.0
  %4245 = vmatmul.mubr.f32.gmra.mrb[0].mxu0 %v3500
  %v4246 = vpop.f32.mrb[0].mxu0
  %v4247 = vadd.f32 %v3862, %v4246
  %v4248 = vpop.f32.mrb[0].mxu0
  %4249 = vmatprep.mubr.f32.mxu0 0.0
  %4250 = vmatmul.mubr.f32.gmra.mrb[0].mxu0 %v3503
  %v4251 = vpop.f32.mrb[0].mxu0
  %v4252 = vadd.f32 %v3867, %v4251
  %v4253 = vpop.f32.mrb[0].mxu0
  %4254 = vmatprep.mubr.f32.mxu0 0.0
  %4255 = vmatmul.mubr.f32.gmra.mrb[0].mxu0 %v3506
  %v4256 = vpop.f32.mrb[0].mxu0
  %v4257 = vadd.f32 %v3872, %v4256
  %v4258 = vpop.f32.mrb[0].mxu0
  %4259 = vmatprep.mubr.f32.mxu0 0.0
  %4260 = vmatmul.mubr.f32.gmra.mrb[0].mxu0 %v3509
  %v4261 = vpop.f32.mrb[0].mxu0
  %v4262 = vadd.f32 %v3877, %v4261
  %v4263 = vpop.f32.mrb[0].mxu0
  %4264 = vmatprep.mubr.f32.mxu0 0.0
  %4265 = vmatmul.mubr.f32.gmra.mrb[0].mxu0 %v3512
  %v4266 = vpop.f32.mrb[0].mxu0
  %v4267 = vadd.f32 %v3882, %v4266
  %v4268 = vpop.f32.mrb[0].mxu0
  %4269 = vmatprep.mubr.f32.mxu0 0.0
  %4270 = vmatmul.mubr.f32.gmra.mrb[0].mxu0 %v3515
  %v4271 = vpop.f32.mrb[0].mxu0
  %v4272 = vadd.f32 %v3887, %v4271
  %v4273 = vpop.f32.mrb[0].mxu0
  %4274 = vmatprep.mubr.f32.mxu0 0.0
  %4275 = vmatmul.mubr.f32.gmra.mrb[0].mxu0 %v3518
  %v4276 = vpop.f32.mrb[0].mxu0
  %v4277 = vadd.f32 %v3892, %v4276
  %v4278 = vpop.f32.mrb[0].mxu0
  %4279 = vmatprep.mubr.f32.mxu0 0.0
  %4280 = vmatmul.mubr.f32.gmra.mrb[0].mxu0 %v3521
  %v4281 = vpop.f32.mrb[0].mxu0
  %v4282 = vadd.f32 %v3897, %v4281
  %v4283 = vpop.f32.mrb[0].mxu0
  %4284 = vmatprep.mubr.f32.mxu0 0.0
  %4285 = vmatmul.mubr.f32.gmra.mrb[0].mxu0 %v3524
  %v4286 = vpop.f32.mrb[0].mxu0
  %v4287 = vadd.f32 %v3902, %v4286
  %v4288 = vpop.f32.mrb[0].mxu0
  %4289 = vmatprep.mubr.f32.mxu0 0.0
  %4290 = vmatmul.mubr.f32.gmra.mrb[0].mxu0 %v3527
  %v4291 = vpop.f32.mrb[0].mxu0
  %v4292 = vadd.f32 %v3907, %v4291
  %v4293 = vpop.f32.mrb[0].mxu0
  %4294 = vmatprep.mubr.f32.mxu0 0.0
  %4295 = vmatmul.mubr.f32.gmra.mrb[0].mxu0 %v3530
  %v4296 = vpop.f32.mrb[0].mxu0
  %v4297 = vadd.f32 %v3912, %v4296
  %v4298 = vpop.f32.mrb[0].mxu0
  %4299 = vmatprep.mubr.f32.mxu0 0.0
  %4300 = vmatmul.mubr.f32.gmra.mrb[0].mxu0 %v3533
  %v4301 = vpop.f32.mrb[0].mxu0
  %v4302 = vadd.f32 %v3917, %v4301
  %v4303 = vpop.f32.mrb[0].mxu0
  %4304 = vmatprep.mubr.f32.mxu0 0.0
  %4305 = vmatmul.mubr.f32.gmra.mrb[0].mxu0 %v3536
  %v4306 = vpop.f32.mrb[0].mxu0
  %v4307 = vadd.f32 %v3922, %v4306
  %v4308 = vpop.f32.mrb[0].mxu0
  %4309 = vmatprep.mubr.f32.mxu0 0.0
  %4310 = vmatmul.mubr.f32.gmra.mrb[0].mxu0 %v3539
  %v4311 = vpop.f32.mrb[0].mxu0
  %v4312 = vadd.f32 %v3927, %v4311
  %v4313 = vpop.f32.mrb[0].mxu0
  %4314 = vmatprep.mubr.f32.mxu0 0.0
  %4315 = vmatmul.mubr.f32.gmra.mrb[0].mxu0 %v3542
  %v4316 = vpop.f32.mrb[0].mxu0
  %v4317 = vadd.f32 %v3932, %v4316
  %v4318 = vpop.f32.mrb[0].mxu0
  %4319 = vmatprep.mubr.f32.mxu0 0.0
  %4320 = vmatmul.mubr.f32.gmra.mrb[0].mxu0 %v3545
  %v4321 = vpop.f32.mrb[0].mxu0
  %v4322 = vadd.f32 %v3937, %v4321
  %v4323 = vpop.f32.mrb[0].mxu0
  %4324 = vmatprep.mubr.f32.mxu0 0.0
  %4325 = vmatmul.mubr.f32.gmra.mrb[0].mxu0 %v3548
  %v4326 = vpop.f32.mrb[0].mxu0
  %v4327 = vadd.f32 %v3942, %v4326
  %v4328 = vpop.f32.mrb[0].mxu0
  %4329 = vmatprep.mubr.f32.mxu0 0.0
  %4330 = vmatmul.mubr.f32.gmra.mrb[0].mxu0 %v3551
  %v4331 = vpop.f32.mrb[0].mxu0
  %v4332 = vadd.f32 %v3947, %v4331
  %v4333 = vpop.f32.mrb[0].mxu0
  %4334 = vmatprep.mubr.f32.mxu0 0.0
  %4335 = vmatmul.mubr.f32.gmra.mrb[0].mxu0 %v3554
  %v4336 = vpop.f32.mrb[0].mxu0
  %v4337 = vadd.f32 %v3952, %v4336
  %v4338 = vpop.f32.mrb[0].mxu0
  %4339 = vmatprep.mubr.f32.mxu0 0.0
  %4340 = vmatmul.mubr.f32.gmra.mrb[0].mxu0 %v3557
  %v4341 = vpop.f32.mrb[0].mxu0
  %v4342 = vadd.f32 %v3957, %v4341
  %v4343 = vpop.f32.mrb[0].mxu0
  %4344 = vmatprep.mubr.f32.mxu0 0.0
  %4345 = vmatmul.mubr.f32.gmra.mrb[0].mxu0 %v3560
  %v4346 = vpop.f32.mrb[0].mxu0
  %v4347 = vadd.f32 %v3962, %v4346
  %v4348 = vpop.f32.mrb[0].mxu0
  %4349 = vmatprep.mubr.f32.mxu0 0.0
  %4350 = vmatmul.mubr.f32.gmra.mrb[0].mxu0 %v3563
  %v4351 = vpop.f32.mrb[0].mxu0
  %v4352 = vadd.f32 %v3967, %v4351
  %v4353 = vpop.f32.mrb[0].mxu0
  %4354 = vmatprep.mubr.f32.mxu0 0.0
  %4355 = vmatmul.mubr.f32.gmra.mrb[0].mxu0 %v3566
  %v4356 = vpop.f32.mrb[0].mxu0
  %v4357 = vadd.f32 %v3972, %v4356
  %v4358 = vpop.f32.mrb[0].mxu0
  %4359 = vmatprep.mubr.f32.mxu0 0.0
  %4360 = vmatmul.mubr.f32.gmra.mrb[0].mxu0 %v3569
  %v4361 = vpop.f32.mrb[0].mxu0
  %v4362 = vadd.f32 %v3977, %v4361
  %v4363 = vpop.f32.mrb[0].mxu0
  %4364 = vmatprep.mubr.f32.mxu0 0.0
  %4365 = vmatmul.mubr.f32.gmra.mrb[0].mxu0 %v3572
  %v4366 = vpop.f32.mrb[0].mxu0
  %v4367 = vadd.f32 %v3982, %v4366
  %v4368 = vpop.f32.mrb[0].mxu0
  %4369 = vmatprep.mubr.f32.mxu0 0.0
  %4370 = vmatmul.mubr.f32.gmra.mrb[0].mxu0 %v3575
  %v4371 = vpop.f32.mrb[0].mxu0
  %v4372 = vadd.f32 %v3987, %v4371
  %v4373 = vpop.f32.mrb[0].mxu0
  %4374 = vmatprep.mubr.f32.mxu0 0.0
  %4375 = vmatmul.mubr.f32.gmra.mrb[0].mxu0 %v3578
  %v4376 = vpop.f32.mrb[0].mxu0
  %v4377 = vadd.f32 %v3992, %v4376
  %v4378 = vpop.f32.mrb[0].mxu0
  %4379 = vmatprep.mubr.f32.mxu0 0.0
  %4380 = vmatmul.mubr.f32.gmra.mrb[0].mxu0 %v3581
  %v4381 = vpop.f32.mrb[0].mxu0
  %v4382 = vadd.f32 %v3997, %v4381
  %v4383 = vpop.f32.mrb[0].mxu0
  %4384 = vmatprep.mubr.f32.mxu0 0.0
  %4385 = vmatmul.mubr.f32.gmra.mrb[0].mxu0 %v3584
  %v4386 = vpop.f32.mrb[0].mxu0
  %v4387 = vadd.f32 %v4002, %v4386
  %v4388 = vpop.f32.mrb[0].mxu0
  %4389 = vmatprep.mubr.f32.mxu0 0.0
  %4390 = vmatmul.mubr.f32.gmra.mrb[0].mxu0 %v3587
  %v4391 = vpop.f32.mrb[0].mxu0
  %v4392 = vadd.f32 %v4007, %v4391
  %v4393 = vpop.f32.mrb[0].mxu0
  %4394 = vmatprep.mubr.f32.mxu0 0.0
  %4395 = vmatmul.mubr.f32.gmra.mrb[0].mxu0 %v3590
  %v4396 = vpop.f32.mrb[0].mxu0
  %v4397 = vadd.f32 %v4012, %v4396
  %v4398 = vpop.f32.mrb[0].mxu0
  %4399 = vmatprep.mubr.f32.mxu0 0.0
  %4400 = vmatmul.mubr.f32.gmra.mrb[0].mxu0 %v3593
  %v4401 = vpop.f32.mrb[0].mxu0
  %v4402 = vadd.f32 %v4017, %v4401
  %v4403 = vpop.f32.mrb[0].mxu0
  %4404 = vmatprep.mubr.f32.mxu0 0.0
  %4405 = vmatmul.mubr.f32.gmra.mrb[0].mxu0 %v3596
  %v4406 = vpop.f32.mrb[0].mxu0
  %v4407 = vadd.f32 %v4022, %v4406
  %v4408 = vpop.f32.mrb[0].mxu0
  %4409 = vmatprep.mubr.f32.mxu0 0.0
  %4410 = vmatmul.mubr.f32.gmra.mrb[0].mxu0 %v3599
  %v4411 = vpop.f32.mrb[0].mxu0
  %v4412 = vadd.f32 %v4027, %v4411
  %v4413 = vpop.f32.mrb[0].mxu0
  %4414 = vmatprep.mubr.f32.mxu0 0.0
  %4415 = vmatmul.mubr.f32.gmra.mrb[0].mxu0 %v3602
  %v4416 = vpop.f32.mrb[0].mxu0
  %v4417 = vadd.f32 %v4032, %v4416
  %v4418 = vpop.f32.mrb[0].mxu0
  %4419 = vmatprep.mubr.f32.mxu0 0.0
  %4420 = vmatmul.mubr.f32.gmra.mrb[0].mxu0 %v3605
  %v4421 = vpop.f32.mrb[0].mxu0
  %v4422 = vadd.f32 %v4037, %v4421
  %v4423 = vpop.f32.mrb[0].mxu0
  %4424 = vdwg.mxu0
  %v4425 = vadd.f32 %v2711, %v4107
  %v4426 = vadd.f32 %v2716, %v4112
  %v4427 = vadd.f32 %v2721, %v4117
  %v4428 = vadd.f32 %v2726, %v4122
  %v4429 = vadd.f32 %v2731, %v4127
  %v4430 = vadd.f32 %v2736, %v4132
  %v4431 = vadd.f32 %v2741, %v4137
  %v4432 = vadd.f32 %v2746, %v4142
  %v4433 = vadd.f32 %v2751, %v4147
  %v4434 = vadd.f32 %v2756, %v4152
  %v4435 = vadd.f32 %v2761, %v4157
  %v4436 = vadd.f32 %v2766, %v4162
  %v4437 = vadd.f32 %v2771, %v4167
  %v4438 = vadd.f32 %v2776, %v4172
  %v4439 = vadd.f32 %v2781, %v4177
  %v4440 = vadd.f32 %v2786, %v4182
  %v4441 = vadd.f32 %v2791, %v4187
  %v4442 = vadd.f32 %v2796, %v4192
  %v4443 = vadd.f32 %v2801, %v4197
  %v4444 = vadd.f32 %v2806, %v4202
  %v4445 = vadd.f32 %v2811, %v4207
  %v4446 = vadd.f32 %v2816, %v4212
  %v4447 = vadd.f32 %v2821, %v4217
  %v4448 = vadd.f32 %v2826, %v4222
  %v4449 = vadd.f32 %v2831, %v4227
  %v4450 = vadd.f32 %v2836, %v4232
  %v4451 = vadd.f32 %v2841, %v4237
  %v4452 = vadd.f32 %v2846, %v4242
  %v4453 = vadd.f32 %v2851, %v4247
  %v4454 = vadd.f32 %v2856, %v4252
  %v4455 = vadd.f32 %v2861, %v4257
  %v4456 = vadd.f32 %v2866, %v4262
  %v4457 = vadd.f32 %v2871, %v4267
  %v4458 = vadd.f32 %v2876, %v4272
  %v4459 = vadd.f32 %v2881, %v4277
  %v4460 = vadd.f32 %v2886, %v4282
  %v4461 = vadd.f32 %v2891, %v4287
  %v4462 = vadd.f32 %v2896, %v4292
  %v4463 = vadd.f32 %v2901, %v4297
  %v4464 = vadd.f32 %v2906, %v4302
  %v4465 = vadd.f32 %v2911, %v4307
  %v4466 = vadd.f32 %v2916, %v4312
  %v4467 = vadd.f32 %v2921, %v4317
  %v4468 = vadd.f32 %v2926, %v4322
  %v4469 = vadd.f32 %v2931, %v4327
  %v4470 = vadd.f32 %v2936, %v4332
  %v4471 = vadd.f32 %v2941, %v4337
  %v4472 = vadd.f32 %v2946, %v4342
  %v4473 = vadd.f32 %v2951, %v4347
  %v4474 = vadd.f32 %v2956, %v4352
  %v4475 = vadd.f32 %v2961, %v4357
  %v4476 = vadd.f32 %v2966, %v4362
  %v4477 = vadd.f32 %v2971, %v4367
  %v4478 = vadd.f32 %v2976, %v4372
  %v4479 = vadd.f32 %v2981, %v4377
  %v4480 = vadd.f32 %v2986, %v4382
  %v4481 = vadd.f32 %v2991, %v4387
  %v4482 = vadd.f32 %v2996, %v4392
  %v4483 = vadd.f32 %v3001, %v4397
  %v4484 = vadd.f32 %v3006, %v4402
  %v4485 = vadd.f32 %v3011, %v4407
  %v4486 = vadd.f32 %v3016, %v4412
  %v4487 = vadd.f32 %v3021, %v4417
  %v4488 = vadd.f32 %v3026, %v4422
  %v4489 = vld [vmem:[%s2] sm:$0x1]
  %v4490 = vld [vmem:[%s3] sm:$0x1]
  %v4491 = vadd.f32 %v4425, %v4426
  %v4492 = vadd.f32 %v4491, %v4427
  %v4493 = vadd.f32 %v4492, %v4428
  %v4494 = vadd.f32 %v4493, %v4429
  %v4495 = vadd.f32 %v4494, %v4430
  %v4496 = vadd.f32 %v4495, %v4431
  %v4497 = vadd.f32 %v4496, %v4432
  %v4498 = vadd.f32 %v4497, %v4433
  %v4499 = vadd.f32 %v4498, %v4434
  %v4500 = vadd.f32 %v4499, %v4435
  %v4501 = vadd.f32 %v4500, %v4436
  %v4502 = vadd.f32 %v4501, %v4437
  %v4503 = vadd.f32 %v4502, %v4438
  %v4504 = vadd.f32 %v4503, %v4439
  %v4505 = vadd.f32 %v4504, %v4440
  %v4506 = vadd.f32 %v4505, %v4441
  %v4507 = vadd.f32 %v4506, %v4442
  %v4508 = vadd.f32 %v4507, %v4443
  %v4509 = vadd.f32 %v4508, %v4444
  %v4510 = vadd.f32 %v4509, %v4445
  %v4511 = vadd.f32 %v4510, %v4446
  %v4512 = vadd.f32 %v4511, %v4447
  %v4513 = vadd.f32 %v4512, %v4448
  %v4514 = vadd.f32 %v4513, %v4449
  %v4515 = vadd.f32 %v4514, %v4450
  %v4516 = vadd.f32 %v4515, %v4451
  %v4517 = vadd.f32 %v4516, %v4452
  %v4518 = vadd.f32 %v4517, %v4453
  %v4519 = vadd.f32 %v4518, %v4454
  %v4520 = vadd.f32 %v4519, %v4455
  %v4521 = vadd.f32 %v4520, %v4456
  %v4522 = vadd.f32 %v4521, %v4457
  %v4523 = vadd.f32 %v4522, %v4458
  %v4524 = vadd.f32 %v4523, %v4459
  %v4525 = vadd.f32 %v4524, %v4460
  %v4526 = vadd.f32 %v4525, %v4461
  %v4527 = vadd.f32 %v4526, %v4462
  %v4528 = vadd.f32 %v4527, %v4463
  %v4529 = vadd.f32 %v4528, %v4464
  %v4530 = vadd.f32 %v4529, %v4465
  %v4531 = vadd.f32 %v4530, %v4466
  %v4532 = vadd.f32 %v4531, %v4467
  %v4533 = vadd.f32 %v4532, %v4468
  %v4534 = vadd.f32 %v4533, %v4469
  %v4535 = vadd.f32 %v4534, %v4470
  %v4536 = vadd.f32 %v4535, %v4471
  %v4537 = vadd.f32 %v4536, %v4472
  %v4538 = vadd.f32 %v4537, %v4473
  %v4539 = vadd.f32 %v4538, %v4474
  %v4540 = vadd.f32 %v4539, %v4475
  %v4541 = vadd.f32 %v4540, %v4476
  %v4542 = vadd.f32 %v4541, %v4477
  %v4543 = vadd.f32 %v4542, %v4478
  %v4544 = vadd.f32 %v4543, %v4479
  %v4545 = vadd.f32 %v4544, %v4480
  %v4546 = vadd.f32 %v4545, %v4481
  %v4547 = vadd.f32 %v4546, %v4482
  %v4548 = vadd.f32 %v4547, %v4483
  %v4549 = vadd.f32 %v4548, %v4484
  %v4550 = vadd.f32 %v4549, %v4485
  %v4551 = vadd.f32 %v4550, %v4486
  %v4552 = vadd.f32 %v4551, %v4487
  %v4553 = vadd.f32 %v4552, %v4488
  %v4554 = vrot.slane %v4553, 4
  %v4555 = vadd.f32 %v4553, %v4554
  %v4556 = vrot.slane %v4555, 2
  %v4557 = vadd.f32 %v4555, %v4556
  %v4558 = vrot.slane %v4557, 1
  %v4559 = vadd.f32 %v4557, %v4558
  %v4560 = vmul.f32 %v4425, %v4425
  %v4561 = vmul.f32 %v4426, %v4426
  %v4562 = vmul.f32 %v4427, %v4427
  %v4563 = vmul.f32 %v4428, %v4428
  %v4564 = vmul.f32 %v4429, %v4429
  %v4565 = vmul.f32 %v4430, %v4430
  %v4566 = vmul.f32 %v4431, %v4431
  %v4567 = vmul.f32 %v4432, %v4432
  %v4568 = vmul.f32 %v4433, %v4433
  %v4569 = vmul.f32 %v4434, %v4434
  %v4570 = vmul.f32 %v4435, %v4435
  %v4571 = vmul.f32 %v4436, %v4436
  %v4572 = vmul.f32 %v4437, %v4437
  %v4573 = vmul.f32 %v4438, %v4438
  %v4574 = vmul.f32 %v4439, %v4439
  %v4575 = vmul.f32 %v4440, %v4440
  %v4576 = vmul.f32 %v4441, %v4441
  %v4577 = vmul.f32 %v4442, %v4442
  %v4578 = vmul.f32 %v4443, %v4443
  %v4579 = vmul.f32 %v4444, %v4444
  %v4580 = vmul.f32 %v4445, %v4445
  %v4581 = vmul.f32 %v4446, %v4446
  %v4582 = vmul.f32 %v4447, %v4447
  %v4583 = vmul.f32 %v4448, %v4448
  %v4584 = vmul.f32 %v4449, %v4449
  %v4585 = vmul.f32 %v4450, %v4450
  %v4586 = vmul.f32 %v4451, %v4451
  %v4587 = vmul.f32 %v4452, %v4452
  %v4588 = vmul.f32 %v4453, %v4453
  %v4589 = vmul.f32 %v4454, %v4454
  %v4590 = vmul.f32 %v4455, %v4455
  %v4591 = vmul.f32 %v4456, %v4456
  %v4592 = vmul.f32 %v4457, %v4457
  %v4593 = vmul.f32 %v4458, %v4458
  %v4594 = vmul.f32 %v4459, %v4459
  %v4595 = vmul.f32 %v4460, %v4460
  %v4596 = vmul.f32 %v4461, %v4461
  %v4597 = vmul.f32 %v4462, %v4462
  %v4598 = vmul.f32 %v4463, %v4463
  %v4599 = vmul.f32 %v4464, %v4464
  %v4600 = vmul.f32 %v4465, %v4465
  %v4601 = vmul.f32 %v4466, %v4466
  %v4602 = vmul.f32 %v4467, %v4467
  %v4603 = vmul.f32 %v4468, %v4468
  %v4604 = vmul.f32 %v4469, %v4469
  %v4605 = vmul.f32 %v4470, %v4470
  %v4606 = vmul.f32 %v4471, %v4471
  %v4607 = vmul.f32 %v4472, %v4472
  %v4608 = vmul.f32 %v4473, %v4473
  %v4609 = vmul.f32 %v4474, %v4474
  %v4610 = vmul.f32 %v4475, %v4475
  %v4611 = vmul.f32 %v4476, %v4476
  %v4612 = vmul.f32 %v4477, %v4477
  %v4613 = vmul.f32 %v4478, %v4478
  %v4614 = vmul.f32 %v4479, %v4479
  %v4615 = vmul.f32 %v4480, %v4480
  %v4616 = vmul.f32 %v4481, %v4481
  %v4617 = vmul.f32 %v4482, %v4482
  %v4618 = vmul.f32 %v4483, %v4483
  %v4619 = vmul.f32 %v4484, %v4484
  %v4620 = vmul.f32 %v4485, %v4485
  %v4621 = vmul.f32 %v4486, %v4486
  %v4622 = vmul.f32 %v4487, %v4487
  %v4623 = vmul.f32 %v4488, %v4488
  %v4624 = vadd.f32 %v4560, %v4561
  %v4625 = vadd.f32 %v4624, %v4562
  %v4626 = vadd.f32 %v4625, %v4563
  %v4627 = vadd.f32 %v4626, %v4564
  %v4628 = vadd.f32 %v4627, %v4565
  %v4629 = vadd.f32 %v4628, %v4566
  %v4630 = vadd.f32 %v4629, %v4567
  %v4631 = vadd.f32 %v4630, %v4568
  %v4632 = vadd.f32 %v4631, %v4569
  %v4633 = vadd.f32 %v4632, %v4570
  %v4634 = vadd.f32 %v4633, %v4571
  %v4635 = vadd.f32 %v4634, %v4572
  %v4636 = vadd.f32 %v4635, %v4573
  %v4637 = vadd.f32 %v4636, %v4574
  %v4638 = vadd.f32 %v4637, %v4575
  %v4639 = vadd.f32 %v4638, %v4576
  %v4640 = vadd.f32 %v4639, %v4577
  %v4641 = vadd.f32 %v4640, %v4578
  %v4642 = vadd.f32 %v4641, %v4579
  %v4643 = vadd.f32 %v4642, %v4580
  %v4644 = vadd.f32 %v4643, %v4581
  %v4645 = vadd.f32 %v4644, %v4582
  %v4646 = vadd.f32 %v4645, %v4583
  %v4647 = vadd.f32 %v4646, %v4584
  %v4648 = vadd.f32 %v4647, %v4585
  %v4649 = vadd.f32 %v4648, %v4586
  %v4650 = vadd.f32 %v4649, %v4587
  %v4651 = vadd.f32 %v4650, %v4588
  %v4652 = vadd.f32 %v4651, %v4589
  %v4653 = vadd.f32 %v4652, %v4590
  %v4654 = vadd.f32 %v4653, %v4591
  %v4655 = vadd.f32 %v4654, %v4592
  %v4656 = vadd.f32 %v4655, %v4593
  %v4657 = vadd.f32 %v4656, %v4594
  %v4658 = vadd.f32 %v4657, %v4595
  %v4659 = vadd.f32 %v4658, %v4596
  %v4660 = vadd.f32 %v4659, %v4597
  %v4661 = vadd.f32 %v4660, %v4598
  %v4662 = vadd.f32 %v4661, %v4599
  %v4663 = vadd.f32 %v4662, %v4600
  %v4664 = vadd.f32 %v4663, %v4601
  %v4665 = vadd.f32 %v4664, %v4602
  %v4666 = vadd.f32 %v4665, %v4603
  %v4667 = vadd.f32 %v4666, %v4604
  %v4668 = vadd.f32 %v4667, %v4605
  %v4669 = vadd.f32 %v4668, %v4606
  %v4670 = vadd.f32 %v4669, %v4607
  %v4671 = vadd.f32 %v4670, %v4608
  %v4672 = vadd.f32 %v4671, %v4609
  %v4673 = vadd.f32 %v4672, %v4610
  %v4674 = vadd.f32 %v4673, %v4611
  %v4675 = vadd.f32 %v4674, %v4612
  %v4676 = vadd.f32 %v4675, %v4613
  %v4677 = vadd.f32 %v4676, %v4614
  %v4678 = vadd.f32 %v4677, %v4615
  %v4679 = vadd.f32 %v4678, %v4616
  %v4680 = vadd.f32 %v4679, %v4617
  %v4681 = vadd.f32 %v4680, %v4618
  %v4682 = vadd.f32 %v4681, %v4619
  %v4683 = vadd.f32 %v4682, %v4620
  %v4684 = vadd.f32 %v4683, %v4621
  %v4685 = vadd.f32 %v4684, %v4622
  %v4686 = vadd.f32 %v4685, %v4623
  %v4687 = vrot.slane %v4686, 4
  %v4688 = vadd.f32 %v4686, %v4687
  %v4689 = vrot.slane %v4688, 2
  %v4690 = vadd.f32 %v4688, %v4689
  %v4691 = vrot.slane %v4690, 1
  %v4692 = vadd.f32 %v4690, %v4691
  %v4693 = vmul.f32 %v4559, 0.001953125
  %v4694 = vmul.f32 %v4692, 0.001953125
  %v4695 = vmul.f32 %v4693, %v4693
  %v4696 = vsub.f32 %v4694, %v4695
  %v4697 = vadd.f32 %v4696, 1e-05
  %v4698 = vrsqrt.pop %v4697
  %v4699 = vmul.f32 %v4489, %v4698
  %v4700 = vmul.f32 %v4693, %v4699
  %v4701 = vsub.f32 %v4490, %v4700
  %v4703 = vlaneseq
  %v4704 = vshrl.u32 %v4703, 7
  %v4705 = vsub.s32 0, %v4704
  %v4706 = vrot.slane %v4699, %v4705
  %v4708 = vmul.f32 %v4425, %v4706
  %v4709 = vmul.f32 %v4426, %v4706
  %v4710 = vmul.f32 %v4427, %v4706
  %v4711 = vmul.f32 %v4428, %v4706
  %v4712 = vmul.f32 %v4429, %v4706
  %v4713 = vmul.f32 %v4430, %v4706
  %v4714 = vmul.f32 %v4431, %v4706
  %v4715 = vmul.f32 %v4432, %v4706
  %v4716 = vmul.f32 %v4433, %v4706
  %v4717 = vmul.f32 %v4434, %v4706
  %v4718 = vmul.f32 %v4435, %v4706
  %v4719 = vmul.f32 %v4436, %v4706
  %v4720 = vmul.f32 %v4437, %v4706
  %v4721 = vmul.f32 %v4438, %v4706
  %v4722 = vmul.f32 %v4439, %v4706
  %v4723 = vmul.f32 %v4440, %v4706
  %v4724 = vmul.f32 %v4441, %v4706
  %v4725 = vmul.f32 %v4442, %v4706
  %v4726 = vmul.f32 %v4443, %v4706
  %v4727 = vmul.f32 %v4444, %v4706
  %v4728 = vmul.f32 %v4445, %v4706
  %v4729 = vmul.f32 %v4446, %v4706
  %v4730 = vmul.f32 %v4447, %v4706
  %v4731 = vmul.f32 %v4448, %v4706
  %v4732 = vmul.f32 %v4449, %v4706
  %v4733 = vmul.f32 %v4450, %v4706
  %v4734 = vmul.f32 %v4451, %v4706
  %v4735 = vmul.f32 %v4452, %v4706
  %v4736 = vmul.f32 %v4453, %v4706
  %v4737 = vmul.f32 %v4454, %v4706
  %v4738 = vmul.f32 %v4455, %v4706
  %v4739 = vmul.f32 %v4456, %v4706
  %v4740 = vmul.f32 %v4457, %v4706
  %v4741 = vmul.f32 %v4458, %v4706
  %v4742 = vmul.f32 %v4459, %v4706
  %v4743 = vmul.f32 %v4460, %v4706
  %v4744 = vmul.f32 %v4461, %v4706
  %v4745 = vmul.f32 %v4462, %v4706
  %v4746 = vmul.f32 %v4463, %v4706
  %v4747 = vmul.f32 %v4464, %v4706
  %v4748 = vmul.f32 %v4465, %v4706
  %v4749 = vmul.f32 %v4466, %v4706
  %v4750 = vmul.f32 %v4467, %v4706
  %v4751 = vmul.f32 %v4468, %v4706
  %v4752 = vmul.f32 %v4469, %v4706
  %v4753 = vmul.f32 %v4470, %v4706
  %v4754 = vmul.f32 %v4471, %v4706
  %v4755 = vmul.f32 %v4472, %v4706
  %v4756 = vmul.f32 %v4473, %v4706
  %v4757 = vmul.f32 %v4474, %v4706
  %v4758 = vmul.f32 %v4475, %v4706
  %v4759 = vmul.f32 %v4476, %v4706
  %v4760 = vmul.f32 %v4477, %v4706
  %v4761 = vmul.f32 %v4478, %v4706
  %v4762 = vmul.f32 %v4479, %v4706
  %v4763 = vmul.f32 %v4480, %v4706
  %v4764 = vmul.f32 %v4481, %v4706
  %v4765 = vmul.f32 %v4482, %v4706
  %v4766 = vmul.f32 %v4483, %v4706
  %v4767 = vmul.f32 %v4484, %v4706
  %v4768 = vmul.f32 %v4485, %v4706
  %v4769 = vmul.f32 %v4486, %v4706
  %v4770 = vmul.f32 %v4487, %v4706
  %v4771 = vmul.f32 %v4488, %v4706
  %v4773 = vlaneseq
  %v4774 = vshrl.u32 %v4773, 7
  %v4775 = vsub.s32 0, %v4774
  %v4776 = vrot.slane %v4701, %v4775
  %v4778 = vadd.f32 %v4708, %v4776
  %v4779 = vadd.f32 %v4709, %v4776
  %v4780 = vadd.f32 %v4710, %v4776
  %v4781 = vadd.f32 %v4711, %v4776
  %v4782 = vadd.f32 %v4712, %v4776
  %v4783 = vadd.f32 %v4713, %v4776
  %v4784 = vadd.f32 %v4714, %v4776
  %v4785 = vadd.f32 %v4715, %v4776
  %v4786 = vadd.f32 %v4716, %v4776
  %v4787 = vadd.f32 %v4717, %v4776
  %v4788 = vadd.f32 %v4718, %v4776
  %v4789 = vadd.f32 %v4719, %v4776
  %v4790 = vadd.f32 %v4720, %v4776
  %v4791 = vadd.f32 %v4721, %v4776
  %v4792 = vadd.f32 %v4722, %v4776
  %v4793 = vadd.f32 %v4723, %v4776
  %v4794 = vadd.f32 %v4724, %v4776
  %v4795 = vadd.f32 %v4725, %v4776
  %v4796 = vadd.f32 %v4726, %v4776
  %v4797 = vadd.f32 %v4727, %v4776
  %v4798 = vadd.f32 %v4728, %v4776
  %v4799 = vadd.f32 %v4729, %v4776
  %v4800 = vadd.f32 %v4730, %v4776
  %v4801 = vadd.f32 %v4731, %v4776
  %v4802 = vadd.f32 %v4732, %v4776
  %v4803 = vadd.f32 %v4733, %v4776
  %v4804 = vadd.f32 %v4734, %v4776
  %v4805 = vadd.f32 %v4735, %v4776
  %v4806 = vadd.f32 %v4736, %v4776
  %v4807 = vadd.f32 %v4737, %v4776
  %v4808 = vadd.f32 %v4738, %v4776
  %v4809 = vadd.f32 %v4739, %v4776
  %v4810 = vadd.f32 %v4740, %v4776
  %v4811 = vadd.f32 %v4741, %v4776
  %v4812 = vadd.f32 %v4742, %v4776
  %v4813 = vadd.f32 %v4743, %v4776
  %v4814 = vadd.f32 %v4744, %v4776
  %v4815 = vadd.f32 %v4745, %v4776
  %v4816 = vadd.f32 %v4746, %v4776
  %v4817 = vadd.f32 %v4747, %v4776
  %v4818 = vadd.f32 %v4748, %v4776
  %v4819 = vadd.f32 %v4749, %v4776
  %v4820 = vadd.f32 %v4750, %v4776
  %v4821 = vadd.f32 %v4751, %v4776
  %v4822 = vadd.f32 %v4752, %v4776
  %v4823 = vadd.f32 %v4753, %v4776
  %v4824 = vadd.f32 %v4754, %v4776
  %v4825 = vadd.f32 %v4755, %v4776
  %v4826 = vadd.f32 %v4756, %v4776
  %v4827 = vadd.f32 %v4757, %v4776
  %v4828 = vadd.f32 %v4758, %v4776
  %v4829 = vadd.f32 %v4759, %v4776
  %v4830 = vadd.f32 %v4760, %v4776
  %v4831 = vadd.f32 %v4761, %v4776
  %v4832 = vadd.f32 %v4762, %v4776
  %v4833 = vadd.f32 %v4763, %v4776
  %v4834 = vadd.f32 %v4764, %v4776
  %v4835 = vadd.f32 %v4765, %v4776
  %v4836 = vadd.f32 %v4766, %v4776
  %v4837 = vadd.f32 %v4767, %v4776
  %v4838 = vadd.f32 %v4768, %v4776
  %v4839 = vadd.f32 %v4769, %v4776
  %v4840 = vadd.f32 %v4770, %v4776
  %v4841 = vadd.f32 %v4771, %v4776
  %v4842 = vmax.f32 %v4778, 0.0
  %v4843 = vmax.f32 %v4779, 0.0
  %v4844 = vmax.f32 %v4780, 0.0
  %v4845 = vmax.f32 %v4781, 0.0
  %v4846 = vmax.f32 %v4782, 0.0
  %v4847 = vmax.f32 %v4783, 0.0
  %v4848 = vmax.f32 %v4784, 0.0
  %v4849 = vmax.f32 %v4785, 0.0
  %v4850 = vmax.f32 %v4786, 0.0
  %v4851 = vmax.f32 %v4787, 0.0
  %v4852 = vmax.f32 %v4788, 0.0
  %v4853 = vmax.f32 %v4789, 0.0
  %v4854 = vmax.f32 %v4790, 0.0
  %v4855 = vmax.f32 %v4791, 0.0
  %v4856 = vmax.f32 %v4792, 0.0
  %v4857 = vmax.f32 %v4793, 0.0
  %v4858 = vmax.f32 %v4794, 0.0
  %v4859 = vmax.f32 %v4795, 0.0
  %v4860 = vmax.f32 %v4796, 0.0
  %v4861 = vmax.f32 %v4797, 0.0
  %v4862 = vmax.f32 %v4798, 0.0
  %v4863 = vmax.f32 %v4799, 0.0
  %v4864 = vmax.f32 %v4800, 0.0
  %v4865 = vmax.f32 %v4801, 0.0
  %v4866 = vmax.f32 %v4802, 0.0
  %v4867 = vmax.f32 %v4803, 0.0
  %v4868 = vmax.f32 %v4804, 0.0
  %v4869 = vmax.f32 %v4805, 0.0
  %v4870 = vmax.f32 %v4806, 0.0
  %v4871 = vmax.f32 %v4807, 0.0
  %v4872 = vmax.f32 %v4808, 0.0
  %v4873 = vmax.f32 %v4809, 0.0
  %v4874 = vmax.f32 %v4810, 0.0
  %v4875 = vmax.f32 %v4811, 0.0
  %v4876 = vmax.f32 %v4812, 0.0
  %v4877 = vmax.f32 %v4813, 0.0
  %v4878 = vmax.f32 %v4814, 0.0
  %v4879 = vmax.f32 %v4815, 0.0
  %v4880 = vmax.f32 %v4816, 0.0
  %v4881 = vmax.f32 %v4817, 0.0
  %v4882 = vmax.f32 %v4818, 0.0
  %v4883 = vmax.f32 %v4819, 0.0
  %v4884 = vmax.f32 %v4820, 0.0
  %v4885 = vmax.f32 %v4821, 0.0
  %v4886 = vmax.f32 %v4822, 0.0
  %v4887 = vmax.f32 %v4823, 0.0
  %v4888 = vmax.f32 %v4824, 0.0
  %v4889 = vmax.f32 %v4825, 0.0
  %v4890 = vmax.f32 %v4826, 0.0
  %v4891 = vmax.f32 %v4827, 0.0
  %v4892 = vmax.f32 %v4828, 0.0
  %v4893 = vmax.f32 %v4829, 0.0
  %v4894 = vmax.f32 %v4830, 0.0
  %v4895 = vmax.f32 %v4831, 0.0
  %v4896 = vmax.f32 %v4832, 0.0
  %v4897 = vmax.f32 %v4833, 0.0
  %v4898 = vmax.f32 %v4834, 0.0
  %v4899 = vmax.f32 %v4835, 0.0
  %v4900 = vmax.f32 %v4836, 0.0
  %v4901 = vmax.f32 %v4837, 0.0
  %v4902 = vmax.f32 %v4838, 0.0
  %v4903 = vmax.f32 %v4839, 0.0
  %v4904 = vmax.f32 %v4840, 0.0
  %v4905 = vmax.f32 %v4841, 0.0
  %4906 = vst [vmem:[%s175 + $0x1] sm:$0xff] %v4842
  %4907 = vst [vmem:[%s175 + $0x9] sm:$0xff] %v4843
  %4908 = vst [vmem:[%s175 + $0x19] sm:$0xff] %v4844
  %4909 = vst [vmem:[%s175 + $0x21] sm:$0xff] %v4845
  %4910 = vst [vmem:[%s175 + $0x31] sm:$0xff] %v4846
  %4911 = vst [vmem:[%s175 + $0x39] sm:$0xff] %v4847
  %4912 = vst [vmem:[%s175 + $0x49] sm:$0xff] %v4848
  %4913 = vst [vmem:[%s175 + $0x51] sm:$0xff] %v4849
  %4914 = vst [vmem:[%s175 + $0x61] sm:$0xff] %v4850
  %4915 = vst [vmem:[%s175 + $0x69] sm:$0xff] %v4851
  %4916 = vst [vmem:[%s175 + $0x79] sm:$0xff] %v4852
  %4917 = vst [vmem:[%s175 + $0x81] sm:$0xff] %v4853
  %4918 = vst [vmem:[%s175 + $0x91] sm:$0xff] %v4854
  %4919 = vst [vmem:[%s175 + $0x99] sm:$0xff] %v4855
  %4920 = vst [vmem:[%s175 + $0xa9] sm:$0xff] %v4856
  %4921 = vst [vmem:[%s175 + $0xb1] sm:$0xff] %v4857
  %4922 = vst [vmem:[%s175 + $0xc1] sm:$0xff] %v4858
  %4923 = vst [vmem:[%s175 + $0xc9] sm:$0xff] %v4859
  %4924 = vst [vmem:[%s175 + $0xd9] sm:$0xff] %v4860
  %4925 = vst [vmem:[%s175 + $0xe1] sm:$0xff] %v4861
  %4926 = vst [vmem:[%s175 + $0xf1] sm:$0xff] %v4862
  %4927 = vst [vmem:[%s175 + $0xf9] sm:$0xff] %v4863
  %4928 = vst [vmem:[%s175 + $0x109] sm:$0xff] %v4864
  %4929 = vst [vmem:[%s175 + $0x111] sm:$0xff] %v4865
  %4930 = vst [vmem:[%s175 + $0x121] sm:$0xff] %v4866
  %4931 = vst [vmem:[%s175 + $0x129] sm:$0xff] %v4867
  %4932 = vst [vmem:[%s175 + $0x139] sm:$0xff] %v4868
  %4933 = vst [vmem:[%s175 + $0x141] sm:$0xff] %v4869
  %4934 = vst [vmem:[%s175 + $0x151] sm:$0xff] %v4870
  %4935 = vst [vmem:[%s175 + $0x159] sm:$0xff] %v4871
  %4936 = vst [vmem:[%s175 + $0x169] sm:$0xff] %v4872
  %4937 = vst [vmem:[%s175 + $0x171] sm:$0xff] %v4873
  %4938 = vst [vmem:[%s175 + $0x1b1] sm:$0xff] %v4874
  %4939 = vst [vmem:[%s175 + $0x1b9] sm:$0xff] %v4875
  %4940 = vst [vmem:[%s175 + $0x1c9] sm:$0xff] %v4876
  %4941 = vst [vmem:[%s175 + $0x1d1] sm:$0xff] %v4877
  %4942 = vst [vmem:[%s175 + $0x1e1] sm:$0xff] %v4878
  %4943 = vst [vmem:[%s175 + $0x1e9] sm:$0xff] %v4879
  %4944 = vst [vmem:[%s175 + $0x1f9] sm:$0xff] %v4880
  %4945 = vst [vmem:[%s175 + $0x201] sm:$0xff] %v4881
  %4946 = vst [vmem:[%s175 + $0x211] sm:$0xff] %v4882
  %4947 = vst [vmem:[%s175 + $0x219] sm:$0xff] %v4883
  %4948 = vst [vmem:[%s175 + $0x229] sm:$0xff] %v4884
  %4949 = vst [vmem:[%s175 + $0x231] sm:$0xff] %v4885
  %4950 = vst [vmem:[%s175 + $0x241] sm:$0xff] %v4886
  %4951 = vst [vmem:[%s175 + $0x249] sm:$0xff] %v4887
  %4952 = vst [vmem:[%s175 + $0x259] sm:$0xff] %v4888
  %4953 = vst [vmem:[%s175 + $0x261] sm:$0xff] %v4889
  %4954 = vst [vmem:[%s175 + $0x271] sm:$0xff] %v4890
  %4955 = vst [vmem:[%s175 + $0x279] sm:$0xff] %v4891
  %4956 = vst [vmem:[%s175 + $0x289] sm:$0xff] %v4892
  %4957 = vst [vmem:[%s175 + $0x291] sm:$0xff] %v4893
  %4958 = vst [vmem:[%s175 + $0x2a1] sm:$0xff] %v4894
  %4959 = vst [vmem:[%s175 + $0x2a9] sm:$0xff] %v4895
  %4960 = vst [vmem:[%s175 + $0x2b9] sm:$0xff] %v4896
  %4961 = vst [vmem:[%s175 + $0x2c1] sm:$0xff] %v4897
  %4962 = vst [vmem:[%s175 + $0x2d1] sm:$0xff] %v4898
  %4963 = vst [vmem:[%s175 + $0x2d9] sm:$0xff] %v4899
  %4964 = vst [vmem:[%s175 + $0x2e9] sm:$0xff] %v4900
  %4965 = vst [vmem:[%s175 + $0x2f1] sm:$0xff] %v4901
  %4966 = vst [vmem:[%s175 + $0x301] sm:$0xff] %v4902
  %4967 = vst [vmem:[%s175 + $0x309] sm:$0xff] %v4903
  %4968 = vst [vmem:[%s175 + $0x319] sm:$0xff] %v4904
  %4969 = vst [vmem:[%s175 + $0x321] sm:$0xff] %v4905
  %v4970 = vld [vmem:[#allocation2] sm:$0xff]
  %v4971 = vld [vmem:[#allocation2 + $0x8] sm:$0xff]
  %v4972 = vld [vmem:[#allocation2 + $0x18] sm:$0xff]
  %v4973 = vld [vmem:[#allocation2 + $0x20] sm:$0xff]
  %v4974 = vld [vmem:[#allocation2 + $0x30] sm:$0xff]
  %v4975 = vld [vmem:[#allocation2 + $0x38] sm:$0xff]
  %v4976 = vld [vmem:[#allocation2 + $0x48] sm:$0xff]
  %v4977 = vld [vmem:[#allocation2 + $0x50] sm:$0xff]
  %v4978 = vld [vmem:[#allocation2 + $0x60] sm:$0xff]
  %v4979 = vld [vmem:[#allocation2 + $0x68] sm:$0xff]
  %v4980 = vld [vmem:[#allocation2 + $0x78] sm:$0xff]
  %v4981 = vld [vmem:[#allocation2 + $0x80] sm:$0xff]
  %v4982 = vld [vmem:[#allocation2 + $0x90] sm:$0xff]
  %v4983 = vld [vmem:[#allocation2 + $0x98] sm:$0xff]
  %v4984 = vld [vmem:[#allocation2 + $0xa8] sm:$0xff]
  %v4985 = vld [vmem:[#allocation2 + $0xb0] sm:$0xff]
  %v4986 = vld [vmem:[#allocation2 + $0xc0] sm:$0xff]
  %v4987 = vld [vmem:[#allocation2 + $0xc8] sm:$0xff]
  %v4988 = vld [vmem:[#allocation2 + $0xd8] sm:$0xff]
  %v4989 = vld [vmem:[#allocation2 + $0xe0] sm:$0xff]
  %v4990 = vld [vmem:[#allocation2 + $0xf0] sm:$0xff]
  %v4991 = vld [vmem:[#allocation2 + $0xf8] sm:$0xff]
  %v4992 = vld [vmem:[#allocation2 + $0x108] sm:$0xff]
  %v4993 = vld [vmem:[#allocation2 + $0x110] sm:$0xff]
  %v4994 = vld [vmem:[#allocation2 + $0x120] sm:$0xff]
  %v4995 = vld [vmem:[#allocation2 + $0x128] sm:$0xff]
  %v4996 = vld [vmem:[#allocation2 + $0x138] sm:$0xff]
  %v4997 = vld [vmem:[#allocation2 + $0x140] sm:$0xff]
  %v4998 = vld [vmem:[#allocation2 + $0x150] sm:$0xff]
  %v4999 = vld [vmem:[#allocation2 + $0x158] sm:$0xff]
  %v5000 = vld [vmem:[#allocation2 + $0x168] sm:$0xff]
  %v5001 = vld [vmem:[#allocation2 + $0x170] sm:$0xff]
  %v5002 = vld [vmem:[#allocation2 + $0x1b0] sm:$0xff]
  %v5003 = vld [vmem:[#allocation2 + $0x1b8] sm:$0xff]
  %v5004 = vld [vmem:[#allocation2 + $0x1c8] sm:$0xff]
  %v5005 = vld [vmem:[#allocation2 + $0x1d0] sm:$0xff]
  %v5006 = vld [vmem:[#allocation2 + $0x1e0] sm:$0xff]
  %v5007 = vld [vmem:[#allocation2 + $0x1e8] sm:$0xff]
  %v5008 = vld [vmem:[#allocation2 + $0x1f8] sm:$0xff]
  %v5009 = vld [vmem:[#allocation2 + $0x200] sm:$0xff]
  %v5010 = vld [vmem:[#allocation2 + $0x210] sm:$0xff]
  %v5011 = vld [vmem:[#allocation2 + $0x218] sm:$0xff]
  %v5012 = vld [vmem:[#allocation2 + $0x228] sm:$0xff]
  %v5013 = vld [vmem:[#allocation2 + $0x230] sm:$0xff]
  %v5014 = vld [vmem:[#allocation2 + $0x240] sm:$0xff]
  %v5015 = vld [vmem:[#allocation2 + $0x248] sm:$0xff]
  %v5016 = vld [vmem:[#allocation2 + $0x258] sm:$0xff]
  %v5017 = vld [vmem:[#allocation2 + $0x260] sm:$0xff]
  %v5018 = vld [vmem:[#allocation2 + $0x270] sm:$0xff]
  %v5019 = vld [vmem:[#allocation2 + $0x278] sm:$0xff]
  %v5020 = vld [vmem:[#allocation2 + $0x288] sm:$0xff]
  %v5021 = vld [vmem:[#allocation2 + $0x290] sm:$0xff]
  %v5022 = vld [vmem:[#allocation2 + $0x2a0] sm:$0xff]
  %v5023 = vld [vmem:[#allocation2 + $0x2a8] sm:$0xff]
  %v5024 = vld [vmem:[#allocation2 + $0x2b8] sm:$0xff]
  %v5025 = vld [vmem:[#allocation2 + $0x2c0] sm:$0xff]
  %v5026 = vld [vmem:[#allocation2 + $0x2d0] sm:$0xff]
  %v5027 = vld [vmem:[#allocation2 + $0x2d8] sm:$0xff]
  %v5028 = vld [vmem:[#allocation2 + $0x2e8] sm:$0xff]
  %v5029 = vld [vmem:[#allocation2 + $0x2f0] sm:$0xff]
  %v5030 = vld [vmem:[#allocation2 + $0x300] sm:$0xff]
  %v5031 = vld [vmem:[#allocation2 + $0x308] sm:$0xff]
  %v5032 = vld [vmem:[#allocation2 + $0x318] sm:$0xff]
  %v5033 = vld [vmem:[#allocation2 + $0x320] sm:$0xff]
  %5034 = vst [vmem:[#allocation3] sm:$0xff] %v4970
  %5035 = vst [vmem:[#allocation3 + $0x18] sm:$0xff] %v4971
  %5036 = vst [vmem:[#allocation3 + $0x30] sm:$0xff] %v4972
  %5037 = vst [vmem:[#allocation3 + $0x48] sm:$0xff] %v4973
  %5038 = vst [vmem:[#allocation3 + $0x60] sm:$0xff] %v4974
  %5039 = vst [vmem:[#allocation3 + $0x78] sm:$0xff] %v4975
  %5040 = vst [vmem:[#allocation3 + $0x90] sm:$0xff] %v4976
  %5041 = vst [vmem:[#allocation3 + $0xa8] sm:$0xff] %v4977
  %5042 = vst [vmem:[#allocation3 + $0xc0] sm:$0xff] %v4978
  %5043 = vst [vmem:[#allocation3 + $0xd8] sm:$0xff] %v4979
  %5044 = vst [vmem:[#allocation3 + $0xf0] sm:$0xff] %v4980
  %5045 = vst [vmem:[#allocation3 + $0x108] sm:$0xff] %v4981
  %5046 = vst [vmem:[#allocation3 + $0x120] sm:$0xff] %v4982
  %5047 = vst [vmem:[#allocation3 + $0x138] sm:$0xff] %v4983
  %5048 = vst [vmem:[#allocation3 + $0x150] sm:$0xff] %v4984
  %5049 = vst [vmem:[#allocation3 + $0x168] sm:$0xff] %v4985
  %5050 = vst [vmem:[#allocation3 + $0x180] sm:$0xff] %v4986
  %5051 = vst [vmem:[#allocation3 + $0x198] sm:$0xff] %v4987
  %5052 = vst [vmem:[#allocation3 + $0x1b0] sm:$0xff] %v4988
  %5053 = vst [vmem:[#allocation3 + $0x1c8] sm:$0xff] %v4989
  %5054 = vst [vmem:[#allocation3 + $0x1e0] sm:$0xff] %v4990
  %5055 = vst [vmem:[#allocation3 + $0x1f8] sm:$0xff] %v4991
  %5056 = vst [vmem:[#allocation3 + $0x210] sm:$0xff] %v4992
  %5057 = vst [vmem:[#allocation3 + $0x228] sm:$0xff] %v4993
  %5058 = vst [vmem:[#allocation3 + $0x240] sm:$0xff] %v4994
  %5059 = vst [vmem:[#allocation3 + $0x258] sm:$0xff] %v4995
  %5060 = vst [vmem:[#allocation3 + $0x270] sm:$0xff] %v4996
  %5061 = vst [vmem:[#allocation3 + $0x288] sm:$0xff] %v4997
  %5062 = vst [vmem:[#allocation3 + $0x2a0] sm:$0xff] %v4998
  %5063 = vst [vmem:[#allocation3 + $0x2b8] sm:$0xff] %v4999
  %5064 = vst [vmem:[#allocation3 + $0x2d0] sm:$0xff] %v5000
  %5065 = vst [vmem:[#allocation3 + $0x2e8] sm:$0xff] %v5001
  %5066 = vst [vmem:[#allocation3 + $0x300] sm:$0xff] %v5002
  %5067 = vst [vmem:[#allocation3 + $0x318] sm:$0xff] %v5003
  %5068 = vst [vmem:[#allocation3 + $0x330] sm:$0xff] %v5004
  %5069 = vst [vmem:[#allocation3 + $0x348] sm:$0xff] %v5005
  %5070 = vst [vmem:[#allocation3 + $0x360] sm:$0xff] %v5006
  %5071 = vst [vmem:[#allocation3 + $0x378] sm:$0xff] %v5007
  %5072 = vst [vmem:[#allocation3 + $0x390] sm:$0xff] %v5008
  %5073 = vst [vmem:[#allocation3 + $0x3a8] sm:$0xff] %v5009
  %5074 = vst [vmem:[#allocation3 + $0x3c0] sm:$0xff] %v5010
  %5075 = vst [vmem:[#allocation3 + $0x3d8] sm:$0xff] %v5011
  %5076 = vst [vmem:[#allocation3 + $0x3f0] sm:$0xff] %v5012
  %5077 = vst [vmem:[#allocation3 + $0x408] sm:$0xff] %v5013
  %5078 = vst [vmem:[#allocation3 + $0x420] sm:$0xff] %v5014
  %5079 = vst [vmem:[#allocation3 + $0x438] sm:$0xff] %v5015
  %5080 = vst [vmem:[#allocation3 + $0x450] sm:$0xff] %v5016
  %5081 = vst [vmem:[#allocation3 + $0x468] sm:$0xff] %v5017
  %5082 = vst [vmem:[#allocation3 + $0x480] sm:$0xff] %v5018
  %5083 = vst [vmem:[#allocation3 + $0x498] sm:$0xff] %v5019
  %5084 = vst [vmem:[#allocation3 + $0x4b0] sm:$0xff] %v5020
  %5085 = vst [vmem:[#allocation3 + $0x4c8] sm:$0xff] %v5021
  %5086 = vst [vmem:[#allocation3 + $0x4e0] sm:$0xff] %v5022
  %5087 = vst [vmem:[#allocation3 + $0x4f8] sm:$0xff] %v5023
  %5088 = vst [vmem:[#allocation3 + $0x510] sm:$0xff] %v5024
  %5089 = vst [vmem:[#allocation3 + $0x528] sm:$0xff] %v5025
  %5090 = vst [vmem:[#allocation3 + $0x540] sm:$0xff] %v5026
  %5091 = vst [vmem:[#allocation3 + $0x558] sm:$0xff] %v5027
  %5092 = vst [vmem:[#allocation3 + $0x570] sm:$0xff] %v5028
  %5093 = vst [vmem:[#allocation3 + $0x588] sm:$0xff] %v5029
  %5094 = vst [vmem:[#allocation3 + $0x5a0] sm:$0xff] %v5030
  %5095 = vst [vmem:[#allocation3 + $0x5b8] sm:$0xff] %v5031
  %5096 = vst [vmem:[#allocation3 + $0x5d0] sm:$0xff] %v5032
  %5097 = vst [vmem:[#allocation3 + $0x5e8] sm:$0xff] %v5033
  %v5098 = vld [vmem:[#allocation2 + $0x1] sm:$0xff]
  %v5099 = vld [vmem:[#allocation2 + $0x9] sm:$0xff]
  %v5100 = vld [vmem:[#allocation2 + $0x19] sm:$0xff]
  %v5101 = vld [vmem:[#allocation2 + $0x21] sm:$0xff]
  %v5102 = vld [vmem:[#allocation2 + $0x31] sm:$0xff]
  %v5103 = vld [vmem:[#allocation2 + $0x39] sm:$0xff]
  %v5104 = vld [vmem:[#allocation2 + $0x49] sm:$0xff]
  %v5105 = vld [vmem:[#allocation2 + $0x51] sm:$0xff]
  %v5106 = vld [vmem:[#allocation2 + $0x61] sm:$0xff]
  %v5107 = vld [vmem:[#allocation2 + $0x69] sm:$0xff]
  %v5108 = vld [vmem:[#allocation2 + $0x79] sm:$0xff]
  %v5109 = vld [vmem:[#allocation2 + $0x81] sm:$0xff]
  %v5110 = vld [vmem:[#allocation2 + $0x91] sm:$0xff]
  %v5111 = vld [vmem:[#allocation2 + $0x99] sm:$0xff]
  %v5112 = vld [vmem:[#allocation2 + $0xa9] sm:$0xff]
  %v5113 = vld [vmem:[#allocation2 + $0xb1] sm:$0xff]
  %v5114 = vld [vmem:[#allocation2 + $0xc1] sm:$0xff]
  %v5115 = vld [vmem:[#allocation2 + $0xc9] sm:$0xff]
  %v5116 = vld [vmem:[#allocation2 + $0xd9] sm:$0xff]
  %v5117 = vld [vmem:[#allocation2 + $0xe1] sm:$0xff]
  %v5118 = vld [vmem:[#allocation2 + $0xf1] sm:$0xff]
  %v5119 = vld [vmem:[#allocation2 + $0xf9] sm:$0xff]
  %v5120 = vld [vmem:[#allocation2 + $0x109] sm:$0xff]
  %v5121 = vld [vmem:[#allocation2 + $0x111] sm:$0xff]
  %v5122 = vld [vmem:[#allocation2 + $0x121] sm:$0xff]
  %v5123 = vld [vmem:[#allocation2 + $0x129] sm:$0xff]
  %v5124 = vld [vmem:[#allocation2 + $0x139] sm:$0xff]
  %v5125 = vld [vmem:[#allocation2 + $0x141] sm:$0xff]
  %v5126 = vld [vmem:[#allocation2 + $0x151] sm:$0xff]
  %v5127 = vld [vmem:[#allocation2 + $0x159] sm:$0xff]
  %v5128 = vld [vmem:[#allocation2 + $0x169] sm:$0xff]
  %v5129 = vld [vmem:[#allocation2 + $0x171] sm:$0xff]
  %v5130 = vld [vmem:[#allocation2 + $0x1b1] sm:$0xff]
  %v5131 = vld [vmem:[#allocation2 + $0x1b9] sm:$0xff]
  %v5132 = vld [vmem:[#allocation2 + $0x1c9] sm:$0xff]
  %v5133 = vld [vmem:[#allocation2 + $0x1d1] sm:$0xff]
  %v5134 = vld [vmem:[#allocation2 + $0x1e1] sm:$0xff]
  %v5135 = vld [vmem:[#allocation2 + $0x1e9] sm:$0xff]
  %v5136 = vld [vmem:[#allocation2 + $0x1f9] sm:$0xff]
  %v5137 = vld [vmem:[#allocation2 + $0x201] sm:$0xff]
  %v5138 = vld [vmem:[#allocation2 + $0x211] sm:$0xff]
  %v5139 = vld [vmem:[#allocation2 + $0x219] sm:$0xff]
  %v5140 = vld [vmem:[#allocation2 + $0x229] sm:$0xff]
  %v5141 = vld [vmem:[#allocation2 + $0x231] sm:$0xff]
  %v5142 = vld [vmem:[#allocation2 + $0x241] sm:$0xff]
  %v5143 = vld [vmem:[#allocation2 + $0x249] sm:$0xff]
  %v5144 = vld [vmem:[#allocation2 + $0x259] sm:$0xff]
  %v5145 = vld [vmem:[#allocation2 + $0x261] sm:$0xff]
  %v5146 = vld [vmem:[#allocation2 + $0x271] sm:$0xff]
  %v5147 = vld [vmem:[#allocation2 + $0x279] sm:$0xff]
  %v5148 = vld [vmem:[#allocation2 + $0x289] sm:$0xff]
  %v5149 = vld [vmem:[#allocation2 + $0x291] sm:$0xff]
  %v5150 = vld [vmem:[#allocation2 + $0x2a1] sm:$0xff]
  %v5151 = vld [vmem:[#allocation2 + $0x2a9] sm:$0xff]
  %v5152 = vld [vmem:[#allocation2 + $0x2b9] sm:$0xff]
  %v5153 = vld [vmem:[#allocation2 + $0x2c1] sm:$0xff]
  %v5154 = vld [vmem:[#allocation2 + $0x2d1] sm:$0xff]
  %v5155 = vld [vmem:[#allocation2 + $0x2d9] sm:$0xff]
  %v5156 = vld [vmem:[#allocation2 + $0x2e9] sm:$0xff]
  %v5157 = vld [vmem:[#allocation2 + $0x2f1] sm:$0xff]
  %v5158 = vld [vmem:[#allocation2 + $0x301] sm:$0xff]
  %v5159 = vld [vmem:[#allocation2 + $0x309] sm:$0xff]
  %v5160 = vld [vmem:[#allocation2 + $0x319] sm:$0xff]
  %v5161 = vld [vmem:[#allocation2 + $0x321] sm:$0xff]
  %5162 = vst [vmem:[#allocation3 + $0x8] sm:$0xff] %v5098
  %5163 = vst [vmem:[#allocation3 + $0x20] sm:$0xff] %v5099
  %5164 = vst [vmem:[#allocation3 + $0x38] sm:$0xff] %v5100
  %5165 = vst [vmem:[#allocation3 + $0x50] sm:$0xff] %v5101
  %5166 = vst [vmem:[#allocation3 + $0x68] sm:$0xff] %v5102
  %5167 = vst [vmem:[#allocation3 + $0x80] sm:$0xff] %v5103
  %5168 = vst [vmem:[#allocation3 + $0x98] sm:$0xff] %v5104
  %5169 = vst [vmem:[#allocation3 + $0xb0] sm:$0xff] %v5105
  %5170 = vst [vmem:[#allocation3 + $0xc8] sm:$0xff] %v5106
  %5171 = vst [vmem:[#allocation3 + $0xe0] sm:$0xff] %v5107
  %5172 = vst [vmem:[#allocation3 + $0xf8] sm:$0xff] %v5108
  %5173 = vst [vmem:[#allocation3 + $0x110] sm:$0xff] %v5109
  %5174 = vst [vmem:[#allocation3 + $0x128] sm:$0xff] %v5110
  %5175 = vst [vmem:[#allocation3 + $0x140] sm:$0xff] %v5111
  %5176 = vst [vmem:[#allocation3 + $0x158] sm:$0xff] %v5112
  %5177 = vst [vmem:[#allocation3 + $0x170] sm:$0xff] %v5113
  %5178 = vst [vmem:[#allocation3 + $0x188] sm:$0xff] %v5114
  %5179 = vst [vmem:[#allocation3 + $0x1a0] sm:$0xff] %v5115
  %5180 = vst [vmem:[#allocation3 + $0x1b8] sm:$0xff] %v5116
  %5181 = vst [vmem:[#allocation3 + $0x1d0] sm:$0xff] %v5117
  %5182 = vst [vmem:[#allocation3 + $0x1e8] sm:$0xff] %v5118
  %5183 = vst [vmem:[#allocation3 + $0x200] sm:$0xff] %v5119
  %5184 = vst [vmem:[#allocation3 + $0x218] sm:$0xff] %v5120
  %5185 = vst [vmem:[#allocation3 + $0x230] sm:$0xff] %v5121
  %5186 = vst [vmem:[#allocation3 + $0x248] sm:$0xff] %v5122
  %5187 = vst [vmem:[#allocation3 + $0x260] sm:$0xff] %v5123
  %5188 = vst [vmem:[#allocation3 + $0x278] sm:$0xff] %v5124
  %5189 = vst [vmem:[#allocation3 + $0x290] sm:$0xff] %v5125
  %5190 = vst [vmem:[#allocation3 + $0x2a8] sm:$0xff] %v5126
  %5191 = vst [vmem:[#allocation3 + $0x2c0] sm:$0xff] %v5127
  %5192 = vst [vmem:[#allocation3 + $0x2d8] sm:$0xff] %v5128
  %5193 = vst [vmem:[#allocation3 + $0x2f0] sm:$0xff] %v5129
  %5194 = vst [vmem:[#allocation3 + $0x308] sm:$0xff] %v5130
  %5195 = vst [vmem:[#allocation3 + $0x320] sm:$0xff] %v5131
  %5196 = vst [vmem:[#allocation3 + $0x338] sm:$0xff] %v5132
  %5197 = vst [vmem:[#allocation3 + $0x350] sm:$0xff] %v5133
  %5198 = vst [vmem:[#allocation3 + $0x368] sm:$0xff] %v5134
  %5199 = vst [vmem:[#allocation3 + $0x380] sm:$0xff] %v5135
  %5200 = vst [vmem:[#allocation3 + $0x398] sm:$0xff] %v5136
  %5201 = vst [vmem:[#allocation3 + $0x3b0] sm:$0xff] %v5137
  %5202 = vst [vmem:[#allocation3 + $0x3c8] sm:$0xff] %v5138
  %5203 = vst [vmem:[#allocation3 + $0x3e0] sm:$0xff] %v5139
  %5204 = vst [vmem:[#allocation3 + $0x3f8] sm:$0xff] %v5140
  %5205 = vst [vmem:[#allocation3 + $0x410] sm:$0xff] %v5141
  %5206 = vst [vmem:[#allocation3 + $0x428] sm:$0xff] %v5142
  %5207 = vst [vmem:[#allocation3 + $0x440] sm:$0xff] %v5143
  %5208 = vst [vmem:[#allocation3 + $0x458] sm:$0xff] %v5144
  %5209 = vst [vmem:[#allocation3 + $0x470] sm:$0xff] %v5145
  %5210 = vst [vmem:[#allocation3 + $0x488] sm:$0xff] %v5146
  %5211 = vst [vmem:[#allocation3 + $0x4a0] sm:$0xff] %v5147
  %5212 = vst [vmem:[#allocation3 + $0x4b8] sm:$0xff] %v5148
  %5213 = vst [vmem:[#allocation3 + $0x4d0] sm:$0xff] %v5149
  %5214 = vst [vmem:[#allocation3 + $0x4e8] sm:$0xff] %v5150
  %5215 = vst [vmem:[#allocation3 + $0x500] sm:$0xff] %v5151
  %5216 = vst [vmem:[#allocation3 + $0x518] sm:$0xff] %v5152
  %5217 = vst [vmem:[#allocation3 + $0x530] sm:$0xff] %v5153
  %5218 = vst [vmem:[#allocation3 + $0x548] sm:$0xff] %v5154
  %5219 = vst [vmem:[#allocation3 + $0x560] sm:$0xff] %v5155
  %5220 = vst [vmem:[#allocation3 + $0x578] sm:$0xff] %v5156
  %5221 = vst [vmem:[#allocation3 + $0x590] sm:$0xff] %v5157
  %5222 = vst [vmem:[#allocation3 + $0x5a8] sm:$0xff] %v5158
  %5223 = vst [vmem:[#allocation3 + $0x5c0] sm:$0xff] %v5159
  %5224 = vst [vmem:[#allocation3 + $0x5d8] sm:$0xff] %v5160
  %5225 = vst [vmem:[#allocation3 + $0x5f0] sm:$0xff] %v5161
  %v5226 = vld [vmem:[#allocation2 + $0x2] sm:$0xff]
  %v5227 = vld [vmem:[#allocation2 + $0xa] sm:$0xff]
  %v5228 = vld [vmem:[#allocation2 + $0x1a] sm:$0xff]
  %v5229 = vld [vmem:[#allocation2 + $0x22] sm:$0xff]
  %v5230 = vld [vmem:[#allocation2 + $0x32] sm:$0xff]
  %v5231 = vld [vmem:[#allocation2 + $0x3a] sm:$0xff]
  %v5232 = vld [vmem:[#allocation2 + $0x4a] sm:$0xff]
  %v5233 = vld [vmem:[#allocation2 + $0x52] sm:$0xff]
  %v5234 = vld [vmem:[#allocation2 + $0x62] sm:$0xff]
  %v5235 = vld [vmem:[#allocation2 + $0x6a] sm:$0xff]
  %v5236 = vld [vmem:[#allocation2 + $0x7a] sm:$0xff]
  %v5237 = vld [vmem:[#allocation2 + $0x82] sm:$0xff]
  %v5238 = vld [vmem:[#allocation2 + $0x92] sm:$0xff]
  %v5239 = vld [vmem:[#allocation2 + $0x9a] sm:$0xff]
  %v5240 = vld [vmem:[#allocation2 + $0xaa] sm:$0xff]
  %v5241 = vld [vmem:[#allocation2 + $0xb2] sm:$0xff]
  %v5242 = vld [vmem:[#allocation2 + $0xc2] sm:$0xff]
  %v5243 = vld [vmem:[#allocation2 + $0xca] sm:$0xff]
  %v5244 = vld [vmem:[#allocation2 + $0xda] sm:$0xff]
  %v5245 = vld [vmem:[#allocation2 + $0xe2] sm:$0xff]
  %v5246 = vld [vmem:[#allocation2 + $0xf2] sm:$0xff]
  %v5247 = vld [vmem:[#allocation2 + $0xfa] sm:$0xff]
  %v5248 = vld [vmem:[#allocation2 + $0x10a] sm:$0xff]
  %v5249 = vld [vmem:[#allocation2 + $0x112] sm:$0xff]
  %v5250 = vld [vmem:[#allocation2 + $0x122] sm:$0xff]
  %v5251 = vld [vmem:[#allocation2 + $0x12a] sm:$0xff]
  %v5252 = vld [vmem:[#allocation2 + $0x13a] sm:$0xff]
  %v5253 = vld [vmem:[#allocation2 + $0x142] sm:$0xff]
  %v5254 = vld [vmem:[#allocation2 + $0x152] sm:$0xff]
  %v5255 = vld [vmem:[#allocation2 + $0x15a] sm:$0xff]
  %v5256 = vld [vmem:[#allocation2 + $0x16a] sm:$0xff]
  %v5257 = vld [vmem:[#allocation2 + $0x172] sm:$0xff]
  %v5258 = vld [vmem:[#allocation2 + $0x1b2] sm:$0xff]
  %v5259 = vld [vmem:[#allocation2 + $0x1ba] sm:$0xff]
  %v5260 = vld [vmem:[#allocation2 + $0x1ca] sm:$0xff]
  %v5261 = vld [vmem:[#allocation2 + $0x1d2] sm:$0xff]
  %v5262 = vld [vmem:[#allocation2 + $0x1e2] sm:$0xff]
  %v5263 = vld [vmem:[#allocation2 + $0x1ea] sm:$0xff]
  %v5264 = vld [vmem:[#allocation2 + $0x1fa] sm:$0xff]
  %v5265 = vld [vmem:[#allocation2 + $0x202] sm:$0xff]
  %v5266 = vld [vmem:[#allocation2 + $0x212] sm:$0xff]
  %v5267 = vld [vmem:[#allocation2 + $0x21a] sm:$0xff]
  %v5268 = vld [vmem:[#allocation2 + $0x22a] sm:$0xff]
  %v5269 = vld [vmem:[#allocation2 + $0x232] sm:$0xff]
  %v5270 = vld [vmem:[#allocation2 + $0x242] sm:$0xff]
  %v5271 = vld [vmem:[#allocation2 + $0x24a] sm:$0xff]
  %v5272 = vld [vmem:[#allocation2 + $0x25a] sm:$0xff]
  %v5273 = vld [vmem:[#allocation2 + $0x262] sm:$0xff]
  %v5274 = vld [vmem:[#allocation2 + $0x272] sm:$0xff]
  %v5275 = vld [vmem:[#allocation2 + $0x27a] sm:$0xff]
  %v5276 = vld [vmem:[#allocation2 + $0x28a] sm:$0xff]
  %v5277 = vld [vmem:[#allocation2 + $0x292] sm:$0xff]
  %v5278 = vld [vmem:[#allocation2 + $0x2a2] sm:$0xff]
  %v5279 = vld [vmem:[#allocation2 + $0x2aa] sm:$0xff]
  %v5280 = vld [vmem:[#allocation2 + $0x2ba] sm:$0xff]
  %v5281 = vld [vmem:[#allocation2 + $0x2c2] sm:$0xff]
  %v5282 = vld [vmem:[#allocation2 + $0x2d2] sm:$0xff]
  %v5283 = vld [vmem:[#allocation2 + $0x2da] sm:$0xff]
  %v5284 = vld [vmem:[#allocation2 + $0x2ea] sm:$0xff]
  %v5285 = vld [vmem:[#allocation2 + $0x2f2] sm:$0xff]
  %v5286 = vld [vmem:[#allocation2 + $0x302] sm:$0xff]
  %v5287 = vld [vmem:[#allocation2 + $0x30a] sm:$0xff]
  %v5288 = vld [vmem:[#allocation2 + $0x31a] sm:$0xff]
  %v5289 = vld [vmem:[#allocation2 + $0x322] sm:$0xff]
  %5290 = vst [vmem:[#allocation3 + $0x10] sm:$0xff] %v5226
  %5291 = vst [vmem:[#allocation3 + $0x28] sm:$0xff] %v5227
  %5292 = vst [vmem:[#allocation3 + $0x40] sm:$0xff] %v5228
  %5293 = vst [vmem:[#allocation3 + $0x58] sm:$0xff] %v5229
  %5294 = vst [vmem:[#allocation3 + $0x70] sm:$0xff] %v5230
  %5295 = vst [vmem:[#allocation3 + $0x88] sm:$0xff] %v5231
  %5296 = vst [vmem:[#allocation3 + $0xa0] sm:$0xff] %v5232
  %5297 = vst [vmem:[#allocation3 + $0xb8] sm:$0xff] %v5233
  %5298 = vst [vmem:[#allocation3 + $0xd0] sm:$0xff] %v5234
  %5299 = vst [vmem:[#allocation3 + $0xe8] sm:$0xff] %v5235
  %5300 = vst [vmem:[#allocation3 + $0x100] sm:$0xff] %v5236
  %5301 = vst [vmem:[#allocation3 + $0x118] sm:$0xff] %v5237
  %5302 = vst [vmem:[#allocation3 + $0x130] sm:$0xff] %v5238
  %5303 = vst [vmem:[#allocation3 + $0x148] sm:$0xff] %v5239
  %5304 = vst [vmem:[#allocation3 + $0x160] sm:$0xff] %v5240
  %5305 = vst [vmem:[#allocation3 + $0x178] sm:$0xff] %v5241
  %5306 = vst [vmem:[#allocation3 + $0x190] sm:$0xff] %v5242
  %5307 = vst [vmem:[#allocation3 + $0x1a8] sm:$0xff] %v5243
  %5308 = vst [vmem:[#allocation3 + $0x1c0] sm:$0xff] %v5244
  %5309 = vst [vmem:[#allocation3 + $0x1d8] sm:$0xff] %v5245
  %5310 = vst [vmem:[#allocation3 + $0x1f0] sm:$0xff] %v5246
  %5311 = vst [vmem:[#allocation3 + $0x208] sm:$0xff] %v5247
  %5312 = vst [vmem:[#allocation3 + $0x220] sm:$0xff] %v5248
  %5313 = vst [vmem:[#allocation3 + $0x238] sm:$0xff] %v5249
  %5314 = vst [vmem:[#allocation3 + $0x250] sm:$0xff] %v5250
  %5315 = vst [vmem:[#allocation3 + $0x268] sm:$0xff] %v5251
  %5316 = vst [vmem:[#allocation3 + $0x280] sm:$0xff] %v5252
  %5317 = vst [vmem:[#allocation3 + $0x298] sm:$0xff] %v5253
  %5318 = vst [vmem:[#allocation3 + $0x2b0] sm:$0xff] %v5254
  %5319 = vst [vmem:[#allocation3 + $0x2c8] sm:$0xff] %v5255
  %5320 = vst [vmem:[#allocation3 + $0x2e0] sm:$0xff] %v5256
  %5321 = vst [vmem:[#allocation3 + $0x2f8] sm:$0xff] %v5257
  %5322 = vst [vmem:[#allocation3 + $0x310] sm:$0xff] %v5258
  %5323 = vst [vmem:[#allocation3 + $0x328] sm:$0xff] %v5259
  %5324 = vst [vmem:[#allocation3 + $0x340] sm:$0xff] %v5260
  %5325 = vst [vmem:[#allocation3 + $0x358] sm:$0xff] %v5261
  %5326 = vst [vmem:[#allocation3 + $0x370] sm:$0xff] %v5262
  %5327 = vst [vmem:[#allocation3 + $0x388] sm:$0xff] %v5263
  %5328 = vst [vmem:[#allocation3 + $0x3a0] sm:$0xff] %v5264
  %5329 = vst [vmem:[#allocation3 + $0x3b8] sm:$0xff] %v5265
  %5330 = vst [vmem:[#allocation3 + $0x3d0] sm:$0xff] %v5266
  %5331 = vst [vmem:[#allocation3 + $0x3e8] sm:$0xff] %v5267
  %5332 = vst [vmem:[#allocation3 + $0x400] sm:$0xff] %v5268
  %5333 = vst [vmem:[#allocation3 + $0x418] sm:$0xff] %v5269
  %5334 = vst [vmem:[#allocation3 + $0x430] sm:$0xff] %v5270
  %5335 = vst [vmem:[#allocation3 + $0x448] sm:$0xff] %v5271
  %5336 = vst [vmem:[#allocation3 + $0x460] sm:$0xff] %v5272
  %5337 = vst [vmem:[#allocation3 + $0x478] sm:$0xff] %v5273
  %5338 = vst [vmem:[#allocation3 + $0x490] sm:$0xff] %v5274
  %5339 = vst [vmem:[#allocation3 + $0x4a8] sm:$0xff] %v5275
  %5340 = vst [vmem:[#allocation3 + $0x4c0] sm:$0xff] %v5276
  %5341 = vst [vmem:[#allocation3 + $0x4d8] sm:$0xff] %v5277
  %5342 = vst [vmem:[#allocation3 + $0x4f0] sm:$0xff] %v5278
  %5343 = vst [vmem:[#allocation3 + $0x508] sm:$0xff] %v5279
  %5344 = vst [vmem:[#allocation3 + $0x520] sm:$0xff] %v5280
  %5345 = vst [vmem:[#allocation3 + $0x538] sm:$0xff] %v5281
  %5346 = vst [vmem:[#allocation3 + $0x550] sm:$0xff] %v5282
  %5347 = vst [vmem:[#allocation3 + $0x568] sm:$0xff] %v5283
  %5348 = vst [vmem:[#allocation3 + $0x580] sm:$0xff] %v5284
  %5349 = vst [vmem:[#allocation3 + $0x598] sm:$0xff] %v5285
  %5350 = vst [vmem:[#allocation3 + $0x5b0] sm:$0xff] %v5286
  %5351 = vst [vmem:[#allocation3 + $0x5c8] sm:$0xff] %v5287
  %5352 = vst [vmem:[#allocation3 + $0x5e0] sm:$0xff] %v5288
  %5353 = vst [vmem:[#allocation3 + $0x5f8] sm:$0xff] %v5289
  %v5354 = vld [vmem:[#allocation3] sm:$0xff]
  %v5355 = vld [vmem:[#allocation3 + $0x8] sm:$0xff]
  %v5356 = vld [vmem:[#allocation3 + $0x10] sm:$0xff]
  %v5357 = vld [vmem:[#allocation3 + $0x18] sm:$0xff]
  %v5358 = vld [vmem:[#allocation3 + $0x20] sm:$0xff]
  %v5359 = vld [vmem:[#allocation3 + $0x28] sm:$0xff]
  %v5360 = vld [vmem:[#allocation3 + $0x30] sm:$0xff]
  %v5361 = vld [vmem:[#allocation3 + $0x38] sm:$0xff]
  %v5362 = vld [vmem:[#allocation3 + $0x40] sm:$0xff]
  %v5363 = vld [vmem:[#allocation3 + $0x48] sm:$0xff]
  %v5364 = vld [vmem:[#allocation3 + $0x50] sm:$0xff]
  %v5365 = vld [vmem:[#allocation3 + $0x58] sm:$0xff]
  %v5366 = vld [vmem:[#allocation3 + $0x60] sm:$0xff]
  %v5367 = vld [vmem:[#allocation3 + $0x68] sm:$0xff]
  %v5368 = vld [vmem:[#allocation3 + $0x70] sm:$0xff]
  %v5369 = vld [vmem:[#allocation3 + $0x78] sm:$0xff]
  %v5370 = vld [vmem:[#allocation3 + $0x80] sm:$0xff]
  %v5371 = vld [vmem:[#allocation3 + $0x88] sm:$0xff]
  %v5372 = vld [vmem:[#allocation3 + $0x90] sm:$0xff]
  %v5373 = vld [vmem:[#allocation3 + $0x98] sm:$0xff]
  %v5374 = vld [vmem:[#allocation3 + $0xa0] sm:$0xff]
  %v5375 = vld [vmem:[#allocation3 + $0xa8] sm:$0xff]
  %v5376 = vld [vmem:[#allocation3 + $0xb0] sm:$0xff]
  %v5377 = vld [vmem:[#allocation3 + $0xb8] sm:$0xff]
  %v5378 = vld [vmem:[#allocation3 + $0xc0] sm:$0xff]
  %v5379 = vld [vmem:[#allocation3 + $0xc8] sm:$0xff]
  %v5380 = vld [vmem:[#allocation3 + $0xd0] sm:$0xff]
  %v5381 = vld [vmem:[#allocation3 + $0xd8] sm:$0xff]
  %v5382 = vld [vmem:[#allocation3 + $0xe0] sm:$0xff]
  %v5383 = vld [vmem:[#allocation3 + $0xe8] sm:$0xff]
  %v5384 = vld [vmem:[#allocation3 + $0xf0] sm:$0xff]
  %v5385 = vld [vmem:[#allocation3 + $0xf8] sm:$0xff]
  %v5386 = vld [vmem:[#allocation3 + $0x100] sm:$0xff]
  %v5387 = vld [vmem:[#allocation3 + $0x108] sm:$0xff]
  %v5388 = vld [vmem:[#allocation3 + $0x110] sm:$0xff]
  %v5389 = vld [vmem:[#allocation3 + $0x118] sm:$0xff]
  %v5390 = vld [vmem:[#allocation3 + $0x120] sm:$0xff]
  %v5391 = vld [vmem:[#allocation3 + $0x128] sm:$0xff]
  %v5392 = vld [vmem:[#allocation3 + $0x130] sm:$0xff]
  %v5393 = vld [vmem:[#allocation3 + $0x138] sm:$0xff]
  %v5394 = vld [vmem:[#allocation3 + $0x140] sm:$0xff]
  %v5395 = vld [vmem:[#allocation3 + $0x148] sm:$0xff]
  %v5396 = vld [vmem:[#allocation3 + $0x150] sm:$0xff]
  %v5397 = vld [vmem:[#allocation3 + $0x158] sm:$0xff]
  %v5398 = vld [vmem:[#allocation3 + $0x160] sm:$0xff]
  %v5399 = vld [vmem:[#allocation3 + $0x168] sm:$0xff]
  %v5400 = vld [vmem:[#allocation3 + $0x170] sm:$0xff]
  %v5401 = vld [vmem:[#allocation3 + $0x178] sm:$0xff]
  %v5402 = vld [vmem:[#allocation3 + $0x180] sm:$0xff]
  %v5403 = vld [vmem:[#allocation3 + $0x188] sm:$0xff]
  %v5404 = vld [vmem:[#allocation3 + $0x190] sm:$0xff]
  %v5405 = vld [vmem:[#allocation3 + $0x198] sm:$0xff]
  %v5406 = vld [vmem:[#allocation3 + $0x1a0] sm:$0xff]
  %v5407 = vld [vmem:[#allocation3 + $0x1a8] sm:$0xff]
  %v5408 = vld [vmem:[#allocation3 + $0x1b0] sm:$0xff]
  %v5409 = vld [vmem:[#allocation3 + $0x1b8] sm:$0xff]
  %v5410 = vld [vmem:[#allocation3 + $0x1c0] sm:$0xff]
  %v5411 = vld [vmem:[#allocation3 + $0x1c8] sm:$0xff]
  %v5412 = vld [vmem:[#allocation3 + $0x1d0] sm:$0xff]
  %v5413 = vld [vmem:[#allocation3 + $0x1d8] sm:$0xff]
  %v5414 = vld [vmem:[#allocation3 + $0x1e0] sm:$0xff]
  %v5415 = vld [vmem:[#allocation3 + $0x1e8] sm:$0xff]
  %v5416 = vld [vmem:[#allocation3 + $0x1f0] sm:$0xff]
  %v5417 = vld [vmem:[#allocation3 + $0x1f8] sm:$0xff]
  %v5418 = vld [vmem:[#allocation3 + $0x200] sm:$0xff]
  %v5419 = vld [vmem:[#allocation3 + $0x208] sm:$0xff]
  %v5420 = vld [vmem:[#allocation3 + $0x210] sm:$0xff]
  %v5421 = vld [vmem:[#allocation3 + $0x218] sm:$0xff]
  %v5422 = vld [vmem:[#allocation3 + $0x220] sm:$0xff]
  %v5423 = vld [vmem:[#allocation3 + $0x228] sm:$0xff]
  %v5424 = vld [vmem:[#allocation3 + $0x230] sm:$0xff]
  %v5425 = vld [vmem:[#allocation3 + $0x238] sm:$0xff]
  %v5426 = vld [vmem:[#allocation3 + $0x240] sm:$0xff]
  %v5427 = vld [vmem:[#allocation3 + $0x248] sm:$0xff]
  %v5428 = vld [vmem:[#allocation3 + $0x250] sm:$0xff]
  %v5429 = vld [vmem:[#allocation3 + $0x258] sm:$0xff]
  %v5430 = vld [vmem:[#allocation3 + $0x260] sm:$0xff]
  %v5431 = vld [vmem:[#allocation3 + $0x268] sm:$0xff]
  %v5432 = vld [vmem:[#allocation3 + $0x270] sm:$0xff]
  %v5433 = vld [vmem:[#allocation3 + $0x278] sm:$0xff]
  %v5434 = vld [vmem:[#allocation3 + $0x280] sm:$0xff]
  %v5435 = vld [vmem:[#allocation3 + $0x288] sm:$0xff]
  %v5436 = vld [vmem:[#allocation3 + $0x290] sm:$0xff]
  %v5437 = vld [vmem:[#allocation3 + $0x298] sm:$0xff]
  %v5438 = vld [vmem:[#allocation3 + $0x2a0] sm:$0xff]
  %v5439 = vld [vmem:[#allocation3 + $0x2a8] sm:$0xff]
  %v5440 = vld [vmem:[#allocation3 + $0x2b0] sm:$0xff]
  %v5441 = vld [vmem:[#allocation3 + $0x2b8] sm:$0xff]
  %v5442 = vld [vmem:[#allocation3 + $0x2c0] sm:$0xff]
  %v5443 = vld [vmem:[#allocation3 + $0x2c8] sm:$0xff]
  %v5444 = vld [vmem:[#allocation3 + $0x2d0] sm:$0xff]
  %v5445 = vld [vmem:[#allocation3 + $0x2d8] sm:$0xff]
  %v5446 = vld [vmem:[#allocation3 + $0x2e0] sm:$0xff]
  %v5447 = vld [vmem:[#allocation3 + $0x2e8] sm:$0xff]
  %v5448 = vld [vmem:[#allocation3 + $0x2f0] sm:$0xff]
  %v5449 = vld [vmem:[#allocation3 + $0x2f8] sm:$0xff]
  %v5450 = vld [vmem:[#allocation3 + $0x300] sm:$0xff]
  %v5451 = vld [vmem:[#allocation3 + $0x308] sm:$0xff]
  %v5452 = vld [vmem:[#allocation3 + $0x310] sm:$0xff]
  %v5453 = vld [vmem:[#allocation3 + $0x318] sm:$0xff]
  %v5454 = vld [vmem:[#allocation3 + $0x320] sm:$0xff]
  %v5455 = vld [vmem:[#allocation3 + $0x328] sm:$0xff]
  %v5456 = vld [vmem:[#allocation3 + $0x330] sm:$0xff]
  %v5457 = vld [vmem:[#allocation3 + $0x338] sm:$0xff]
  %v5458 = vld [vmem:[#allocation3 + $0x340] sm:$0xff]
  %v5459 = vld [vmem:[#allocation3 + $0x348] sm:$0xff]
  %v5460 = vld [vmem:[#allocation3 + $0x350] sm:$0xff]
  %v5461 = vld [vmem:[#allocation3 + $0x358] sm:$0xff]
  %v5462 = vld [vmem:[#allocation3 + $0x360] sm:$0xff]
  %v5463 = vld [vmem:[#allocation3 + $0x368] sm:$0xff]
  %v5464 = vld [vmem:[#allocation3 + $0x370] sm:$0xff]
  %v5465 = vld [vmem:[#allocation3 + $0x378] sm:$0xff]
  %v5466 = vld [vmem:[#allocation3 + $0x380] sm:$0xff]
  %v5467 = vld [vmem:[#allocation3 + $0x388] sm:$0xff]
  %v5468 = vld [vmem:[#allocation3 + $0x390] sm:$0xff]
  %v5469 = vld [vmem:[#allocation3 + $0x398] sm:$0xff]
  %v5470 = vld [vmem:[#allocation3 + $0x3a0] sm:$0xff]
  %v5471 = vld [vmem:[#allocation3 + $0x3a8] sm:$0xff]
  %v5472 = vld [vmem:[#allocation3 + $0x3b0] sm:$0xff]
  %v5473 = vld [vmem:[#allocation3 + $0x3b8] sm:$0xff]
  %v5474 = vld [vmem:[#allocation3 + $0x3c0] sm:$0xff]
  %v5475 = vld [vmem:[#allocation3 + $0x3c8] sm:$0xff]
  %v5476 = vld [vmem:[#allocation3 + $0x3d0] sm:$0xff]
  %v5477 = vld [vmem:[#allocation3 + $0x3d8] sm:$0xff]
  %v5478 = vld [vmem:[#allocation3 + $0x3e0] sm:$0xff]
  %v5479 = vld [vmem:[#allocation3 + $0x3e8] sm:$0xff]
  %v5480 = vld [vmem:[#allocation3 + $0x3f0] sm:$0xff]
  %v5481 = vld [vmem:[#allocation3 + $0x3f8] sm:$0xff]
  %v5482 = vld [vmem:[#allocation3 + $0x400] sm:$0xff]
  %v5483 = vld [vmem:[#allocation3 + $0x408] sm:$0xff]
  %v5484 = vld [vmem:[#allocation3 + $0x410] sm:$0xff]
  %v5485 = vld [vmem:[#allocation3 + $0x418] sm:$0xff]
  %v5486 = vld [vmem:[#allocation3 + $0x420] sm:$0xff]
  %v5487 = vld [vmem:[#allocation3 + $0x428] sm:$0xff]
  %v5488 = vld [vmem:[#allocation3 + $0x430] sm:$0xff]
  %v5489 = vld [vmem:[#allocation3 + $0x438] sm:$0xff]
  %v5490 = vld [vmem:[#allocation3 + $0x440] sm:$0xff]
  %v5491 = vld [vmem:[#allocation3 + $0x448] sm:$0xff]
  %v5492 = vld [vmem:[#allocation3 + $0x450] sm:$0xff]
  %v5493 = vld [vmem:[#allocation3 + $0x458] sm:$0xff]
  %v5494 = vld [vmem:[#allocation3 + $0x460] sm:$0xff]
  %v5495 = vld [vmem:[#allocation3 + $0x468] sm:$0xff]
  %v5496 = vld [vmem:[#allocation3 + $0x470] sm:$0xff]
  %v5497 = vld [vmem:[#allocation3 + $0x478] sm:$0xff]
  %v5498 = vld [vmem:[#allocation3 + $0x480] sm:$0xff]
  %v5499 = vld [vmem:[#allocation3 + $0x488] sm:$0xff]
  %v5500 = vld [vmem:[#allocation3 + $0x490] sm:$0xff]
  %v5501 = vld [vmem:[#allocation3 + $0x498] sm:$0xff]
  %v5502 = vld [vmem:[#allocation3 + $0x4a0] sm:$0xff]
  %v5503 = vld [vmem:[#allocation3 + $0x4a8] sm:$0xff]
  %v5504 = vld [vmem:[#allocation3 + $0x4b0] sm:$0xff]
  %v5505 = vld [vmem:[#allocation3 + $0x4b8] sm:$0xff]
  %v5506 = vld [vmem:[#allocation3 + $0x4c0] sm:$0xff]
  %v5507 = vld [vmem:[#allocation3 + $0x4c8] sm:$0xff]
  %v5508 = vld [vmem:[#allocation3 + $0x4d0] sm:$0xff]
  %v5509 = vld [vmem:[#allocation3 + $0x4d8] sm:$0xff]
  %v5510 = vld [vmem:[#allocation3 + $0x4e0] sm:$0xff]
  %v5511 = vld [vmem:[#allocation3 + $0x4e8] sm:$0xff]
  %v5512 = vld [vmem:[#allocation3 + $0x4f0] sm:$0xff]
  %v5513 = vld [vmem:[#allocation3 + $0x4f8] sm:$0xff]
  %v5514 = vld [vmem:[#allocation3 + $0x500] sm:$0xff]
  %v5515 = vld [vmem:[#allocation3 + $0x508] sm:$0xff]
  %v5516 = vld [vmem:[#allocation3 + $0x510] sm:$0xff]
  %v5517 = vld [vmem:[#allocation3 + $0x518] sm:$0xff]
  %v5518 = vld [vmem:[#allocation3 + $0x520] sm:$0xff]
  %v5519 = vld [vmem:[#allocation3 + $0x528] sm:$0xff]
  %v5520 = vld [vmem:[#allocation3 + $0x530] sm:$0xff]
  %v5521 = vld [vmem:[#allocation3 + $0x538] sm:$0xff]
  %v5522 = vld [vmem:[#allocation3 + $0x540] sm:$0xff]
  %v5523 = vld [vmem:[#allocation3 + $0x548] sm:$0xff]
  %v5524 = vld [vmem:[#allocation3 + $0x550] sm:$0xff]
  %v5525 = vld [vmem:[#allocation3 + $0x558] sm:$0xff]
  %v5526 = vld [vmem:[#allocation3 + $0x560] sm:$0xff]
  %v5527 = vld [vmem:[#allocation3 + $0x568] sm:$0xff]
  %v5528 = vld [vmem:[#allocation3 + $0x570] sm:$0xff]
  %v5529 = vld [vmem:[#allocation3 + $0x578] sm:$0xff]
  %v5530 = vld [vmem:[#allocation3 + $0x580] sm:$0xff]
  %v5531 = vld [vmem:[#allocation3 + $0x588] sm:$0xff]
  %v5532 = vld [vmem:[#allocation3 + $0x590] sm:$0xff]
  %v5533 = vld [vmem:[#allocation3 + $0x598] sm:$0xff]
  %v5534 = vld [vmem:[#allocation3 + $0x5a0] sm:$0xff]
  %v5535 = vld [vmem:[#allocation3 + $0x5a8] sm:$0xff]
  %v5536 = vld [vmem:[#allocation3 + $0x5b0] sm:$0xff]
  %v5537 = vld [vmem:[#allocation3 + $0x5b8] sm:$0xff]
  %v5538 = vld [vmem:[#allocation3 + $0x5c0] sm:$0xff]
  %v5539 = vld [vmem:[#allocation3 + $0x5c8] sm:$0xff]
  %v5540 = vld [vmem:[#allocation3 + $0x5d0] sm:$0xff]
  %v5541 = vld [vmem:[#allocation3 + $0x5d8] sm:$0xff]
  %v5542 = vld [vmem:[#allocation3 + $0x5e0] sm:$0xff]
  %v5543 = vld [vmem:[#allocation3 + $0x5e8] sm:$0xff]
  %v5544 = vld [vmem:[#allocation3 + $0x5f0] sm:$0xff]
  %v5545 = vld [vmem:[#allocation3 + $0x5f8] sm:$0xff]
  %v5546 = vld [vmem:[%s4] sm:$0xff]
  %v5547 = vld [vmem:[%s4 + $0x8] sm:$0xff]
  %v5548 = vld [vmem:[%s4 + $0x10] sm:$0xff]
  %v5549 = vld [vmem:[%s4 + $0x18] sm:$0xff]
  %v5550 = vld [vmem:[%s4 + $0x20] sm:$0xff]
  %v5551 = vld [vmem:[%s4 + $0x28] sm:$0xff]
  %v5552 = vld [vmem:[%s4 + $0x30] sm:$0xff]
  %v5553 = vld [vmem:[%s4 + $0x38] sm:$0xff]
  %v5554 = vld [vmem:[%s4 + $0x40] sm:$0xff]
  %v5555 = vld [vmem:[%s4 + $0x48] sm:$0xff]
  %v5556 = vld [vmem:[%s4 + $0x50] sm:$0xff]
  %v5557 = vld [vmem:[%s4 + $0x58] sm:$0xff]
  %v5558 = vld [vmem:[%s4 + $0x60] sm:$0xff]
  %v5559 = vld [vmem:[%s4 + $0x68] sm:$0xff]
  %v5560 = vld [vmem:[%s4 + $0x70] sm:$0xff]
  %v5561 = vld [vmem:[%s4 + $0x78] sm:$0xff]
  %v5562 = vld [vmem:[%s4 + $0x80] sm:$0xff]
  %v5563 = vld [vmem:[%s4 + $0x88] sm:$0xff]
  %v5564 = vld [vmem:[%s4 + $0x90] sm:$0xff]
  %v5565 = vld [vmem:[%s4 + $0x98] sm:$0xff]
  %v5566 = vld [vmem:[%s4 + $0xa0] sm:$0xff]
  %v5567 = vld [vmem:[%s4 + $0xa8] sm:$0xff]
  %v5568 = vld [vmem:[%s4 + $0xb0] sm:$0xff]
  %v5569 = vld [vmem:[%s4 + $0xb8] sm:$0xff]
  %v5570 = vld [vmem:[%s4 + $0xc0] sm:$0xff]
  %v5571 = vld [vmem:[%s4 + $0xc8] sm:$0xff]
  %v5572 = vld [vmem:[%s4 + $0xd0] sm:$0xff]
  %v5573 = vld [vmem:[%s4 + $0xd8] sm:$0xff]
  %v5574 = vld [vmem:[%s4 + $0xe0] sm:$0xff]
  %v5575 = vld [vmem:[%s4 + $0xe8] sm:$0xff]
  %v5576 = vld [vmem:[%s4 + $0xf0] sm:$0xff]
  %v5577 = vld [vmem:[%s4 + $0xf8] sm:$0xff]
  %v5578 = vld [vmem:[%s4 + $0x100] sm:$0xff]
  %v5579 = vld [vmem:[%s4 + $0x108] sm:$0xff]
  %v5580 = vld [vmem:[%s4 + $0x110] sm:$0xff]
  %v5581 = vld [vmem:[%s4 + $0x118] sm:$0xff]
  %v5582 = vld [vmem:[%s4 + $0x120] sm:$0xff]
  %v5583 = vld [vmem:[%s4 + $0x128] sm:$0xff]
  %v5584 = vld [vmem:[%s4 + $0x130] sm:$0xff]
  %v5585 = vld [vmem:[%s4 + $0x138] sm:$0xff]
  %v5586 = vld [vmem:[%s4 + $0x140] sm:$0xff]
  %v5587 = vld [vmem:[%s4 + $0x148] sm:$0xff]
  %v5588 = vld [vmem:[%s4 + $0x150] sm:$0xff]
  %v5589 = vld [vmem:[%s4 + $0x158] sm:$0xff]
  %v5590 = vld [vmem:[%s4 + $0x160] sm:$0xff]
  %v5591 = vld [vmem:[%s4 + $0x168] sm:$0xff]
  %v5592 = vld [vmem:[%s4 + $0x170] sm:$0xff]
  %v5593 = vld [vmem:[%s4 + $0x178] sm:$0xff]
  %v5594 = vld [vmem:[%s175] sm:$0xff]
  %v5595 = vld [vmem:[%s175 + $0x8] sm:$0xff]
  %v5596 = vld [vmem:[%s175 + $0x18] sm:$0xff]
  %v5597 = vld [vmem:[%s175 + $0x20] sm:$0xff]
  %v5598 = vld [vmem:[%s175 + $0x30] sm:$0xff]
  %v5599 = vld [vmem:[%s175 + $0x38] sm:$0xff]
  %v5600 = vld [vmem:[%s175 + $0x48] sm:$0xff]
  %v5601 = vld [vmem:[%s175 + $0x50] sm:$0xff]
  %v5602 = vld [vmem:[%s175 + $0x60] sm:$0xff]
  %v5603 = vld [vmem:[%s175 + $0x68] sm:$0xff]
  %v5604 = vld [vmem:[%s175 + $0x78] sm:$0xff]
  %v5605 = vld [vmem:[%s175 + $0x80] sm:$0xff]
  %v5606 = vld [vmem:[%s175 + $0x90] sm:$0xff]
  %v5607 = vld [vmem:[%s175 + $0x98] sm:$0xff]
  %v5608 = vld [vmem:[%s175 + $0xa8] sm:$0xff]
  %v5609 = vld [vmem:[%s175 + $0xb0] sm:$0xff]
  %v5610 = vld [vmem:[%s175 + $0xc0] sm:$0xff]
  %v5611 = vld [vmem:[%s175 + $0xc8] sm:$0xff]
  %v5612 = vld [vmem:[%s175 + $0xd8] sm:$0xff]
  %v5613 = vld [vmem:[%s175 + $0xe0] sm:$0xff]
  %v5614 = vld [vmem:[%s175 + $0xf0] sm:$0xff]
  %v5615 = vld [vmem:[%s175 + $0xf8] sm:$0xff]
  %v5616 = vld [vmem:[%s175 + $0x108] sm:$0xff]
  %v5617 = vld [vmem:[%s175 + $0x110] sm:$0xff]
  %v5618 = vld [vmem:[%s175 + $0x120] sm:$0xff]
  %v5619 = vld [vmem:[%s175 + $0x128] sm:$0xff]
  %v5620 = vld [vmem:[%s175 + $0x138] sm:$0xff]
  %v5621 = vld [vmem:[%s175 + $0x140] sm:$0xff]
  %v5622 = vld [vmem:[%s175 + $0x150] sm:$0xff]
  %v5623 = vld [vmem:[%s175 + $0x158] sm:$0xff]
  %v5624 = vld [vmem:[%s175 + $0x168] sm:$0xff]
  %v5625 = vld [vmem:[%s175 + $0x170] sm:$0xff]
  %v5626 = vld [vmem:[%s175 + $0x1b0] sm:$0xff]
  %v5627 = vld [vmem:[%s175 + $0x1b8] sm:$0xff]
  %v5628 = vld [vmem:[%s175 + $0x1c8] sm:$0xff]
  %v5629 = vld [vmem:[%s175 + $0x1d0] sm:$0xff]
  %v5630 = vld [vmem:[%s175 + $0x1e0] sm:$0xff]
  %v5631 = vld [vmem:[%s175 + $0x1e8] sm:$0xff]
  %v5632 = vld [vmem:[%s175 + $0x1f8] sm:$0xff]
  %v5633 = vld [vmem:[%s175 + $0x200] sm:$0xff]
  %v5634 = vld [vmem:[%s175 + $0x210] sm:$0xff]
  %v5635 = vld [vmem:[%s175 + $0x218] sm:$0xff]
  %v5636 = vld [vmem:[%s175 + $0x228] sm:$0xff]
  %v5637 = vld [vmem:[%s175 + $0x230] sm:$0xff]
  %v5638 = vld [vmem:[%s175 + $0x240] sm:$0xff]
  %v5639 = vld [vmem:[%s175 + $0x248] sm:$0xff]
  %v5640 = vld [vmem:[%s175 + $0x258] sm:$0xff]
  %v5641 = vld [vmem:[%s175 + $0x260] sm:$0xff]
  %v5642 = vld [vmem:[%s175 + $0x270] sm:$0xff]
  %v5643 = vld [vmem:[%s175 + $0x278] sm:$0xff]
  %v5644 = vld [vmem:[%s175 + $0x288] sm:$0xff]
  %v5645 = vld [vmem:[%s175 + $0x290] sm:$0xff]
  %v5646 = vld [vmem:[%s175 + $0x2a0] sm:$0xff]
  %v5647 = vld [vmem:[%s175 + $0x2a8] sm:$0xff]
  %v5648 = vld [vmem:[%s175 + $0x2b8] sm:$0xff]
  %v5649 = vld [vmem:[%s175 + $0x2c0] sm:$0xff]
  %v5650 = vld [vmem:[%s175 + $0x2d0] sm:$0xff]
  %v5651 = vld [vmem:[%s175 + $0x2d8] sm:$0xff]
  %v5652 = vld [vmem:[%s175 + $0x2e8] sm:$0xff]
  %v5653 = vld [vmem:[%s175 + $0x2f0] sm:$0xff]
  %v5654 = vld [vmem:[%s175 + $0x300] sm:$0xff]
  %v5655 = vld [vmem:[%s175 + $0x308] sm:$0xff]
  %v5656 = vld [vmem:[%s175 + $0x318] sm:$0xff]
  %v5657 = vld [vmem:[%s175 + $0x320] sm:$0xff]
  %5658 = vst [vmem:[#allocation3] sm:$0xff] %v5594
  %5659 = vst [vmem:[#allocation3 + $0x18] sm:$0xff] %v5595
  %5660 = vst [vmem:[#allocation3 + $0x30] sm:$0xff] %v5596
  %5661 = vst [vmem:[#allocation3 + $0x48] sm:$0xff] %v5597
  %5662 = vst [vmem:[#allocation3 + $0x60] sm:$0xff] %v5598
  %5663 = vst [vmem:[#allocation3 + $0x78] sm:$0xff] %v5599
  %5664 = vst [vmem:[#allocation3 + $0x90] sm:$0xff] %v5600
  %5665 = vst [vmem:[#allocation3 + $0xa8] sm:$0xff] %v5601
  %5666 = vst [vmem:[#allocation3 + $0xc0] sm:$0xff] %v5602
  %5667 = vst [vmem:[#allocation3 + $0xd8] sm:$0xff] %v5603
  %5668 = vst [vmem:[#allocation3 + $0xf0] sm:$0xff] %v5604
  %5669 = vst [vmem:[#allocation3 + $0x108] sm:$0xff] %v5605
  %5670 = vst [vmem:[#allocation3 + $0x120] sm:$0xff] %v5606
  %5671 = vst [vmem:[#allocation3 + $0x138] sm:$0xff] %v5607
  %5672 = vst [vmem:[#allocation3 + $0x150] sm:$0xff] %v5608
  %5673 = vst [vmem:[#allocation3 + $0x168] sm:$0xff] %v5609
  %5674 = vst [vmem:[#allocation3 + $0x180] sm:$0xff] %v5610
  %5675 = vst [vmem:[#allocation3 + $0x198] sm:$0xff] %v5611
  %5676 = vst [vmem:[#allocation3 + $0x1b0] sm:$0xff] %v5612
  %5677 = vst [vmem:[#allocation3 + $0x1c8] sm:$0xff] %v5613
  %5678 = vst [vmem:[#allocation3 + $0x1e0] sm:$0xff] %v5614
  %5679 = vst [vmem:[#allocation3 + $0x1f8] sm:$0xff] %v5615
  %5680 = vst [vmem:[#allocation3 + $0x210] sm:$0xff] %v5616
  %5681 = vst [vmem:[#allocation3 + $0x228] sm:$0xff] %v5617
  %5682 = vst [vmem:[#allocation3 + $0x240] sm:$0xff] %v5618
  %5683 = vst [vmem:[#allocation3 + $0x258] sm:$0xff] %v5619
  %5684 = vst [vmem:[#allocation3 + $0x270] sm:$0xff] %v5620
  %5685 = vst [vmem:[#allocation3 + $0x288] sm:$0xff] %v5621
  %5686 = vst [vmem:[#allocation3 + $0x2a0] sm:$0xff] %v5622
  %5687 = vst [vmem:[#allocation3 + $0x2b8] sm:$0xff] %v5623
  %5688 = vst [vmem:[#allocation3 + $0x2d0] sm:$0xff] %v5624
  %5689 = vst [vmem:[#allocation3 + $0x2e8] sm:$0xff] %v5625
  %5690 = vst [vmem:[#allocation3 + $0x300] sm:$0xff] %v5626
  %5691 = vst [vmem:[#allocation3 + $0x318] sm:$0xff] %v5627
  %5692 = vst [vmem:[#allocation3 + $0x330] sm:$0xff] %v5628
  %5693 = vst [vmem:[#allocation3 + $0x348] sm:$0xff] %v5629
  %5694 = vst [vmem:[#allocation3 + $0x360] sm:$0xff] %v5630
  %5695 = vst [vmem:[#allocation3 + $0x378] sm:$0xff] %v5631
  %5696 = vst [vmem:[#allocation3 + $0x390] sm:$0xff] %v5632
  %5697 = vst [vmem:[#allocation3 + $0x3a8] sm:$0xff] %v5633
  %5698 = vst [vmem:[#allocation3 + $0x3c0] sm:$0xff] %v5634
  %5699 = vst [vmem:[#allocation3 + $0x3d8] sm:$0xff] %v5635
  %5700 = vst [vmem:[#allocation3 + $0x3f0] sm:$0xff] %v5636
  %5701 = vst [vmem:[#allocation3 + $0x408] sm:$0xff] %v5637
  %5702 = vst [vmem:[#allocation3 + $0x420] sm:$0xff] %v5638
  %5703 = vst [vmem:[#allocation3 + $0x438] sm:$0xff] %v5639
  %5704 = vst [vmem:[#allocation3 + $0x450] sm:$0xff] %v5640
  %5705 = vst [vmem:[#allocation3 + $0x468] sm:$0xff] %v5641
  %5706 = vst [vmem:[#allocation3 + $0x480] sm:$0xff] %v5642
  %5707 = vst [vmem:[#allocation3 + $0x498] sm:$0xff] %v5643
  %5708 = vst [vmem:[#allocation3 + $0x4b0] sm:$0xff] %v5644
  %5709 = vst [vmem:[#allocation3 + $0x4c8] sm:$0xff] %v5645
  %5710 = vst [vmem:[#allocation3 + $0x4e0] sm:$0xff] %v5646
  %5711 = vst [vmem:[#allocation3 + $0x4f8] sm:$0xff] %v5647
  %5712 = vst [vmem:[#allocation3 + $0x510] sm:$0xff] %v5648
  %5713 = vst [vmem:[#allocation3 + $0x528] sm:$0xff] %v5649
  %5714 = vst [vmem:[#allocation3 + $0x540] sm:$0xff] %v5650
  %5715 = vst [vmem:[#allocation3 + $0x558] sm:$0xff] %v5651
  %5716 = vst [vmem:[#allocation3 + $0x570] sm:$0xff] %v5652
  %5717 = vst [vmem:[#allocation3 + $0x588] sm:$0xff] %v5653
  %5718 = vst [vmem:[#allocation3 + $0x5a0] sm:$0xff] %v5654
  %5719 = vst [vmem:[#allocation3 + $0x5b8] sm:$0xff] %v5655
  %5720 = vst [vmem:[#allocation3 + $0x5d0] sm:$0xff] %v5656
  %5721 = vst [vmem:[#allocation3 + $0x5e8] sm:$0xff] %v5657
  %v5722 = vld [vmem:[%s175 + $0x1] sm:$0xff]
  %v5723 = vld [vmem:[%s175 + $0x9] sm:$0xff]
  %v5724 = vld [vmem:[%s175 + $0x19] sm:$0xff]
  %v5725 = vld [vmem:[%s175 + $0x21] sm:$0xff]
  %v5726 = vld [vmem:[%s175 + $0x31] sm:$0xff]
  %v5727 = vld [vmem:[%s175 + $0x39] sm:$0xff]
  %v5728 = vld [vmem:[%s175 + $0x49] sm:$0xff]
  %v5729 = vld [vmem:[%s175 + $0x51] sm:$0xff]
  %v5730 = vld [vmem:[%s175 + $0x61] sm:$0xff]
  %v5731 = vld [vmem:[%s175 + $0x69] sm:$0xff]
  %v5732 = vld [vmem:[%s175 + $0x79] sm:$0xff]
  %v5733 = vld [vmem:[%s175 + $0x81] sm:$0xff]
  %v5734 = vld [vmem:[%s175 + $0x91] sm:$0xff]
  %v5735 = vld [vmem:[%s175 + $0x99] sm:$0xff]
  %v5736 = vld [vmem:[%s175 + $0xa9] sm:$0xff]
  %v5737 = vld [vmem:[%s175 + $0xb1] sm:$0xff]
  %v5738 = vld [vmem:[%s175 + $0xc1] sm:$0xff]
  %v5739 = vld [vmem:[%s175 + $0xc9] sm:$0xff]
  %v5740 = vld [vmem:[%s175 + $0xd9] sm:$0xff]
  %v5741 = vld [vmem:[%s175 + $0xe1] sm:$0xff]
  %v5742 = vld [vmem:[%s175 + $0xf1] sm:$0xff]
  %v5743 = vld [vmem:[%s175 + $0xf9] sm:$0xff]
  %v5744 = vld [vmem:[%s175 + $0x109] sm:$0xff]
  %v5745 = vld [vmem:[%s175 + $0x111] sm:$0xff]
  %v5746 = vld [vmem:[%s175 + $0x121] sm:$0xff]
  %v5747 = vld [vmem:[%s175 + $0x129] sm:$0xff]
  %v5748 = vld [vmem:[%s175 + $0x139] sm:$0xff]
  %v5749 = vld [vmem:[%s175 + $0x141] sm:$0xff]
  %v5750 = vld [vmem:[%s175 + $0x151] sm:$0xff]
  %v5751 = vld [vmem:[%s175 + $0x159] sm:$0xff]
  %v5752 = vld [vmem:[%s175 + $0x169] sm:$0xff]
  %v5753 = vld [vmem:[%s175 + $0x171] sm:$0xff]
  %v5754 = vld [vmem:[%s175 + $0x1b1] sm:$0xff]
  %v5755 = vld [vmem:[%s175 + $0x1b9] sm:$0xff]
  %v5756 = vld [vmem:[%s175 + $0x1c9] sm:$0xff]
  %v5757 = vld [vmem:[%s175 + $0x1d1] sm:$0xff]
  %v5758 = vld [vmem:[%s175 + $0x1e1] sm:$0xff]
  %v5759 = vld [vmem:[%s175 + $0x1e9] sm:$0xff]
  %v5760 = vld [vmem:[%s175 + $0x1f9] sm:$0xff]
  %v5761 = vld [vmem:[%s175 + $0x201] sm:$0xff]
  %v5762 = vld [vmem:[%s175 + $0x211] sm:$0xff]
  %v5763 = vld [vmem:[%s175 + $0x219] sm:$0xff]
  %v5764 = vld [vmem:[%s175 + $0x229] sm:$0xff]
  %v5765 = vld [vmem:[%s175 + $0x231] sm:$0xff]
  %v5766 = vld [vmem:[%s175 + $0x241] sm:$0xff]
  %v5767 = vld [vmem:[%s175 + $0x249] sm:$0xff]
  %v5768 = vld [vmem:[%s175 + $0x259] sm:$0xff]
  %v5769 = vld [vmem:[%s175 + $0x261] sm:$0xff]
  %v5770 = vld [vmem:[%s175 + $0x271] sm:$0xff]
  %v5771 = vld [vmem:[%s175 + $0x279] sm:$0xff]
  %v5772 = vld [vmem:[%s175 + $0x289] sm:$0xff]
  %v5773 = vld [vmem:[%s175 + $0x291] sm:$0xff]
  %v5774 = vld [vmem:[%s175 + $0x2a1] sm:$0xff]
  %v5775 = vld [vmem:[%s175 + $0x2a9] sm:$0xff]
  %v5776 = vld [vmem:[%s175 + $0x2b9] sm:$0xff]
  %v5777 = vld [vmem:[%s175 + $0x2c1] sm:$0xff]
  %v5778 = vld [vmem:[%s175 + $0x2d1] sm:$0xff]
  %v5779 = vld [vmem:[%s175 + $0x2d9] sm:$0xff]
  %v5780 = vld [vmem:[%s175 + $0x2e9] sm:$0xff]
  %v5781 = vld [vmem:[%s175 + $0x2f1] sm:$0xff]
  %v5782 = vld [vmem:[%s175 + $0x301] sm:$0xff]
  %v5783 = vld [vmem:[%s175 + $0x309] sm:$0xff]
  %v5784 = vld [vmem:[%s175 + $0x319] sm:$0xff]
  %v5785 = vld [vmem:[%s175 + $0x321] sm:$0xff]
  %5786 = vst [vmem:[#allocation3 + $0x8] sm:$0xff] %v5722
  %5787 = vst [vmem:[#allocation3 + $0x20] sm:$0xff] %v5723
  %5788 = vst [vmem:[#allocation3 + $0x38] sm:$0xff] %v5724
  %5789 = vst [vmem:[#allocation3 + $0x50] sm:$0xff] %v5725
  %5790 = vst [vmem:[#allocation3 + $0x68] sm:$0xff] %v5726
  %5791 = vst [vmem:[#allocation3 + $0x80] sm:$0xff] %v5727
  %5792 = vst [vmem:[#allocation3 + $0x98] sm:$0xff] %v5728
  %5793 = vst [vmem:[#allocation3 + $0xb0] sm:$0xff] %v5729
  %5794 = vst [vmem:[#allocation3 + $0xc8] sm:$0xff] %v5730
  %5795 = vst [vmem:[#allocation3 + $0xe0] sm:$0xff] %v5731
  %5796 = vst [vmem:[#allocation3 + $0xf8] sm:$0xff] %v5732
  %5797 = vst [vmem:[#allocation3 + $0x110] sm:$0xff] %v5733
  %5798 = vst [vmem:[#allocation3 + $0x128] sm:$0xff] %v5734
  %5799 = vst [vmem:[#allocation3 + $0x140] sm:$0xff] %v5735
  %5800 = vst [vmem:[#allocation3 + $0x158] sm:$0xff] %v5736
  %5801 = vst [vmem:[#allocation3 + $0x170] sm:$0xff] %v5737
  %5802 = vst [vmem:[#allocation3 + $0x188] sm:$0xff] %v5738
  %5803 = vst [vmem:[#allocation3 + $0x1a0] sm:$0xff] %v5739
  %5804 = vst [vmem:[#allocation3 + $0x1b8] sm:$0xff] %v5740
  %5805 = vst [vmem:[#allocation3 + $0x1d0] sm:$0xff] %v5741
  %5806 = vst [vmem:[#allocation3 + $0x1e8] sm:$0xff] %v5742
  %5807 = vst [vmem:[#allocation3 + $0x200] sm:$0xff] %v5743
  %5808 = vst [vmem:[#allocation3 + $0x218] sm:$0xff] %v5744
  %5809 = vst [vmem:[#allocation3 + $0x230] sm:$0xff] %v5745
  %5810 = vst [vmem:[#allocation3 + $0x248] sm:$0xff] %v5746
  %5811 = vst [vmem:[#allocation3 + $0x260] sm:$0xff] %v5747
  %5812 = vst [vmem:[#allocation3 + $0x278] sm:$0xff] %v5748
  %5813 = vst [vmem:[#allocation3 + $0x290] sm:$0xff] %v5749
  %5814 = vst [vmem:[#allocation3 + $0x2a8] sm:$0xff] %v5750
  %5815 = vst [vmem:[#allocation3 + $0x2c0] sm:$0xff] %v5751
  %5816 = vst [vmem:[#allocation3 + $0x2d8] sm:$0xff] %v5752
  %5817 = vst [vmem:[#allocation3 + $0x2f0] sm:$0xff] %v5753
  %5818 = vst [vmem:[#allocation3 + $0x308] sm:$0xff] %v5754
  %5819 = vst [vmem:[#allocation3 + $0x320] sm:$0xff] %v5755
  %5820 = vst [vmem:[#allocation3 + $0x338] sm:$0xff] %v5756
  %5821 = vst [vmem:[#allocation3 + $0x350] sm:$0xff] %v5757
  %5822 = vst [vmem:[#allocation3 + $0x368] sm:$0xff] %v5758
  %5823 = vst [vmem:[#allocation3 + $0x380] sm:$0xff] %v5759
  %5824 = vst [vmem:[#allocation3 + $0x398] sm:$0xff] %v5760
  %5825 = vst [vmem:[#allocation3 + $0x3b0] sm:$0xff] %v5761
  %5826 = vst [vmem:[#allocation3 + $0x3c8] sm:$0xff] %v5762
  %5827 = vst [vmem:[#allocation3 + $0x3e0] sm:$0xff] %v5763
  %5828 = vst [vmem:[#allocation3 + $0x3f8] sm:$0xff] %v5764
  %5829 = vst [vmem:[#allocation3 + $0x410] sm:$0xff] %v5765
  %5830 = vst [vmem:[#allocation3 + $0x428] sm:$0xff] %v5766
  %5831 = vst [vmem:[#allocation3 + $0x440] sm:$0xff] %v5767
  %5832 = vst [vmem:[#allocation3 + $0x458] sm:$0xff] %v5768
  %5833 = vst [vmem:[#allocation3 + $0x470] sm:$0xff] %v5769
  %5834 = vst [vmem:[#allocation3 + $0x488] sm:$0xff] %v5770
  %5835 = vst [vmem:[#allocation3 + $0x4a0] sm:$0xff] %v5771
  %5836 = vst [vmem:[#allocation3 + $0x4b8] sm:$0xff] %v5772
  %5837 = vst [vmem:[#allocation3 + $0x4d0] sm:$0xff] %v5773
  %5838 = vst [vmem:[#allocation3 + $0x4e8] sm:$0xff] %v5774
  %5839 = vst [vmem:[#allocation3 + $0x500] sm:$0xff] %v5775
  %5840 = vst [vmem:[#allocation3 + $0x518] sm:$0xff] %v5776
  %5841 = vst [vmem:[#allocation3 + $0x530] sm:$0xff] %v5777
  %5842 = vst [vmem:[#allocation3 + $0x548] sm:$0xff] %v5778
  %5843 = vst [vmem:[#allocation3 + $0x560] sm:$0xff] %v5779
  %5844 = vst [vmem:[#allocation3 + $0x578] sm:$0xff] %v5780
  %5845 = vst [vmem:[#allocation3 + $0x590] sm:$0xff] %v5781
  %5846 = vst [vmem:[#allocation3 + $0x5a8] sm:$0xff] %v5782
  %5847 = vst [vmem:[#allocation3 + $0x5c0] sm:$0xff] %v5783
  %5848 = vst [vmem:[#allocation3 + $0x5d8] sm:$0xff] %v5784
  %5849 = vst [vmem:[#allocation3 + $0x5f0] sm:$0xff] %v5785
  %v5850 = vld [vmem:[%s175 + $0x2] sm:$0xff]
  %v5851 = vld [vmem:[%s175 + $0xa] sm:$0xff]
  %v5852 = vld [vmem:[%s175 + $0x1a] sm:$0xff]
  %v5853 = vld [vmem:[%s175 + $0x22] sm:$0xff]
  %v5854 = vld [vmem:[%s175 + $0x32] sm:$0xff]
  %v5855 = vld [vmem:[%s175 + $0x3a] sm:$0xff]
  %v5856 = vld [vmem:[%s175 + $0x4a] sm:$0xff]
  %v5857 = vld [vmem:[%s175 + $0x52] sm:$0xff]
  %v5858 = vld [vmem:[%s175 + $0x62] sm:$0xff]
  %v5859 = vld [vmem:[%s175 + $0x6a] sm:$0xff]
  %v5860 = vld [vmem:[%s175 + $0x7a] sm:$0xff]
  %v5861 = vld [vmem:[%s175 + $0x82] sm:$0xff]
  %v5862 = vld [vmem:[%s175 + $0x92] sm:$0xff]
  %v5863 = vld [vmem:[%s175 + $0x9a] sm:$0xff]
  %v5864 = vld [vmem:[%s175 + $0xaa] sm:$0xff]
  %v5865 = vld [vmem:[%s175 + $0xb2] sm:$0xff]
  %v5866 = vld [vmem:[%s175 + $0xc2] sm:$0xff]
  %v5867 = vld [vmem:[%s175 + $0xca] sm:$0xff]
  %v5868 = vld [vmem:[%s175 + $0xda] sm:$0xff]
  %v5869 = vld [vmem:[%s175 + $0xe2] sm:$0xff]
  %v5870 = vld [vmem:[%s175 + $0xf2] sm:$0xff]
  %v5871 = vld [vmem:[%s175 + $0xfa] sm:$0xff]
  %v5872 = vld [vmem:[%s175 + $0x10a] sm:$0xff]
  %v5873 = vld [vmem:[%s175 + $0x112] sm:$0xff]
  %v5874 = vld [vmem:[%s175 + $0x122] sm:$0xff]
  %v5875 = vld [vmem:[%s175 + $0x12a] sm:$0xff]
  %v5876 = vld [vmem:[%s175 + $0x13a] sm:$0xff]
  %v5877 = vld [vmem:[%s175 + $0x142] sm:$0xff]
  %v5878 = vld [vmem:[%s175 + $0x152] sm:$0xff]
  %v5879 = vld [vmem:[%s175 + $0x15a] sm:$0xff]
  %v5880 = vld [vmem:[%s175 + $0x16a] sm:$0xff]
  %v5881 = vld [vmem:[%s175 + $0x172] sm:$0xff]
  %v5882 = vld [vmem:[%s175 + $0x1b2] sm:$0xff]
  %v5883 = vld [vmem:[%s175 + $0x1ba] sm:$0xff]
  %v5884 = vld [vmem:[%s175 + $0x1ca] sm:$0xff]
  %v5885 = vld [vmem:[%s175 + $0x1d2] sm:$0xff]
  %v5886 = vld [vmem:[%s175 + $0x1e2] sm:$0xff]
  %v5887 = vld [vmem:[%s175 + $0x1ea] sm:$0xff]
  %v5888 = vld [vmem:[%s175 + $0x1fa] sm:$0xff]
  %v5889 = vld [vmem:[%s175 + $0x202] sm:$0xff]
  %v5890 = vld [vmem:[%s175 + $0x212] sm:$0xff]
  %v5891 = vld [vmem:[%s175 + $0x21a] sm:$0xff]
  %v5892 = vld [vmem:[%s175 + $0x22a] sm:$0xff]
  %v5893 = vld [vmem:[%s175 + $0x232] sm:$0xff]
  %v5894 = vld [vmem:[%s175 + $0x242] sm:$0xff]
  %v5895 = vld [vmem:[%s175 + $0x24a] sm:$0xff]
  %v5896 = vld [vmem:[%s175 + $0x25a] sm:$0xff]
  %v5897 = vld [vmem:[%s175 + $0x262] sm:$0xff]
  %v5898 = vld [vmem:[%s175 + $0x272] sm:$0xff]
  %v5899 = vld [vmem:[%s175 + $0x27a] sm:$0xff]
  %v5900 = vld [vmem:[%s175 + $0x28a] sm:$0xff]
  %v5901 = vld [vmem:[%s175 + $0x292] sm:$0xff]
  %v5902 = vld [vmem:[%s175 + $0x2a2] sm:$0xff]
  %v5903 = vld [vmem:[%s175 + $0x2aa] sm:$0xff]
  %v5904 = vld [vmem:[%s175 + $0x2ba] sm:$0xff]
  %v5905 = vld [vmem:[%s175 + $0x2c2] sm:$0xff]
  %v5906 = vld [vmem:[%s175 + $0x2d2] sm:$0xff]
  %v5907 = vld [vmem:[%s175 + $0x2da] sm:$0xff]
  %v5908 = vld [vmem:[%s175 + $0x2ea] sm:$0xff]
  %v5909 = vld [vmem:[%s175 + $0x2f2] sm:$0xff]
  %v5910 = vld [vmem:[%s175 + $0x302] sm:$0xff]
  %v5911 = vld [vmem:[%s175 + $0x30a] sm:$0xff]
  %v5912 = vld [vmem:[%s175 + $0x31a] sm:$0xff]
  %v5913 = vld [vmem:[%s175 + $0x322] sm:$0xff]
  %5914 = vst [vmem:[#allocation3 + $0x10] sm:$0xff] %v5850
  %5915 = vst [vmem:[#allocation3 + $0x28] sm:$0xff] %v5851
  %5916 = vst [vmem:[#allocation3 + $0x40] sm:$0xff] %v5852
  %5917 = vst [vmem:[#allocation3 + $0x58] sm:$0xff] %v5853
  %5918 = vst [vmem:[#allocation3 + $0x70] sm:$0xff] %v5854
  %5919 = vst [vmem:[#allocation3 + $0x88] sm:$0xff] %v5855
  %5920 = vst [vmem:[#allocation3 + $0xa0] sm:$0xff] %v5856
  %5921 = vst [vmem:[#allocation3 + $0xb8] sm:$0xff] %v5857
  %5922 = vst [vmem:[#allocation3 + $0xd0] sm:$0xff] %v5858
  %5923 = vst [vmem:[#allocation3 + $0xe8] sm:$0xff] %v5859
  %5924 = vst [vmem:[#allocation3 + $0x100] sm:$0xff] %v5860
  %5925 = vst [vmem:[#allocation3 + $0x118] sm:$0xff] %v5861
  %5926 = vst [vmem:[#allocation3 + $0x130] sm:$0xff] %v5862
  %5927 = vst [vmem:[#allocation3 + $0x148] sm:$0xff] %v5863
  %5928 = vst [vmem:[#allocation3 + $0x160] sm:$0xff] %v5864
  %5929 = vst [vmem:[#allocation3 + $0x178] sm:$0xff] %v5865
  %5930 = vst [vmem:[#allocation3 + $0x190] sm:$0xff] %v5866
  %5931 = vst [vmem:[#allocation3 + $0x1a8] sm:$0xff] %v5867
  %5932 = vst [vmem:[#allocation3 + $0x1c0] sm:$0xff] %v5868
  %5933 = vst [vmem:[#allocation3 + $0x1d8] sm:$0xff] %v5869
  %5934 = vst [vmem:[#allocation3 + $0x1f0] sm:$0xff] %v5870
  %5935 = vst [vmem:[#allocation3 + $0x208] sm:$0xff] %v5871
  %5936 = vst [vmem:[#allocation3 + $0x220] sm:$0xff] %v5872
  %5937 = vst [vmem:[#allocation3 + $0x238] sm:$0xff] %v5873
  %5938 = vst [vmem:[#allocation3 + $0x250] sm:$0xff] %v5874
  %5939 = vst [vmem:[#allocation3 + $0x268] sm:$0xff] %v5875
  %5940 = vst [vmem:[#allocation3 + $0x280] sm:$0xff] %v5876
  %5941 = vst [vmem:[#allocation3 + $0x298] sm:$0xff] %v5877
  %5942 = vst [vmem:[#allocation3 + $0x2b0] sm:$0xff] %v5878
  %5943 = vst [vmem:[#allocation3 + $0x2c8] sm:$0xff] %v5879
  %5944 = vst [vmem:[#allocation3 + $0x2e0] sm:$0xff] %v5880
  %5945 = vst [vmem:[#allocation3 + $0x2f8] sm:$0xff] %v5881
  %5946 = vst [vmem:[#allocation3 + $0x310] sm:$0xff] %v5882
  %5947 = vst [vmem:[#allocation3 + $0x328] sm:$0xff] %v5883
  %5948 = vst [vmem:[#allocation3 + $0x340] sm:$0xff] %v5884
  %5949 = vst [vmem:[#allocation3 + $0x358] sm:$0xff] %v5885
  %5950 = vst [vmem:[#allocation3 + $0x370] sm:$0xff] %v5886
  %5951 = vst [vmem:[#allocation3 + $0x388] sm:$0xff] %v5887
  %5952 = vst [vmem:[#allocation3 + $0x3a0] sm:$0xff] %v5888
  %5953 = vst [vmem:[#allocation3 + $0x3b8] sm:$0xff] %v5889
  %5954 = vst [vmem:[#allocation3 + $0x3d0] sm:$0xff] %v5890
  %5955 = vst [vmem:[#allocation3 + $0x3e8] sm:$0xff] %v5891
  %5956 = vst [vmem:[#allocation3 + $0x400] sm:$0xff] %v5892
  %5957 = vst [vmem:[#allocation3 + $0x418] sm:$0xff] %v5893
  %5958 = vst [vmem:[#allocation3 + $0x430] sm:$0xff] %v5894
  %5959 = vst [vmem:[#allocation3 + $0x448] sm:$0xff] %v5895
  %5960 = vst [vmem:[#allocation3 + $0x460] sm:$0xff] %v5896
  %5961 = vst [vmem:[#allocation3 + $0x478] sm:$0xff] %v5897
  %5962 = vst [vmem:[#allocation3 + $0x490] sm:$0xff] %v5898
  %5963 = vst [vmem:[#allocation3 + $0x4a8] sm:$0xff] %v5899
  %5964 = vst [vmem:[#allocation3 + $0x4c0] sm:$0xff] %v5900
  %5965 = vst [vmem:[#allocation3 + $0x4d8] sm:$0xff] %v5901
  %5966 = vst [vmem:[#allocation3 + $0x4f0] sm:$0xff] %v5902
  %5967 = vst [vmem:[#allocation3 + $0x508] sm:$0xff] %v5903
  %5968 = vst [vmem:[#allocation3 + $0x520] sm:$0xff] %v5904
  %5969 = vst [vmem:[#allocation3 + $0x538] sm:$0xff] %v5905
  %5970 = vst [vmem:[#allocation3 + $0x550] sm:$0xff] %v5906
  %5971 = vst [vmem:[#allocation3 + $0x568] sm:$0xff] %v5907
  %5972 = vst [vmem:[#allocation3 + $0x580] sm:$0xff] %v5908
  %5973 = vst [vmem:[#allocation3 + $0x598] sm:$0xff] %v5909
  %5974 = vst [vmem:[#allocation3 + $0x5b0] sm:$0xff] %v5910
  %5975 = vst [vmem:[#allocation3 + $0x5c8] sm:$0xff] %v5911
  %5976 = vst [vmem:[#allocation3 + $0x5e0] sm:$0xff] %v5912
  %5977 = vst [vmem:[#allocation3 + $0x5f8] sm:$0xff] %v5913
  %v5978 = vld [vmem:[#allocation3] sm:$0xff]
  %v5979 = vld [vmem:[#allocation3 + $0x8] sm:$0xff]
  %v5980 = vld [vmem:[#allocation3 + $0x10] sm:$0xff]
  %v5981 = vld [vmem:[#allocation3 + $0x18] sm:$0xff]
  %v5982 = vld [vmem:[#allocation3 + $0x20] sm:$0xff]
  %v5983 = vld [vmem:[#allocation3 + $0x28] sm:$0xff]
  %v5984 = vld [vmem:[#allocation3 + $0x30] sm:$0xff]
  %v5985 = vld [vmem:[#allocation3 + $0x38] sm:$0xff]
  %v5986 = vld [vmem:[#allocation3 + $0x40] sm:$0xff]
  %v5987 = vld [vmem:[#allocation3 + $0x48] sm:$0xff]
  %v5988 = vld [vmem:[#allocation3 + $0x50] sm:$0xff]
  %v5989 = vld [vmem:[#allocation3 + $0x58] sm:$0xff]
  %v5990 = vld [vmem:[#allocation3 + $0x60] sm:$0xff]
  %v5991 = vld [vmem:[#allocation3 + $0x68] sm:$0xff]
  %v5992 = vld [vmem:[#allocation3 + $0x70] sm:$0xff]
  %v5993 = vld [vmem:[#allocation3 + $0x78] sm:$0xff]
  %v5994 = vld [vmem:[#allocation3 + $0x80] sm:$0xff]
  %v5995 = vld [vmem:[#allocation3 + $0x88] sm:$0xff]
  %v5996 = vld [vmem:[#allocation3 + $0x90] sm:$0xff]
  %v5997 = vld [vmem:[#allocation3 + $0x98] sm:$0xff]
  %v5998 = vld [vmem:[#allocation3 + $0xa0] sm:$0xff]
  %v5999 = vld [vmem:[#allocation3 + $0xa8] sm:$0xff]
  %v6000 = vld [vmem:[#allocation3 + $0xb0] sm:$0xff]
  %v6001 = vld [vmem:[#allocation3 + $0xb8] sm:$0xff]
  %v6002 = vld [vmem:[#allocation3 + $0xc0] sm:$0xff]
  %v6003 = vld [vmem:[#allocation3 + $0xc8] sm:$0xff]
  %v6004 = vld [vmem:[#allocation3 + $0xd0] sm:$0xff]
  %v6005 = vld [vmem:[#allocation3 + $0xd8] sm:$0xff]
  %v6006 = vld [vmem:[#allocation3 + $0xe0] sm:$0xff]
  %v6007 = vld [vmem:[#allocation3 + $0xe8] sm:$0xff]
  %v6008 = vld [vmem:[#allocation3 + $0xf0] sm:$0xff]
  %v6009 = vld [vmem:[#allocation3 + $0xf8] sm:$0xff]
  %v6010 = vld [vmem:[#allocation3 + $0x100] sm:$0xff]
  %v6011 = vld [vmem:[#allocation3 + $0x108] sm:$0xff]
  %v6012 = vld [vmem:[#allocation3 + $0x110] sm:$0xff]
  %v6013 = vld [vmem:[#allocation3 + $0x118] sm:$0xff]
  %v6014 = vld [vmem:[#allocation3 + $0x120] sm:$0xff]
  %v6015 = vld [vmem:[#allocation3 + $0x128] sm:$0xff]
  %v6016 = vld [vmem:[#allocation3 + $0x130] sm:$0xff]
  %v6017 = vld [vmem:[#allocation3 + $0x138] sm:$0xff]
  %v6018 = vld [vmem:[#allocation3 + $0x140] sm:$0xff]
  %v6019 = vld [vmem:[#allocation3 + $0x148] sm:$0xff]
  %v6020 = vld [vmem:[#allocation3 + $0x150] sm:$0xff]
  %v6021 = vld [vmem:[#allocation3 + $0x158] sm:$0xff]
  %v6022 = vld [vmem:[#allocation3 + $0x160] sm:$0xff]
  %v6023 = vld [vmem:[#allocation3 + $0x168] sm:$0xff]
  %v6024 = vld [vmem:[#allocation3 + $0x170] sm:$0xff]
  %v6025 = vld [vmem:[#allocation3 + $0x178] sm:$0xff]
  %v6026 = vld [vmem:[#allocation3 + $0x180] sm:$0xff]
  %v6027 = vld [vmem:[#allocation3 + $0x188] sm:$0xff]
  %v6028 = vld [vmem:[#allocation3 + $0x190] sm:$0xff]
  %v6029 = vld [vmem:[#allocation3 + $0x198] sm:$0xff]
  %v6030 = vld [vmem:[#allocation3 + $0x1a0] sm:$0xff]
  %v6031 = vld [vmem:[#allocation3 + $0x1a8] sm:$0xff]
  %v6032 = vld [vmem:[#allocation3 + $0x1b0] sm:$0xff]
  %v6033 = vld [vmem:[#allocation3 + $0x1b8] sm:$0xff]
  %v6034 = vld [vmem:[#allocation3 + $0x1c0] sm:$0xff]
  %v6035 = vld [vmem:[#allocation3 + $0x1c8] sm:$0xff]
  %v6036 = vld [vmem:[#allocation3 + $0x1d0] sm:$0xff]
  %v6037 = vld [vmem:[#allocation3 + $0x1d8] sm:$0xff]
  %v6038 = vld [vmem:[#allocation3 + $0x1e0] sm:$0xff]
  %v6039 = vld [vmem:[#allocation3 + $0x1e8] sm:$0xff]
  %v6040 = vld [vmem:[#allocation3 + $0x1f0] sm:$0xff]
  %v6041 = vld [vmem:[#allocation3 + $0x1f8] sm:$0xff]
  %v6042 = vld [vmem:[#allocation3 + $0x200] sm:$0xff]
  %v6043 = vld [vmem:[#allocation3 + $0x208] sm:$0xff]
  %v6044 = vld [vmem:[#allocation3 + $0x210] sm:$0xff]
  %v6045 = vld [vmem:[#allocation3 + $0x218] sm:$0xff]
  %v6046 = vld [vmem:[#allocation3 + $0x220] sm:$0xff]
  %v6047 = vld [vmem:[#allocation3 + $0x228] sm:$0xff]
  %v6048 = vld [vmem:[#allocation3 + $0x230] sm:$0xff]
  %v6049 = vld [vmem:[#allocation3 + $0x238] sm:$0xff]
  %v6050 = vld [vmem:[#allocation3 + $0x240] sm:$0xff]
  %v6051 = vld [vmem:[#allocation3 + $0x248] sm:$0xff]
  %v6052 = vld [vmem:[#allocation3 + $0x250] sm:$0xff]
  %v6053 = vld [vmem:[#allocation3 + $0x258] sm:$0xff]
  %v6054 = vld [vmem:[#allocation3 + $0x260] sm:$0xff]
  %v6055 = vld [vmem:[#allocation3 + $0x268] sm:$0xff]
  %v6056 = vld [vmem:[#allocation3 + $0x270] sm:$0xff]
  %v6057 = vld [vmem:[#allocation3 + $0x278] sm:$0xff]
  %v6058 = vld [vmem:[#allocation3 + $0x280] sm:$0xff]
  %v6059 = vld [vmem:[#allocation3 + $0x288] sm:$0xff]
  %v6060 = vld [vmem:[#allocation3 + $0x290] sm:$0xff]
  %v6061 = vld [vmem:[#allocation3 + $0x298] sm:$0xff]
  %v6062 = vld [vmem:[#allocation3 + $0x2a0] sm:$0xff]
  %v6063 = vld [vmem:[#allocation3 + $0x2a8] sm:$0xff]
  %v6064 = vld [vmem:[#allocation3 + $0x2b0] sm:$0xff]
  %v6065 = vld [vmem:[#allocation3 + $0x2b8] sm:$0xff]
  %v6066 = vld [vmem:[#allocation3 + $0x2c0] sm:$0xff]
  %v6067 = vld [vmem:[#allocation3 + $0x2c8] sm:$0xff]
  %v6068 = vld [vmem:[#allocation3 + $0x2d0] sm:$0xff]
  %v6069 = vld [vmem:[#allocation3 + $0x2d8] sm:$0xff]
  %v6070 = vld [vmem:[#allocation3 + $0x2e0] sm:$0xff]
  %v6071 = vld [vmem:[#allocation3 + $0x2e8] sm:$0xff]
  %v6072 = vld [vmem:[#allocation3 + $0x2f0] sm:$0xff]
  %v6073 = vld [vmem:[#allocation3 + $0x2f8] sm:$0xff]
  %v6074 = vld [vmem:[#allocation3 + $0x300] sm:$0xff]
  %v6075 = vld [vmem:[#allocation3 + $0x308] sm:$0xff]
  %v6076 = vld [vmem:[#allocation3 + $0x310] sm:$0xff]
  %v6077 = vld [vmem:[#allocation3 + $0x318] sm:$0xff]
  %v6078 = vld [vmem:[#allocation3 + $0x320] sm:$0xff]
  %v6079 = vld [vmem:[#allocation3 + $0x328] sm:$0xff]
  %v6080 = vld [vmem:[#allocation3 + $0x330] sm:$0xff]
  %v6081 = vld [vmem:[#allocation3 + $0x338] sm:$0xff]
  %v6082 = vld [vmem:[#allocation3 + $0x340] sm:$0xff]
  %v6083 = vld [vmem:[#allocation3 + $0x348] sm:$0xff]
  %v6084 = vld [vmem:[#allocation3 + $0x350] sm:$0xff]
  %v6085 = vld [vmem:[#allocation3 + $0x358] sm:$0xff]
  %v6086 = vld [vmem:[#allocation3 + $0x360] sm:$0xff]
  %v6087 = vld [vmem:[#allocation3 + $0x368] sm:$0xff]
  %v6088 = vld [vmem:[#allocation3 + $0x370] sm:$0xff]
  %v6089 = vld [vmem:[#allocation3 + $0x378] sm:$0xff]
  %v6090 = vld [vmem:[#allocation3 + $0x380] sm:$0xff]
  %v6091 = vld [vmem:[#allocation3 + $0x388] sm:$0xff]
  %v6092 = vld [vmem:[#allocation3 + $0x390] sm:$0xff]
  %v6093 = vld [vmem:[#allocation3 + $0x398] sm:$0xff]
  %v6094 = vld [vmem:[#allocation3 + $0x3a0] sm:$0xff]
  %v6095 = vld [vmem:[#allocation3 + $0x3a8] sm:$0xff]
  %v6096 = vld [vmem:[#allocation3 + $0x3b0] sm:$0xff]
  %v6097 = vld [vmem:[#allocation3 + $0x3b8] sm:$0xff]
  %v6098 = vld [vmem:[#allocation3 + $0x3c0] sm:$0xff]
  %v6099 = vld [vmem:[#allocation3 + $0x3c8] sm:$0xff]
  %v6100 = vld [vmem:[#allocation3 + $0x3d0] sm:$0xff]
  %v6101 = vld [vmem:[#allocation3 + $0x3d8] sm:$0xff]
  %v6102 = vld [vmem:[#allocation3 + $0x3e0] sm:$0xff]
  %v6103 = vld [vmem:[#allocation3 + $0x3e8] sm:$0xff]
  %v6104 = vld [vmem:[#allocation3 + $0x3f0] sm:$0xff]
  %v6105 = vld [vmem:[#allocation3 + $0x3f8] sm:$0xff]
  %v6106 = vld [vmem:[#allocation3 + $0x400] sm:$0xff]
  %v6107 = vld [vmem:[#allocation3 + $0x408] sm:$0xff]
  %v6108 = vld [vmem:[#allocation3 + $0x410] sm:$0xff]
  %v6109 = vld [vmem:[#allocation3 + $0x418] sm:$0xff]
  %v6110 = vld [vmem:[#allocation3 + $0x420] sm:$0xff]
  %v6111 = vld [vmem:[#allocation3 + $0x428] sm:$0xff]
  %v6112 = vld [vmem:[#allocation3 + $0x430] sm:$0xff]
  %v6113 = vld [vmem:[#allocation3 + $0x438] sm:$0xff]
  %v6114 = vld [vmem:[#allocation3 + $0x440] sm:$0xff]
  %v6115 = vld [vmem:[#allocation3 + $0x448] sm:$0xff]
  %v6116 = vld [vmem:[#allocation3 + $0x450] sm:$0xff]
  %v6117 = vld [vmem:[#allocation3 + $0x458] sm:$0xff]
  %v6118 = vld [vmem:[#allocation3 + $0x460] sm:$0xff]
  %v6119 = vld [vmem:[#allocation3 + $0x468] sm:$0xff]
  %v6120 = vld [vmem:[#allocation3 + $0x470] sm:$0xff]
  %v6121 = vld [vmem:[#allocation3 + $0x478] sm:$0xff]
  %v6122 = vld [vmem:[#allocation3 + $0x480] sm:$0xff]
  %v6123 = vld [vmem:[#allocation3 + $0x488] sm:$0xff]
  %v6124 = vld [vmem:[#allocation3 + $0x490] sm:$0xff]
  %v6125 = vld [vmem:[#allocation3 + $0x498] sm:$0xff]
  %v6126 = vld [vmem:[#allocation3 + $0x4a0] sm:$0xff]
  %v6127 = vld [vmem:[#allocation3 + $0x4a8] sm:$0xff]
  %v6128 = vld [vmem:[#allocation3 + $0x4b0] sm:$0xff]
  %v6129 = vld [vmem:[#allocation3 + $0x4b8] sm:$0xff]
  %v6130 = vld [vmem:[#allocation3 + $0x4c0] sm:$0xff]
  %v6131 = vld [vmem:[#allocation3 + $0x4c8] sm:$0xff]
  %v6132 = vld [vmem:[#allocation3 + $0x4d0] sm:$0xff]
  %v6133 = vld [vmem:[#allocation3 + $0x4d8] sm:$0xff]
  %v6134 = vld [vmem:[#allocation3 + $0x4e0] sm:$0xff]
  %v6135 = vld [vmem:[#allocation3 + $0x4e8] sm:$0xff]
  %v6136 = vld [vmem:[#allocation3 + $0x4f0] sm:$0xff]
  %v6137 = vld [vmem:[#allocation3 + $0x4f8] sm:$0xff]
  %v6138 = vld [vmem:[#allocation3 + $0x500] sm:$0xff]
  %v6139 = vld [vmem:[#allocation3 + $0x508] sm:$0xff]
  %v6140 = vld [vmem:[#allocation3 + $0x510] sm:$0xff]
  %v6141 = vld [vmem:[#allocation3 + $0x518] sm:$0xff]
  %v6142 = vld [vmem:[#allocation3 + $0x520] sm:$0xff]
  %v6143 = vld [vmem:[#allocation3 + $0x528] sm:$0xff]
  %v6144 = vld [vmem:[#allocation3 + $0x530] sm:$0xff]
  %v6145 = vld [vmem:[#allocation3 + $0x538] sm:$0xff]
  %v6146 = vld [vmem:[#allocation3 + $0x540] sm:$0xff]
  %v6147 = vld [vmem:[#allocation3 + $0x548] sm:$0xff]
  %v6148 = vld [vmem:[#allocation3 + $0x550] sm:$0xff]
  %v6149 = vld [vmem:[#allocation3 + $0x558] sm:$0xff]
  %v6150 = vld [vmem:[#allocation3 + $0x560] sm:$0xff]
  %v6151 = vld [vmem:[#allocation3 + $0x568] sm:$0xff]
  %v6152 = vld [vmem:[#allocation3 + $0x570] sm:$0xff]
  %v6153 = vld [vmem:[#allocation3 + $0x578] sm:$0xff]
  %v6154 = vld [vmem:[#allocation3 + $0x580] sm:$0xff]
  %v6155 = vld [vmem:[#allocation3 + $0x588] sm:$0xff]
  %v6156 = vld [vmem:[#allocation3 + $0x590] sm:$0xff]
  %v6157 = vld [vmem:[#allocation3 + $0x598] sm:$0xff]
  %v6158 = vld [vmem:[#allocation3 + $0x5a0] sm:$0xff]
  %v6159 = vld [vmem:[#allocation3 + $0x5a8] sm:$0xff]
  %v6160 = vld [vmem:[#allocation3 + $0x5b0] sm:$0xff]
  %v6161 = vld [vmem:[#allocation3 + $0x5b8] sm:$0xff]
  %v6162 = vld [vmem:[#allocation3 + $0x5c0] sm:$0xff]
  %v6163 = vld [vmem:[#allocation3 + $0x5c8] sm:$0xff]
  %v6164 = vld [vmem:[#allocation3 + $0x5d0] sm:$0xff]
  %v6165 = vld [vmem:[#allocation3 + $0x5d8] sm:$0xff]
  %v6166 = vld [vmem:[#allocation3 + $0x5e0] sm:$0xff]
  %v6167 = vld [vmem:[#allocation3 + $0x5e8] sm:$0xff]
  %v6168 = vld [vmem:[#allocation3 + $0x5f0] sm:$0xff]
  %v6169 = vld [vmem:[#allocation3 + $0x5f8] sm:$0xff]
  %s6170 = scalar_lea.vmem %s4, 384
  %v6171 = vld [vmem:[%s6170] sm:$0xff]
  %v6172 = vld [vmem:[%s6170 + $0x8] sm:$0xff]
  %v6173 = vld [vmem:[%s6170 + $0x10] sm:$0xff]
  %v6174 = vld [vmem:[%s6170 + $0x18] sm:$0xff]
  %v6175 = vld [vmem:[%s6170 + $0x20] sm:$0xff]
  %v6176 = vld [vmem:[%s6170 + $0x28] sm:$0xff]
  %v6177 = vld [vmem:[%s6170 + $0x30] sm:$0xff]
  %v6178 = vld [vmem:[%s6170 + $0x38] sm:$0xff]
  %v6179 = vld [vmem:[%s6170 + $0x40] sm:$0xff]
  %v6180 = vld [vmem:[%s6170 + $0x48] sm:$0xff]
  %v6181 = vld [vmem:[%s6170 + $0x50] sm:$0xff]
  %v6182 = vld [vmem:[%s6170 + $0x58] sm:$0xff]
  %v6183 = vld [vmem:[%s6170 + $0x60] sm:$0xff]
  %v6184 = vld [vmem:[%s6170 + $0x68] sm:$0xff]
  %v6185 = vld [vmem:[%s6170 + $0x70] sm:$0xff]
  %v6186 = vld [vmem:[%s6170 + $0x78] sm:$0xff]
  %v6187 = vld [vmem:[%s6170 + $0x80] sm:$0xff]
  %v6188 = vld [vmem:[%s6170 + $0x88] sm:$0xff]
  %v6189 = vld [vmem:[%s6170 + $0x90] sm:$0xff]
  %v6190 = vld [vmem:[%s6170 + $0x98] sm:$0xff]
  %v6191 = vld [vmem:[%s6170 + $0xa0] sm:$0xff]
  %v6192 = vld [vmem:[%s6170 + $0xa8] sm:$0xff]
  %v6193 = vld [vmem:[%s6170 + $0xb0] sm:$0xff]
  %v6194 = vld [vmem:[%s6170 + $0xb8] sm:$0xff]
  %v6195 = vld [vmem:[%s6170 + $0xc0] sm:$0xff]
  %v6196 = vld [vmem:[%s6170 + $0xc8] sm:$0xff]
  %v6197 = vld [vmem:[%s6170 + $0xd0] sm:$0xff]
  %v6198 = vld [vmem:[%s6170 + $0xd8] sm:$0xff]
  %v6199 = vld [vmem:[%s6170 + $0xe0] sm:$0xff]
  %v6200 = vld [vmem:[%s6170 + $0xe8] sm:$0xff]
  %v6201 = vld [vmem:[%s6170 + $0xf0] sm:$0xff]
  %v6202 = vld [vmem:[%s6170 + $0xf8] sm:$0xff]
  %v6203 = vld [vmem:[%s6170 + $0x100] sm:$0xff]
  %v6204 = vld [vmem:[%s6170 + $0x108] sm:$0xff]
  %v6205 = vld [vmem:[%s6170 + $0x110] sm:$0xff]
  %v6206 = vld [vmem:[%s6170 + $0x118] sm:$0xff]
  %v6207 = vld [vmem:[%s6170 + $0x120] sm:$0xff]
  %v6208 = vld [vmem:[%s6170 + $0x128] sm:$0xff]
  %v6209 = vld [vmem:[%s6170 + $0x130] sm:$0xff]
  %v6210 = vld [vmem:[%s6170 + $0x138] sm:$0xff]
  %v6211 = vld [vmem:[%s6170 + $0x140] sm:$0xff]
  %v6212 = vld [vmem:[%s6170 + $0x148] sm:$0xff]
  %v6213 = vld [vmem:[%s6170 + $0x150] sm:$0xff]
  %v6214 = vld [vmem:[%s6170 + $0x158] sm:$0xff]
  %v6215 = vld [vmem:[%s6170 + $0x160] sm:$0xff]
  %v6216 = vld [vmem:[%s6170 + $0x168] sm:$0xff]
  %v6217 = vld [vmem:[%s6170 + $0x170] sm:$0xff]
  %v6218 = vld [vmem:[%s6170 + $0x178] sm:$0xff]
  %6219 = vmatprep.subr.mxu0 0.0
  %6220 = vmatpush1.msra.mxu0 %v6171
  %6221 = vmatprep.subr.mxu0 0.0
  %6222 = vmatpush1.msra.mxu0 %v6172
  %6223 = vmatprep.subr.mxu0 0.0
  %6224 = vmatpush1.msra.mxu0 %v6173
  %6225 = vmatprep.subr.mxu0 0.0
  %6226 = vmatpush1.msra.mxu0 %v6174
  %6227 = vmatprep.subr.mxu0 0.0
  %6228 = vmatpush1.msra.mxu0 %v6175
  %6229 = vmatprep.subr.mxu0 0.0
  %6230 = vmatpush1.msra.mxu0 %v6176
  %6231 = vmatprep.subr.mxu0 0.0
  %6232 = vmatpush1.msra.mxu0 %v6177
  %6233 = vmatprep.subr.mxu0 0.0
  %6234 = vmatpush1.msra.mxu0 %v6178
  %6235 = vmatprep.subr.mxu0 0.0
  %6236 = vmatpush1.msra.mxu0 %v6179
  %6237 = vmatprep.subr.mxu0 0.0
  %6238 = vmatpush1.msra.mxu0 %v6180
  %6239 = vmatprep.subr.mxu0 0.0
  %6240 = vmatpush1.msra.mxu0 %v6181
  %6241 = vmatprep.subr.mxu0 0.0
  %6242 = vmatpush1.msra.mxu0 %v6182
  %6243 = vmatprep.subr.mxu0 0.0
  %6244 = vmatpush1.msra.mxu0 %v6183
  %6245 = vmatprep.subr.mxu0 0.0
  %6246 = vmatpush1.msra.mxu0 %v6184
  %6247 = vmatprep.subr.mxu0 0.0
  %6248 = vmatpush1.msra.mxu0 %v6185
  %6249 = vmatprep.subr.mxu0 0.0
  %6250 = vmatpush1.msra.mxu0 %v6186
  %6251 = vmatprep.subr.mxu0 0.0
  %6252 = vmatpush1.msra.mxu0 %v6187
  %6253 = vmatprep.subr.mxu0 0.0
  %6254 = vmatpush1.msra.mxu0 %v6188
  %6255 = vmatprep.subr.mxu0 0.0
  %6256 = vmatpush1.msra.mxu0 %v6189
  %6257 = vmatprep.subr.mxu0 0.0
  %6258 = vmatpush1.msra.mxu0 %v6190
  %6259 = vmatprep.subr.mxu0 0.0
  %6260 = vmatpush1.msra.mxu0 %v6191
  %6261 = vmatprep.subr.mxu0 0.0
  %6262 = vmatpush1.msra.mxu0 %v6192
  %6263 = vmatprep.subr.mxu0 0.0
  %6264 = vmatpush1.msra.mxu0 %v6193
  %6265 = vmatprep.subr.mxu0 0.0
  %6266 = vmatpush1.msra.mxu0 %v6194
  %6267 = vmatprep.subr.mxu0 0.0
  %6268 = vmatpush1.msra.mxu0 %v6195
  %6269 = vmatprep.subr.mxu0 0.0
  %6270 = vmatpush1.msra.mxu0 %v6196
  %6271 = vmatprep.subr.mxu0 0.0
  %6272 = vmatpush1.msra.mxu0 %v6197
  %6273 = vmatprep.subr.mxu0 0.0
  %6274 = vmatpush1.msra.mxu0 %v6198
  %6275 = vmatprep.subr.mxu0 0.0
  %6276 = vmatpush1.msra.mxu0 %v6199
  %6277 = vmatprep.subr.mxu0 0.0
  %6278 = vmatpush1.msra.mxu0 %v6200
  %6279 = vmatprep.subr.mxu0 0.0
  %6280 = vmatpush1.msra.mxu0 %v6201
  %6281 = vmatprep.subr.mxu0 0.0
  %6282 = vmatpush1.msra.mxu0 %v6202
  %6283 = vmatprep.mubr.f32.mxu0 %v5979
  %6284 = vmatmul.mubr.f32.gmra.mrb[0].mxu0 %v5978
  %v6285 = vpop.f32.mrb[0].mxu0
  %v6286 = vadd.f32 0.0, %v6285
  %v6287 = vpop.f32.mrb[0].mxu0
  %6288 = vmatprep.mubr.f32.mxu0 %v5982
  %6289 = vmatmul.mubr.f32.gmra.mrb[0].mxu0 %v5981
  %v6290 = vpop.f32.mrb[0].mxu0
  %v6291 = vadd.f32 0.0, %v6290
  %v6292 = vpop.f32.mrb[0].mxu0
  %6293 = vmatprep.mubr.f32.mxu0 %v5985
  %6294 = vmatmul.mubr.f32.gmra.mrb[0].mxu0 %v5984
  %v6295 = vpop.f32.mrb[0].mxu0
  %v6296 = vadd.f32 0.0, %v6295
  %v6297 = vpop.f32.mrb[0].mxu0
  %6298 = vmatprep.mubr.f32.mxu0 %v5988
  %6299 = vmatmul.mubr.f32.gmra.mrb[0].mxu0 %v5987
  %v6300 = vpop.f32.mrb[0].mxu0
  %v6301 = vadd.f32 0.0, %v6300
  %v6302 = vpop.f32.mrb[0].mxu0
  %6303 = vmatprep.mubr.f32.mxu0 %v5991
  %6304 = vmatmul.mubr.f32.gmra.mrb[0].mxu0 %v5990
  %v6305 = vpop.f32.mrb[0].mxu0
  %v6306 = vadd.f32 0.0, %v6305
  %v6307 = vpop.f32.mrb[0].mxu0
  %6308 = vmatprep.mubr.f32.mxu0 %v5994
  %6309 = vmatmul.mubr.f32.gmra.mrb[0].mxu0 %v5993
  %v6310 = vpop.f32.mrb[0].mxu0
  %v6311 = vadd.f32 0.0, %v6310
  %v6312 = vpop.f32.mrb[0].mxu0
  %6313 = vmatprep.mubr.f32.mxu0 %v5997
  %6314 = vmatmul.mubr.f32.gmra.mrb[0].mxu0 %v5996
  %v6315 = vpop.f32.mrb[0].mxu0
  %v6316 = vadd.f32 0.0, %v6315
  %v6317 = vpop.f32.mrb[0].mxu0
  %6318 = vmatprep.mubr.f32.mxu0 %v6000
  %6319 = vmatmul.mubr.f32.gmra.mrb[0].mxu0 %v5999
  %v6320 = vpop.f32.mrb[0].mxu0
  %v6321 = vadd.f32 0.0, %v6320
  %v6322 = vpop.f32.mrb[0].mxu0
  %6323 = vmatprep.mubr.f32.mxu0 %v6003
  %6324 = vmatmul.mubr.f32.gmra.mrb[0].mxu0 %v6002
  %v6325 = vpop.f32.mrb[0].mxu0
  %v6326 = vadd.f32 0.0, %v6325
  %v6327 = vpop.f32.mrb[0].mxu0
  %6328 = vmatprep.mubr.f32.mxu0 %v6006
  %6329 = vmatmul.mubr.f32.gmra.mrb[0].mxu0 %v6005
  %v6330 = vpop.f32.mrb[0].mxu0
  %v6331 = vadd.f32 0.0, %v6330
  %v6332 = vpop.f32.mrb[0].mxu0
  %6333 = vmatprep.mubr.f32.mxu0 %v6009
  %6334 = vmatmul.mubr.f32.gmra.mrb[0].mxu0 %v6008
  %v6335 = vpop.f32.mrb[0].mxu0
  %v6336 = vadd.f32 0.0, %v6335
  %v6337 = vpop.f32.mrb[0].mxu0
  %6338 = vmatprep.mubr.f32.mxu0 %v6012
  %6339 = vmatmul.mubr.f32.gmra.mrb[0].mxu0 %v6011
  %v6340 = vpop.f32.mrb[0].mxu0
  %v6341 = vadd.f32 0.0, %v6340
  %v6342 = vpop.f32.mrb[0].mxu0
  %6343 = vmatprep.mubr.f32.mxu0 %v6015
  %6344 = vmatmul.mubr.f32.gmra.mrb[0].mxu0 %v6014
  %v6345 = vpop.f32.mrb[0].mxu0
  %v6346 = vadd.f32 0.0, %v6345
  %v6347 = vpop.f32.mrb[0].mxu0
  %6348 = vmatprep.mubr.f32.mxu0 %v6018
  %6349 = vmatmul.mubr.f32.gmra.mrb[0].mxu0 %v6017
  %v6350 = vpop.f32.mrb[0].mxu0
  %v6351 = vadd.f32 0.0, %v6350
  %v6352 = vpop.f32.mrb[0].mxu0
  %6353 = vmatprep.mubr.f32.mxu0 %v6021
  %6354 = vmatmul.mubr.f32.gmra.mrb[0].mxu0 %v6020
  %v6355 = vpop.f32.mrb[0].mxu0
  %v6356 = vadd.f32 0.0, %v6355
  %v6357 = vpop.f32.mrb[0].mxu0
  %6358 = vmatprep.mubr.f32.mxu0 %v6024
  %6359 = vmatmul.mubr.f32.gmra.mrb[0].mxu0 %v6023
  %v6360 = vpop.f32.mrb[0].mxu0
  %v6361 = vadd.f32 0.0, %v6360
  %v6362 = vpop.f32.mrb[0].mxu0
  %6363 = vmatprep.mubr.f32.mxu0 %v6027
  %6364 = vmatmul.mubr.f32.gmra.mrb[0].mxu0 %v6026
  %v6365 = vpop.f32.mrb[0].mxu0
  %v6366 = vadd.f32 0.0, %v6365
  %v6367 = vpop.f32.mrb[0].mxu0
  %6368 = vmatprep.mubr.f32.mxu0 %v6030
  %6369 = vmatmul.mubr.f32.gmra.mrb[0].mxu0 %v6029
  %v6370 = vpop.f32.mrb[0].mxu0
  %v6371 = vadd.f32 0.0, %v6370
  %v6372 = vpop.f32.mrb[0].mxu0
  %6373 = vmatprep.mubr.f32.mxu0 %v6033
  %6374 = vmatmul.mubr.f32.gmra.mrb[0].mxu0 %v6032
  %v6375 = vpop.f32.mrb[0].mxu0
  %v6376 = vadd.f32 0.0, %v6375
  %v6377 = vpop.f32.mrb[0].mxu0
  %6378 = vmatprep.mubr.f32.mxu0 %v6036
  %6379 = vmatmul.mubr.f32.gmra.mrb[0].mxu0 %v6035
  %v6380 = vpop.f32.mrb[0].mxu0
  %v6381 = vadd.f32 0.0, %v6380
  %v6382 = vpop.f32.mrb[0].mxu0
  %6383 = vmatprep.mubr.f32.mxu0 %v6039
  %6384 = vmatmul.mubr.f32.gmra.mrb[0].mxu0 %v6038
  %v6385 = vpop.f32.mrb[0].mxu0
  %v6386 = vadd.f32 0.0, %v6385
  %v6387 = vpop.f32.mrb[0].mxu0
  %6388 = vmatprep.mubr.f32.mxu0 %v6042
  %6389 = vmatmul.mubr.f32.gmra.mrb[0].mxu0 %v6041
  %v6390 = vpop.f32.mrb[0].mxu0
  %v6391 = vadd.f32 0.0, %v6390
  %v6392 = vpop.f32.mrb[0].mxu0
  %6393 = vmatprep.mubr.f32.mxu0 %v6045
  %6394 = vmatmul.mubr.f32.gmra.mrb[0].mxu0 %v6044
  %v6395 = vpop.f32.mrb[0].mxu0
  %v6396 = vadd.f32 0.0, %v6395
  %v6397 = vpop.f32.mrb[0].mxu0
  %6398 = vmatprep.mubr.f32.mxu0 %v6048
  %6399 = vmatmul.mubr.f32.gmra.mrb[0].mxu0 %v6047
  %v6400 = vpop.f32.mrb[0].mxu0
  %v6401 = vadd.f32 0.0, %v6400
  %v6402 = vpop.f32.mrb[0].mxu0
  %6403 = vmatprep.mubr.f32.mxu0 %v6051
  %6404 = vmatmul.mubr.f32.gmra.mrb[0].mxu0 %v6050
  %v6405 = vpop.f32.mrb[0].mxu0
  %v6406 = vadd.f32 0.0, %v6405
  %v6407 = vpop.f32.mrb[0].mxu0
  %6408 = vmatprep.mubr.f32.mxu0 %v6054
  %6409 = vmatmul.mubr.f32.gmra.mrb[0].mxu0 %v6053
  %v6410 = vpop.f32.mrb[0].mxu0
  %v6411 = vadd.f32 0.0, %v6410
  %v6412 = vpop.f32.mrb[0].mxu0
  %6413 = vmatprep.mubr.f32.mxu0 %v6057
  %6414 = vmatmul.mubr.f32.gmra.mrb[0].mxu0 %v6056
  %v6415 = vpop.f32.mrb[0].mxu0
  %v6416 = vadd.f32 0.0, %v6415
  %v6417 = vpop.f32.mrb[0].mxu0
  %6418 = vmatprep.mubr.f32.mxu0 %v6060
  %6419 = vmatmul.mubr.f32.gmra.mrb[0].mxu0 %v6059
  %v6420 = vpop.f32.mrb[0].mxu0
  %v6421 = vadd.f32 0.0, %v6420
  %v6422 = vpop.f32.mrb[0].mxu0
  %6423 = vmatprep.mubr.f32.mxu0 %v6063
  %6424 = vmatmul.mubr.f32.gmra.mrb[0].mxu0 %v6062
  %v6425 = vpop.f32.mrb[0].mxu0
  %v6426 = vadd.f32 0.0, %v6425
  %v6427 = vpop.f32.mrb[0].mxu0
  %6428 = vmatprep.mubr.f32.mxu0 %v6066
  %6429 = vmatmul.mubr.f32.gmra.mrb[0].mxu0 %v6065
  %v6430 = vpop.f32.mrb[0].mxu0
  %v6431 = vadd.f32 0.0, %v6430
  %v6432 = vpop.f32.mrb[0].mxu0
  %6433 = vmatprep.mubr.f32.mxu0 %v6069
  %6434 = vmatmul.mubr.f32.gmra.mrb[0].mxu0 %v6068
  %v6435 = vpop.f32.mrb[0].mxu0
  %v6436 = vadd.f32 0.0, %v6435
  %v6437 = vpop.f32.mrb[0].mxu0
  %6438 = vmatprep.mubr.f32.mxu0 %v6072
  %6439 = vmatmul.mubr.f32.gmra.mrb[0].mxu0 %v6071
  %v6440 = vpop.f32.mrb[0].mxu0
  %v6441 = vadd.f32 0.0, %v6440
  %v6442 = vpop.f32.mrb[0].mxu0
  %6443 = vmatprep.mubr.f32.mxu0 %v6075
  %6444 = vmatmul.mubr.f32.gmra.mrb[0].mxu0 %v6074
  %v6445 = vpop.f32.mrb[0].mxu0
  %v6446 = vadd.f32 0.0, %v6445
  %v6447 = vpop.f32.mrb[0].mxu0
  %6448 = vmatprep.mubr.f32.mxu0 %v6078
  %6449 = vmatmul.mubr.f32.gmra.mrb[0].mxu0 %v6077
  %v6450 = vpop.f32.mrb[0].mxu0
  %v6451 = vadd.f32 0.0, %v6450
  %v6452 = vpop.f32.mrb[0].mxu0
  %6453 = vmatprep.mubr.f32.mxu0 %v6081
  %6454 = vmatmul.mubr.f32.gmra.mrb[0].mxu0 %v6080
  %v6455 = vpop.f32.mrb[0].mxu0
  %v6456 = vadd.f32 0.0, %v6455
  %v6457 = vpop.f32.mrb[0].mxu0
  %6458 = vmatprep.mubr.f32.mxu0 %v6084
  %6459 = vmatmul.mubr.f32.gmra.mrb[0].mxu0 %v6083
  %v6460 = vpop.f32.mrb[0].mxu0
  %v6461 = vadd.f32 0.0, %v6460
  %v6462 = vpop.f32.mrb[0].mxu0
  %6463 = vmatprep.mubr.f32.mxu0 %v6087
  %6464 = vmatmul.mubr.f32.gmra.mrb[0].mxu0 %v6086
  %v6465 = vpop.f32.mrb[0].mxu0
  %v6466 = vadd.f32 0.0, %v6465
  %v6467 = vpop.f32.mrb[0].mxu0
  %6468 = vmatprep.mubr.f32.mxu0 %v6090
  %6469 = vmatmul.mubr.f32.gmra.mrb[0].mxu0 %v6089
  %v6470 = vpop.f32.mrb[0].mxu0
  %v6471 = vadd.f32 0.0, %v6470
  %v6472 = vpop.f32.mrb[0].mxu0
  %6473 = vmatprep.mubr.f32.mxu0 %v6093
  %6474 = vmatmul.mubr.f32.gmra.mrb[0].mxu0 %v6092
  %v6475 = vpop.f32.mrb[0].mxu0
  %v6476 = vadd.f32 0.0, %v6475
  %v6477 = vpop.f32.mrb[0].mxu0
  %6478 = vmatprep.mubr.f32.mxu0 %v6096
  %6479 = vmatmul.mubr.f32.gmra.mrb[0].mxu0 %v6095
  %v6480 = vpop.f32.mrb[0].mxu0
  %v6481 = vadd.f32 0.0, %v6480
  %v6482 = vpop.f32.mrb[0].mxu0
  %6483 = vmatprep.mubr.f32.mxu0 %v6099
  %6484 = vmatmul.mubr.f32.gmra.mrb[0].mxu0 %v6098
  %v6485 = vpop.f32.mrb[0].mxu0
  %v6486 = vadd.f32 0.0, %v6485
  %v6487 = vpop.f32.mrb[0].mxu0
  %6488 = vmatprep.mubr.f32.mxu0 %v6102
  %6489 = vmatmul.mubr.f32.gmra.mrb[0].mxu0 %v6101
  %v6490 = vpop.f32.mrb[0].mxu0
  %v6491 = vadd.f32 0.0, %v6490
  %v6492 = vpop.f32.mrb[0].mxu0
  %6493 = vmatprep.mubr.f32.mxu0 %v6105
  %6494 = vmatmul.mubr.f32.gmra.mrb[0].mxu0 %v6104
  %v6495 = vpop.f32.mrb[0].mxu0
  %v6496 = vadd.f32 0.0, %v6495
  %v6497 = vpop.f32.mrb[0].mxu0
  %6498 = vmatprep.mubr.f32.mxu0 %v6108
  %6499 = vmatmul.mubr.f32.gmra.mrb[0].mxu0 %v6107
  %v6500 = vpop.f32.mrb[0].mxu0
  %v6501 = vadd.f32 0.0, %v6500
  %v6502 = vpop.f32.mrb[0].mxu0
  %6503 = vmatprep.mubr.f32.mxu0 %v6111
  %6504 = vmatmul.mubr.f32.gmra.mrb[0].mxu0 %v6110
  %v6505 = vpop.f32.mrb[0].mxu0
  %v6506 = vadd.f32 0.0, %v6505
  %v6507 = vpop.f32.mrb[0].mxu0
  %6508 = vmatprep.mubr.f32.mxu0 %v6114
  %6509 = vmatmul.mubr.f32.gmra.mrb[0].mxu0 %v6113
  %v6510 = vpop.f32.mrb[0].mxu0
  %v6511 = vadd.f32 0.0, %v6510
  %v6512 = vpop.f32.mrb[0].mxu0
  %6513 = vmatprep.mubr.f32.mxu0 %v6117
  %6514 = vmatmul.mubr.f32.gmra.mrb[0].mxu0 %v6116
  %v6515 = vpop.f32.mrb[0].mxu0
  %v6516 = vadd.f32 0.0, %v6515
  %v6517 = vpop.f32.mrb[0].mxu0
  %6518 = vmatprep.mubr.f32.mxu0 %v6120
  %6519 = vmatmul.mubr.f32.gmra.mrb[0].mxu0 %v6119
  %v6520 = vpop.f32.mrb[0].mxu0
  %v6521 = vadd.f32 0.0, %v6520
  %v6522 = vpop.f32.mrb[0].mxu0
  %6523 = vmatprep.mubr.f32.mxu0 %v6123
  %6524 = vmatmul.mubr.f32.gmra.mrb[0].mxu0 %v6122
  %v6525 = vpop.f32.mrb[0].mxu0
  %v6526 = vadd.f32 0.0, %v6525
  %v6527 = vpop.f32.mrb[0].mxu0
  %6528 = vmatprep.mubr.f32.mxu0 %v6126
  %6529 = vmatmul.mubr.f32.gmra.mrb[0].mxu0 %v6125
  %v6530 = vpop.f32.mrb[0].mxu0
  %v6531 = vadd.f32 0.0, %v6530
  %v6532 = vpop.f32.mrb[0].mxu0
  %6533 = vmatprep.mubr.f32.mxu0 %v6129
  %6534 = vmatmul.mubr.f32.gmra.mrb[0].mxu0 %v6128
  %v6535 = vpop.f32.mrb[0].mxu0
  %v6536 = vadd.f32 0.0, %v6535
  %v6537 = vpop.f32.mrb[0].mxu0
  %6538 = vmatprep.mubr.f32.mxu0 %v6132
  %6539 = vmatmul.mubr.f32.gmra.mrb[0].mxu0 %v6131
  %v6540 = vpop.f32.mrb[0].mxu0
  %v6541 = vadd.f32 0.0, %v6540
  %v6542 = vpop.f32.mrb[0].mxu0
  %6543 = vmatprep.mubr.f32.mxu0 %v6135
  %6544 = vmatmul.mubr.f32.gmra.mrb[0].mxu0 %v6134
  %v6545 = vpop.f32.mrb[0].mxu0
  %v6546 = vadd.f32 0.0, %v6545
  %v6547 = vpop.f32.mrb[0].mxu0
  %6548 = vmatprep.mubr.f32.mxu0 %v6138
  %6549 = vmatmul.mubr.f32.gmra.mrb[0].mxu0 %v6137
  %v6550 = vpop.f32.mrb[0].mxu0
  %v6551 = vadd.f32 0.0, %v6550
  %v6552 = vpop.f32.mrb[0].mxu0
  %6553 = vmatprep.mubr.f32.mxu0 %v6141
  %6554 = vmatmul.mubr.f32.gmra.mrb[0].mxu0 %v6140
  %v6555 = vpop.f32.mrb[0].mxu0
  %v6556 = vadd.f32 0.0, %v6555
  %v6557 = vpop.f32.mrb[0].mxu0
  %6558 = vmatprep.mubr.f32.mxu0 %v6144
  %6559 = vmatmul.mubr.f32.gmra.mrb[0].mxu0 %v6143
  %v6560 = vpop.f32.mrb[0].mxu0
  %v6561 = vadd.f32 0.0, %v6560
  %v6562 = vpop.f32.mrb[0].mxu0
  %6563 = vmatprep.mubr.f32.mxu0 %v6147
  %6564 = vmatmul.mubr.f32.gmra.mrb[0].mxu0 %v6146
  %v6565 = vpop.f32.mrb[0].mxu0
  %v6566 = vadd.f32 0.0, %v6565
  %v6567 = vpop.f32.mrb[0].mxu0
  %6568 = vmatprep.mubr.f32.mxu0 %v6150
  %6569 = vmatmul.mubr.f32.gmra.mrb[0].mxu0 %v6149
  %v6570 = vpop.f32.mrb[0].mxu0
  %v6571 = vadd.f32 0.0, %v6570
  %v6572 = vpop.f32.mrb[0].mxu0
  %6573 = vmatprep.mubr.f32.mxu0 %v6153
  %6574 = vmatmul.mubr.f32.gmra.mrb[0].mxu0 %v6152
  %v6575 = vpop.f32.mrb[0].mxu0
  %v6576 = vadd.f32 0.0, %v6575
  %v6577 = vpop.f32.mrb[0].mxu0
  %6578 = vmatprep.mubr.f32.mxu0 %v6156
  %6579 = vmatmul.mubr.f32.gmra.mrb[0].mxu0 %v6155
  %v6580 = vpop.f32.mrb[0].mxu0
  %v6581 = vadd.f32 0.0, %v6580
  %v6582 = vpop.f32.mrb[0].mxu0
  %6583 = vmatprep.mubr.f32.mxu0 %v6159
  %6584 = vmatmul.mubr.f32.gmra.mrb[0].mxu0 %v6158
  %v6585 = vpop.f32.mrb[0].mxu0
  %v6586 = vadd.f32 0.0, %v6585
  %v6587 = vpop.f32.mrb[0].mxu0
  %6588 = vmatprep.mubr.f32.mxu0 %v6162
  %6589 = vmatmul.mubr.f32.gmra.mrb[0].mxu0 %v6161
  %v6590 = vpop.f32.mrb[0].mxu0
  %v6591 = vadd.f32 0.0, %v6590
  %v6592 = vpop.f32.mrb[0].mxu0
  %6593 = vmatprep.mubr.f32.mxu0 %v6165
  %6594 = vmatmul.mubr.f32.gmra.mrb[0].mxu0 %v6164
  %v6595 = vpop.f32.mrb[0].mxu0
  %v6596 = vadd.f32 0.0, %v6595
  %v6597 = vpop.f32.mrb[0].mxu0
  %6598 = vmatprep.mubr.f32.mxu0 %v6168
  %6599 = vmatmul.mubr.f32.gmra.mrb[0].mxu0 %v6167
  %v6600 = vpop.f32.mrb[0].mxu0
  %v6601 = vadd.f32 0.0, %v6600
  %v6602 = vpop.f32.mrb[0].mxu0
  %6603 = vdwg.mxu0
  %6604 = vmatprep.subr.mxu0 0.0
  %6605 = vmatpush1.msra.mxu0 %v6203
  %6606 = vmatprep.subr.mxu0 0.0
  %6607 = vmatpush1.msra.mxu0 %v6204
  %6608 = vmatprep.subr.mxu0 0.0
  %6609 = vmatpush1.msra.mxu0 %v6205
  %6610 = vmatprep.subr.mxu0 0.0
  %6611 = vmatpush1.msra.mxu0 %v6206
  %6612 = vmatprep.subr.mxu0 0.0
  %6613 = vmatpush1.msra.mxu0 %v6207
  %6614 = vmatprep.subr.mxu0 0.0
  %6615 = vmatpush1.msra.mxu0 %v6208
  %6616 = vmatprep.subr.mxu0 0.0
  %6617 = vmatpush1.msra.mxu0 %v6209
  %6618 = vmatprep.subr.mxu0 0.0
  %6619 = vmatpush1.msra.mxu0 %v6210
  %6620 = vmatprep.subr.mxu0 0.0
  %6621 = vmatpush1.msra.mxu0 %v6211
  %6622 = vmatprep.subr.mxu0 0.0
  %6623 = vmatpush1.msra.mxu0 %v6212
  %6624 = vmatprep.subr.mxu0 0.0
  %6625 = vmatpush1.msra.mxu0 %v6213
  %6626 = vmatprep.subr.mxu0 0.0
  %6627 = vmatpush1.msra.mxu0 %v6214
  %6628 = vmatprep.subr.mxu0 0.0
  %6629 = vmatpush1.msra.mxu0 %v6215
  %6630 = vmatprep.subr.mxu0 0.0
  %6631 = vmatpush1.msra.mxu0 %v6216
  %6632 = vmatprep.subr.mxu0 0.0
  %6633 = vmatpush1.msra.mxu0 %v6217
  %6634 = vmatprep.subr.mxu0 0.0
  %6635 = vmatpush1.msra.mxu0 %v6218
  %6636 = vmatprep.subr.mxu0 0.0
  %6637 = vmatpush1.msra.mxu0 0.0
  %6638 = vmatprep.subr.mxu0 0.0
  %6639 = vmatpush1.msra.mxu0 0.0
  %6640 = vmatprep.subr.mxu0 0.0
  %6641 = vmatpush1.msra.mxu0 0.0
  %6642 = vmatprep.subr.mxu0 0.0
  %6643 = vmatpush1.msra.mxu0 0.0
  %6644 = vmatprep.subr.mxu0 0.0
  %6645 = vmatpush1.msra.mxu0 0.0
  %6646 = vmatprep.subr.mxu0 0.0
  %6647 = vmatpush1.msra.mxu0 0.0
  %6648 = vmatprep.subr.mxu0 0.0
  %6649 = vmatpush1.msra.mxu0 0.0
  %6650 = vmatprep.subr.mxu0 0.0
  %6651 = vmatpush1.msra.mxu0 0.0
  %6652 = vmatprep.subr.mxu0 0.0
  %6653 = vmatpush1.msra.mxu0 0.0
  %6654 = vmatprep.subr.mxu0 0.0
  %6655 = vmatpush1.msra.mxu0 0.0
  %6656 = vmatprep.subr.mxu0 0.0
  %6657 = vmatpush1.msra.mxu0 0.0
  %6658 = vmatprep.subr.mxu0 0.0
  %6659 = vmatpush1.msra.mxu0 0.0
  %6660 = vmatprep.subr.mxu0 0.0
  %6661 = vmatpush1.msra.mxu0 0.0
  %6662 = vmatprep.subr.mxu0 0.0
  %6663 = vmatpush1.msra.mxu0 0.0
  %6664 = vmatprep.subr.mxu0 0.0
  %6665 = vmatpush1.msra.mxu0 0.0
  %6666 = vmatprep.subr.mxu0 0.0
  %6667 = vmatpush1.msra.mxu0 0.0
  %6668 = vmatprep.mubr.f32.mxu0 0.0
  %6669 = vmatmul.mubr.f32.gmra.mrb[0].mxu0 %v5980
  %v6670 = vpop.f32.mrb[0].mxu0
  %v6671 = vadd.f32 %v6286, %v6670
  %v6672 = vpop.f32.mrb[0].mxu0
  %6673 = vmatprep.mubr.f32.mxu0 0.0
  %6674 = vmatmul.mubr.f32.gmra.mrb[0].mxu0 %v5983
  %v6675 = vpop.f32.mrb[0].mxu0
  %v6676 = vadd.f32 %v6291, %v6675
  %v6677 = vpop.f32.mrb[0].mxu0
  %6678 = vmatprep.mubr.f32.mxu0 0.0
  %6679 = vmatmul.mubr.f32.gmra.mrb[0].mxu0 %v5986
  %v6680 = vpop.f32.mrb[0].mxu0
  %v6681 = vadd.f32 %v6296, %v6680
  %v6682 = vpop.f32.mrb[0].mxu0
  %6683 = vmatprep.mubr.f32.mxu0 0.0
  %6684 = vmatmul.mubr.f32.gmra.mrb[0].mxu0 %v5989
  %v6685 = vpop.f32.mrb[0].mxu0
  %v6686 = vadd.f32 %v6301, %v6685
  %v6687 = vpop.f32.mrb[0].mxu0
  %6688 = vmatprep.mubr.f32.mxu0 0.0
  %6689 = vmatmul.mubr.f32.gmra.mrb[0].mxu0 %v5992
  %v6690 = vpop.f32.mrb[0].mxu0
  %v6691 = vadd.f32 %v6306, %v6690
  %v6692 = vpop.f32.mrb[0].mxu0
  %6693 = vmatprep.mubr.f32.mxu0 0.0
  %6694 = vmatmul.mubr.f32.gmra.mrb[0].mxu0 %v5995
  %v6695 = vpop.f32.mrb[0].mxu0
  %v6696 = vadd.f32 %v6311, %v6695
  %v6697 = vpop.f32.mrb[0].mxu0
  %6698 = vmatprep.mubr.f32.mxu0 0.0
  %6699 = vmatmul.mubr.f32.gmra.mrb[0].mxu0 %v5998
  %v6700 = vpop.f32.mrb[0].mxu0
  %v6701 = vadd.f32 %v6316, %v6700
  %v6702 = vpop.f32.mrb[0].mxu0
  %6703 = vmatprep.mubr.f32.mxu0 0.0
  %6704 = vmatmul.mubr.f32.gmra.mrb[0].mxu0 %v6001
  %v6705 = vpop.f32.mrb[0].mxu0
  %v6706 = vadd.f32 %v6321, %v6705
  %v6707 = vpop.f32.mrb[0].mxu0
  %6708 = vmatprep.mubr.f32.mxu0 0.0
  %6709 = vmatmul.mubr.f32.gmra.mrb[0].mxu0 %v6004
  %v6710 = vpop.f32.mrb[0].mxu0
  %v6711 = vadd.f32 %v6326, %v6710
  %v6712 = vpop.f32.mrb[0].mxu0
  %6713 = vmatprep.mubr.f32.mxu0 0.0
  %6714 = vmatmul.mubr.f32.gmra.mrb[0].mxu0 %v6007
  %v6715 = vpop.f32.mrb[0].mxu0
  %v6716 = vadd.f32 %v6331, %v6715
  %v6717 = vpop.f32.mrb[0].mxu0
  %6718 = vmatprep.mubr.f32.mxu0 0.0
  %6719 = vmatmul.mubr.f32.gmra.mrb[0].mxu0 %v6010
  %v6720 = vpop.f32.mrb[0].mxu0
  %v6721 = vadd.f32 %v6336, %v6720
  %v6722 = vpop.f32.mrb[0].mxu0
  %6723 = vmatprep.mubr.f32.mxu0 0.0
  %6724 = vmatmul.mubr.f32.gmra.mrb[0].mxu0 %v6013
  %v6725 = vpop.f32.mrb[0].mxu0
  %v6726 = vadd.f32 %v6341, %v6725
  %v6727 = vpop.f32.mrb[0].mxu0
  %6728 = vmatprep.mubr.f32.mxu0 0.0
  %6729 = vmatmul.mubr.f32.gmra.mrb[0].mxu0 %v6016
  %v6730 = vpop.f32.mrb[0].mxu0
  %v6731 = vadd.f32 %v6346, %v6730
  %v6732 = vpop.f32.mrb[0].mxu0
  %6733 = vmatprep.mubr.f32.mxu0 0.0
  %6734 = vmatmul.mubr.f32.gmra.mrb[0].mxu0 %v6019
  %v6735 = vpop.f32.mrb[0].mxu0
  %v6736 = vadd.f32 %v6351, %v6735
  %v6737 = vpop.f32.mrb[0].mxu0
  %6738 = vmatprep.mubr.f32.mxu0 0.0
  %6739 = vmatmul.mubr.f32.gmra.mrb[0].mxu0 %v6022
  %v6740 = vpop.f32.mrb[0].mxu0
  %v6741 = vadd.f32 %v6356, %v6740
  %v6742 = vpop.f32.mrb[0].mxu0
  %6743 = vmatprep.mubr.f32.mxu0 0.0
  %6744 = vmatmul.mubr.f32.gmra.mrb[0].mxu0 %v6025
  %v6745 = vpop.f32.mrb[0].mxu0
  %v6746 = vadd.f32 %v6361, %v6745
  %v6747 = vpop.f32.mrb[0].mxu0
  %6748 = vmatprep.mubr.f32.mxu0 0.0
  %6749 = vmatmul.mubr.f32.gmra.mrb[0].mxu0 %v6028
  %v6750 = vpop.f32.mrb[0].mxu0
  %v6751 = vadd.f32 %v6366, %v6750
  %v6752 = vpop.f32.mrb[0].mxu0
  %6753 = vmatprep.mubr.f32.mxu0 0.0
  %6754 = vmatmul.mubr.f32.gmra.mrb[0].mxu0 %v6031
  %v6755 = vpop.f32.mrb[0].mxu0
  %v6756 = vadd.f32 %v6371, %v6755
  %v6757 = vpop.f32.mrb[0].mxu0
  %6758 = vmatprep.mubr.f32.mxu0 0.0
  %6759 = vmatmul.mubr.f32.gmra.mrb[0].mxu0 %v6034
  %v6760 = vpop.f32.mrb[0].mxu0
  %v6761 = vadd.f32 %v6376, %v6760
  %v6762 = vpop.f32.mrb[0].mxu0
  %6763 = vmatprep.mubr.f32.mxu0 0.0
  %6764 = vmatmul.mubr.f32.gmra.mrb[0].mxu0 %v6037
  %v6765 = vpop.f32.mrb[0].mxu0
  %v6766 = vadd.f32 %v6381, %v6765
  %v6767 = vpop.f32.mrb[0].mxu0
  %6768 = vmatprep.mubr.f32.mxu0 0.0
  %6769 = vmatmul.mubr.f32.gmra.mrb[0].mxu0 %v6040
  %v6770 = vpop.f32.mrb[0].mxu0
  %v6771 = vadd.f32 %v6386, %v6770
  %v6772 = vpop.f32.mrb[0].mxu0
  %6773 = vmatprep.mubr.f32.mxu0 0.0
  %6774 = vmatmul.mubr.f32.gmra.mrb[0].mxu0 %v6043
  %v6775 = vpop.f32.mrb[0].mxu0
  %v6776 = vadd.f32 %v6391, %v6775
  %v6777 = vpop.f32.mrb[0].mxu0
  %6778 = vmatprep.mubr.f32.mxu0 0.0
  %6779 = vmatmul.mubr.f32.gmra.mrb[0].mxu0 %v6046
  %v6780 = vpop.f32.mrb[0].mxu0
  %v6781 = vadd.f32 %v6396, %v6780
  %v6782 = vpop.f32.mrb[0].mxu0
  %6783 = vmatprep.mubr.f32.mxu0 0.0
  %6784 = vmatmul.mubr.f32.gmra.mrb[0].mxu0 %v6049
  %v6785 = vpop.f32.mrb[0].mxu0
  %v6786 = vadd.f32 %v6401, %v6785
  %v6787 = vpop.f32.mrb[0].mxu0
  %6788 = vmatprep.mubr.f32.mxu0 0.0
  %6789 = vmatmul.mubr.f32.gmra.mrb[0].mxu0 %v6052
  %v6790 = vpop.f32.mrb[0].mxu0
  %v6791 = vadd.f32 %v6406, %v6790
  %v6792 = vpop.f32.mrb[0].mxu0
  %6793 = vmatprep.mubr.f32.mxu0 0.0
  %6794 = vmatmul.mubr.f32.gmra.mrb[0].mxu0 %v6055
  %v6795 = vpop.f32.mrb[0].mxu0
  %v6796 = vadd.f32 %v6411, %v6795
  %v6797 = vpop.f32.mrb[0].mxu0
  %6798 = vmatprep.mubr.f32.mxu0 0.0
  %6799 = vmatmul.mubr.f32.gmra.mrb[0].mxu0 %v6058
  %v6800 = vpop.f32.mrb[0].mxu0
  %v6801 = vadd.f32 %v6416, %v6800
  %v6802 = vpop.f32.mrb[0].mxu0
  %6803 = vmatprep.mubr.f32.mxu0 0.0
  %6804 = vmatmul.mubr.f32.gmra.mrb[0].mxu0 %v6061
  %v6805 = vpop.f32.mrb[0].mxu0
  %v6806 = vadd.f32 %v6421, %v6805
  %v6807 = vpop.f32.mrb[0].mxu0
  %6808 = vmatprep.mubr.f32.mxu0 0.0
  %6809 = vmatmul.mubr.f32.gmra.mrb[0].mxu0 %v6064
  %v6810 = vpop.f32.mrb[0].mxu0
  %v6811 = vadd.f32 %v6426, %v6810
  %v6812 = vpop.f32.mrb[0].mxu0
  %6813 = vmatprep.mubr.f32.mxu0 0.0
  %6814 = vmatmul.mubr.f32.gmra.mrb[0].mxu0 %v6067
  %v6815 = vpop.f32.mrb[0].mxu0
  %v6816 = vadd.f32 %v6431, %v6815
  %v6817 = vpop.f32.mrb[0].mxu0
  %6818 = vmatprep.mubr.f32.mxu0 0.0
  %6819 = vmatmul.mubr.f32.gmra.mrb[0].mxu0 %v6070
  %v6820 = vpop.f32.mrb[0].mxu0
  %v6821 = vadd.f32 %v6436, %v6820
  %v6822 = vpop.f32.mrb[0].mxu0
  %6823 = vmatprep.mubr.f32.mxu0 0.0
  %6824 = vmatmul.mubr.f32.gmra.mrb[0].mxu0 %v6073
  %v6825 = vpop.f32.mrb[0].mxu0
  %v6826 = vadd.f32 %v6441, %v6825
  %v6827 = vpop.f32.mrb[0].mxu0
  %6828 = vmatprep.mubr.f32.mxu0 0.0
  %6829 = vmatmul.mubr.f32.gmra.mrb[0].mxu0 %v6076
  %v6830 = vpop.f32.mrb[0].mxu0
  %v6831 = vadd.f32 %v6446, %v6830
  %v6832 = vpop.f32.mrb[0].mxu0
  %6833 = vmatprep.mubr.f32.mxu0 0.0
  %6834 = vmatmul.mubr.f32.gmra.mrb[0].mxu0 %v6079
  %v6835 = vpop.f32.mrb[0].mxu0
  %v6836 = vadd.f32 %v6451, %v6835
  %v6837 = vpop.f32.mrb[0].mxu0
  %6838 = vmatprep.mubr.f32.mxu0 0.0
  %6839 = vmatmul.mubr.f32.gmra.mrb[0].mxu0 %v6082
  %v6840 = vpop.f32.mrb[0].mxu0
  %v6841 = vadd.f32 %v6456, %v6840
  %v6842 = vpop.f32.mrb[0].mxu0
  %6843 = vmatprep.mubr.f32.mxu0 0.0
  %6844 = vmatmul.mubr.f32.gmra.mrb[0].mxu0 %v6085
  %v6845 = vpop.f32.mrb[0].mxu0
  %v6846 = vadd.f32 %v6461, %v6845
  %v6847 = vpop.f32.mrb[0].mxu0
  %6848 = vmatprep.mubr.f32.mxu0 0.0
  %6849 = vmatmul.mubr.f32.gmra.mrb[0].mxu0 %v6088
  %v6850 = vpop.f32.mrb[0].mxu0
  %v6851 = vadd.f32 %v6466, %v6850
  %v6852 = vpop.f32.mrb[0].mxu0
  %6853 = vmatprep.mubr.f32.mxu0 0.0
  %6854 = vmatmul.mubr.f32.gmra.mrb[0].mxu0 %v6091
  %v6855 = vpop.f32.mrb[0].mxu0
  %v6856 = vadd.f32 %v6471, %v6855
  %v6857 = vpop.f32.mrb[0].mxu0
  %6858 = vmatprep.mubr.f32.mxu0 0.0
  %6859 = vmatmul.mubr.f32.gmra.mrb[0].mxu0 %v6094
  %v6860 = vpop.f32.mrb[0].mxu0
  %v6861 = vadd.f32 %v6476, %v6860
  %v6862 = vpop.f32.mrb[0].mxu0
  %6863 = vmatprep.mubr.f32.mxu0 0.0
  %6864 = vmatmul.mubr.f32.gmra.mrb[0].mxu0 %v6097
  %v6865 = vpop.f32.mrb[0].mxu0
  %v6866 = vadd.f32 %v6481, %v6865
  %v6867 = vpop.f32.mrb[0].mxu0
  %6868 = vmatprep.mubr.f32.mxu0 0.0
  %6869 = vmatmul.mubr.f32.gmra.mrb[0].mxu0 %v6100
  %v6870 = vpop.f32.mrb[0].mxu0
  %v6871 = vadd.f32 %v6486, %v6870
  %v6872 = vpop.f32.mrb[0].mxu0
  %6873 = vmatprep.mubr.f32.mxu0 0.0
  %6874 = vmatmul.mubr.f32.gmra.mrb[0].mxu0 %v6103
  %v6875 = vpop.f32.mrb[0].mxu0
  %v6876 = vadd.f32 %v6491, %v6875
  %v6877 = vpop.f32.mrb[0].mxu0
  %6878 = vmatprep.mubr.f32.mxu0 0.0
  %6879 = vmatmul.mubr.f32.gmra.mrb[0].mxu0 %v6106
  %v6880 = vpop.f32.mrb[0].mxu0
  %v6881 = vadd.f32 %v6496, %v6880
  %v6882 = vpop.f32.mrb[0].mxu0
  %6883 = vmatprep.mubr.f32.mxu0 0.0
  %6884 = vmatmul.mubr.f32.gmra.mrb[0].mxu0 %v6109
  %v6885 = vpop.f32.mrb[0].mxu0
  %v6886 = vadd.f32 %v6501, %v6885
  %v6887 = vpop.f32.mrb[0].mxu0
  %6888 = vmatprep.mubr.f32.mxu0 0.0
  %6889 = vmatmul.mubr.f32.gmra.mrb[0].mxu0 %v6112
  %v6890 = vpop.f32.mrb[0].mxu0
  %v6891 = vadd.f32 %v6506, %v6890
  %v6892 = vpop.f32.mrb[0].mxu0
  %6893 = vmatprep.mubr.f32.mxu0 0.0
  %6894 = vmatmul.mubr.f32.gmra.mrb[0].mxu0 %v6115
  %v6895 = vpop.f32.mrb[0].mxu0
  %v6896 = vadd.f32 %v6511, %v6895
  %v6897 = vpop.f32.mrb[0].mxu0
  %6898 = vmatprep.mubr.f32.mxu0 0.0
  %6899 = vmatmul.mubr.f32.gmra.mrb[0].mxu0 %v6118
  %v6900 = vpop.f32.mrb[0].mxu0
  %v6901 = vadd.f32 %v6516, %v6900
  %v6902 = vpop.f32.mrb[0].mxu0
  %6903 = vmatprep.mubr.f32.mxu0 0.0
  %6904 = vmatmul.mubr.f32.gmra.mrb[0].mxu0 %v6121
  %v6905 = vpop.f32.mrb[0].mxu0
  %v6906 = vadd.f32 %v6521, %v6905
  %v6907 = vpop.f32.mrb[0].mxu0
  %6908 = vmatprep.mubr.f32.mxu0 0.0
  %6909 = vmatmul.mubr.f32.gmra.mrb[0].mxu0 %v6124
  %v6910 = vpop.f32.mrb[0].mxu0
  %v6911 = vadd.f32 %v6526, %v6910
  %v6912 = vpop.f32.mrb[0].mxu0
  %6913 = vmatprep.mubr.f32.mxu0 0.0
  %6914 = vmatmul.mubr.f32.gmra.mrb[0].mxu0 %v6127
  %v6915 = vpop.f32.mrb[0].mxu0
  %v6916 = vadd.f32 %v6531, %v6915
  %v6917 = vpop.f32.mrb[0].mxu0
  %6918 = vmatprep.mubr.f32.mxu0 0.0
  %6919 = vmatmul.mubr.f32.gmra.mrb[0].mxu0 %v6130
  %v6920 = vpop.f32.mrb[0].mxu0
  %v6921 = vadd.f32 %v6536, %v6920
  %v6922 = vpop.f32.mrb[0].mxu0
  %6923 = vmatprep.mubr.f32.mxu0 0.0
  %6924 = vmatmul.mubr.f32.gmra.mrb[0].mxu0 %v6133
  %v6925 = vpop.f32.mrb[0].mxu0
  %v6926 = vadd.f32 %v6541, %v6925
  %v6927 = vpop.f32.mrb[0].mxu0
  %6928 = vmatprep.mubr.f32.mxu0 0.0
  %6929 = vmatmul.mubr.f32.gmra.mrb[0].mxu0 %v6136
  %v6930 = vpop.f32.mrb[0].mxu0
  %v6931 = vadd.f32 %v6546, %v6930
  %v6932 = vpop.f32.mrb[0].mxu0
  %6933 = vmatprep.mubr.f32.mxu0 0.0
  %6934 = vmatmul.mubr.f32.gmra.mrb[0].mxu0 %v6139
  %v6935 = vpop.f32.mrb[0].mxu0
  %v6936 = vadd.f32 %v6551, %v6935
  %v6937 = vpop.f32.mrb[0].mxu0
  %6938 = vmatprep.mubr.f32.mxu0 0.0
  %6939 = vmatmul.mubr.f32.gmra.mrb[0].mxu0 %v6142
  %v6940 = vpop.f32.mrb[0].mxu0
  %v6941 = vadd.f32 %v6556, %v6940
  %v6942 = vpop.f32.mrb[0].mxu0
  %6943 = vmatprep.mubr.f32.mxu0 0.0
  %6944 = vmatmul.mubr.f32.gmra.mrb[0].mxu0 %v6145
  %v6945 = vpop.f32.mrb[0].mxu0
  %v6946 = vadd.f32 %v6561, %v6945
  %v6947 = vpop.f32.mrb[0].mxu0
  %6948 = vmatprep.mubr.f32.mxu0 0.0
  %6949 = vmatmul.mubr.f32.gmra.mrb[0].mxu0 %v6148
  %v6950 = vpop.f32.mrb[0].mxu0
  %v6951 = vadd.f32 %v6566, %v6950
  %v6952 = vpop.f32.mrb[0].mxu0
  %6953 = vmatprep.mubr.f32.mxu0 0.0
  %6954 = vmatmul.mubr.f32.gmra.mrb[0].mxu0 %v6151
  %v6955 = vpop.f32.mrb[0].mxu0
  %v6956 = vadd.f32 %v6571, %v6955
  %v6957 = vpop.f32.mrb[0].mxu0
  %6958 = vmatprep.mubr.f32.mxu0 0.0
  %6959 = vmatmul.mubr.f32.gmra.mrb[0].mxu0 %v6154
  %v6960 = vpop.f32.mrb[0].mxu0
  %v6961 = vadd.f32 %v6576, %v6960
  %v6962 = vpop.f32.mrb[0].mxu0
  %6963 = vmatprep.mubr.f32.mxu0 0.0
  %6964 = vmatmul.mubr.f32.gmra.mrb[0].mxu0 %v6157
  %v6965 = vpop.f32.mrb[0].mxu0
  %v6966 = vadd.f32 %v6581, %v6965
  %v6967 = vpop.f32.mrb[0].mxu0
  %6968 = vmatprep.mubr.f32.mxu0 0.0
  %6969 = vmatmul.mubr.f32.gmra.mrb[0].mxu0 %v6160
  %v6970 = vpop.f32.mrb[0].mxu0
  %v6971 = vadd.f32 %v6586, %v6970
  %v6972 = vpop.f32.mrb[0].mxu0
  %6973 = vmatprep.mubr.f32.mxu0 0.0
  %6974 = vmatmul.mubr.f32.gmra.mrb[0].mxu0 %v6163
  %v6975 = vpop.f32.mrb[0].mxu0
  %v6976 = vadd.f32 %v6591, %v6975
  %v6977 = vpop.f32.mrb[0].mxu0
  %6978 = vmatprep.mubr.f32.mxu0 0.0
  %6979 = vmatmul.mubr.f32.gmra.mrb[0].mxu0 %v6166
  %v6980 = vpop.f32.mrb[0].mxu0
  %v6981 = vadd.f32 %v6596, %v6980
  %v6982 = vpop.f32.mrb[0].mxu0
  %6983 = vmatprep.mubr.f32.mxu0 0.0
  %6984 = vmatmul.mubr.f32.gmra.mrb[0].mxu0 %v6169
  %v6985 = vpop.f32.mrb[0].mxu0
  %v6986 = vadd.f32 %v6601, %v6985
  %v6987 = vpop.f32.mrb[0].mxu0
  %6988 = vdwg.mxu0
  %6989 = vmatprep.subr.mxu0 0.0
  %6990 = vmatpush1.msra.mxu0 %v5546
  %6991 = vmatprep.subr.mxu0 0.0
  %6992 = vmatpush1.msra.mxu0 %v5547
  %6993 = vmatprep.subr.mxu0 0.0
  %6994 = vmatpush1.msra.mxu0 %v5548
  %6995 = vmatprep.subr.mxu0 0.0
  %6996 = vmatpush1.msra.mxu0 %v5549
  %6997 = vmatprep.subr.mxu0 0.0
  %6998 = vmatpush1.msra.mxu0 %v5550
  %6999 = vmatprep.subr.mxu0 0.0
  %7000 = vmatpush1.msra.mxu0 %v5551
  %7001 = vmatprep.subr.mxu0 0.0
  %7002 = vmatpush1.msra.mxu0 %v5552
  %7003 = vmatprep.subr.mxu0 0.0
  %7004 = vmatpush1.msra.mxu0 %v5553
  %7005 = vmatprep.subr.mxu0 0.0
  %7006 = vmatpush1.msra.mxu0 %v5554
  %7007 = vmatprep.subr.mxu0 0.0
  %7008 = vmatpush1.msra.mxu0 %v5555
  %7009 = vmatprep.subr.mxu0 0.0
  %7010 = vmatpush1.msra.mxu0 %v5556
  %7011 = vmatprep.subr.mxu0 0.0
  %7012 = vmatpush1.msra.mxu0 %v5557
  %7013 = vmatprep.subr.mxu0 0.0
  %7014 = vmatpush1.msra.mxu0 %v5558
  %7015 = vmatprep.subr.mxu0 0.0
  %7016 = vmatpush1.msra.mxu0 %v5559
  %7017 = vmatprep.subr.mxu0 0.0
  %7018 = vmatpush1.msra.mxu0 %v5560
  %7019 = vmatprep.subr.mxu0 0.0
  %7020 = vmatpush1.msra.mxu0 %v5561
  %7021 = vmatprep.subr.mxu0 0.0
  %7022 = vmatpush1.msra.mxu0 %v5562
  %7023 = vmatprep.subr.mxu0 0.0
  %7024 = vmatpush1.msra.mxu0 %v5563
  %7025 = vmatprep.subr.mxu0 0.0
  %7026 = vmatpush1.msra.mxu0 %v5564
  %7027 = vmatprep.subr.mxu0 0.0
  %7028 = vmatpush1.msra.mxu0 %v5565
  %7029 = vmatprep.subr.mxu0 0.0
  %7030 = vmatpush1.msra.mxu0 %v5566
  %7031 = vmatprep.subr.mxu0 0.0
  %7032 = vmatpush1.msra.mxu0 %v5567
  %7033 = vmatprep.subr.mxu0 0.0
  %7034 = vmatpush1.msra.mxu0 %v5568
  %7035 = vmatprep.subr.mxu0 0.0
  %7036 = vmatpush1.msra.mxu0 %v5569
  %7037 = vmatprep.subr.mxu0 0.0
  %7038 = vmatpush1.msra.mxu0 %v5570
  %7039 = vmatprep.subr.mxu0 0.0
  %7040 = vmatpush1.msra.mxu0 %v5571
  %7041 = vmatprep.subr.mxu0 0.0
  %7042 = vmatpush1.msra.mxu0 %v5572
  %7043 = vmatprep.subr.mxu0 0.0
  %7044 = vmatpush1.msra.mxu0 %v5573
  %7045 = vmatprep.subr.mxu0 0.0
  %7046 = vmatpush1.msra.mxu0 %v5574
  %7047 = vmatprep.subr.mxu0 0.0
  %7048 = vmatpush1.msra.mxu0 %v5575
  %7049 = vmatprep.subr.mxu0 0.0
  %7050 = vmatpush1.msra.mxu0 %v5576
  %7051 = vmatprep.subr.mxu0 0.0
  %7052 = vmatpush1.msra.mxu0 %v5577
  %7053 = vmatprep.mubr.f32.mxu0 %v5355
  %7054 = vmatmul.mubr.f32.gmra.mrb[0].mxu0 %v5354
  %v7055 = vpop.f32.mrb[0].mxu0
  %v7056 = vadd.f32 %v6671, %v7055
  %v7057 = vpop.f32.mrb[0].mxu0
  %7058 = vmatprep.mubr.f32.mxu0 %v5358
  %7059 = vmatmul.mubr.f32.gmra.mrb[0].mxu0 %v5357
  %v7060 = vpop.f32.mrb[0].mxu0
  %v7061 = vadd.f32 %v6676, %v7060
  %v7062 = vpop.f32.mrb[0].mxu0
  %7063 = vmatprep.mubr.f32.mxu0 %v5361
  %7064 = vmatmul.mubr.f32.gmra.mrb[0].mxu0 %v5360
  %v7065 = vpop.f32.mrb[0].mxu0
  %v7066 = vadd.f32 %v6681, %v7065
  %v7067 = vpop.f32.mrb[0].mxu0
  %7068 = vmatprep.mubr.f32.mxu0 %v5364
  %7069 = vmatmul.mubr.f32.gmra.mrb[0].mxu0 %v5363
  %v7070 = vpop.f32.mrb[0].mxu0
  %v7071 = vadd.f32 %v6686, %v7070
  %v7072 = vpop.f32.mrb[0].mxu0
  %7073 = vmatprep.mubr.f32.mxu0 %v5367
  %7074 = vmatmul.mubr.f32.gmra.mrb[0].mxu0 %v5366
  %v7075 = vpop.f32.mrb[0].mxu0
  %v7076 = vadd.f32 %v6691, %v7075
  %v7077 = vpop.f32.mrb[0].mxu0
  %7078 = vmatprep.mubr.f32.mxu0 %v5370
  %7079 = vmatmul.mubr.f32.gmra.mrb[0].mxu0 %v5369
  %v7080 = vpop.f32.mrb[0].mxu0
  %v7081 = vadd.f32 %v6696, %v7080
  %v7082 = vpop.f32.mrb[0].mxu0
  %7083 = vmatprep.mubr.f32.mxu0 %v5373
  %7084 = vmatmul.mubr.f32.gmra.mrb[0].mxu0 %v5372
  %v7085 = vpop.f32.mrb[0].mxu0
  %v7086 = vadd.f32 %v6701, %v7085
  %v7087 = vpop.f32.mrb[0].mxu0
  %7088 = vmatprep.mubr.f32.mxu0 %v5376
  %7089 = vmatmul.mubr.f32.gmra.mrb[0].mxu0 %v5375
  %v7090 = vpop.f32.mrb[0].mxu0
  %v7091 = vadd.f32 %v6706, %v7090
  %v7092 = vpop.f32.mrb[0].mxu0
  %7093 = vmatprep.mubr.f32.mxu0 %v5379
  %7094 = vmatmul.mubr.f32.gmra.mrb[0].mxu0 %v5378
  %v7095 = vpop.f32.mrb[0].mxu0
  %v7096 = vadd.f32 %v6711, %v7095
  %v7097 = vpop.f32.mrb[0].mxu0
  %7098 = vmatprep.mubr.f32.mxu0 %v5382
  %7099 = vmatmul.mubr.f32.gmra.mrb[0].mxu0 %v5381
  %v7100 = vpop.f32.mrb[0].mxu0
  %v7101 = vadd.f32 %v6716, %v7100
  %v7102 = vpop.f32.mrb[0].mxu0
  %7103 = vmatprep.mubr.f32.mxu0 %v5385
  %7104 = vmatmul.mubr.f32.gmra.mrb[0].mxu0 %v5384
  %v7105 = vpop.f32.mrb[0].mxu0
  %v7106 = vadd.f32 %v6721, %v7105
  %v7107 = vpop.f32.mrb[0].mxu0
  %7108 = vmatprep.mubr.f32.mxu0 %v5388
  %7109 = vmatmul.mubr.f32.gmra.mrb[0].mxu0 %v5387
  %v7110 = vpop.f32.mrb[0].mxu0
  %v7111 = vadd.f32 %v6726, %v7110
  %v7112 = vpop.f32.mrb[0].mxu0
  %7113 = vmatprep.mubr.f32.mxu0 %v5391
  %7114 = vmatmul.mubr.f32.gmra.mrb[0].mxu0 %v5390
  %v7115 = vpop.f32.mrb[0].mxu0
  %v7116 = vadd.f32 %v6731, %v7115
  %v7117 = vpop.f32.mrb[0].mxu0
  %7118 = vmatprep.mubr.f32.mxu0 %v5394
  %7119 = vmatmul.mubr.f32.gmra.mrb[0].mxu0 %v5393
  %v7120 = vpop.f32.mrb[0].mxu0
  %v7121 = vadd.f32 %v6736, %v7120
  %v7122 = vpop.f32.mrb[0].mxu0
  %7123 = vmatprep.mubr.f32.mxu0 %v5397
  %7124 = vmatmul.mubr.f32.gmra.mrb[0].mxu0 %v5396
  %v7125 = vpop.f32.mrb[0].mxu0
  %v7126 = vadd.f32 %v6741, %v7125
  %v7127 = vpop.f32.mrb[0].mxu0
  %7128 = vmatprep.mubr.f32.mxu0 %v5400
  %7129 = vmatmul.mubr.f32.gmra.mrb[0].mxu0 %v5399
  %v7130 = vpop.f32.mrb[0].mxu0
  %v7131 = vadd.f32 %v6746, %v7130
  %v7132 = vpop.f32.mrb[0].mxu0
  %7133 = vmatprep.mubr.f32.mxu0 %v5403
  %7134 = vmatmul.mubr.f32.gmra.mrb[0].mxu0 %v5402
  %v7135 = vpop.f32.mrb[0].mxu0
  %v7136 = vadd.f32 %v6751, %v7135
  %v7137 = vpop.f32.mrb[0].mxu0
  %7138 = vmatprep.mubr.f32.mxu0 %v5406
  %7139 = vmatmul.mubr.f32.gmra.mrb[0].mxu0 %v5405
  %v7140 = vpop.f32.mrb[0].mxu0
  %v7141 = vadd.f32 %v6756, %v7140
  %v7142 = vpop.f32.mrb[0].mxu0
  %7143 = vmatprep.mubr.f32.mxu0 %v5409
  %7144 = vmatmul.mubr.f32.gmra.mrb[0].mxu0 %v5408
  %v7145 = vpop.f32.mrb[0].mxu0
  %v7146 = vadd.f32 %v6761, %v7145
  %v7147 = vpop.f32.mrb[0].mxu0
  %7148 = vmatprep.mubr.f32.mxu0 %v5412
  %7149 = vmatmul.mubr.f32.gmra.mrb[0].mxu0 %v5411
  %v7150 = vpop.f32.mrb[0].mxu0
  %v7151 = vadd.f32 %v6766, %v7150
  %v7152 = vpop.f32.mrb[0].mxu0
  %7153 = vmatprep.mubr.f32.mxu0 %v5415
  %7154 = vmatmul.mubr.f32.gmra.mrb[0].mxu0 %v5414
  %v7155 = vpop.f32.mrb[0].mxu0
  %v7156 = vadd.f32 %v6771, %v7155
  %v7157 = vpop.f32.mrb[0].mxu0
  %7158 = vmatprep.mubr.f32.mxu0 %v5418
  %7159 = vmatmul.mubr.f32.gmra.mrb[0].mxu0 %v5417
  %v7160 = vpop.f32.mrb[0].mxu0
  %v7161 = vadd.f32 %v6776, %v7160
  %v7162 = vpop.f32.mrb[0].mxu0
  %7163 = vmatprep.mubr.f32.mxu0 %v5421
  %7164 = vmatmul.mubr.f32.gmra.mrb[0].mxu0 %v5420
  %v7165 = vpop.f32.mrb[0].mxu0
  %v7166 = vadd.f32 %v6781, %v7165
  %v7167 = vpop.f32.mrb[0].mxu0
  %7168 = vmatprep.mubr.f32.mxu0 %v5424
  %7169 = vmatmul.mubr.f32.gmra.mrb[0].mxu0 %v5423
  %v7170 = vpop.f32.mrb[0].mxu0
  %v7171 = vadd.f32 %v6786, %v7170
  %v7172 = vpop.f32.mrb[0].mxu0
  %7173 = vmatprep.mubr.f32.mxu0 %v5427
  %7174 = vmatmul.mubr.f32.gmra.mrb[0].mxu0 %v5426
  %v7175 = vpop.f32.mrb[0].mxu0
  %v7176 = vadd.f32 %v6791, %v7175
  %v7177 = vpop.f32.mrb[0].mxu0
  %7178 = vmatprep.mubr.f32.mxu0 %v5430
  %7179 = vmatmul.mubr.f32.gmra.mrb[0].mxu0 %v5429
  %v7180 = vpop.f32.mrb[0].mxu0
  %v7181 = vadd.f32 %v6796, %v7180
  %v7182 = vpop.f32.mrb[0].mxu0
  %7183 = vmatprep.mubr.f32.mxu0 %v5433
  %7184 = vmatmul.mubr.f32.gmra.mrb[0].mxu0 %v5432
  %v7185 = vpop.f32.mrb[0].mxu0
  %v7186 = vadd.f32 %v6801, %v7185
  %v7187 = vpop.f32.mrb[0].mxu0
  %7188 = vmatprep.mubr.f32.mxu0 %v5436
  %7189 = vmatmul.mubr.f32.gmra.mrb[0].mxu0 %v5435
  %v7190 = vpop.f32.mrb[0].mxu0
  %v7191 = vadd.f32 %v6806, %v7190
  %v7192 = vpop.f32.mrb[0].mxu0
  %7193 = vmatprep.mubr.f32.mxu0 %v5439
  %7194 = vmatmul.mubr.f32.gmra.mrb[0].mxu0 %v5438
  %v7195 = vpop.f32.mrb[0].mxu0
  %v7196 = vadd.f32 %v6811, %v7195
  %v7197 = vpop.f32.mrb[0].mxu0
  %7198 = vmatprep.mubr.f32.mxu0 %v5442
  %7199 = vmatmul.mubr.f32.gmra.mrb[0].mxu0 %v5441
  %v7200 = vpop.f32.mrb[0].mxu0
  %v7201 = vadd.f32 %v6816, %v7200
  %v7202 = vpop.f32.mrb[0].mxu0
  %7203 = vmatprep.mubr.f32.mxu0 %v5445
  %7204 = vmatmul.mubr.f32.gmra.mrb[0].mxu0 %v5444
  %v7205 = vpop.f32.mrb[0].mxu0
  %v7206 = vadd.f32 %v6821, %v7205
  %v7207 = vpop.f32.mrb[0].mxu0
  %7208 = vmatprep.mubr.f32.mxu0 %v5448
  %7209 = vmatmul.mubr.f32.gmra.mrb[0].mxu0 %v5447
  %v7210 = vpop.f32.mrb[0].mxu0
  %v7211 = vadd.f32 %v6826, %v7210
  %v7212 = vpop.f32.mrb[0].mxu0
  %7213 = vmatprep.mubr.f32.mxu0 %v5451
  %7214 = vmatmul.mubr.f32.gmra.mrb[0].mxu0 %v5450
  %v7215 = vpop.f32.mrb[0].mxu0
  %v7216 = vadd.f32 %v6831, %v7215
  %v7217 = vpop.f32.mrb[0].mxu0
  %7218 = vmatprep.mubr.f32.mxu0 %v5454
  %7219 = vmatmul.mubr.f32.gmra.mrb[0].mxu0 %v5453
  %v7220 = vpop.f32.mrb[0].mxu0
  %v7221 = vadd.f32 %v6836, %v7220
  %v7222 = vpop.f32.mrb[0].mxu0
  %7223 = vmatprep.mubr.f32.mxu0 %v5457
  %7224 = vmatmul.mubr.f32.gmra.mrb[0].mxu0 %v5456
  %v7225 = vpop.f32.mrb[0].mxu0
  %v7226 = vadd.f32 %v6841, %v7225
  %v7227 = vpop.f32.mrb[0].mxu0
  %7228 = vmatprep.mubr.f32.mxu0 %v5460
  %7229 = vmatmul.mubr.f32.gmra.mrb[0].mxu0 %v5459
  %v7230 = vpop.f32.mrb[0].mxu0
  %v7231 = vadd.f32 %v6846, %v7230
  %v7232 = vpop.f32.mrb[0].mxu0
  %7233 = vmatprep.mubr.f32.mxu0 %v5463
  %7234 = vmatmul.mubr.f32.gmra.mrb[0].mxu0 %v5462
  %v7235 = vpop.f32.mrb[0].mxu0
  %v7236 = vadd.f32 %v6851, %v7235
  %v7237 = vpop.f32.mrb[0].mxu0
  %7238 = vmatprep.mubr.f32.mxu0 %v5466
  %7239 = vmatmul.mubr.f32.gmra.mrb[0].mxu0 %v5465
  %v7240 = vpop.f32.mrb[0].mxu0
  %v7241 = vadd.f32 %v6856, %v7240
  %v7242 = vpop.f32.mrb[0].mxu0
  %7243 = vmatprep.mubr.f32.mxu0 %v5469
  %7244 = vmatmul.mubr.f32.gmra.mrb[0].mxu0 %v5468
  %v7245 = vpop.f32.mrb[0].mxu0
  %v7246 = vadd.f32 %v6861, %v7245
  %v7247 = vpop.f32.mrb[0].mxu0
  %7248 = vmatprep.mubr.f32.mxu0 %v5472
  %7249 = vmatmul.mubr.f32.gmra.mrb[0].mxu0 %v5471
  %v7250 = vpop.f32.mrb[0].mxu0
  %v7251 = vadd.f32 %v6866, %v7250
  %v7252 = vpop.f32.mrb[0].mxu0
  %7253 = vmatprep.mubr.f32.mxu0 %v5475
  %7254 = vmatmul.mubr.f32.gmra.mrb[0].mxu0 %v5474
  %v7255 = vpop.f32.mrb[0].mxu0
  %v7256 = vadd.f32 %v6871, %v7255
  %v7257 = vpop.f32.mrb[0].mxu0
  %7258 = vmatprep.mubr.f32.mxu0 %v5478
  %7259 = vmatmul.mubr.f32.gmra.mrb[0].mxu0 %v5477
  %v7260 = vpop.f32.mrb[0].mxu0
  %v7261 = vadd.f32 %v6876, %v7260
  %v7262 = vpop.f32.mrb[0].mxu0
  %7263 = vmatprep.mubr.f32.mxu0 %v5481
  %7264 = vmatmul.mubr.f32.gmra.mrb[0].mxu0 %v5480
  %v7265 = vpop.f32.mrb[0].mxu0
  %v7266 = vadd.f32 %v6881, %v7265
  %v7267 = vpop.f32.mrb[0].mxu0
  %7268 = vmatprep.mubr.f32.mxu0 %v5484
  %7269 = vmatmul.mubr.f32.gmra.mrb[0].mxu0 %v5483
  %v7270 = vpop.f32.mrb[0].mxu0
  %v7271 = vadd.f32 %v6886, %v7270
  %v7272 = vpop.f32.mrb[0].mxu0
  %7273 = vmatprep.mubr.f32.mxu0 %v5487
  %7274 = vmatmul.mubr.f32.gmra.mrb[0].mxu0 %v5486
  %v7275 = vpop.f32.mrb[0].mxu0
  %v7276 = vadd.f32 %v6891, %v7275
  %v7277 = vpop.f32.mrb[0].mxu0
  %7278 = vmatprep.mubr.f32.mxu0 %v5490
  %7279 = vmatmul.mubr.f32.gmra.mrb[0].mxu0 %v5489
  %v7280 = vpop.f32.mrb[0].mxu0
  %v7281 = vadd.f32 %v6896, %v7280
  %v7282 = vpop.f32.mrb[0].mxu0
  %7283 = vmatprep.mubr.f32.mxu0 %v5493
  %7284 = vmatmul.mubr.f32.gmra.mrb[0].mxu0 %v5492
  %v7285 = vpop.f32.mrb[0].mxu0
  %v7286 = vadd.f32 %v6901, %v7285
  %v7287 = vpop.f32.mrb[0].mxu0
  %7288 = vmatprep.mubr.f32.mxu0 %v5496
  %7289 = vmatmul.mubr.f32.gmra.mrb[0].mxu0 %v5495
  %v7290 = vpop.f32.mrb[0].mxu0
  %v7291 = vadd.f32 %v6906, %v7290
  %v7292 = vpop.f32.mrb[0].mxu0
  %7293 = vmatprep.mubr.f32.mxu0 %v5499
  %7294 = vmatmul.mubr.f32.gmra.mrb[0].mxu0 %v5498
  %v7295 = vpop.f32.mrb[0].mxu0
  %v7296 = vadd.f32 %v6911, %v7295
  %v7297 = vpop.f32.mrb[0].mxu0
  %7298 = vmatprep.mubr.f32.mxu0 %v5502
  %7299 = vmatmul.mubr.f32.gmra.mrb[0].mxu0 %v5501
  %v7300 = vpop.f32.mrb[0].mxu0
  %v7301 = vadd.f32 %v6916, %v7300
  %v7302 = vpop.f32.mrb[0].mxu0
  %7303 = vmatprep.mubr.f32.mxu0 %v5505
  %7304 = vmatmul.mubr.f32.gmra.mrb[0].mxu0 %v5504
  %v7305 = vpop.f32.mrb[0].mxu0
  %v7306 = vadd.f32 %v6921, %v7305
  %v7307 = vpop.f32.mrb[0].mxu0
  %7308 = vmatprep.mubr.f32.mxu0 %v5508
  %7309 = vmatmul.mubr.f32.gmra.mrb[0].mxu0 %v5507
  %v7310 = vpop.f32.mrb[0].mxu0
  %v7311 = vadd.f32 %v6926, %v7310
  %v7312 = vpop.f32.mrb[0].mxu0
  %7313 = vmatprep.mubr.f32.mxu0 %v5511
  %7314 = vmatmul.mubr.f32.gmra.mrb[0].mxu0 %v5510
  %v7315 = vpop.f32.mrb[0].mxu0
  %v7316 = vadd.f32 %v6931, %v7315
  %v7317 = vpop.f32.mrb[0].mxu0
  %7318 = vmatprep.mubr.f32.mxu0 %v5514
  %7319 = vmatmul.mubr.f32.gmra.mrb[0].mxu0 %v5513
  %v7320 = vpop.f32.mrb[0].mxu0
  %v7321 = vadd.f32 %v6936, %v7320
  %v7322 = vpop.f32.mrb[0].mxu0
  %7323 = vmatprep.mubr.f32.mxu0 %v5517
  %7324 = vmatmul.mubr.f32.gmra.mrb[0].mxu0 %v5516
  %v7325 = vpop.f32.mrb[0].mxu0
  %v7326 = vadd.f32 %v6941, %v7325
  %v7327 = vpop.f32.mrb[0].mxu0
  %7328 = vmatprep.mubr.f32.mxu0 %v5520
  %7329 = vmatmul.mubr.f32.gmra.mrb[0].mxu0 %v5519
  %v7330 = vpop.f32.mrb[0].mxu0
  %v7331 = vadd.f32 %v6946, %v7330
  %v7332 = vpop.f32.mrb[0].mxu0
  %7333 = vmatprep.mubr.f32.mxu0 %v5523
  %7334 = vmatmul.mubr.f32.gmra.mrb[0].mxu0 %v5522
  %v7335 = vpop.f32.mrb[0].mxu0
  %v7336 = vadd.f32 %v6951, %v7335
  %v7337 = vpop.f32.mrb[0].mxu0
  %7338 = vmatprep.mubr.f32.mxu0 %v5526
  %7339 = vmatmul.mubr.f32.gmra.mrb[0].mxu0 %v5525
  %v7340 = vpop.f32.mrb[0].mxu0
  %v7341 = vadd.f32 %v6956, %v7340
  %v7342 = vpop.f32.mrb[0].mxu0
  %7343 = vmatprep.mubr.f32.mxu0 %v5529
  %7344 = vmatmul.mubr.f32.gmra.mrb[0].mxu0 %v5528
  %v7345 = vpop.f32.mrb[0].mxu0
  %v7346 = vadd.f32 %v6961, %v7345
  %v7347 = vpop.f32.mrb[0].mxu0
  %7348 = vmatprep.mubr.f32.mxu0 %v5532
  %7349 = vmatmul.mubr.f32.gmra.mrb[0].mxu0 %v5531
  %v7350 = vpop.f32.mrb[0].mxu0
  %v7351 = vadd.f32 %v6966, %v7350
  %v7352 = vpop.f32.mrb[0].mxu0
  %7353 = vmatprep.mubr.f32.mxu0 %v5535
  %7354 = vmatmul.mubr.f32.gmra.mrb[0].mxu0 %v5534
  %v7355 = vpop.f32.mrb[0].mxu0
  %v7356 = vadd.f32 %v6971, %v7355
  %v7357 = vpop.f32.mrb[0].mxu0
  %7358 = vmatprep.mubr.f32.mxu0 %v5538
  %7359 = vmatmul.mubr.f32.gmra.mrb[0].mxu0 %v5537
  %v7360 = vpop.f32.mrb[0].mxu0
  %v7361 = vadd.f32 %v6976, %v7360
  %v7362 = vpop.f32.mrb[0].mxu0
  %7363 = vmatprep.mubr.f32.mxu0 %v5541
  %7364 = vmatmul.mubr.f32.gmra.mrb[0].mxu0 %v5540
  %v7365 = vpop.f32.mrb[0].mxu0
  %v7366 = vadd.f32 %v6981, %v7365
  %v7367 = vpop.f32.mrb[0].mxu0
  %7368 = vmatprep.mubr.f32.mxu0 %v5544
  %7369 = vmatmul.mubr.f32.gmra.mrb[0].mxu0 %v5543
  %v7370 = vpop.f32.mrb[0].mxu0
  %v7371 = vadd.f32 %v6986, %v7370
  %v7372 = vpop.f32.mrb[0].mxu0
  %7373 = vdwg.mxu0
  %7374 = vmatprep.subr.mxu0 0.0
  %7375 = vmatpush1.msra.mxu0 %v5578
  %7376 = vmatprep.subr.mxu0 0.0
  %7377 = vmatpush1.msra.mxu0 %v5579
  %7378 = vmatprep.subr.mxu0 0.0
  %7379 = vmatpush1.msra.mxu0 %v5580
  %7380 = vmatprep.subr.mxu0 0.0
  %7381 = vmatpush1.msra.mxu0 %v5581
  %7382 = vmatprep.subr.mxu0 0.0
  %7383 = vmatpush1.msra.mxu0 %v5582
  %7384 = vmatprep.subr.mxu0 0.0
  %7385 = vmatpush1.msra.mxu0 %v5583
  %7386 = vmatprep.subr.mxu0 0.0
  %7387 = vmatpush1.msra.mxu0 %v5584
  %7388 = vmatprep.subr.mxu0 0.0
  %7389 = vmatpush1.msra.mxu0 %v5585
  %7390 = vmatprep.subr.mxu0 0.0
  %7391 = vmatpush1.msra.mxu0 %v5586
  %7392 = vmatprep.subr.mxu0 0.0
  %7393 = vmatpush1.msra.mxu0 %v5587
  %7394 = vmatprep.subr.mxu0 0.0
  %7395 = vmatpush1.msra.mxu0 %v5588
  %7396 = vmatprep.subr.mxu0 0.0
  %7397 = vmatpush1.msra.mxu0 %v5589
  %7398 = vmatprep.subr.mxu0 0.0
  %7399 = vmatpush1.msra.mxu0 %v5590
  %7400 = vmatprep.subr.mxu0 0.0
  %7401 = vmatpush1.msra.mxu0 %v5591
  %7402 = vmatprep.subr.mxu0 0.0
  %7403 = vmatpush1.msra.mxu0 %v5592
  %7404 = vmatprep.subr.mxu0 0.0
  %7405 = vmatpush1.msra.mxu0 %v5593
  %7406 = vmatprep.subr.mxu0 0.0
  %7407 = vmatpush1.msra.mxu0 0.0
  %7408 = vmatprep.subr.mxu0 0.0
  %7409 = vmatpush1.msra.mxu0 0.0
  %7410 = vmatprep.subr.mxu0 0.0
  %7411 = vmatpush1.msra.mxu0 0.0
  %7412 = vmatprep.subr.mxu0 0.0
  %7413 = vmatpush1.msra.mxu0 0.0
  %7414 = vmatprep.subr.mxu0 0.0
  %7415 = vmatpush1.msra.mxu0 0.0
  %7416 = vmatprep.subr.mxu0 0.0
  %7417 = vmatpush1.msra.mxu0 0.0
  %7418 = vmatprep.subr.mxu0 0.0
  %7419 = vmatpush1.msra.mxu0 0.0
  %7420 = vmatprep.subr.mxu0 0.0
  %7421 = vmatpush1.msra.mxu0 0.0
  %7422 = vmatprep.subr.mxu0 0.0
  %7423 = vmatpush1.msra.mxu0 0.0
  %7424 = vmatprep.subr.mxu0 0.0
  %7425 = vmatpush1.msra.mxu0 0.0
  %7426 = vmatprep.subr.mxu0 0.0
  %7427 = vmatpush1.msra.mxu0 0.0
  %7428 = vmatprep.subr.mxu0 0.0
  %7429 = vmatpush1.msra.mxu0 0.0
  %7430 = vmatprep.subr.mxu0 0.0
  %7431 = vmatpush1.msra.mxu0 0.0
  %7432 = vmatprep.subr.mxu0 0.0
  %7433 = vmatpush1.msra.mxu0 0.0
  %7434 = vmatprep.subr.mxu0 0.0
  %7435 = vmatpush1.msra.mxu0 0.0
  %7436 = vmatprep.subr.mxu0 0.0
  %7437 = vmatpush1.msra.mxu0 0.0
  %7438 = vmatprep.mubr.f32.mxu0 0.0
  %7439 = vmatmul.mubr.f32.gmra.mrb[0].mxu0 %v5356
  %v7440 = vpop.f32.mrb[0].mxu0
  %v7441 = vadd.f32 %v7056, %v7440
  %v7442 = vpop.f32.mrb[0].mxu0
  %7443 = vmatprep.mubr.f32.mxu0 0.0
  %7444 = vmatmul.mubr.f32.gmra.mrb[0].mxu0 %v5359
  %v7445 = vpop.f32.mrb[0].mxu0
  %v7446 = vadd.f32 %v7061, %v7445
  %v7447 = vpop.f32.mrb[0].mxu0
  %7448 = vmatprep.mubr.f32.mxu0 0.0
  %7449 = vmatmul.mubr.f32.gmra.mrb[0].mxu0 %v5362
  %v7450 = vpop.f32.mrb[0].mxu0
  %v7451 = vadd.f32 %v7066, %v7450
  %v7452 = vpop.f32.mrb[0].mxu0
  %7453 = vmatprep.mubr.f32.mxu0 0.0
  %7454 = vmatmul.mubr.f32.gmra.mrb[0].mxu0 %v5365
  %v7455 = vpop.f32.mrb[0].mxu0
  %v7456 = vadd.f32 %v7071, %v7455
  %v7457 = vpop.f32.mrb[0].mxu0
  %7458 = vmatprep.mubr.f32.mxu0 0.0
  %7459 = vmatmul.mubr.f32.gmra.mrb[0].mxu0 %v5368
  %v7460 = vpop.f32.mrb[0].mxu0
  %v7461 = vadd.f32 %v7076, %v7460
  %v7462 = vpop.f32.mrb[0].mxu0
  %7463 = vmatprep.mubr.f32.mxu0 0.0
  %7464 = vmatmul.mubr.f32.gmra.mrb[0].mxu0 %v5371
  %v7465 = vpop.f32.mrb[0].mxu0
  %v7466 = vadd.f32 %v7081, %v7465
  %v7467 = vpop.f32.mrb[0].mxu0
  %7468 = vmatprep.mubr.f32.mxu0 0.0
  %7469 = vmatmul.mubr.f32.gmra.mrb[0].mxu0 %v5374
  %v7470 = vpop.f32.mrb[0].mxu0
  %v7471 = vadd.f32 %v7086, %v7470
  %v7472 = vpop.f32.mrb[0].mxu0
  %7473 = vmatprep.mubr.f32.mxu0 0.0
  %7474 = vmatmul.mubr.f32.gmra.mrb[0].mxu0 %v5377
  %v7475 = vpop.f32.mrb[0].mxu0
  %v7476 = vadd.f32 %v7091, %v7475
  %v7477 = vpop.f32.mrb[0].mxu0
  %7478 = vmatprep.mubr.f32.mxu0 0.0
  %7479 = vmatmul.mubr.f32.gmra.mrb[0].mxu0 %v5380
  %v7480 = vpop.f32.mrb[0].mxu0
  %v7481 = vadd.f32 %v7096, %v7480
  %v7482 = vpop.f32.mrb[0].mxu0
  %7483 = vmatprep.mubr.f32.mxu0 0.0
  %7484 = vmatmul.mubr.f32.gmra.mrb[0].mxu0 %v5383
  %v7485 = vpop.f32.mrb[0].mxu0
  %v7486 = vadd.f32 %v7101, %v7485
  %v7487 = vpop.f32.mrb[0].mxu0
  %7488 = vmatprep.mubr.f32.mxu0 0.0
  %7489 = vmatmul.mubr.f32.gmra.mrb[0].mxu0 %v5386
  %v7490 = vpop.f32.mrb[0].mxu0
  %v7491 = vadd.f32 %v7106, %v7490
  %v7492 = vpop.f32.mrb[0].mxu0
  %7493 = vmatprep.mubr.f32.mxu0 0.0
  %7494 = vmatmul.mubr.f32.gmra.mrb[0].mxu0 %v5389
  %v7495 = vpop.f32.mrb[0].mxu0
  %v7496 = vadd.f32 %v7111, %v7495
  %v7497 = vpop.f32.mrb[0].mxu0
  %7498 = vmatprep.mubr.f32.mxu0 0.0
  %7499 = vmatmul.mubr.f32.gmra.mrb[0].mxu0 %v5392
  %v7500 = vpop.f32.mrb[0].mxu0
  %v7501 = vadd.f32 %v7116, %v7500
  %v7502 = vpop.f32.mrb[0].mxu0
  %7503 = vmatprep.mubr.f32.mxu0 0.0
  %7504 = vmatmul.mubr.f32.gmra.mrb[0].mxu0 %v5395
  %v7505 = vpop.f32.mrb[0].mxu0
  %v7506 = vadd.f32 %v7121, %v7505
  %v7507 = vpop.f32.mrb[0].mxu0
  %7508 = vmatprep.mubr.f32.mxu0 0.0
  %7509 = vmatmul.mubr.f32.gmra.mrb[0].mxu0 %v5398
  %v7510 = vpop.f32.mrb[0].mxu0
  %v7511 = vadd.f32 %v7126, %v7510
  %v7512 = vpop.f32.mrb[0].mxu0
  %7513 = vmatprep.mubr.f32.mxu0 0.0
  %7514 = vmatmul.mubr.f32.gmra.mrb[0].mxu0 %v5401
  %v7515 = vpop.f32.mrb[0].mxu0
  %v7516 = vadd.f32 %v7131, %v7515
  %v7517 = vpop.f32.mrb[0].mxu0
  %7518 = vmatprep.mubr.f32.mxu0 0.0
  %7519 = vmatmul.mubr.f32.gmra.mrb[0].mxu0 %v5404
  %v7520 = vpop.f32.mrb[0].mxu0
  %v7521 = vadd.f32 %v7136, %v7520
  %v7522 = vpop.f32.mrb[0].mxu0
  %7523 = vmatprep.mubr.f32.mxu0 0.0
  %7524 = vmatmul.mubr.f32.gmra.mrb[0].mxu0 %v5407
  %v7525 = vpop.f32.mrb[0].mxu0
  %v7526 = vadd.f32 %v7141, %v7525
  %v7527 = vpop.f32.mrb[0].mxu0
  %7528 = vmatprep.mubr.f32.mxu0 0.0
  %7529 = vmatmul.mubr.f32.gmra.mrb[0].mxu0 %v5410
  %v7530 = vpop.f32.mrb[0].mxu0
  %v7531 = vadd.f32 %v7146, %v7530
  %v7532 = vpop.f32.mrb[0].mxu0
  %7533 = vmatprep.mubr.f32.mxu0 0.0
  %7534 = vmatmul.mubr.f32.gmra.mrb[0].mxu0 %v5413
  %v7535 = vpop.f32.mrb[0].mxu0
  %v7536 = vadd.f32 %v7151, %v7535
  %v7537 = vpop.f32.mrb[0].mxu0
  %7538 = vmatprep.mubr.f32.mxu0 0.0
  %7539 = vmatmul.mubr.f32.gmra.mrb[0].mxu0 %v5416
  %v7540 = vpop.f32.mrb[0].mxu0
  %v7541 = vadd.f32 %v7156, %v7540
  %v7542 = vpop.f32.mrb[0].mxu0
  %7543 = vmatprep.mubr.f32.mxu0 0.0
  %7544 = vmatmul.mubr.f32.gmra.mrb[0].mxu0 %v5419
  %v7545 = vpop.f32.mrb[0].mxu0
  %v7546 = vadd.f32 %v7161, %v7545
  %v7547 = vpop.f32.mrb[0].mxu0
  %7548 = vmatprep.mubr.f32.mxu0 0.0
  %7549 = vmatmul.mubr.f32.gmra.mrb[0].mxu0 %v5422
  %v7550 = vpop.f32.mrb[0].mxu0
  %v7551 = vadd.f32 %v7166, %v7550
  %v7552 = vpop.f32.mrb[0].mxu0
  %7553 = vmatprep.mubr.f32.mxu0 0.0
  %7554 = vmatmul.mubr.f32.gmra.mrb[0].mxu0 %v5425
  %v7555 = vpop.f32.mrb[0].mxu0
  %v7556 = vadd.f32 %v7171, %v7555
  %v7557 = vpop.f32.mrb[0].mxu0
  %7558 = vmatprep.mubr.f32.mxu0 0.0
  %7559 = vmatmul.mubr.f32.gmra.mrb[0].mxu0 %v5428
  %v7560 = vpop.f32.mrb[0].mxu0
  %v7561 = vadd.f32 %v7176, %v7560
  %v7562 = vpop.f32.mrb[0].mxu0
  %7563 = vmatprep.mubr.f32.mxu0 0.0
  %7564 = vmatmul.mubr.f32.gmra.mrb[0].mxu0 %v5431
  %v7565 = vpop.f32.mrb[0].mxu0
  %v7566 = vadd.f32 %v7181, %v7565
  %v7567 = vpop.f32.mrb[0].mxu0
  %7568 = vmatprep.mubr.f32.mxu0 0.0
  %7569 = vmatmul.mubr.f32.gmra.mrb[0].mxu0 %v5434
  %v7570 = vpop.f32.mrb[0].mxu0
  %v7571 = vadd.f32 %v7186, %v7570
  %v7572 = vpop.f32.mrb[0].mxu0
  %7573 = vmatprep.mubr.f32.mxu0 0.0
  %7574 = vmatmul.mubr.f32.gmra.mrb[0].mxu0 %v5437
  %v7575 = vpop.f32.mrb[0].mxu0
  %v7576 = vadd.f32 %v7191, %v7575
  %v7577 = vpop.f32.mrb[0].mxu0
  %7578 = vmatprep.mubr.f32.mxu0 0.0
  %7579 = vmatmul.mubr.f32.gmra.mrb[0].mxu0 %v5440
  %v7580 = vpop.f32.mrb[0].mxu0
  %v7581 = vadd.f32 %v7196, %v7580
  %v7582 = vpop.f32.mrb[0].mxu0
  %7583 = vmatprep.mubr.f32.mxu0 0.0
  %7584 = vmatmul.mubr.f32.gmra.mrb[0].mxu0 %v5443
  %v7585 = vpop.f32.mrb[0].mxu0
  %v7586 = vadd.f32 %v7201, %v7585
  %v7587 = vpop.f32.mrb[0].mxu0
  %7588 = vmatprep.mubr.f32.mxu0 0.0
  %7589 = vmatmul.mubr.f32.gmra.mrb[0].mxu0 %v5446
  %v7590 = vpop.f32.mrb[0].mxu0
  %v7591 = vadd.f32 %v7206, %v7590
  %v7592 = vpop.f32.mrb[0].mxu0
  %7593 = vmatprep.mubr.f32.mxu0 0.0
  %7594 = vmatmul.mubr.f32.gmra.mrb[0].mxu0 %v5449
  %v7595 = vpop.f32.mrb[0].mxu0
  %v7596 = vadd.f32 %v7211, %v7595
  %v7597 = vpop.f32.mrb[0].mxu0
  %7598 = vmatprep.mubr.f32.mxu0 0.0
  %7599 = vmatmul.mubr.f32.gmra.mrb[0].mxu0 %v5452
  %v7600 = vpop.f32.mrb[0].mxu0
  %v7601 = vadd.f32 %v7216, %v7600
  %v7602 = vpop.f32.mrb[0].mxu0
  %7603 = vmatprep.mubr.f32.mxu0 0.0
  %7604 = vmatmul.mubr.f32.gmra.mrb[0].mxu0 %v5455
  %v7605 = vpop.f32.mrb[0].mxu0
  %v7606 = vadd.f32 %v7221, %v7605
  %v7607 = vpop.f32.mrb[0].mxu0
  %7608 = vmatprep.mubr.f32.mxu0 0.0
  %7609 = vmatmul.mubr.f32.gmra.mrb[0].mxu0 %v5458
  %v7610 = vpop.f32.mrb[0].mxu0
  %v7611 = vadd.f32 %v7226, %v7610
  %v7612 = vpop.f32.mrb[0].mxu0
  %7613 = vmatprep.mubr.f32.mxu0 0.0
  %7614 = vmatmul.mubr.f32.gmra.mrb[0].mxu0 %v5461
  %v7615 = vpop.f32.mrb[0].mxu0
  %v7616 = vadd.f32 %v7231, %v7615
  %v7617 = vpop.f32.mrb[0].mxu0
  %7618 = vmatprep.mubr.f32.mxu0 0.0
  %7619 = vmatmul.mubr.f32.gmra.mrb[0].mxu0 %v5464
  %v7620 = vpop.f32.mrb[0].mxu0
  %v7621 = vadd.f32 %v7236, %v7620
  %v7622 = vpop.f32.mrb[0].mxu0
  %7623 = vmatprep.mubr.f32.mxu0 0.0
  %7624 = vmatmul.mubr.f32.gmra.mrb[0].mxu0 %v5467
  %v7625 = vpop.f32.mrb[0].mxu0
  %v7626 = vadd.f32 %v7241, %v7625
  %v7627 = vpop.f32.mrb[0].mxu0
  %7628 = vmatprep.mubr.f32.mxu0 0.0
  %7629 = vmatmul.mubr.f32.gmra.mrb[0].mxu0 %v5470
  %v7630 = vpop.f32.mrb[0].mxu0
  %v7631 = vadd.f32 %v7246, %v7630
  %v7632 = vpop.f32.mrb[0].mxu0
  %7633 = vmatprep.mubr.f32.mxu0 0.0
  %7634 = vmatmul.mubr.f32.gmra.mrb[0].mxu0 %v5473
  %v7635 = vpop.f32.mrb[0].mxu0
  %v7636 = vadd.f32 %v7251, %v7635
  %v7637 = vpop.f32.mrb[0].mxu0
  %7638 = vmatprep.mubr.f32.mxu0 0.0
  %7639 = vmatmul.mubr.f32.gmra.mrb[0].mxu0 %v5476
  %v7640 = vpop.f32.mrb[0].mxu0
  %v7641 = vadd.f32 %v7256, %v7640
  %v7642 = vpop.f32.mrb[0].mxu0
  %7643 = vmatprep.mubr.f32.mxu0 0.0
  %7644 = vmatmul.mubr.f32.gmra.mrb[0].mxu0 %v5479
  %v7645 = vpop.f32.mrb[0].mxu0
  %v7646 = vadd.f32 %v7261, %v7645
  %v7647 = vpop.f32.mrb[0].mxu0
  %7648 = vmatprep.mubr.f32.mxu0 0.0
  %7649 = vmatmul.mubr.f32.gmra.mrb[0].mxu0 %v5482
  %v7650 = vpop.f32.mrb[0].mxu0
  %v7651 = vadd.f32 %v7266, %v7650
  %v7652 = vpop.f32.mrb[0].mxu0
  %7653 = vmatprep.mubr.f32.mxu0 0.0
  %7654 = vmatmul.mubr.f32.gmra.mrb[0].mxu0 %v5485
  %v7655 = vpop.f32.mrb[0].mxu0
  %v7656 = vadd.f32 %v7271, %v7655
  %v7657 = vpop.f32.mrb[0].mxu0
  %7658 = vmatprep.mubr.f32.mxu0 0.0
  %7659 = vmatmul.mubr.f32.gmra.mrb[0].mxu0 %v5488
  %v7660 = vpop.f32.mrb[0].mxu0
  %v7661 = vadd.f32 %v7276, %v7660
  %v7662 = vpop.f32.mrb[0].mxu0
  %7663 = vmatprep.mubr.f32.mxu0 0.0
  %7664 = vmatmul.mubr.f32.gmra.mrb[0].mxu0 %v5491
  %v7665 = vpop.f32.mrb[0].mxu0
  %v7666 = vadd.f32 %v7281, %v7665
  %v7667 = vpop.f32.mrb[0].mxu0
  %7668 = vmatprep.mubr.f32.mxu0 0.0
  %7669 = vmatmul.mubr.f32.gmra.mrb[0].mxu0 %v5494
  %v7670 = vpop.f32.mrb[0].mxu0
  %v7671 = vadd.f32 %v7286, %v7670
  %v7672 = vpop.f32.mrb[0].mxu0
  %7673 = vmatprep.mubr.f32.mxu0 0.0
  %7674 = vmatmul.mubr.f32.gmra.mrb[0].mxu0 %v5497
  %v7675 = vpop.f32.mrb[0].mxu0
  %v7676 = vadd.f32 %v7291, %v7675
  %v7677 = vpop.f32.mrb[0].mxu0
  %7678 = vmatprep.mubr.f32.mxu0 0.0
  %7679 = vmatmul.mubr.f32.gmra.mrb[0].mxu0 %v5500
  %v7680 = vpop.f32.mrb[0].mxu0
  %v7681 = vadd.f32 %v7296, %v7680
  %v7682 = vpop.f32.mrb[0].mxu0
  %7683 = vmatprep.mubr.f32.mxu0 0.0
  %7684 = vmatmul.mubr.f32.gmra.mrb[0].mxu0 %v5503
  %v7685 = vpop.f32.mrb[0].mxu0
  %v7686 = vadd.f32 %v7301, %v7685
  %v7687 = vpop.f32.mrb[0].mxu0
  %7688 = vmatprep.mubr.f32.mxu0 0.0
  %7689 = vmatmul.mubr.f32.gmra.mrb[0].mxu0 %v5506
  %v7690 = vpop.f32.mrb[0].mxu0
  %v7691 = vadd.f32 %v7306, %v7690
  %v7692 = vpop.f32.mrb[0].mxu0
  %7693 = vmatprep.mubr.f32.mxu0 0.0
  %7694 = vmatmul.mubr.f32.gmra.mrb[0].mxu0 %v5509
  %v7695 = vpop.f32.mrb[0].mxu0
  %v7696 = vadd.f32 %v7311, %v7695
  %v7697 = vpop.f32.mrb[0].mxu0
  %7698 = vmatprep.mubr.f32.mxu0 0.0
  %7699 = vmatmul.mubr.f32.gmra.mrb[0].mxu0 %v5512
  %v7700 = vpop.f32.mrb[0].mxu0
  %v7701 = vadd.f32 %v7316, %v7700
  %v7702 = vpop.f32.mrb[0].mxu0
  %7703 = vmatprep.mubr.f32.mxu0 0.0
  %7704 = vmatmul.mubr.f32.gmra.mrb[0].mxu0 %v5515
  %v7705 = vpop.f32.mrb[0].mxu0
  %v7706 = vadd.f32 %v7321, %v7705
  %v7707 = vpop.f32.mrb[0].mxu0
  %7708 = vmatprep.mubr.f32.mxu0 0.0
  %7709 = vmatmul.mubr.f32.gmra.mrb[0].mxu0 %v5518
  %v7710 = vpop.f32.mrb[0].mxu0
  %v7711 = vadd.f32 %v7326, %v7710
  %v7712 = vpop.f32.mrb[0].mxu0
  %7713 = vmatprep.mubr.f32.mxu0 0.0
  %7714 = vmatmul.mubr.f32.gmra.mrb[0].mxu0 %v5521
  %v7715 = vpop.f32.mrb[0].mxu0
  %v7716 = vadd.f32 %v7331, %v7715
  %v7717 = vpop.f32.mrb[0].mxu0
  %7718 = vmatprep.mubr.f32.mxu0 0.0
  %7719 = vmatmul.mubr.f32.gmra.mrb[0].mxu0 %v5524
  %v7720 = vpop.f32.mrb[0].mxu0
  %v7721 = vadd.f32 %v7336, %v7720
  %v7722 = vpop.f32.mrb[0].mxu0
  %7723 = vmatprep.mubr.f32.mxu0 0.0
  %7724 = vmatmul.mubr.f32.gmra.mrb[0].mxu0 %v5527
  %v7725 = vpop.f32.mrb[0].mxu0
  %v7726 = vadd.f32 %v7341, %v7725
  %v7727 = vpop.f32.mrb[0].mxu0
  %7728 = vmatprep.mubr.f32.mxu0 0.0
  %7729 = vmatmul.mubr.f32.gmra.mrb[0].mxu0 %v5530
  %v7730 = vpop.f32.mrb[0].mxu0
  %v7731 = vadd.f32 %v7346, %v7730
  %v7732 = vpop.f32.mrb[0].mxu0
  %7733 = vmatprep.mubr.f32.mxu0 0.0
  %7734 = vmatmul.mubr.f32.gmra.mrb[0].mxu0 %v5533
  %v7735 = vpop.f32.mrb[0].mxu0
  %v7736 = vadd.f32 %v7351, %v7735
  %v7737 = vpop.f32.mrb[0].mxu0
  %7738 = vmatprep.mubr.f32.mxu0 0.0
  %7739 = vmatmul.mubr.f32.gmra.mrb[0].mxu0 %v5536
  %v7740 = vpop.f32.mrb[0].mxu0
  %v7741 = vadd.f32 %v7356, %v7740
  %v7742 = vpop.f32.mrb[0].mxu0
  %7743 = vmatprep.mubr.f32.mxu0 0.0
  %7744 = vmatmul.mubr.f32.gmra.mrb[0].mxu0 %v5539
  %v7745 = vpop.f32.mrb[0].mxu0
  %v7746 = vadd.f32 %v7361, %v7745
  %v7747 = vpop.f32.mrb[0].mxu0
  %7748 = vmatprep.mubr.f32.mxu0 0.0
  %7749 = vmatmul.mubr.f32.gmra.mrb[0].mxu0 %v5542
  %v7750 = vpop.f32.mrb[0].mxu0
  %v7751 = vadd.f32 %v7366, %v7750
  %v7752 = vpop.f32.mrb[0].mxu0
  %7753 = vmatprep.mubr.f32.mxu0 0.0
  %7754 = vmatmul.mubr.f32.gmra.mrb[0].mxu0 %v5545
  %v7755 = vpop.f32.mrb[0].mxu0
  %v7756 = vadd.f32 %v7371, %v7755
  %v7757 = vpop.f32.mrb[0].mxu0
  %7758 = vdwg.mxu0
  %v7759 = vld [vmem:[%s3029] sm:$0xff]
  %v7760 = vld [vmem:[%s3029 + $0x8] sm:$0xff]
  %v7761 = vld [vmem:[%s3029 + $0x18] sm:$0xff]
  %v7762 = vld [vmem:[%s3029 + $0x20] sm:$0xff]
  %v7763 = vld [vmem:[%s3029 + $0x30] sm:$0xff]
  %v7764 = vld [vmem:[%s3029 + $0x38] sm:$0xff]
  %v7765 = vld [vmem:[%s3029 + $0x48] sm:$0xff]
  %v7766 = vld [vmem:[%s3029 + $0x50] sm:$0xff]
  %v7767 = vld [vmem:[%s3029 + $0x60] sm:$0xff]
  %v7768 = vld [vmem:[%s3029 + $0x68] sm:$0xff]
  %v7769 = vld [vmem:[%s3029 + $0x78] sm:$0xff]
  %v7770 = vld [vmem:[%s3029 + $0x80] sm:$0xff]
  %v7771 = vld [vmem:[%s3029 + $0x90] sm:$0xff]
  %v7772 = vld [vmem:[%s3029 + $0x98] sm:$0xff]
  %v7773 = vld [vmem:[%s3029 + $0xa8] sm:$0xff]
  %v7774 = vld [vmem:[%s3029 + $0xb0] sm:$0xff]
  %v7775 = vld [vmem:[%s3029 + $0xc0] sm:$0xff]
  %v7776 = vld [vmem:[%s3029 + $0xc8] sm:$0xff]
  %v7777 = vld [vmem:[%s3029 + $0xd8] sm:$0xff]
  %v7778 = vld [vmem:[%s3029 + $0xe0] sm:$0xff]
  %v7779 = vld [vmem:[%s3029 + $0xf0] sm:$0xff]
  %v7780 = vld [vmem:[%s3029 + $0xf8] sm:$0xff]
  %v7781 = vld [vmem:[%s3029 + $0x108] sm:$0xff]
  %v7782 = vld [vmem:[%s3029 + $0x110] sm:$0xff]
  %v7783 = vld [vmem:[%s3029 + $0x120] sm:$0xff]
  %v7784 = vld [vmem:[%s3029 + $0x128] sm:$0xff]
  %v7785 = vld [vmem:[%s3029 + $0x138] sm:$0xff]
  %v7786 = vld [vmem:[%s3029 + $0x140] sm:$0xff]
  %v7787 = vld [vmem:[%s3029 + $0x150] sm:$0xff]
  %v7788 = vld [vmem:[%s3029 + $0x158] sm:$0xff]
  %v7789 = vld [vmem:[%s3029 + $0x168] sm:$0xff]
  %v7790 = vld [vmem:[%s3029 + $0x170] sm:$0xff]
  %v7791 = vld [vmem:[%s3029 + $0x1b0] sm:$0xff]
  %v7792 = vld [vmem:[%s3029 + $0x1b8] sm:$0xff]
  %v7793 = vld [vmem:[%s3029 + $0x1c8] sm:$0xff]
  %v7794 = vld [vmem:[%s3029 + $0x1d0] sm:$0xff]
  %v7795 = vld [vmem:[%s3029 + $0x1e0] sm:$0xff]
  %v7796 = vld [vmem:[%s3029 + $0x1e8] sm:$0xff]
  %v7797 = vld [vmem:[%s3029 + $0x1f8] sm:$0xff]
  %v7798 = vld [vmem:[%s3029 + $0x200] sm:$0xff]
  %v7799 = vld [vmem:[%s3029 + $0x210] sm:$0xff]
  %v7800 = vld [vmem:[%s3029 + $0x218] sm:$0xff]
  %v7801 = vld [vmem:[%s3029 + $0x228] sm:$0xff]
  %v7802 = vld [vmem:[%s3029 + $0x230] sm:$0xff]
  %v7803 = vld [vmem:[%s3029 + $0x240] sm:$0xff]
  %v7804 = vld [vmem:[%s3029 + $0x248] sm:$0xff]
  %v7805 = vld [vmem:[%s3029 + $0x258] sm:$0xff]
  %v7806 = vld [vmem:[%s3029 + $0x260] sm:$0xff]
  %v7807 = vld [vmem:[%s3029 + $0x270] sm:$0xff]
  %v7808 = vld [vmem:[%s3029 + $0x278] sm:$0xff]
  %v7809 = vld [vmem:[%s3029 + $0x288] sm:$0xff]
  %v7810 = vld [vmem:[%s3029 + $0x290] sm:$0xff]
  %v7811 = vld [vmem:[%s3029 + $0x2a0] sm:$0xff]
  %v7812 = vld [vmem:[%s3029 + $0x2a8] sm:$0xff]
  %v7813 = vld [vmem:[%s3029 + $0x2b8] sm:$0xff]
  %v7814 = vld [vmem:[%s3029 + $0x2c0] sm:$0xff]
  %v7815 = vld [vmem:[%s3029 + $0x2d0] sm:$0xff]
  %v7816 = vld [vmem:[%s3029 + $0x2d8] sm:$0xff]
  %v7817 = vld [vmem:[%s3029 + $0x2e8] sm:$0xff]
  %v7818 = vld [vmem:[%s3029 + $0x2f0] sm:$0xff]
  %v7819 = vld [vmem:[%s3029 + $0x300] sm:$0xff]
  %v7820 = vld [vmem:[%s3029 + $0x308] sm:$0xff]
  %v7821 = vld [vmem:[%s3029 + $0x318] sm:$0xff]
  %v7822 = vld [vmem:[%s3029 + $0x320] sm:$0xff]
  %7823 = vst [vmem:[#allocation3] sm:$0xff] %v7759
  %7824 = vst [vmem:[#allocation3 + $0x18] sm:$0xff] %v7760
  %7825 = vst [vmem:[#allocation3 + $0x30] sm:$0xff] %v7761
  %7826 = vst [vmem:[#allocation3 + $0x48] sm:$0xff] %v7762
  %7827 = vst [vmem:[#allocation3 + $0x60] sm:$0xff] %v7763
  %7828 = vst [vmem:[#allocation3 + $0x78] sm:$0xff] %v7764
  %7829 = vst [vmem:[#allocation3 + $0x90] sm:$0xff] %v7765
  %7830 = vst [vmem:[#allocation3 + $0xa8] sm:$0xff] %v7766
  %7831 = vst [vmem:[#allocation3 + $0xc0] sm:$0xff] %v7767
  %7832 = vst [vmem:[#allocation3 + $0xd8] sm:$0xff] %v7768
  %7833 = vst [vmem:[#allocation3 + $0xf0] sm:$0xff] %v7769
  %7834 = vst [vmem:[#allocation3 + $0x108] sm:$0xff] %v7770
  %7835 = vst [vmem:[#allocation3 + $0x120] sm:$0xff] %v7771
  %7836 = vst [vmem:[#allocation3 + $0x138] sm:$0xff] %v7772
  %7837 = vst [vmem:[#allocation3 + $0x150] sm:$0xff] %v7773
  %7838 = vst [vmem:[#allocation3 + $0x168] sm:$0xff] %v7774
  %7839 = vst [vmem:[#allocation3 + $0x180] sm:$0xff] %v7775
  %7840 = vst [vmem:[#allocation3 + $0x198] sm:$0xff] %v7776
  %7841 = vst [vmem:[#allocation3 + $0x1b0] sm:$0xff] %v7777
  %7842 = vst [vmem:[#allocation3 + $0x1c8] sm:$0xff] %v7778
  %7843 = vst [vmem:[#allocation3 + $0x1e0] sm:$0xff] %v7779
  %7844 = vst [vmem:[#allocation3 + $0x1f8] sm:$0xff] %v7780
  %7845 = vst [vmem:[#allocation3 + $0x210] sm:$0xff] %v7781
  %7846 = vst [vmem:[#allocation3 + $0x228] sm:$0xff] %v7782
  %7847 = vst [vmem:[#allocation3 + $0x240] sm:$0xff] %v7783
  %7848 = vst [vmem:[#allocation3 + $0x258] sm:$0xff] %v7784
  %7849 = vst [vmem:[#allocation3 + $0x270] sm:$0xff] %v7785
  %7850 = vst [vmem:[#allocation3 + $0x288] sm:$0xff] %v7786
  %7851 = vst [vmem:[#allocation3 + $0x2a0] sm:$0xff] %v7787
  %7852 = vst [vmem:[#allocation3 + $0x2b8] sm:$0xff] %v7788
  %7853 = vst [vmem:[#allocation3 + $0x2d0] sm:$0xff] %v7789
  %7854 = vst [vmem:[#allocation3 + $0x2e8] sm:$0xff] %v7790
  %7855 = vst [vmem:[#allocation3 + $0x300] sm:$0xff] %v7791
  %7856 = vst [vmem:[#allocation3 + $0x318] sm:$0xff] %v7792
  %7857 = vst [vmem:[#allocation3 + $0x330] sm:$0xff] %v7793
  %7858 = vst [vmem:[#allocation3 + $0x348] sm:$0xff] %v7794
  %7859 = vst [vmem:[#allocation3 + $0x360] sm:$0xff] %v7795
  %7860 = vst [vmem:[#allocation3 + $0x378] sm:$0xff] %v7796
  %7861 = vst [vmem:[#allocation3 + $0x390] sm:$0xff] %v7797
  %7862 = vst [vmem:[#allocation3 + $0x3a8] sm:$0xff] %v7798
  %7863 = vst [vmem:[#allocation3 + $0x3c0] sm:$0xff] %v7799
  %7864 = vst [vmem:[#allocation3 + $0x3d8] sm:$0xff] %v7800
  %7865 = vst [vmem:[#allocation3 + $0x3f0] sm:$0xff] %v7801
  %7866 = vst [vmem:[#allocation3 + $0x408] sm:$0xff] %v7802
  %7867 = vst [vmem:[#allocation3 + $0x420] sm:$0xff] %v7803
  %7868 = vst [vmem:[#allocation3 + $0x438] sm:$0xff] %v7804
  %7869 = vst [vmem:[#allocation3 + $0x450] sm:$0xff] %v7805
  %7870 = vst [vmem:[#allocation3 + $0x468] sm:$0xff] %v7806
  %7871 = vst [vmem:[#allocation3 + $0x480] sm:$0xff] %v7807
  %7872 = vst [vmem:[#allocation3 + $0x498] sm:$0xff] %v7808
  %7873 = vst [vmem:[#allocation3 + $0x4b0] sm:$0xff] %v7809
  %7874 = vst [vmem:[#allocation3 + $0x4c8] sm:$0xff] %v7810
  %7875 = vst [vmem:[#allocation3 + $0x4e0] sm:$0xff] %v7811
  %7876 = vst [vmem:[#allocation3 + $0x4f8] sm:$0xff] %v7812
  %7877 = vst [vmem:[#allocation3 + $0x510] sm:$0xff] %v7813
  %7878 = vst [vmem:[#allocation3 + $0x528] sm:$0xff] %v7814
  %7879 = vst [vmem:[#allocation3 + $0x540] sm:$0xff] %v7815
  %7880 = vst [vmem:[#allocation3 + $0x558] sm:$0xff] %v7816
  %7881 = vst [vmem:[#allocation3 + $0x570] sm:$0xff] %v7817
  %7882 = vst [vmem:[#allocation3 + $0x588] sm:$0xff] %v7818
  %7883 = vst [vmem:[#allocation3 + $0x5a0] sm:$0xff] %v7819
  %7884 = vst [vmem:[#allocation3 + $0x5b8] sm:$0xff] %v7820
  %7885 = vst [vmem:[#allocation3 + $0x5d0] sm:$0xff] %v7821
  %7886 = vst [vmem:[#allocation3 + $0x5e8] sm:$0xff] %v7822
  %v7887 = vld [vmem:[%s3029 + $0x1] sm:$0xff]
  %v7888 = vld [vmem:[%s3029 + $0x9] sm:$0xff]
  %v7889 = vld [vmem:[%s3029 + $0x19] sm:$0xff]
  %v7890 = vld [vmem:[%s3029 + $0x21] sm:$0xff]
  %v7891 = vld [vmem:[%s3029 + $0x31] sm:$0xff]
  %v7892 = vld [vmem:[%s3029 + $0x39] sm:$0xff]
  %v7893 = vld [vmem:[%s3029 + $0x49] sm:$0xff]
  %v7894 = vld [vmem:[%s3029 + $0x51] sm:$0xff]
  %v7895 = vld [vmem:[%s3029 + $0x61] sm:$0xff]
  %v7896 = vld [vmem:[%s3029 + $0x69] sm:$0xff]
  %v7897 = vld [vmem:[%s3029 + $0x79] sm:$0xff]
  %v7898 = vld [vmem:[%s3029 + $0x81] sm:$0xff]
  %v7899 = vld [vmem:[%s3029 + $0x91] sm:$0xff]
  %v7900 = vld [vmem:[%s3029 + $0x99] sm:$0xff]
  %v7901 = vld [vmem:[%s3029 + $0xa9] sm:$0xff]
  %v7902 = vld [vmem:[%s3029 + $0xb1] sm:$0xff]
  %v7903 = vld [vmem:[%s3029 + $0xc1] sm:$0xff]
  %v7904 = vld [vmem:[%s3029 + $0xc9] sm:$0xff]
  %v7905 = vld [vmem:[%s3029 + $0xd9] sm:$0xff]
  %v7906 = vld [vmem:[%s3029 + $0xe1] sm:$0xff]
  %v7907 = vld [vmem:[%s3029 + $0xf1] sm:$0xff]
  %v7908 = vld [vmem:[%s3029 + $0xf9] sm:$0xff]
  %v7909 = vld [vmem:[%s3029 + $0x109] sm:$0xff]
  %v7910 = vld [vmem:[%s3029 + $0x111] sm:$0xff]
  %v7911 = vld [vmem:[%s3029 + $0x121] sm:$0xff]
  %v7912 = vld [vmem:[%s3029 + $0x129] sm:$0xff]
  %v7913 = vld [vmem:[%s3029 + $0x139] sm:$0xff]
  %v7914 = vld [vmem:[%s3029 + $0x141] sm:$0xff]
  %v7915 = vld [vmem:[%s3029 + $0x151] sm:$0xff]
  %v7916 = vld [vmem:[%s3029 + $0x159] sm:$0xff]
  %v7917 = vld [vmem:[%s3029 + $0x169] sm:$0xff]
  %v7918 = vld [vmem:[%s3029 + $0x171] sm:$0xff]
  %v7919 = vld [vmem:[%s3029 + $0x1b1] sm:$0xff]
  %v7920 = vld [vmem:[%s3029 + $0x1b9] sm:$0xff]
  %v7921 = vld [vmem:[%s3029 + $0x1c9] sm:$0xff]
  %v7922 = vld [vmem:[%s3029 + $0x1d1] sm:$0xff]
  %v7923 = vld [vmem:[%s3029 + $0x1e1] sm:$0xff]
  %v7924 = vld [vmem:[%s3029 + $0x1e9] sm:$0xff]
  %v7925 = vld [vmem:[%s3029 + $0x1f9] sm:$0xff]
  %v7926 = vld [vmem:[%s3029 + $0x201] sm:$0xff]
  %v7927 = vld [vmem:[%s3029 + $0x211] sm:$0xff]
  %v7928 = vld [vmem:[%s3029 + $0x219] sm:$0xff]
  %v7929 = vld [vmem:[%s3029 + $0x229] sm:$0xff]
  %v7930 = vld [vmem:[%s3029 + $0x231] sm:$0xff]
  %v7931 = vld [vmem:[%s3029 + $0x241] sm:$0xff]
  %v7932 = vld [vmem:[%s3029 + $0x249] sm:$0xff]
  %v7933 = vld [vmem:[%s3029 + $0x259] sm:$0xff]
  %v7934 = vld [vmem:[%s3029 + $0x261] sm:$0xff]
  %v7935 = vld [vmem:[%s3029 + $0x271] sm:$0xff]
  %v7936 = vld [vmem:[%s3029 + $0x279] sm:$0xff]
  %v7937 = vld [vmem:[%s3029 + $0x289] sm:$0xff]
  %v7938 = vld [vmem:[%s3029 + $0x291] sm:$0xff]
  %v7939 = vld [vmem:[%s3029 + $0x2a1] sm:$0xff]
  %v7940 = vld [vmem:[%s3029 + $0x2a9] sm:$0xff]
  %v7941 = vld [vmem:[%s3029 + $0x2b9] sm:$0xff]
  %v7942 = vld [vmem:[%s3029 + $0x2c1] sm:$0xff]
  %v7943 = vld [vmem:[%s3029 + $0x2d1] sm:$0xff]
  %v7944 = vld [vmem:[%s3029 + $0x2d9] sm:$0xff]
  %v7945 = vld [vmem:[%s3029 + $0x2e9] sm:$0xff]
  %v7946 = vld [vmem:[%s3029 + $0x2f1] sm:$0xff]
  %v7947 = vld [vmem:[%s3029 + $0x301] sm:$0xff]
  %v7948 = vld [vmem:[%s3029 + $0x309] sm:$0xff]
  %v7949 = vld [vmem:[%s3029 + $0x319] sm:$0xff]
  %v7950 = vld [vmem:[%s3029 + $0x321] sm:$0xff]
  %7951 = vst [vmem:[#allocation3 + $0x8] sm:$0xff] %v7887
  %7952 = vst [vmem:[#allocation3 + $0x20] sm:$0xff] %v7888
  %7953 = vst [vmem:[#allocation3 + $0x38] sm:$0xff] %v7889
  %7954 = vst [vmem:[#allocation3 + $0x50] sm:$0xff] %v7890
  %7955 = vst [vmem:[#allocation3 + $0x68] sm:$0xff] %v7891
  %7956 = vst [vmem:[#allocation3 + $0x80] sm:$0xff] %v7892
  %7957 = vst [vmem:[#allocation3 + $0x98] sm:$0xff] %v7893
  %7958 = vst [vmem:[#allocation3 + $0xb0] sm:$0xff] %v7894
  %7959 = vst [vmem:[#allocation3 + $0xc8] sm:$0xff] %v7895
  %7960 = vst [vmem:[#allocation3 + $0xe0] sm:$0xff] %v7896
  %7961 = vst [vmem:[#allocation3 + $0xf8] sm:$0xff] %v7897
  %7962 = vst [vmem:[#allocation3 + $0x110] sm:$0xff] %v7898
  %7963 = vst [vmem:[#allocation3 + $0x128] sm:$0xff] %v7899
  %7964 = vst [vmem:[#allocation3 + $0x140] sm:$0xff] %v7900
  %7965 = vst [vmem:[#allocation3 + $0x158] sm:$0xff] %v7901
  %7966 = vst [vmem:[#allocation3 + $0x170] sm:$0xff] %v7902
  %7967 = vst [vmem:[#allocation3 + $0x188] sm:$0xff] %v7903
  %7968 = vst [vmem:[#allocation3 + $0x1a0] sm:$0xff] %v7904
  %7969 = vst [vmem:[#allocation3 + $0x1b8] sm:$0xff] %v7905
  %7970 = vst [vmem:[#allocation3 + $0x1d0] sm:$0xff] %v7906
  %7971 = vst [vmem:[#allocation3 + $0x1e8] sm:$0xff] %v7907
  %7972 = vst [vmem:[#allocation3 + $0x200] sm:$0xff] %v7908
  %7973 = vst [vmem:[#allocation3 + $0x218] sm:$0xff] %v7909
  %7974 = vst [vmem:[#allocation3 + $0x230] sm:$0xff] %v7910
  %7975 = vst [vmem:[#allocation3 + $0x248] sm:$0xff] %v7911
  %7976 = vst [vmem:[#allocation3 + $0x260] sm:$0xff] %v7912
  %7977 = vst [vmem:[#allocation3 + $0x278] sm:$0xff] %v7913
  %7978 = vst [vmem:[#allocation3 + $0x290] sm:$0xff] %v7914
  %7979 = vst [vmem:[#allocation3 + $0x2a8] sm:$0xff] %v7915
  %7980 = vst [vmem:[#allocation3 + $0x2c0] sm:$0xff] %v7916
  %7981 = vst [vmem:[#allocation3 + $0x2d8] sm:$0xff] %v7917
  %7982 = vst [vmem:[#allocation3 + $0x2f0] sm:$0xff] %v7918
  %7983 = vst [vmem:[#allocation3 + $0x308] sm:$0xff] %v7919
  %7984 = vst [vmem:[#allocation3 + $0x320] sm:$0xff] %v7920
  %7985 = vst [vmem:[#allocation3 + $0x338] sm:$0xff] %v7921
  %7986 = vst [vmem:[#allocation3 + $0x350] sm:$0xff] %v7922
  %7987 = vst [vmem:[#allocation3 + $0x368] sm:$0xff] %v7923
  %7988 = vst [vmem:[#allocation3 + $0x380] sm:$0xff] %v7924
  %7989 = vst [vmem:[#allocation3 + $0x398] sm:$0xff] %v7925
  %7990 = vst [vmem:[#allocation3 + $0x3b0] sm:$0xff] %v7926
  %7991 = vst [vmem:[#allocation3 + $0x3c8] sm:$0xff] %v7927
  %7992 = vst [vmem:[#allocation3 + $0x3e0] sm:$0xff] %v7928
  %7993 = vst [vmem:[#allocation3 + $0x3f8] sm:$0xff] %v7929
  %7994 = vst [vmem:[#allocation3 + $0x410] sm:$0xff] %v7930
  %7995 = vst [vmem:[#allocation3 + $0x428] sm:$0xff] %v7931
  %7996 = vst [vmem:[#allocation3 + $0x440] sm:$0xff] %v7932
  %7997 = vst [vmem:[#allocation3 + $0x458] sm:$0xff] %v7933
  %7998 = vst [vmem:[#allocation3 + $0x470] sm:$0xff] %v7934
  %7999 = vst [vmem:[#allocation3 + $0x488] sm:$0xff] %v7935
  %8000 = vst [vmem:[#allocation3 + $0x4a0] sm:$0xff] %v7936
  %8001 = vst [vmem:[#allocation3 + $0x4b8] sm:$0xff] %v7937
  %8002 = vst [vmem:[#allocation3 + $0x4d0] sm:$0xff] %v7938
  %8003 = vst [vmem:[#allocation3 + $0x4e8] sm:$0xff] %v7939
  %8004 = vst [vmem:[#allocation3 + $0x500] sm:$0xff] %v7940
  %8005 = vst [vmem:[#allocation3 + $0x518] sm:$0xff] %v7941
  %8006 = vst [vmem:[#allocation3 + $0x530] sm:$0xff] %v7942
  %8007 = vst [vmem:[#allocation3 + $0x548] sm:$0xff] %v7943
  %8008 = vst [vmem:[#allocation3 + $0x560] sm:$0xff] %v7944
  %8009 = vst [vmem:[#allocation3 + $0x578] sm:$0xff] %v7945
  %8010 = vst [vmem:[#allocation3 + $0x590] sm:$0xff] %v7946
  %8011 = vst [vmem:[#allocation3 + $0x5a8] sm:$0xff] %v7947
  %8012 = vst [vmem:[#allocation3 + $0x5c0] sm:$0xff] %v7948
  %8013 = vst [vmem:[#allocation3 + $0x5d8] sm:$0xff] %v7949
  %8014 = vst [vmem:[#allocation3 + $0x5f0] sm:$0xff] %v7950
  %v8015 = vld [vmem:[%s3029 + $0x2] sm:$0xff]
  %v8016 = vld [vmem:[%s3029 + $0xa] sm:$0xff]
  %v8017 = vld [vmem:[%s3029 + $0x1a] sm:$0xff]
  %v8018 = vld [vmem:[%s3029 + $0x22] sm:$0xff]
  %v8019 = vld [vmem:[%s3029 + $0x32] sm:$0xff]
  %v8020 = vld [vmem:[%s3029 + $0x3a] sm:$0xff]
  %v8021 = vld [vmem:[%s3029 + $0x4a] sm:$0xff]
  %v8022 = vld [vmem:[%s3029 + $0x52] sm:$0xff]
  %v8023 = vld [vmem:[%s3029 + $0x62] sm:$0xff]
  %v8024 = vld [vmem:[%s3029 + $0x6a] sm:$0xff]
  %v8025 = vld [vmem:[%s3029 + $0x7a] sm:$0xff]
  %v8026 = vld [vmem:[%s3029 + $0x82] sm:$0xff]
  %v8027 = vld [vmem:[%s3029 + $0x92] sm:$0xff]
  %v8028 = vld [vmem:[%s3029 + $0x9a] sm:$0xff]
  %v8029 = vld [vmem:[%s3029 + $0xaa] sm:$0xff]
  %v8030 = vld [vmem:[%s3029 + $0xb2] sm:$0xff]
  %v8031 = vld [vmem:[%s3029 + $0xc2] sm:$0xff]
  %v8032 = vld [vmem:[%s3029 + $0xca] sm:$0xff]
  %v8033 = vld [vmem:[%s3029 + $0xda] sm:$0xff]
  %v8034 = vld [vmem:[%s3029 + $0xe2] sm:$0xff]
  %v8035 = vld [vmem:[%s3029 + $0xf2] sm:$0xff]
  %v8036 = vld [vmem:[%s3029 + $0xfa] sm:$0xff]
  %v8037 = vld [vmem:[%s3029 + $0x10a] sm:$0xff]
  %v8038 = vld [vmem:[%s3029 + $0x112] sm:$0xff]
  %v8039 = vld [vmem:[%s3029 + $0x122] sm:$0xff]
  %v8040 = vld [vmem:[%s3029 + $0x12a] sm:$0xff]
  %v8041 = vld [vmem:[%s3029 + $0x13a] sm:$0xff]
  %v8042 = vld [vmem:[%s3029 + $0x142] sm:$0xff]
  %v8043 = vld [vmem:[%s3029 + $0x152] sm:$0xff]
  %v8044 = vld [vmem:[%s3029 + $0x15a] sm:$0xff]
  %v8045 = vld [vmem:[%s3029 + $0x16a] sm:$0xff]
  %v8046 = vld [vmem:[%s3029 + $0x172] sm:$0xff]
  %v8047 = vld [vmem:[%s3029 + $0x1b2] sm:$0xff]
  %v8048 = vld [vmem:[%s3029 + $0x1ba] sm:$0xff]
  %v8049 = vld [vmem:[%s3029 + $0x1ca] sm:$0xff]
  %v8050 = vld [vmem:[%s3029 + $0x1d2] sm:$0xff]
  %v8051 = vld [vmem:[%s3029 + $0x1e2] sm:$0xff]
  %v8052 = vld [vmem:[%s3029 + $0x1ea] sm:$0xff]
  %v8053 = vld [vmem:[%s3029 + $0x1fa] sm:$0xff]
  %v8054 = vld [vmem:[%s3029 + $0x202] sm:$0xff]
  %v8055 = vld [vmem:[%s3029 + $0x212] sm:$0xff]
  %v8056 = vld [vmem:[%s3029 + $0x21a] sm:$0xff]
  %v8057 = vld [vmem:[%s3029 + $0x22a] sm:$0xff]
  %v8058 = vld [vmem:[%s3029 + $0x232] sm:$0xff]
  %v8059 = vld [vmem:[%s3029 + $0x242] sm:$0xff]
  %v8060 = vld [vmem:[%s3029 + $0x24a] sm:$0xff]
  %v8061 = vld [vmem:[%s3029 + $0x25a] sm:$0xff]
  %v8062 = vld [vmem:[%s3029 + $0x262] sm:$0xff]
  %v8063 = vld [vmem:[%s3029 + $0x272] sm:$0xff]
  %v8064 = vld [vmem:[%s3029 + $0x27a] sm:$0xff]
  %v8065 = vld [vmem:[%s3029 + $0x28a] sm:$0xff]
  %v8066 = vld [vmem:[%s3029 + $0x292] sm:$0xff]
  %v8067 = vld [vmem:[%s3029 + $0x2a2] sm:$0xff]
  %v8068 = vld [vmem:[%s3029 + $0x2aa] sm:$0xff]
  %v8069 = vld [vmem:[%s3029 + $0x2ba] sm:$0xff]
  %v8070 = vld [vmem:[%s3029 + $0x2c2] sm:$0xff]
  %v8071 = vld [vmem:[%s3029 + $0x2d2] sm:$0xff]
  %v8072 = vld [vmem:[%s3029 + $0x2da] sm:$0xff]
  %v8073 = vld [vmem:[%s3029 + $0x2ea] sm:$0xff]
  %v8074 = vld [vmem:[%s3029 + $0x2f2] sm:$0xff]
  %v8075 = vld [vmem:[%s3029 + $0x302] sm:$0xff]
  %v8076 = vld [vmem:[%s3029 + $0x30a] sm:$0xff]
  %v8077 = vld [vmem:[%s3029 + $0x31a] sm:$0xff]
  %v8078 = vld [vmem:[%s3029 + $0x322] sm:$0xff]
  %8079 = vst [vmem:[#allocation3 + $0x10] sm:$0xff] %v8015
  %8080 = vst [vmem:[#allocation3 + $0x28] sm:$0xff] %v8016
  %8081 = vst [vmem:[#allocation3 + $0x40] sm:$0xff] %v8017
  %8082 = vst [vmem:[#allocation3 + $0x58] sm:$0xff] %v8018
  %8083 = vst [vmem:[#allocation3 + $0x70] sm:$0xff] %v8019
  %8084 = vst [vmem:[#allocation3 + $0x88] sm:$0xff] %v8020
  %8085 = vst [vmem:[#allocation3 + $0xa0] sm:$0xff] %v8021
  %8086 = vst [vmem:[#allocation3 + $0xb8] sm:$0xff] %v8022
  %8087 = vst [vmem:[#allocation3 + $0xd0] sm:$0xff] %v8023
  %8088 = vst [vmem:[#allocation3 + $0xe8] sm:$0xff] %v8024
  %8089 = vst [vmem:[#allocation3 + $0x100] sm:$0xff] %v8025
  %8090 = vst [vmem:[#allocation3 + $0x118] sm:$0xff] %v8026
  %8091 = vst [vmem:[#allocation3 + $0x130] sm:$0xff] %v8027
  %8092 = vst [vmem:[#allocation3 + $0x148] sm:$0xff] %v8028
  %8093 = vst [vmem:[#allocation3 + $0x160] sm:$0xff] %v8029
  %8094 = vst [vmem:[#allocation3 + $0x178] sm:$0xff] %v8030
  %8095 = vst [vmem:[#allocation3 + $0x190] sm:$0xff] %v8031
  %8096 = vst [vmem:[#allocation3 + $0x1a8] sm:$0xff] %v8032
  %8097 = vst [vmem:[#allocation3 + $0x1c0] sm:$0xff] %v8033
  %8098 = vst [vmem:[#allocation3 + $0x1d8] sm:$0xff] %v8034
  %8099 = vst [vmem:[#allocation3 + $0x1f0] sm:$0xff] %v8035
  %8100 = vst [vmem:[#allocation3 + $0x208] sm:$0xff] %v8036
  %8101 = vst [vmem:[#allocation3 + $0x220] sm:$0xff] %v8037
  %8102 = vst [vmem:[#allocation3 + $0x238] sm:$0xff] %v8038
  %8103 = vst [vmem:[#allocation3 + $0x250] sm:$0xff] %v8039
  %8104 = vst [vmem:[#allocation3 + $0x268] sm:$0xff] %v8040
  %8105 = vst [vmem:[#allocation3 + $0x280] sm:$0xff] %v8041
  %8106 = vst [vmem:[#allocation3 + $0x298] sm:$0xff] %v8042
  %8107 = vst [vmem:[#allocation3 + $0x2b0] sm:$0xff] %v8043
  %8108 = vst [vmem:[#allocation3 + $0x2c8] sm:$0xff] %v8044
  %8109 = vst [vmem:[#allocation3 + $0x2e0] sm:$0xff] %v8045
  %8110 = vst [vmem:[#allocation3 + $0x2f8] sm:$0xff] %v8046
  %8111 = vst [vmem:[#allocation3 + $0x310] sm:$0xff] %v8047
  %8112 = vst [vmem:[#allocation3 + $0x328] sm:$0xff] %v8048
  %8113 = vst [vmem:[#allocation3 + $0x340] sm:$0xff] %v8049
  %8114 = vst [vmem:[#allocation3 + $0x358] sm:$0xff] %v8050
  %8115 = vst [vmem:[#allocation3 + $0x370] sm:$0xff] %v8051
  %8116 = vst [vmem:[#allocation3 + $0x388] sm:$0xff] %v8052
  %8117 = vst [vmem:[#allocation3 + $0x3a0] sm:$0xff] %v8053
  %8118 = vst [vmem:[#allocation3 + $0x3b8] sm:$0xff] %v8054
  %8119 = vst [vmem:[#allocation3 + $0x3d0] sm:$0xff] %v8055
  %8120 = vst [vmem:[#allocation3 + $0x3e8] sm:$0xff] %v8056
  %8121 = vst [vmem:[#allocation3 + $0x400] sm:$0xff] %v8057
  %8122 = vst [vmem:[#allocation3 + $0x418] sm:$0xff] %v8058
  %8123 = vst [vmem:[#allocation3 + $0x430] sm:$0xff] %v8059
  %8124 = vst [vmem:[#allocation3 + $0x448] sm:$0xff] %v8060
  %8125 = vst [vmem:[#allocation3 + $0x460] sm:$0xff] %v8061
  %8126 = vst [vmem:[#allocation3 + $0x478] sm:$0xff] %v8062
  %8127 = vst [vmem:[#allocation3 + $0x490] sm:$0xff] %v8063
  %8128 = vst [vmem:[#allocation3 + $0x4a8] sm:$0xff] %v8064
  %8129 = vst [vmem:[#allocation3 + $0x4c0] sm:$0xff] %v8065
  %8130 = vst [vmem:[#allocation3 + $0x4d8] sm:$0xff] %v8066
  %8131 = vst [vmem:[#allocation3 + $0x4f0] sm:$0xff] %v8067
  %8132 = vst [vmem:[#allocation3 + $0x508] sm:$0xff] %v8068
  %8133 = vst [vmem:[#allocation3 + $0x520] sm:$0xff] %v8069
  %8134 = vst [vmem:[#allocation3 + $0x538] sm:$0xff] %v8070
  %8135 = vst [vmem:[#allocation3 + $0x550] sm:$0xff] %v8071
  %8136 = vst [vmem:[#allocation3 + $0x568] sm:$0xff] %v8072
  %8137 = vst [vmem:[#allocation3 + $0x580] sm:$0xff] %v8073
  %8138 = vst [vmem:[#allocation3 + $0x598] sm:$0xff] %v8074
  %8139 = vst [vmem:[#allocation3 + $0x5b0] sm:$0xff] %v8075
  %8140 = vst [vmem:[#allocation3 + $0x5c8] sm:$0xff] %v8076
  %8141 = vst [vmem:[#allocation3 + $0x5e0] sm:$0xff] %v8077
  %8142 = vst [vmem:[#allocation3 + $0x5f8] sm:$0xff] %v8078
  %v8143 = vld [vmem:[#allocation3] sm:$0xff]
  %v8144 = vld [vmem:[#allocation3 + $0x8] sm:$0xff]
  %v8145 = vld [vmem:[#allocation3 + $0x10] sm:$0xff]
  %v8146 = vld [vmem:[#allocation3 + $0x18] sm:$0xff]
  %v8147 = vld [vmem:[#allocation3 + $0x20] sm:$0xff]
  %v8148 = vld [vmem:[#allocation3 + $0x28] sm:$0xff]
  %v8149 = vld [vmem:[#allocation3 + $0x30] sm:$0xff]
  %v8150 = vld [vmem:[#allocation3 + $0x38] sm:$0xff]
  %v8151 = vld [vmem:[#allocation3 + $0x40] sm:$0xff]
  %v8152 = vld [vmem:[#allocation3 + $0x48] sm:$0xff]
  %v8153 = vld [vmem:[#allocation3 + $0x50] sm:$0xff]
  %v8154 = vld [vmem:[#allocation3 + $0x58] sm:$0xff]
  %v8155 = vld [vmem:[#allocation3 + $0x60] sm:$0xff]
  %v8156 = vld [vmem:[#allocation3 + $0x68] sm:$0xff]
  %v8157 = vld [vmem:[#allocation3 + $0x70] sm:$0xff]
  %v8158 = vld [vmem:[#allocation3 + $0x78] sm:$0xff]
  %v8159 = vld [vmem:[#allocation3 + $0x80] sm:$0xff]
  %v8160 = vld [vmem:[#allocation3 + $0x88] sm:$0xff]
  %v8161 = vld [vmem:[#allocation3 + $0x90] sm:$0xff]
  %v8162 = vld [vmem:[#allocation3 + $0x98] sm:$0xff]
  %v8163 = vld [vmem:[#allocation3 + $0xa0] sm:$0xff]
  %v8164 = vld [vmem:[#allocation3 + $0xa8] sm:$0xff]
  %v8165 = vld [vmem:[#allocation3 + $0xb0] sm:$0xff]
  %v8166 = vld [vmem:[#allocation3 + $0xb8] sm:$0xff]
  %v8167 = vld [vmem:[#allocation3 + $0xc0] sm:$0xff]
  %v8168 = vld [vmem:[#allocation3 + $0xc8] sm:$0xff]
  %v8169 = vld [vmem:[#allocation3 + $0xd0] sm:$0xff]
  %v8170 = vld [vmem:[#allocation3 + $0xd8] sm:$0xff]
  %v8171 = vld [vmem:[#allocation3 + $0xe0] sm:$0xff]
  %v8172 = vld [vmem:[#allocation3 + $0xe8] sm:$0xff]
  %v8173 = vld [vmem:[#allocation3 + $0xf0] sm:$0xff]
  %v8174 = vld [vmem:[#allocation3 + $0xf8] sm:$0xff]
  %v8175 = vld [vmem:[#allocation3 + $0x100] sm:$0xff]
  %v8176 = vld [vmem:[#allocation3 + $0x108] sm:$0xff]
  %v8177 = vld [vmem:[#allocation3 + $0x110] sm:$0xff]
  %v8178 = vld [vmem:[#allocation3 + $0x118] sm:$0xff]
  %v8179 = vld [vmem:[#allocation3 + $0x120] sm:$0xff]
  %v8180 = vld [vmem:[#allocation3 + $0x128] sm:$0xff]
  %v8181 = vld [vmem:[#allocation3 + $0x130] sm:$0xff]
  %v8182 = vld [vmem:[#allocation3 + $0x138] sm:$0xff]
  %v8183 = vld [vmem:[#allocation3 + $0x140] sm:$0xff]
  %v8184 = vld [vmem:[#allocation3 + $0x148] sm:$0xff]
  %v8185 = vld [vmem:[#allocation3 + $0x150] sm:$0xff]
  %v8186 = vld [vmem:[#allocation3 + $0x158] sm:$0xff]
  %v8187 = vld [vmem:[#allocation3 + $0x160] sm:$0xff]
  %v8188 = vld [vmem:[#allocation3 + $0x168] sm:$0xff]
  %v8189 = vld [vmem:[#allocation3 + $0x170] sm:$0xff]
  %v8190 = vld [vmem:[#allocation3 + $0x178] sm:$0xff]
  %v8191 = vld [vmem:[#allocation3 + $0x180] sm:$0xff]
  %v8192 = vld [vmem:[#allocation3 + $0x188] sm:$0xff]
  %v8193 = vld [vmem:[#allocation3 + $0x190] sm:$0xff]
  %v8194 = vld [vmem:[#allocation3 + $0x198] sm:$0xff]
  %v8195 = vld [vmem:[#allocation3 + $0x1a0] sm:$0xff]
  %v8196 = vld [vmem:[#allocation3 + $0x1a8] sm:$0xff]
  %v8197 = vld [vmem:[#allocation3 + $0x1b0] sm:$0xff]
  %v8198 = vld [vmem:[#allocation3 + $0x1b8] sm:$0xff]
  %v8199 = vld [vmem:[#allocation3 + $0x1c0] sm:$0xff]
  %v8200 = vld [vmem:[#allocation3 + $0x1c8] sm:$0xff]
  %v8201 = vld [vmem:[#allocation3 + $0x1d0] sm:$0xff]
  %v8202 = vld [vmem:[#allocation3 + $0x1d8] sm:$0xff]
  %v8203 = vld [vmem:[#allocation3 + $0x1e0] sm:$0xff]
  %v8204 = vld [vmem:[#allocation3 + $0x1e8] sm:$0xff]
  %v8205 = vld [vmem:[#allocation3 + $0x1f0] sm:$0xff]
  %v8206 = vld [vmem:[#allocation3 + $0x1f8] sm:$0xff]
  %v8207 = vld [vmem:[#allocation3 + $0x200] sm:$0xff]
  %v8208 = vld [vmem:[#allocation3 + $0x208] sm:$0xff]
  %v8209 = vld [vmem:[#allocation3 + $0x210] sm:$0xff]
  %v8210 = vld [vmem:[#allocation3 + $0x218] sm:$0xff]
  %v8211 = vld [vmem:[#allocation3 + $0x220] sm:$0xff]
  %v8212 = vld [vmem:[#allocation3 + $0x228] sm:$0xff]
  %v8213 = vld [vmem:[#allocation3 + $0x230] sm:$0xff]
  %v8214 = vld [vmem:[#allocation3 + $0x238] sm:$0xff]
  %v8215 = vld [vmem:[#allocation3 + $0x240] sm:$0xff]
  %v8216 = vld [vmem:[#allocation3 + $0x248] sm:$0xff]
  %v8217 = vld [vmem:[#allocation3 + $0x250] sm:$0xff]
  %v8218 = vld [vmem:[#allocation3 + $0x258] sm:$0xff]
  %v8219 = vld [vmem:[#allocation3 + $0x260] sm:$0xff]
  %v8220 = vld [vmem:[#allocation3 + $0x268] sm:$0xff]
  %v8221 = vld [vmem:[#allocation3 + $0x270] sm:$0xff]
  %v8222 = vld [vmem:[#allocation3 + $0x278] sm:$0xff]
  %v8223 = vld [vmem:[#allocation3 + $0x280] sm:$0xff]
  %v8224 = vld [vmem:[#allocation3 + $0x288] sm:$0xff]
  %v8225 = vld [vmem:[#allocation3 + $0x290] sm:$0xff]
  %v8226 = vld [vmem:[#allocation3 + $0x298] sm:$0xff]
  %v8227 = vld [vmem:[#allocation3 + $0x2a0] sm:$0xff]
  %v8228 = vld [vmem:[#allocation3 + $0x2a8] sm:$0xff]
  %v8229 = vld [vmem:[#allocation3 + $0x2b0] sm:$0xff]
  %v8230 = vld [vmem:[#allocation3 + $0x2b8] sm:$0xff]
  %v8231 = vld [vmem:[#allocation3 + $0x2c0] sm:$0xff]
  %v8232 = vld [vmem:[#allocation3 + $0x2c8] sm:$0xff]
  %v8233 = vld [vmem:[#allocation3 + $0x2d0] sm:$0xff]
  %v8234 = vld [vmem:[#allocation3 + $0x2d8] sm:$0xff]
  %v8235 = vld [vmem:[#allocation3 + $0x2e0] sm:$0xff]
  %v8236 = vld [vmem:[#allocation3 + $0x2e8] sm:$0xff]
  %v8237 = vld [vmem:[#allocation3 + $0x2f0] sm:$0xff]
  %v8238 = vld [vmem:[#allocation3 + $0x2f8] sm:$0xff]
  %v8239 = vld [vmem:[#allocation3 + $0x300] sm:$0xff]
  %v8240 = vld [vmem:[#allocation3 + $0x308] sm:$0xff]
  %v8241 = vld [vmem:[#allocation3 + $0x310] sm:$0xff]
  %v8242 = vld [vmem:[#allocation3 + $0x318] sm:$0xff]
  %v8243 = vld [vmem:[#allocation3 + $0x320] sm:$0xff]
  %v8244 = vld [vmem:[#allocation3 + $0x328] sm:$0xff]
  %v8245 = vld [vmem:[#allocation3 + $0x330] sm:$0xff]
  %v8246 = vld [vmem:[#allocation3 + $0x338] sm:$0xff]
  %v8247 = vld [vmem:[#allocation3 + $0x340] sm:$0xff]
  %v8248 = vld [vmem:[#allocation3 + $0x348] sm:$0xff]
  %v8249 = vld [vmem:[#allocation3 + $0x350] sm:$0xff]
  %v8250 = vld [vmem:[#allocation3 + $0x358] sm:$0xff]
  %v8251 = vld [vmem:[#allocation3 + $0x360] sm:$0xff]
  %v8252 = vld [vmem:[#allocation3 + $0x368] sm:$0xff]
  %v8253 = vld [vmem:[#allocation3 + $0x370] sm:$0xff]
  %v8254 = vld [vmem:[#allocation3 + $0x378] sm:$0xff]
  %v8255 = vld [vmem:[#allocation3 + $0x380] sm:$0xff]
  %v8256 = vld [vmem:[#allocation3 + $0x388] sm:$0xff]
  %v8257 = vld [vmem:[#allocation3 + $0x390] sm:$0xff]
  %v8258 = vld [vmem:[#allocation3 + $0x398] sm:$0xff]
  %v8259 = vld [vmem:[#allocation3 + $0x3a0] sm:$0xff]
  %v8260 = vld [vmem:[#allocation3 + $0x3a8] sm:$0xff]
  %v8261 = vld [vmem:[#allocation3 + $0x3b0] sm:$0xff]
  %v8262 = vld [vmem:[#allocation3 + $0x3b8] sm:$0xff]
  %v8263 = vld [vmem:[#allocation3 + $0x3c0] sm:$0xff]
  %v8264 = vld [vmem:[#allocation3 + $0x3c8] sm:$0xff]
  %v8265 = vld [vmem:[#allocation3 + $0x3d0] sm:$0xff]
  %v8266 = vld [vmem:[#allocation3 + $0x3d8] sm:$0xff]
  %v8267 = vld [vmem:[#allocation3 + $0x3e0] sm:$0xff]
  %v8268 = vld [vmem:[#allocation3 + $0x3e8] sm:$0xff]
  %v8269 = vld [vmem:[#allocation3 + $0x3f0] sm:$0xff]
  %v8270 = vld [vmem:[#allocation3 + $0x3f8] sm:$0xff]
  %v8271 = vld [vmem:[#allocation3 + $0x400] sm:$0xff]
  %v8272 = vld [vmem:[#allocation3 + $0x408] sm:$0xff]
  %v8273 = vld [vmem:[#allocation3 + $0x410] sm:$0xff]
  %v8274 = vld [vmem:[#allocation3 + $0x418] sm:$0xff]
  %v8275 = vld [vmem:[#allocation3 + $0x420] sm:$0xff]
  %v8276 = vld [vmem:[#allocation3 + $0x428] sm:$0xff]
  %v8277 = vld [vmem:[#allocation3 + $0x430] sm:$0xff]
  %v8278 = vld [vmem:[#allocation3 + $0x438] sm:$0xff]
  %v8279 = vld [vmem:[#allocation3 + $0x440] sm:$0xff]
  %v8280 = vld [vmem:[#allocation3 + $0x448] sm:$0xff]
  %v8281 = vld [vmem:[#allocation3 + $0x450] sm:$0xff]
  %v8282 = vld [vmem:[#allocation3 + $0x458] sm:$0xff]
  %v8283 = vld [vmem:[#allocation3 + $0x460] sm:$0xff]
  %v8284 = vld [vmem:[#allocation3 + $0x468] sm:$0xff]
  %v8285 = vld [vmem:[#allocation3 + $0x470] sm:$0xff]
  %v8286 = vld [vmem:[#allocation3 + $0x478] sm:$0xff]
  %v8287 = vld [vmem:[#allocation3 + $0x480] sm:$0xff]
  %v8288 = vld [vmem:[#allocation3 + $0x488] sm:$0xff]
  %v8289 = vld [vmem:[#allocation3 + $0x490] sm:$0xff]
  %v8290 = vld [vmem:[#allocation3 + $0x498] sm:$0xff]
  %v8291 = vld [vmem:[#allocation3 + $0x4a0] sm:$0xff]
  %v8292 = vld [vmem:[#allocation3 + $0x4a8] sm:$0xff]
  %v8293 = vld [vmem:[#allocation3 + $0x4b0] sm:$0xff]
  %v8294 = vld [vmem:[#allocation3 + $0x4b8] sm:$0xff]
  %v8295 = vld [vmem:[#allocation3 + $0x4c0] sm:$0xff]
  %v8296 = vld [vmem:[#allocation3 + $0x4c8] sm:$0xff]
  %v8297 = vld [vmem:[#allocation3 + $0x4d0] sm:$0xff]
  %v8298 = vld [vmem:[#allocation3 + $0x4d8] sm:$0xff]
  %v8299 = vld [vmem:[#allocation3 + $0x4e0] sm:$0xff]
  %v8300 = vld [vmem:[#allocation3 + $0x4e8] sm:$0xff]
  %v8301 = vld [vmem:[#allocation3 + $0x4f0] sm:$0xff]
  %v8302 = vld [vmem:[#allocation3 + $0x4f8] sm:$0xff]
  %v8303 = vld [vmem:[#allocation3 + $0x500] sm:$0xff]
  %v8304 = vld [vmem:[#allocation3 + $0x508] sm:$0xff]
  %v8305 = vld [vmem:[#allocation3 + $0x510] sm:$0xff]
  %v8306 = vld [vmem:[#allocation3 + $0x518] sm:$0xff]
  %v8307 = vld [vmem:[#allocation3 + $0x520] sm:$0xff]
  %v8308 = vld [vmem:[#allocation3 + $0x528] sm:$0xff]
  %v8309 = vld [vmem:[#allocation3 + $0x530] sm:$0xff]
  %v8310 = vld [vmem:[#allocation3 + $0x538] sm:$0xff]
  %v8311 = vld [vmem:[#allocation3 + $0x540] sm:$0xff]
  %v8312 = vld [vmem:[#allocation3 + $0x548] sm:$0xff]
  %v8313 = vld [vmem:[#allocation3 + $0x550] sm:$0xff]
  %v8314 = vld [vmem:[#allocation3 + $0x558] sm:$0xff]
  %v8315 = vld [vmem:[#allocation3 + $0x560] sm:$0xff]
  %v8316 = vld [vmem:[#allocation3 + $0x568] sm:$0xff]
  %v8317 = vld [vmem:[#allocation3 + $0x570] sm:$0xff]
  %v8318 = vld [vmem:[#allocation3 + $0x578] sm:$0xff]
  %v8319 = vld [vmem:[#allocation3 + $0x580] sm:$0xff]
  %v8320 = vld [vmem:[#allocation3 + $0x588] sm:$0xff]
  %v8321 = vld [vmem:[#allocation3 + $0x590] sm:$0xff]
  %v8322 = vld [vmem:[#allocation3 + $0x598] sm:$0xff]
  %v8323 = vld [vmem:[#allocation3 + $0x5a0] sm:$0xff]
  %v8324 = vld [vmem:[#allocation3 + $0x5a8] sm:$0xff]
  %v8325 = vld [vmem:[#allocation3 + $0x5b0] sm:$0xff]
  %v8326 = vld [vmem:[#allocation3 + $0x5b8] sm:$0xff]
  %v8327 = vld [vmem:[#allocation3 + $0x5c0] sm:$0xff]
  %v8328 = vld [vmem:[#allocation3 + $0x5c8] sm:$0xff]
  %v8329 = vld [vmem:[#allocation3 + $0x5d0] sm:$0xff]
  %v8330 = vld [vmem:[#allocation3 + $0x5d8] sm:$0xff]
  %v8331 = vld [vmem:[#allocation3 + $0x5e0] sm:$0xff]
  %v8332 = vld [vmem:[#allocation3 + $0x5e8] sm:$0xff]
  %v8333 = vld [vmem:[#allocation3 + $0x5f0] sm:$0xff]
  %v8334 = vld [vmem:[#allocation3 + $0x5f8] sm:$0xff]
  %s8335 = scalar_lea.vmem %s4, 768
  %v8336 = vld [vmem:[%s8335] sm:$0xff]
  %v8337 = vld [vmem:[%s8335 + $0x8] sm:$0xff]
  %v8338 = vld [vmem:[%s8335 + $0x10] sm:$0xff]
  %v8339 = vld [vmem:[%s8335 + $0x18] sm:$0xff]
  %v8340 = vld [vmem:[%s8335 + $0x20] sm:$0xff]
  %v8341 = vld [vmem:[%s8335 + $0x28] sm:$0xff]
  %v8342 = vld [vmem:[%s8335 + $0x30] sm:$0xff]
  %v8343 = vld [vmem:[%s8335 + $0x38] sm:$0xff]
  %v8344 = vld [vmem:[%s8335 + $0x40] sm:$0xff]
  %v8345 = vld [vmem:[%s8335 + $0x48] sm:$0xff]
  %v8346 = vld [vmem:[%s8335 + $0x50] sm:$0xff]
  %v8347 = vld [vmem:[%s8335 + $0x58] sm:$0xff]
  %v8348 = vld [vmem:[%s8335 + $0x60] sm:$0xff]
  %v8349 = vld [vmem:[%s8335 + $0x68] sm:$0xff]
  %v8350 = vld [vmem:[%s8335 + $0x70] sm:$0xff]
  %v8351 = vld [vmem:[%s8335 + $0x78] sm:$0xff]
  %v8352 = vld [vmem:[%s8335 + $0x80] sm:$0xff]
  %v8353 = vld [vmem:[%s8335 + $0x88] sm:$0xff]
  %v8354 = vld [vmem:[%s8335 + $0x90] sm:$0xff]
  %v8355 = vld [vmem:[%s8335 + $0x98] sm:$0xff]
  %v8356 = vld [vmem:[%s8335 + $0xa0] sm:$0xff]
  %v8357 = vld [vmem:[%s8335 + $0xa8] sm:$0xff]
  %v8358 = vld [vmem:[%s8335 + $0xb0] sm:$0xff]
  %v8359 = vld [vmem:[%s8335 + $0xb8] sm:$0xff]
  %v8360 = vld [vmem:[%s8335 + $0xc0] sm:$0xff]
  %v8361 = vld [vmem:[%s8335 + $0xc8] sm:$0xff]
  %v8362 = vld [vmem:[%s8335 + $0xd0] sm:$0xff]
  %v8363 = vld [vmem:[%s8335 + $0xd8] sm:$0xff]
  %v8364 = vld [vmem:[%s8335 + $0xe0] sm:$0xff]
  %v8365 = vld [vmem:[%s8335 + $0xe8] sm:$0xff]
  %v8366 = vld [vmem:[%s8335 + $0xf0] sm:$0xff]
  %v8367 = vld [vmem:[%s8335 + $0xf8] sm:$0xff]
  %v8368 = vld [vmem:[%s8335 + $0x100] sm:$0xff]
  %v8369 = vld [vmem:[%s8335 + $0x108] sm:$0xff]
  %v8370 = vld [vmem:[%s8335 + $0x110] sm:$0xff]
  %v8371 = vld [vmem:[%s8335 + $0x118] sm:$0xff]
  %v8372 = vld [vmem:[%s8335 + $0x120] sm:$0xff]
  %v8373 = vld [vmem:[%s8335 + $0x128] sm:$0xff]
  %v8374 = vld [vmem:[%s8335 + $0x130] sm:$0xff]
  %v8375 = vld [vmem:[%s8335 + $0x138] sm:$0xff]
  %v8376 = vld [vmem:[%s8335 + $0x140] sm:$0xff]
  %v8377 = vld [vmem:[%s8335 + $0x148] sm:$0xff]
  %v8378 = vld [vmem:[%s8335 + $0x150] sm:$0xff]
  %v8379 = vld [vmem:[%s8335 + $0x158] sm:$0xff]
  %v8380 = vld [vmem:[%s8335 + $0x160] sm:$0xff]
  %v8381 = vld [vmem:[%s8335 + $0x168] sm:$0xff]
  %v8382 = vld [vmem:[%s8335 + $0x170] sm:$0xff]
  %v8383 = vld [vmem:[%s8335 + $0x178] sm:$0xff]
  %8384 = vmatprep.subr.mxu0 0.0
  %8385 = vmatpush1.msra.mxu0 %v8336
  %8386 = vmatprep.subr.mxu0 0.0
  %8387 = vmatpush1.msra.mxu0 %v8337
  %8388 = vmatprep.subr.mxu0 0.0
  %8389 = vmatpush1.msra.mxu0 %v8338
  %8390 = vmatprep.subr.mxu0 0.0
  %8391 = vmatpush1.msra.mxu0 %v8339
  %8392 = vmatprep.subr.mxu0 0.0
  %8393 = vmatpush1.msra.mxu0 %v8340
  %8394 = vmatprep.subr.mxu0 0.0
  %8395 = vmatpush1.msra.mxu0 %v8341
  %8396 = vmatprep.subr.mxu0 0.0
  %8397 = vmatpush1.msra.mxu0 %v8342
  %8398 = vmatprep.subr.mxu0 0.0
  %8399 = vmatpush1.msra.mxu0 %v8343
  %8400 = vmatprep.subr.mxu0 0.0
  %8401 = vmatpush1.msra.mxu0 %v8344
  %8402 = vmatprep.subr.mxu0 0.0
  %8403 = vmatpush1.msra.mxu0 %v8345
  %8404 = vmatprep.subr.mxu0 0.0
  %8405 = vmatpush1.msra.mxu0 %v8346
  %8406 = vmatprep.subr.mxu0 0.0
  %8407 = vmatpush1.msra.mxu0 %v8347
  %8408 = vmatprep.subr.mxu0 0.0
  %8409 = vmatpush1.msra.mxu0 %v8348
  %8410 = vmatprep.subr.mxu0 0.0
  %8411 = vmatpush1.msra.mxu0 %v8349
  %8412 = vmatprep.subr.mxu0 0.0
  %8413 = vmatpush1.msra.mxu0 %v8350
  %8414 = vmatprep.subr.mxu0 0.0
  %8415 = vmatpush1.msra.mxu0 %v8351
  %8416 = vmatprep.subr.mxu0 0.0
  %8417 = vmatpush1.msra.mxu0 %v8352
  %8418 = vmatprep.subr.mxu0 0.0
  %8419 = vmatpush1.msra.mxu0 %v8353
  %8420 = vmatprep.subr.mxu0 0.0
  %8421 = vmatpush1.msra.mxu0 %v8354
  %8422 = vmatprep.subr.mxu0 0.0
  %8423 = vmatpush1.msra.mxu0 %v8355
  %8424 = vmatprep.subr.mxu0 0.0
  %8425 = vmatpush1.msra.mxu0 %v8356
  %8426 = vmatprep.subr.mxu0 0.0
  %8427 = vmatpush1.msra.mxu0 %v8357
  %8428 = vmatprep.subr.mxu0 0.0
  %8429 = vmatpush1.msra.mxu0 %v8358
  %8430 = vmatprep.subr.mxu0 0.0
  %8431 = vmatpush1.msra.mxu0 %v8359
  %8432 = vmatprep.subr.mxu0 0.0
  %8433 = vmatpush1.msra.mxu0 %v8360
  %8434 = vmatprep.subr.mxu0 0.0
  %8435 = vmatpush1.msra.mxu0 %v8361
  %8436 = vmatprep.subr.mxu0 0.0
  %8437 = vmatpush1.msra.mxu0 %v8362
  %8438 = vmatprep.subr.mxu0 0.0
  %8439 = vmatpush1.msra.mxu0 %v8363
  %8440 = vmatprep.subr.mxu0 0.0
  %8441 = vmatpush1.msra.mxu0 %v8364
  %8442 = vmatprep.subr.mxu0 0.0
  %8443 = vmatpush1.msra.mxu0 %v8365
  %8444 = vmatprep.subr.mxu0 0.0
  %8445 = vmatpush1.msra.mxu0 %v8366
  %8446 = vmatprep.subr.mxu0 0.0
  %8447 = vmatpush1.msra.mxu0 %v8367
  %8448 = vmatprep.mubr.f32.mxu0 %v8144
  %8449 = vmatmul.mubr.f32.gmra.mrb[0].mxu0 %v8143
  %v8450 = vpop.f32.mrb[0].mxu0
  %v8451 = vadd.f32 0.0, %v8450
  %v8452 = vpop.f32.mrb[0].mxu0
  %8453 = vmatprep.mubr.f32.mxu0 %v8147
  %8454 = vmatmul.mubr.f32.gmra.mrb[0].mxu0 %v8146
  %v8455 = vpop.f32.mrb[0].mxu0
  %v8456 = vadd.f32 0.0, %v8455
  %v8457 = vpop.f32.mrb[0].mxu0
  %8458 = vmatprep.mubr.f32.mxu0 %v8150
  %8459 = vmatmul.mubr.f32.gmra.mrb[0].mxu0 %v8149
  %v8460 = vpop.f32.mrb[0].mxu0
  %v8461 = vadd.f32 0.0, %v8460
  %v8462 = vpop.f32.mrb[0].mxu0
  %8463 = vmatprep.mubr.f32.mxu0 %v8153
  %8464 = vmatmul.mubr.f32.gmra.mrb[0].mxu0 %v8152
  %v8465 = vpop.f32.mrb[0].mxu0
  %v8466 = vadd.f32 0.0, %v8465
  %v8467 = vpop.f32.mrb[0].mxu0
  %8468 = vmatprep.mubr.f32.mxu0 %v8156
  %8469 = vmatmul.mubr.f32.gmra.mrb[0].mxu0 %v8155
  %v8470 = vpop.f32.mrb[0].mxu0
  %v8471 = vadd.f32 0.0, %v8470
  %v8472 = vpop.f32.mrb[0].mxu0
  %8473 = vmatprep.mubr.f32.mxu0 %v8159
  %8474 = vmatmul.mubr.f32.gmra.mrb[0].mxu0 %v8158
  %v8475 = vpop.f32.mrb[0].mxu0
  %v8476 = vadd.f32 0.0, %v8475
  %v8477 = vpop.f32.mrb[0].mxu0
  %8478 = vmatprep.mubr.f32.mxu0 %v8162
  %8479 = vmatmul.mubr.f32.gmra.mrb[0].mxu0 %v8161
  %v8480 = vpop.f32.mrb[0].mxu0
  %v8481 = vadd.f32 0.0, %v8480
  %v8482 = vpop.f32.mrb[0].mxu0
  %8483 = vmatprep.mubr.f32.mxu0 %v8165
  %8484 = vmatmul.mubr.f32.gmra.mrb[0].mxu0 %v8164
  %v8485 = vpop.f32.mrb[0].mxu0
  %v8486 = vadd.f32 0.0, %v8485
  %v8487 = vpop.f32.mrb[0].mxu0
  %8488 = vmatprep.mubr.f32.mxu0 %v8168
  %8489 = vmatmul.mubr.f32.gmra.mrb[0].mxu0 %v8167
  %v8490 = vpop.f32.mrb[0].mxu0
  %v8491 = vadd.f32 0.0, %v8490
  %v8492 = vpop.f32.mrb[0].mxu0
  %8493 = vmatprep.mubr.f32.mxu0 %v8171
  %8494 = vmatmul.mubr.f32.gmra.mrb[0].mxu0 %v8170
  %v8495 = vpop.f32.mrb[0].mxu0
  %v8496 = vadd.f32 0.0, %v8495
  %v8497 = vpop.f32.mrb[0].mxu0
  %8498 = vmatprep.mubr.f32.mxu0 %v8174
  %8499 = vmatmul.mubr.f32.gmra.mrb[0].mxu0 %v8173
  %v8500 = vpop.f32.mrb[0].mxu0
  %v8501 = vadd.f32 0.0, %v8500
  %v8502 = vpop.f32.mrb[0].mxu0
  %8503 = vmatprep.mubr.f32.mxu0 %v8177
  %8504 = vmatmul.mubr.f32.gmra.mrb[0].mxu0 %v8176
  %v8505 = vpop.f32.mrb[0].mxu0
  %v8506 = vadd.f32 0.0, %v8505
  %v8507 = vpop.f32.mrb[0].mxu0
  %8508 = vmatprep.mubr.f32.mxu0 %v8180
  %8509 = vmatmul.mubr.f32.gmra.mrb[0].mxu0 %v8179
  %v8510 = vpop.f32.mrb[0].mxu0
  %v8511 = vadd.f32 0.0, %v8510
  %v8512 = vpop.f32.mrb[0].mxu0
  %8513 = vmatprep.mubr.f32.mxu0 %v8183
  %8514 = vmatmul.mubr.f32.gmra.mrb[0].mxu0 %v8182
  %v8515 = vpop.f32.mrb[0].mxu0
  %v8516 = vadd.f32 0.0, %v8515
  %v8517 = vpop.f32.mrb[0].mxu0
  %8518 = vmatprep.mubr.f32.mxu0 %v8186
  %8519 = vmatmul.mubr.f32.gmra.mrb[0].mxu0 %v8185
  %v8520 = vpop.f32.mrb[0].mxu0
  %v8521 = vadd.f32 0.0, %v8520
  %v8522 = vpop.f32.mrb[0].mxu0
  %8523 = vmatprep.mubr.f32.mxu0 %v8189
  %8524 = vmatmul.mubr.f32.gmra.mrb[0].mxu0 %v8188
  %v8525 = vpop.f32.mrb[0].mxu0
  %v8526 = vadd.f32 0.0, %v8525
  %v8527 = vpop.f32.mrb[0].mxu0
  %8528 = vmatprep.mubr.f32.mxu0 %v8192
  %8529 = vmatmul.mubr.f32.gmra.mrb[0].mxu0 %v8191
  %v8530 = vpop.f32.mrb[0].mxu0
  %v8531 = vadd.f32 0.0, %v8530
  %v8532 = vpop.f32.mrb[0].mxu0
  %8533 = vmatprep.mubr.f32.mxu0 %v8195
  %8534 = vmatmul.mubr.f32.gmra.mrb[0].mxu0 %v8194
  %v8535 = vpop.f32.mrb[0].mxu0
  %v8536 = vadd.f32 0.0, %v8535
  %v8537 = vpop.f32.mrb[0].mxu0
  %8538 = vmatprep.mubr.f32.mxu0 %v8198
  %8539 = vmatmul.mubr.f32.gmra.mrb[0].mxu0 %v8197
  %v8540 = vpop.f32.mrb[0].mxu0
  %v8541 = vadd.f32 0.0, %v8540
  %v8542 = vpop.f32.mrb[0].mxu0
  %8543 = vmatprep.mubr.f32.mxu0 %v8201
  %8544 = vmatmul.mubr.f32.gmra.mrb[0].mxu0 %v8200
  %v8545 = vpop.f32.mrb[0].mxu0
  %v8546 = vadd.f32 0.0, %v8545
  %v8547 = vpop.f32.mrb[0].mxu0
  %8548 = vmatprep.mubr.f32.mxu0 %v8204
  %8549 = vmatmul.mubr.f32.gmra.mrb[0].mxu0 %v8203
  %v8550 = vpop.f32.mrb[0].mxu0
  %v8551 = vadd.f32 0.0, %v8550
  %v8552 = vpop.f32.mrb[0].mxu0
  %8553 = vmatprep.mubr.f32.mxu0 %v8207
  %8554 = vmatmul.mubr.f32.gmra.mrb[0].mxu0 %v8206
  %v8555 = vpop.f32.mrb[0].mxu0
  %v8556 = vadd.f32 0.0, %v8555
  %v8557 = vpop.f32.mrb[0].mxu0
  %8558 = vmatprep.mubr.f32.mxu0 %v8210
  %8559 = vmatmul.mubr.f32.gmra.mrb[0].mxu0 %v8209
  %v8560 = vpop.f32.mrb[0].mxu0
  %v8561 = vadd.f32 0.0, %v8560
  %v8562 = vpop.f32.mrb[0].mxu0
  %8563 = vmatprep.mubr.f32.mxu0 %v8213
  %8564 = vmatmul.mubr.f32.gmra.mrb[0].mxu0 %v8212
  %v8565 = vpop.f32.mrb[0].mxu0
  %v8566 = vadd.f32 0.0, %v8565
  %v8567 = vpop.f32.mrb[0].mxu0
  %8568 = vmatprep.mubr.f32.mxu0 %v8216
  %8569 = vmatmul.mubr.f32.gmra.mrb[0].mxu0 %v8215
  %v8570 = vpop.f32.mrb[0].mxu0
  %v8571 = vadd.f32 0.0, %v8570
  %v8572 = vpop.f32.mrb[0].mxu0
  %8573 = vmatprep.mubr.f32.mxu0 %v8219
  %8574 = vmatmul.mubr.f32.gmra.mrb[0].mxu0 %v8218
  %v8575 = vpop.f32.mrb[0].mxu0
  %v8576 = vadd.f32 0.0, %v8575
  %v8577 = vpop.f32.mrb[0].mxu0
  %8578 = vmatprep.mubr.f32.mxu0 %v8222
  %8579 = vmatmul.mubr.f32.gmra.mrb[0].mxu0 %v8221
  %v8580 = vpop.f32.mrb[0].mxu0
  %v8581 = vadd.f32 0.0, %v8580
  %v8582 = vpop.f32.mrb[0].mxu0
  %8583 = vmatprep.mubr.f32.mxu0 %v8225
  %8584 = vmatmul.mubr.f32.gmra.mrb[0].mxu0 %v8224
  %v8585 = vpop.f32.mrb[0].mxu0
  %v8586 = vadd.f32 0.0, %v8585
  %v8587 = vpop.f32.mrb[0].mxu0
  %8588 = vmatprep.mubr.f32.mxu0 %v8228
  %8589 = vmatmul.mubr.f32.gmra.mrb[0].mxu0 %v8227
  %v8590 = vpop.f32.mrb[0].mxu0
  %v8591 = vadd.f32 0.0, %v8590
  %v8592 = vpop.f32.mrb[0].mxu0
  %8593 = vmatprep.mubr.f32.mxu0 %v8231
  %8594 = vmatmul.mubr.f32.gmra.mrb[0].mxu0 %v8230
  %v8595 = vpop.f32.mrb[0].mxu0
  %v8596 = vadd.f32 0.0, %v8595
  %v8597 = vpop.f32.mrb[0].mxu0
  %8598 = vmatprep.mubr.f32.mxu0 %v8234
  %8599 = vmatmul.mubr.f32.gmra.mrb[0].mxu0 %v8233
  %v8600 = vpop.f32.mrb[0].mxu0
  %v8601 = vadd.f32 0.0, %v8600
  %v8602 = vpop.f32.mrb[0].mxu0
  %8603 = vmatprep.mubr.f32.mxu0 %v8237
  %8604 = vmatmul.mubr.f32.gmra.mrb[0].mxu0 %v8236
  %v8605 = vpop.f32.mrb[0].mxu0
  %v8606 = vadd.f32 0.0, %v8605
  %v8607 = vpop.f32.mrb[0].mxu0
  %8608 = vmatprep.mubr.f32.mxu0 %v8240
  %8609 = vmatmul.mubr.f32.gmra.mrb[0].mxu0 %v8239
  %v8610 = vpop.f32.mrb[0].mxu0
  %v8611 = vadd.f32 0.0, %v8610
  %v8612 = vpop.f32.mrb[0].mxu0
  %8613 = vmatprep.mubr.f32.mxu0 %v8243
  %8614 = vmatmul.mubr.f32.gmra.mrb[0].mxu0 %v8242
  %v8615 = vpop.f32.mrb[0].mxu0
  %v8616 = vadd.f32 0.0, %v8615
  %v8617 = vpop.f32.mrb[0].mxu0
  %8618 = vmatprep.mubr.f32.mxu0 %v8246
  %8619 = vmatmul.mubr.f32.gmra.mrb[0].mxu0 %v8245
  %v8620 = vpop.f32.mrb[0].mxu0
  %v8621 = vadd.f32 0.0, %v8620
  %v8622 = vpop.f32.mrb[0].mxu0
  %8623 = vmatprep.mubr.f32.mxu0 %v8249
  %8624 = vmatmul.mubr.f32.gmra.mrb[0].mxu0 %v8248
  %v8625 = vpop.f32.mrb[0].mxu0
  %v8626 = vadd.f32 0.0, %v8625
  %v8627 = vpop.f32.mrb[0].mxu0
  %8628 = vmatprep.mubr.f32.mxu0 %v8252
  %8629 = vmatmul.mubr.f32.gmra.mrb[0].mxu0 %v8251
  %v8630 = vpop.f32.mrb[0].mxu0
  %v8631 = vadd.f32 0.0, %v8630
  %v8632 = vpop.f32.mrb[0].mxu0
  %8633 = vmatprep.mubr.f32.mxu0 %v8255
  %8634 = vmatmul.mubr.f32.gmra.mrb[0].mxu0 %v8254
  %v8635 = vpop.f32.mrb[0].mxu0
  %v8636 = vadd.f32 0.0, %v8635
  %v8637 = vpop.f32.mrb[0].mxu0
  %8638 = vmatprep.mubr.f32.mxu0 %v8258
  %8639 = vmatmul.mubr.f32.gmra.mrb[0].mxu0 %v8257
  %v8640 = vpop.f32.mrb[0].mxu0
  %v8641 = vadd.f32 0.0, %v8640
  %v8642 = vpop.f32.mrb[0].mxu0
  %8643 = vmatprep.mubr.f32.mxu0 %v8261
  %8644 = vmatmul.mubr.f32.gmra.mrb[0].mxu0 %v8260
  %v8645 = vpop.f32.mrb[0].mxu0
  %v8646 = vadd.f32 0.0, %v8645
  %v8647 = vpop.f32.mrb[0].mxu0
  %8648 = vmatprep.mubr.f32.mxu0 %v8264
  %8649 = vmatmul.mubr.f32.gmra.mrb[0].mxu0 %v8263
  %v8650 = vpop.f32.mrb[0].mxu0
  %v8651 = vadd.f32 0.0, %v8650
  %v8652 = vpop.f32.mrb[0].mxu0
  %8653 = vmatprep.mubr.f32.mxu0 %v8267
  %8654 = vmatmul.mubr.f32.gmra.mrb[0].mxu0 %v8266
  %v8655 = vpop.f32.mrb[0].mxu0
  %v8656 = vadd.f32 0.0, %v8655
  %v8657 = vpop.f32.mrb[0].mxu0
  %8658 = vmatprep.mubr.f32.mxu0 %v8270
  %8659 = vmatmul.mubr.f32.gmra.mrb[0].mxu0 %v8269
  %v8660 = vpop.f32.mrb[0].mxu0
  %v8661 = vadd.f32 0.0, %v8660
  %v8662 = vpop.f32.mrb[0].mxu0
  %8663 = vmatprep.mubr.f32.mxu0 %v8273
  %8664 = vmatmul.mubr.f32.gmra.mrb[0].mxu0 %v8272
  %v8665 = vpop.f32.mrb[0].mxu0
  %v8666 = vadd.f32 0.0, %v8665
  %v8667 = vpop.f32.mrb[0].mxu0
  %8668 = vmatprep.mubr.f32.mxu0 %v8276
  %8669 = vmatmul.mubr.f32.gmra.mrb[0].mxu0 %v8275
  %v8670 = vpop.f32.mrb[0].mxu0
  %v8671 = vadd.f32 0.0, %v8670
  %v8672 = vpop.f32.mrb[0].mxu0
  %8673 = vmatprep.mubr.f32.mxu0 %v8279
  %8674 = vmatmul.mubr.f32.gmra.mrb[0].mxu0 %v8278
  %v8675 = vpop.f32.mrb[0].mxu0
  %v8676 = vadd.f32 0.0, %v8675
  %v8677 = vpop.f32.mrb[0].mxu0
  %8678 = vmatprep.mubr.f32.mxu0 %v8282
  %8679 = vmatmul.mubr.f32.gmra.mrb[0].mxu0 %v8281
  %v8680 = vpop.f32.mrb[0].mxu0
  %v8681 = vadd.f32 0.0, %v8680
  %v8682 = vpop.f32.mrb[0].mxu0
  %8683 = vmatprep.mubr.f32.mxu0 %v8285
  %8684 = vmatmul.mubr.f32.gmra.mrb[0].mxu0 %v8284
  %v8685 = vpop.f32.mrb[0].mxu0
  %v8686 = vadd.f32 0.0, %v8685
  %v8687 = vpop.f32.mrb[0].mxu0
  %8688 = vmatprep.mubr.f32.mxu0 %v8288
  %8689 = vmatmul.mubr.f32.gmra.mrb[0].mxu0 %v8287
  %v8690 = vpop.f32.mrb[0].mxu0
  %v8691 = vadd.f32 0.0, %v8690
  %v8692 = vpop.f32.mrb[0].mxu0
  %8693 = vmatprep.mubr.f32.mxu0 %v8291
  %8694 = vmatmul.mubr.f32.gmra.mrb[0].mxu0 %v8290
  %v8695 = vpop.f32.mrb[0].mxu0
  %v8696 = vadd.f32 0.0, %v8695
  %v8697 = vpop.f32.mrb[0].mxu0
  %8698 = vmatprep.mubr.f32.mxu0 %v8294
  %8699 = vmatmul.mubr.f32.gmra.mrb[0].mxu0 %v8293
  %v8700 = vpop.f32.mrb[0].mxu0
  %v8701 = vadd.f32 0.0, %v8700
  %v8702 = vpop.f32.mrb[0].mxu0
  %8703 = vmatprep.mubr.f32.mxu0 %v8297
  %8704 = vmatmul.mubr.f32.gmra.mrb[0].mxu0 %v8296
  %v8705 = vpop.f32.mrb[0].mxu0
  %v8706 = vadd.f32 0.0, %v8705
  %v8707 = vpop.f32.mrb[0].mxu0
  %8708 = vmatprep.mubr.f32.mxu0 %v8300
  %8709 = vmatmul.mubr.f32.gmra.mrb[0].mxu0 %v8299
  %v8710 = vpop.f32.mrb[0].mxu0
  %v8711 = vadd.f32 0.0, %v8710
  %v8712 = vpop.f32.mrb[0].mxu0
  %8713 = vmatprep.mubr.f32.mxu0 %v8303
  %8714 = vmatmul.mubr.f32.gmra.mrb[0].mxu0 %v8302
  %v8715 = vpop.f32.mrb[0].mxu0
  %v8716 = vadd.f32 0.0, %v8715
  %v8717 = vpop.f32.mrb[0].mxu0
  %8718 = vmatprep.mubr.f32.mxu0 %v8306
  %8719 = vmatmul.mubr.f32.gmra.mrb[0].mxu0 %v8305
  %v8720 = vpop.f32.mrb[0].mxu0
  %v8721 = vadd.f32 0.0, %v8720
  %v8722 = vpop.f32.mrb[0].mxu0
  %8723 = vmatprep.mubr.f32.mxu0 %v8309
  %8724 = vmatmul.mubr.f32.gmra.mrb[0].mxu0 %v8308
  %v8725 = vpop.f32.mrb[0].mxu0
  %v8726 = vadd.f32 0.0, %v8725
  %v8727 = vpop.f32.mrb[0].mxu0
  %8728 = vmatprep.mubr.f32.mxu0 %v8312
  %8729 = vmatmul.mubr.f32.gmra.mrb[0].mxu0 %v8311
  %v8730 = vpop.f32.mrb[0].mxu0
  %v8731 = vadd.f32 0.0, %v8730
  %v8732 = vpop.f32.mrb[0].mxu0
  %8733 = vmatprep.mubr.f32.mxu0 %v8315
  %8734 = vmatmul.mubr.f32.gmra.mrb[0].mxu0 %v8314
  %v8735 = vpop.f32.mrb[0].mxu0
  %v8736 = vadd.f32 0.0, %v8735
  %v8737 = vpop.f32.mrb[0].mxu0
  %8738 = vmatprep.mubr.f32.mxu0 %v8318
  %8739 = vmatmul.mubr.f32.gmra.mrb[0].mxu0 %v8317
  %v8740 = vpop.f32.mrb[0].mxu0
  %v8741 = vadd.f32 0.0, %v8740
  %v8742 = vpop.f32.mrb[0].mxu0
  %8743 = vmatprep.mubr.f32.mxu0 %v8321
  %8744 = vmatmul.mubr.f32.gmra.mrb[0].mxu0 %v8320
  %v8745 = vpop.f32.mrb[0].mxu0
  %v8746 = vadd.f32 0.0, %v8745
  %v8747 = vpop.f32.mrb[0].mxu0
  %8748 = vmatprep.mubr.f32.mxu0 %v8324
  %8749 = vmatmul.mubr.f32.gmra.mrb[0].mxu0 %v8323
  %v8750 = vpop.f32.mrb[0].mxu0
  %v8751 = vadd.f32 0.0, %v8750
  %v8752 = vpop.f32.mrb[0].mxu0
  %8753 = vmatprep.mubr.f32.mxu0 %v8327
  %8754 = vmatmul.mubr.f32.gmra.mrb[0].mxu0 %v8326
  %v8755 = vpop.f32.mrb[0].mxu0
  %v8756 = vadd.f32 0.0, %v8755
  %v8757 = vpop.f32.mrb[0].mxu0
  %8758 = vmatprep.mubr.f32.mxu0 %v8330
  %8759 = vmatmul.mubr.f32.gmra.mrb[0].mxu0 %v8329
  %v8760 = vpop.f32.mrb[0].mxu0
  %v8761 = vadd.f32 0.0, %v8760
  %v8762 = vpop.f32.mrb[0].mxu0
  %8763 = vmatprep.mubr.f32.mxu0 %v8333
  %8764 = vmatmul.mubr.f32.gmra.mrb[0].mxu0 %v8332
  %v8765 = vpop.f32.mrb[0].mxu0
  %v8766 = vadd.f32 0.0, %v8765
  %v8767 = vpop.f32.mrb[0].mxu0
  %8768 = vdwg.mxu0
  %8769 = vmatprep.subr.mxu0 0.0
  %8770 = vmatpush1.msra.mxu0 %v8368
  %8771 = vmatprep.subr.mxu0 0.0
  %8772 = vmatpush1.msra.mxu0 %v8369
  %8773 = vmatprep.subr.mxu0 0.0
  %8774 = vmatpush1.msra.mxu0 %v8370
  %8775 = vmatprep.subr.mxu0 0.0
  %8776 = vmatpush1.msra.mxu0 %v8371
  %8777 = vmatprep.subr.mxu0 0.0
  %8778 = vmatpush1.msra.mxu0 %v8372
  %8779 = vmatprep.subr.mxu0 0.0
  %8780 = vmatpush1.msra.mxu0 %v8373
  %8781 = vmatprep.subr.mxu0 0.0
  %8782 = vmatpush1.msra.mxu0 %v8374
  %8783 = vmatprep.subr.mxu0 0.0
  %8784 = vmatpush1.msra.mxu0 %v8375
  %8785 = vmatprep.subr.mxu0 0.0
  %8786 = vmatpush1.msra.mxu0 %v8376
  %8787 = vmatprep.subr.mxu0 0.0
  %8788 = vmatpush1.msra.mxu0 %v8377
  %8789 = vmatprep.subr.mxu0 0.0
  %8790 = vmatpush1.msra.mxu0 %v8378
  %8791 = vmatprep.subr.mxu0 0.0
  %8792 = vmatpush1.msra.mxu0 %v8379
  %8793 = vmatprep.subr.mxu0 0.0
  %8794 = vmatpush1.msra.mxu0 %v8380
  %8795 = vmatprep.subr.mxu0 0.0
  %8796 = vmatpush1.msra.mxu0 %v8381
  %8797 = vmatprep.subr.mxu0 0.0
  %8798 = vmatpush1.msra.mxu0 %v8382
  %8799 = vmatprep.subr.mxu0 0.0
  %8800 = vmatpush1.msra.mxu0 %v8383
  %8801 = vmatprep.subr.mxu0 0.0
  %8802 = vmatpush1.msra.mxu0 0.0
  %8803 = vmatprep.subr.mxu0 0.0
  %8804 = vmatpush1.msra.mxu0 0.0
  %8805 = vmatprep.subr.mxu0 0.0
  %8806 = vmatpush1.msra.mxu0 0.0
  %8807 = vmatprep.subr.mxu0 0.0
  %8808 = vmatpush1.msra.mxu0 0.0
  %8809 = vmatprep.subr.mxu0 0.0
  %8810 = vmatpush1.msra.mxu0 0.0
  %8811 = vmatprep.subr.mxu0 0.0
  %8812 = vmatpush1.msra.mxu0 0.0
  %8813 = vmatprep.subr.mxu0 0.0
  %8814 = vmatpush1.msra.mxu0 0.0
  %8815 = vmatprep.subr.mxu0 0.0
  %8816 = vmatpush1.msra.mxu0 0.0
  %8817 = vmatprep.subr.mxu0 0.0
  %8818 = vmatpush1.msra.mxu0 0.0
  %8819 = vmatprep.subr.mxu0 0.0
  %8820 = vmatpush1.msra.mxu0 0.0
  %8821 = vmatprep.subr.mxu0 0.0
  %8822 = vmatpush1.msra.mxu0 0.0
  %8823 = vmatprep.subr.mxu0 0.0
  %8824 = vmatpush1.msra.mxu0 0.0
  %8825 = vmatprep.subr.mxu0 0.0
  %8826 = vmatpush1.msra.mxu0 0.0
  %8827 = vmatprep.subr.mxu0 0.0
  %8828 = vmatpush1.msra.mxu0 0.0
  %8829 = vmatprep.subr.mxu0 0.0
  %8830 = vmatpush1.msra.mxu0 0.0
  %8831 = vmatprep.subr.mxu0 0.0
  %8832 = vmatpush1.msra.mxu0 0.0
  %8833 = vmatprep.mubr.f32.mxu0 0.0
  %8834 = vmatmul.mubr.f32.gmra.mrb[0].mxu0 %v8145
  %v8835 = vpop.f32.mrb[0].mxu0
  %v8836 = vadd.f32 %v8451, %v8835
  %v8837 = vpop.f32.mrb[0].mxu0
  %8838 = vmatprep.mubr.f32.mxu0 0.0
  %8839 = vmatmul.mubr.f32.gmra.mrb[0].mxu0 %v8148
  %v8840 = vpop.f32.mrb[0].mxu0
  %v8841 = vadd.f32 %v8456, %v8840
  %v8842 = vpop.f32.mrb[0].mxu0
  %8843 = vmatprep.mubr.f32.mxu0 0.0
  %8844 = vmatmul.mubr.f32.gmra.mrb[0].mxu0 %v8151
  %v8845 = vpop.f32.mrb[0].mxu0
  %v8846 = vadd.f32 %v8461, %v8845
  %v8847 = vpop.f32.mrb[0].mxu0
  %8848 = vmatprep.mubr.f32.mxu0 0.0
  %8849 = vmatmul.mubr.f32.gmra.mrb[0].mxu0 %v8154
  %v8850 = vpop.f32.mrb[0].mxu0
  %v8851 = vadd.f32 %v8466, %v8850
  %v8852 = vpop.f32.mrb[0].mxu0
  %8853 = vmatprep.mubr.f32.mxu0 0.0
  %8854 = vmatmul.mubr.f32.gmra.mrb[0].mxu0 %v8157
  %v8855 = vpop.f32.mrb[0].mxu0
  %v8856 = vadd.f32 %v8471, %v8855
  %v8857 = vpop.f32.mrb[0].mxu0
  %8858 = vmatprep.mubr.f32.mxu0 0.0
  %8859 = vmatmul.mubr.f32.gmra.mrb[0].mxu0 %v8160
  %v8860 = vpop.f32.mrb[0].mxu0
  %v8861 = vadd.f32 %v8476, %v8860
  %v8862 = vpop.f32.mrb[0].mxu0
  %8863 = vmatprep.mubr.f32.mxu0 0.0
  %8864 = vmatmul.mubr.f32.gmra.mrb[0].mxu0 %v8163
  %v8865 = vpop.f32.mrb[0].mxu0
  %v8866 = vadd.f32 %v8481, %v8865
  %v8867 = vpop.f32.mrb[0].mxu0
  %8868 = vmatprep.mubr.f32.mxu0 0.0
  %8869 = vmatmul.mubr.f32.gmra.mrb[0].mxu0 %v8166
  %v8870 = vpop.f32.mrb[0].mxu0
  %v8871 = vadd.f32 %v8486, %v8870
  %v8872 = vpop.f32.mrb[0].mxu0
  %8873 = vmatprep.mubr.f32.mxu0 0.0
  %8874 = vmatmul.mubr.f32.gmra.mrb[0].mxu0 %v8169
  %v8875 = vpop.f32.mrb[0].mxu0
  %v8876 = vadd.f32 %v8491, %v8875
  %v8877 = vpop.f32.mrb[0].mxu0
  %8878 = vmatprep.mubr.f32.mxu0 0.0
  %8879 = vmatmul.mubr.f32.gmra.mrb[0].mxu0 %v8172
  %v8880 = vpop.f32.mrb[0].mxu0
  %v8881 = vadd.f32 %v8496, %v8880
  %v8882 = vpop.f32.mrb[0].mxu0
  %8883 = vmatprep.mubr.f32.mxu0 0.0
  %8884 = vmatmul.mubr.f32.gmra.mrb[0].mxu0 %v8175
  %v8885 = vpop.f32.mrb[0].mxu0
  %v8886 = vadd.f32 %v8501, %v8885
  %v8887 = vpop.f32.mrb[0].mxu0
  %8888 = vmatprep.mubr.f32.mxu0 0.0
  %8889 = vmatmul.mubr.f32.gmra.mrb[0].mxu0 %v8178
  %v8890 = vpop.f32.mrb[0].mxu0
  %v8891 = vadd.f32 %v8506, %v8890
  %v8892 = vpop.f32.mrb[0].mxu0
  %8893 = vmatprep.mubr.f32.mxu0 0.0
  %8894 = vmatmul.mubr.f32.gmra.mrb[0].mxu0 %v8181
  %v8895 = vpop.f32.mrb[0].mxu0
  %v8896 = vadd.f32 %v8511, %v8895
  %v8897 = vpop.f32.mrb[0].mxu0
  %8898 = vmatprep.mubr.f32.mxu0 0.0
  %8899 = vmatmul.mubr.f32.gmra.mrb[0].mxu0 %v8184
  %v8900 = vpop.f32.mrb[0].mxu0
  %v8901 = vadd.f32 %v8516, %v8900
  %v8902 = vpop.f32.mrb[0].mxu0
  %8903 = vmatprep.mubr.f32.mxu0 0.0
  %8904 = vmatmul.mubr.f32.gmra.mrb[0].mxu0 %v8187
  %v8905 = vpop.f32.mrb[0].mxu0
  %v8906 = vadd.f32 %v8521, %v8905
  %v8907 = vpop.f32.mrb[0].mxu0
  %8908 = vmatprep.mubr.f32.mxu0 0.0
  %8909 = vmatmul.mubr.f32.gmra.mrb[0].mxu0 %v8190
  %v8910 = vpop.f32.mrb[0].mxu0
  %v8911 = vadd.f32 %v8526, %v8910
  %v8912 = vpop.f32.mrb[0].mxu0
  %8913 = vmatprep.mubr.f32.mxu0 0.0
  %8914 = vmatmul.mubr.f32.gmra.mrb[0].mxu0 %v8193
  %v8915 = vpop.f32.mrb[0].mxu0
  %v8916 = vadd.f32 %v8531, %v8915
  %v8917 = vpop.f32.mrb[0].mxu0
  %8918 = vmatprep.mubr.f32.mxu0 0.0
  %8919 = vmatmul.mubr.f32.gmra.mrb[0].mxu0 %v8196
  %v8920 = vpop.f32.mrb[0].mxu0
  %v8921 = vadd.f32 %v8536, %v8920
  %v8922 = vpop.f32.mrb[0].mxu0
  %8923 = vmatprep.mubr.f32.mxu0 0.0
  %8924 = vmatmul.mubr.f32.gmra.mrb[0].mxu0 %v8199
  %v8925 = vpop.f32.mrb[0].mxu0
  %v8926 = vadd.f32 %v8541, %v8925
  %v8927 = vpop.f32.mrb[0].mxu0
  %8928 = vmatprep.mubr.f32.mxu0 0.0
  %8929 = vmatmul.mubr.f32.gmra.mrb[0].mxu0 %v8202
  %v8930 = vpop.f32.mrb[0].mxu0
  %v8931 = vadd.f32 %v8546, %v8930
  %v8932 = vpop.f32.mrb[0].mxu0
  %8933 = vmatprep.mubr.f32.mxu0 0.0
  %8934 = vmatmul.mubr.f32.gmra.mrb[0].mxu0 %v8205
  %v8935 = vpop.f32.mrb[0].mxu0
  %v8936 = vadd.f32 %v8551, %v8935
  %v8937 = vpop.f32.mrb[0].mxu0
  %8938 = vmatprep.mubr.f32.mxu0 0.0
  %8939 = vmatmul.mubr.f32.gmra.mrb[0].mxu0 %v8208
  %v8940 = vpop.f32.mrb[0].mxu0
  %v8941 = vadd.f32 %v8556, %v8940
  %v8942 = vpop.f32.mrb[0].mxu0
  %8943 = vmatprep.mubr.f32.mxu0 0.0
  %8944 = vmatmul.mubr.f32.gmra.mrb[0].mxu0 %v8211
  %v8945 = vpop.f32.mrb[0].mxu0
  %v8946 = vadd.f32 %v8561, %v8945
  %v8947 = vpop.f32.mrb[0].mxu0
  %8948 = vmatprep.mubr.f32.mxu0 0.0
  %8949 = vmatmul.mubr.f32.gmra.mrb[0].mxu0 %v8214
  %v8950 = vpop.f32.mrb[0].mxu0
  %v8951 = vadd.f32 %v8566, %v8950
  %v8952 = vpop.f32.mrb[0].mxu0
  %8953 = vmatprep.mubr.f32.mxu0 0.0
  %8954 = vmatmul.mubr.f32.gmra.mrb[0].mxu0 %v8217
  %v8955 = vpop.f32.mrb[0].mxu0
  %v8956 = vadd.f32 %v8571, %v8955
  %v8957 = vpop.f32.mrb[0].mxu0
  %8958 = vmatprep.mubr.f32.mxu0 0.0
  %8959 = vmatmul.mubr.f32.gmra.mrb[0].mxu0 %v8220
  %v8960 = vpop.f32.mrb[0].mxu0
  %v8961 = vadd.f32 %v8576, %v8960
  %v8962 = vpop.f32.mrb[0].mxu0
  %8963 = vmatprep.mubr.f32.mxu0 0.0
  %8964 = vmatmul.mubr.f32.gmra.mrb[0].mxu0 %v8223
  %v8965 = vpop.f32.mrb[0].mxu0
  %v8966 = vadd.f32 %v8581, %v8965
  %v8967 = vpop.f32.mrb[0].mxu0
  %8968 = vmatprep.mubr.f32.mxu0 0.0
  %8969 = vmatmul.mubr.f32.gmra.mrb[0].mxu0 %v8226
  %v8970 = vpop.f32.mrb[0].mxu0
  %v8971 = vadd.f32 %v8586, %v8970
  %v8972 = vpop.f32.mrb[0].mxu0
  %8973 = vmatprep.mubr.f32.mxu0 0.0
  %8974 = vmatmul.mubr.f32.gmra.mrb[0].mxu0 %v8229
  %v8975 = vpop.f32.mrb[0].mxu0
  %v8976 = vadd.f32 %v8591, %v8975
  %v8977 = vpop.f32.mrb[0].mxu0
  %8978 = vmatprep.mubr.f32.mxu0 0.0
  %8979 = vmatmul.mubr.f32.gmra.mrb[0].mxu0 %v8232
  %v8980 = vpop.f32.mrb[0].mxu0
  %v8981 = vadd.f32 %v8596, %v8980
  %v8982 = vpop.f32.mrb[0].mxu0
  %8983 = vmatprep.mubr.f32.mxu0 0.0
  %8984 = vmatmul.mubr.f32.gmra.mrb[0].mxu0 %v8235
  %v8985 = vpop.f32.mrb[0].mxu0
  %v8986 = vadd.f32 %v8601, %v8985
  %v8987 = vpop.f32.mrb[0].mxu0
  %8988 = vmatprep.mubr.f32.mxu0 0.0
  %8989 = vmatmul.mubr.f32.gmra.mrb[0].mxu0 %v8238
  %v8990 = vpop.f32.mrb[0].mxu0
  %v8991 = vadd.f32 %v8606, %v8990
  %v8992 = vpop.f32.mrb[0].mxu0
  %8993 = vmatprep.mubr.f32.mxu0 0.0
  %8994 = vmatmul.mubr.f32.gmra.mrb[0].mxu0 %v8241
  %v8995 = vpop.f32.mrb[0].mxu0
  %v8996 = vadd.f32 %v8611, %v8995
  %v8997 = vpop.f32.mrb[0].mxu0
  %8998 = vmatprep.mubr.f32.mxu0 0.0
  %8999 = vmatmul.mubr.f32.gmra.mrb[0].mxu0 %v8244
  %v9000 = vpop.f32.mrb[0].mxu0
  %v9001 = vadd.f32 %v8616, %v9000
  %v9002 = vpop.f32.mrb[0].mxu0
  %9003 = vmatprep.mubr.f32.mxu0 0.0
  %9004 = vmatmul.mubr.f32.gmra.mrb[0].mxu0 %v8247
  %v9005 = vpop.f32.mrb[0].mxu0
  %v9006 = vadd.f32 %v8621, %v9005
  %v9007 = vpop.f32.mrb[0].mxu0
  %9008 = vmatprep.mubr.f32.mxu0 0.0
  %9009 = vmatmul.mubr.f32.gmra.mrb[0].mxu0 %v8250
  %v9010 = vpop.f32.mrb[0].mxu0
  %v9011 = vadd.f32 %v8626, %v9010
  %v9012 = vpop.f32.mrb[0].mxu0
  %9013 = vmatprep.mubr.f32.mxu0 0.0
  %9014 = vmatmul.mubr.f32.gmra.mrb[0].mxu0 %v8253
  %v9015 = vpop.f32.mrb[0].mxu0
  %v9016 = vadd.f32 %v8631, %v9015
  %v9017 = vpop.f32.mrb[0].mxu0
  %9018 = vmatprep.mubr.f32.mxu0 0.0
  %9019 = vmatmul.mubr.f32.gmra.mrb[0].mxu0 %v8256
  %v9020 = vpop.f32.mrb[0].mxu0
  %v9021 = vadd.f32 %v8636, %v9020
  %v9022 = vpop.f32.mrb[0].mxu0
  %9023 = vmatprep.mubr.f32.mxu0 0.0
  %9024 = vmatmul.mubr.f32.gmra.mrb[0].mxu0 %v8259
  %v9025 = vpop.f32.mrb[0].mxu0
  %v9026 = vadd.f32 %v8641, %v9025
  %v9027 = vpop.f32.mrb[0].mxu0
  %9028 = vmatprep.mubr.f32.mxu0 0.0
  %9029 = vmatmul.mubr.f32.gmra.mrb[0].mxu0 %v8262
  %v9030 = vpop.f32.mrb[0].mxu0
  %v9031 = vadd.f32 %v8646, %v9030
  %v9032 = vpop.f32.mrb[0].mxu0
  %9033 = vmatprep.mubr.f32.mxu0 0.0
  %9034 = vmatmul.mubr.f32.gmra.mrb[0].mxu0 %v8265
  %v9035 = vpop.f32.mrb[0].mxu0
  %v9036 = vadd.f32 %v8651, %v9035
  %v9037 = vpop.f32.mrb[0].mxu0
  %9038 = vmatprep.mubr.f32.mxu0 0.0
  %9039 = vmatmul.mubr.f32.gmra.mrb[0].mxu0 %v8268
  %v9040 = vpop.f32.mrb[0].mxu0
  %v9041 = vadd.f32 %v8656, %v9040
  %v9042 = vpop.f32.mrb[0].mxu0
  %9043 = vmatprep.mubr.f32.mxu0 0.0
  %9044 = vmatmul.mubr.f32.gmra.mrb[0].mxu0 %v8271
  %v9045 = vpop.f32.mrb[0].mxu0
  %v9046 = vadd.f32 %v8661, %v9045
  %v9047 = vpop.f32.mrb[0].mxu0
  %9048 = vmatprep.mubr.f32.mxu0 0.0
  %9049 = vmatmul.mubr.f32.gmra.mrb[0].mxu0 %v8274
  %v9050 = vpop.f32.mrb[0].mxu0
  %v9051 = vadd.f32 %v8666, %v9050
  %v9052 = vpop.f32.mrb[0].mxu0
  %9053 = vmatprep.mubr.f32.mxu0 0.0
  %9054 = vmatmul.mubr.f32.gmra.mrb[0].mxu0 %v8277
  %v9055 = vpop.f32.mrb[0].mxu0
  %v9056 = vadd.f32 %v8671, %v9055
  %v9057 = vpop.f32.mrb[0].mxu0
  %9058 = vmatprep.mubr.f32.mxu0 0.0
  %9059 = vmatmul.mubr.f32.gmra.mrb[0].mxu0 %v8280
  %v9060 = vpop.f32.mrb[0].mxu0
  %v9061 = vadd.f32 %v8676, %v9060
  %v9062 = vpop.f32.mrb[0].mxu0
  %9063 = vmatprep.mubr.f32.mxu0 0.0
  %9064 = vmatmul.mubr.f32.gmra.mrb[0].mxu0 %v8283
  %v9065 = vpop.f32.mrb[0].mxu0
  %v9066 = vadd.f32 %v8681, %v9065
  %v9067 = vpop.f32.mrb[0].mxu0
  %9068 = vmatprep.mubr.f32.mxu0 0.0
  %9069 = vmatmul.mubr.f32.gmra.mrb[0].mxu0 %v8286
  %v9070 = vpop.f32.mrb[0].mxu0
  %v9071 = vadd.f32 %v8686, %v9070
  %v9072 = vpop.f32.mrb[0].mxu0
  %9073 = vmatprep.mubr.f32.mxu0 0.0
  %9074 = vmatmul.mubr.f32.gmra.mrb[0].mxu0 %v8289
  %v9075 = vpop.f32.mrb[0].mxu0
  %v9076 = vadd.f32 %v8691, %v9075
  %v9077 = vpop.f32.mrb[0].mxu0
  %9078 = vmatprep.mubr.f32.mxu0 0.0
  %9079 = vmatmul.mubr.f32.gmra.mrb[0].mxu0 %v8292
  %v9080 = vpop.f32.mrb[0].mxu0
  %v9081 = vadd.f32 %v8696, %v9080
  %v9082 = vpop.f32.mrb[0].mxu0
  %9083 = vmatprep.mubr.f32.mxu0 0.0
  %9084 = vmatmul.mubr.f32.gmra.mrb[0].mxu0 %v8295
  %v9085 = vpop.f32.mrb[0].mxu0
  %v9086 = vadd.f32 %v8701, %v9085
  %v9087 = vpop.f32.mrb[0].mxu0
  %9088 = vmatprep.mubr.f32.mxu0 0.0
  %9089 = vmatmul.mubr.f32.gmra.mrb[0].mxu0 %v8298
  %v9090 = vpop.f32.mrb[0].mxu0
  %v9091 = vadd.f32 %v8706, %v9090
  %v9092 = vpop.f32.mrb[0].mxu0
  %9093 = vmatprep.mubr.f32.mxu0 0.0
  %9094 = vmatmul.mubr.f32.gmra.mrb[0].mxu0 %v8301
  %v9095 = vpop.f32.mrb[0].mxu0
  %v9096 = vadd.f32 %v8711, %v9095
  %v9097 = vpop.f32.mrb[0].mxu0
  %9098 = vmatprep.mubr.f32.mxu0 0.0
  %9099 = vmatmul.mubr.f32.gmra.mrb[0].mxu0 %v8304
  %v9100 = vpop.f32.mrb[0].mxu0
  %v9101 = vadd.f32 %v8716, %v9100
  %v9102 = vpop.f32.mrb[0].mxu0
  %9103 = vmatprep.mubr.f32.mxu0 0.0
  %9104 = vmatmul.mubr.f32.gmra.mrb[0].mxu0 %v8307
  %v9105 = vpop.f32.mrb[0].mxu0
  %v9106 = vadd.f32 %v8721, %v9105
  %v9107 = vpop.f32.mrb[0].mxu0
  %9108 = vmatprep.mubr.f32.mxu0 0.0
  %9109 = vmatmul.mubr.f32.gmra.mrb[0].mxu0 %v8310
  %v9110 = vpop.f32.mrb[0].mxu0
  %v9111 = vadd.f32 %v8726, %v9110
  %v9112 = vpop.f32.mrb[0].mxu0
  %9113 = vmatprep.mubr.f32.mxu0 0.0
  %9114 = vmatmul.mubr.f32.gmra.mrb[0].mxu0 %v8313
  %v9115 = vpop.f32.mrb[0].mxu0
  %v9116 = vadd.f32 %v8731, %v9115
  %v9117 = vpop.f32.mrb[0].mxu0
  %9118 = vmatprep.mubr.f32.mxu0 0.0
  %9119 = vmatmul.mubr.f32.gmra.mrb[0].mxu0 %v8316
  %v9120 = vpop.f32.mrb[0].mxu0
  %v9121 = vadd.f32 %v8736, %v9120
  %v9122 = vpop.f32.mrb[0].mxu0
  %9123 = vmatprep.mubr.f32.mxu0 0.0
  %9124 = vmatmul.mubr.f32.gmra.mrb[0].mxu0 %v8319
  %v9125 = vpop.f32.mrb[0].mxu0
  %v9126 = vadd.f32 %v8741, %v9125
  %v9127 = vpop.f32.mrb[0].mxu0
  %9128 = vmatprep.mubr.f32.mxu0 0.0
  %9129 = vmatmul.mubr.f32.gmra.mrb[0].mxu0 %v8322
  %v9130 = vpop.f32.mrb[0].mxu0
  %v9131 = vadd.f32 %v8746, %v9130
  %v9132 = vpop.f32.mrb[0].mxu0
  %9133 = vmatprep.mubr.f32.mxu0 0.0
  %9134 = vmatmul.mubr.f32.gmra.mrb[0].mxu0 %v8325
  %v9135 = vpop.f32.mrb[0].mxu0
  %v9136 = vadd.f32 %v8751, %v9135
  %v9137 = vpop.f32.mrb[0].mxu0
  %9138 = vmatprep.mubr.f32.mxu0 0.0
  %9139 = vmatmul.mubr.f32.gmra.mrb[0].mxu0 %v8328
  %v9140 = vpop.f32.mrb[0].mxu0
  %v9141 = vadd.f32 %v8756, %v9140
  %v9142 = vpop.f32.mrb[0].mxu0
  %9143 = vmatprep.mubr.f32.mxu0 0.0
  %9144 = vmatmul.mubr.f32.gmra.mrb[0].mxu0 %v8331
  %v9145 = vpop.f32.mrb[0].mxu0
  %v9146 = vadd.f32 %v8761, %v9145
  %v9147 = vpop.f32.mrb[0].mxu0
  %9148 = vmatprep.mubr.f32.mxu0 0.0
  %9149 = vmatmul.mubr.f32.gmra.mrb[0].mxu0 %v8334
  %v9150 = vpop.f32.mrb[0].mxu0
  %v9151 = vadd.f32 %v8766, %v9150
  %v9152 = vpop.f32.mrb[0].mxu0
  %9153 = vdwg.mxu0
  %v9154 = vadd.f32 %v7441, %v8836
  %v9155 = vadd.f32 %v7446, %v8841
  %v9156 = vadd.f32 %v7451, %v8846
  %v9157 = vadd.f32 %v7456, %v8851
  %v9158 = vadd.f32 %v7461, %v8856
  %v9159 = vadd.f32 %v7466, %v8861
  %v9160 = vadd.f32 %v7471, %v8866
  %v9161 = vadd.f32 %v7476, %v8871
  %v9162 = vadd.f32 %v7481, %v8876
  %v9163 = vadd.f32 %v7486, %v8881
  %v9164 = vadd.f32 %v7491, %v8886
  %v9165 = vadd.f32 %v7496, %v8891
  %v9166 = vadd.f32 %v7501, %v8896
  %v9167 = vadd.f32 %v7506, %v8901
  %v9168 = vadd.f32 %v7511, %v8906
  %v9169 = vadd.f32 %v7516, %v8911
  %v9170 = vadd.f32 %v7521, %v8916
  %v9171 = vadd.f32 %v7526, %v8921
  %v9172 = vadd.f32 %v7531, %v8926
  %v9173 = vadd.f32 %v7536, %v8931
  %v9174 = vadd.f32 %v7541, %v8936
  %v9175 = vadd.f32 %v7546, %v8941
  %v9176 = vadd.f32 %v7551, %v8946
  %v9177 = vadd.f32 %v7556, %v8951
  %v9178 = vadd.f32 %v7561, %v8956
  %v9179 = vadd.f32 %v7566, %v8961
  %v9180 = vadd.f32 %v7571, %v8966
  %v9181 = vadd.f32 %v7576, %v8971
  %v9182 = vadd.f32 %v7581, %v8976
  %v9183 = vadd.f32 %v7586, %v8981
  %v9184 = vadd.f32 %v7591, %v8986
  %v9185 = vadd.f32 %v7596, %v8991
  %v9186 = vadd.f32 %v7601, %v8996
  %v9187 = vadd.f32 %v7606, %v9001
  %v9188 = vadd.f32 %v7611, %v9006
  %v9189 = vadd.f32 %v7616, %v9011
  %v9190 = vadd.f32 %v7621, %v9016
  %v9191 = vadd.f32 %v7626, %v9021
  %v9192 = vadd.f32 %v7631, %v9026
  %v9193 = vadd.f32 %v7636, %v9031
  %v9194 = vadd.f32 %v7641, %v9036
  %v9195 = vadd.f32 %v7646, %v9041
  %v9196 = vadd.f32 %v7651, %v9046
  %v9197 = vadd.f32 %v7656, %v9051
  %v9198 = vadd.f32 %v7661, %v9056
  %v9199 = vadd.f32 %v7666, %v9061
  %v9200 = vadd.f32 %v7671, %v9066
  %v9201 = vadd.f32 %v7676, %v9071
  %v9202 = vadd.f32 %v7681, %v9076
  %v9203 = vadd.f32 %v7686, %v9081
  %v9204 = vadd.f32 %v7691, %v9086
  %v9205 = vadd.f32 %v7696, %v9091
  %v9206 = vadd.f32 %v7701, %v9096
  %v9207 = vadd.f32 %v7706, %v9101
  %v9208 = vadd.f32 %v7711, %v9106
  %v9209 = vadd.f32 %v7716, %v9111
  %v9210 = vadd.f32 %v7721, %v9116
  %v9211 = vadd.f32 %v7726, %v9121
  %v9212 = vadd.f32 %v7731, %v9126
  %v9213 = vadd.f32 %v7736, %v9131
  %v9214 = vadd.f32 %v7741, %v9136
  %v9215 = vadd.f32 %v7746, %v9141
  %v9216 = vadd.f32 %v7751, %v9146
  %v9217 = vadd.f32 %v7756, %v9151
  %v9218 = vld [vmem:[%s5] sm:$0x1]
  %v9219 = vld [vmem:[%s6] sm:$0x1]
  %v9220 = vadd.f32 %v9154, %v9155
  %v9221 = vadd.f32 %v9220, %v9156
  %v9222 = vadd.f32 %v9221, %v9157
  %v9223 = vadd.f32 %v9222, %v9158
  %v9224 = vadd.f32 %v9223, %v9159
  %v9225 = vadd.f32 %v9224, %v9160
  %v9226 = vadd.f32 %v9225, %v9161
  %v9227 = vadd.f32 %v9226, %v9162
  %v9228 = vadd.f32 %v9227, %v9163
  %v9229 = vadd.f32 %v9228, %v9164
  %v9230 = vadd.f32 %v9229, %v9165
  %v9231 = vadd.f32 %v9230, %v9166
  %v9232 = vadd.f32 %v9231, %v9167
  %v9233 = vadd.f32 %v9232, %v9168
  %v9234 = vadd.f32 %v9233, %v9169
  %v9235 = vadd.f32 %v9234, %v9170
  %v9236 = vadd.f32 %v9235, %v9171
  %v9237 = vadd.f32 %v9236, %v9172
  %v9238 = vadd.f32 %v9237, %v9173
  %v9239 = vadd.f32 %v9238, %v9174
  %v9240 = vadd.f32 %v9239, %v9175
  %v9241 = vadd.f32 %v9240, %v9176
  %v9242 = vadd.f32 %v9241, %v9177
  %v9243 = vadd.f32 %v9242, %v9178
  %v9244 = vadd.f32 %v9243, %v9179
  %v9245 = vadd.f32 %v9244, %v9180
  %v9246 = vadd.f32 %v9245, %v9181
  %v9247 = vadd.f32 %v9246, %v9182
  %v9248 = vadd.f32 %v9247, %v9183
  %v9249 = vadd.f32 %v9248, %v9184
  %v9250 = vadd.f32 %v9249, %v9185
  %v9251 = vadd.f32 %v9250, %v9186
  %v9252 = vadd.f32 %v9251, %v9187
  %v9253 = vadd.f32 %v9252, %v9188
  %v9254 = vadd.f32 %v9253, %v9189
  %v9255 = vadd.f32 %v9254, %v9190
  %v9256 = vadd.f32 %v9255, %v9191
  %v9257 = vadd.f32 %v9256, %v9192
  %v9258 = vadd.f32 %v9257, %v9193
  %v9259 = vadd.f32 %v9258, %v9194
  %v9260 = vadd.f32 %v9259, %v9195
  %v9261 = vadd.f32 %v9260, %v9196
  %v9262 = vadd.f32 %v9261, %v9197
  %v9263 = vadd.f32 %v9262, %v9198
  %v9264 = vadd.f32 %v9263, %v9199
  %v9265 = vadd.f32 %v9264, %v9200
  %v9266 = vadd.f32 %v9265, %v9201
  %v9267 = vadd.f32 %v9266, %v9202
  %v9268 = vadd.f32 %v9267, %v9203
  %v9269 = vadd.f32 %v9268, %v9204
  %v9270 = vadd.f32 %v9269, %v9205
  %v9271 = vadd.f32 %v9270, %v9206
  %v9272 = vadd.f32 %v9271, %v9207
  %v9273 = vadd.f32 %v9272, %v9208
  %v9274 = vadd.f32 %v9273, %v9209
  %v9275 = vadd.f32 %v9274, %v9210
  %v9276 = vadd.f32 %v9275, %v9211
  %v9277 = vadd.f32 %v9276, %v9212
  %v9278 = vadd.f32 %v9277, %v9213
  %v9279 = vadd.f32 %v9278, %v9214
  %v9280 = vadd.f32 %v9279, %v9215
  %v9281 = vadd.f32 %v9280, %v9216
  %v9282 = vadd.f32 %v9281, %v9217
  %v9283 = vrot.slane %v9282, 4
  %v9284 = vadd.f32 %v9282, %v9283
  %v9285 = vrot.slane %v9284, 2
  %v9286 = vadd.f32 %v9284, %v9285
  %v9287 = vrot.slane %v9286, 1
  %v9288 = vadd.f32 %v9286, %v9287
  %v9289 = vmul.f32 %v9154, %v9154
  %v9290 = vmul.f32 %v9155, %v9155
  %v9291 = vmul.f32 %v9156, %v9156
  %v9292 = vmul.f32 %v9157, %v9157
  %v9293 = vmul.f32 %v9158, %v9158
  %v9294 = vmul.f32 %v9159, %v9159
  %v9295 = vmul.f32 %v9160, %v9160
  %v9296 = vmul.f32 %v9161, %v9161
  %v9297 = vmul.f32 %v9162, %v9162
  %v9298 = vmul.f32 %v9163, %v9163
  %v9299 = vmul.f32 %v9164, %v9164
  %v9300 = vmul.f32 %v9165, %v9165
  %v9301 = vmul.f32 %v9166, %v9166
  %v9302 = vmul.f32 %v9167, %v9167
  %v9303 = vmul.f32 %v9168, %v9168
  %v9304 = vmul.f32 %v9169, %v9169
  %v9305 = vmul.f32 %v9170, %v9170
  %v9306 = vmul.f32 %v9171, %v9171
  %v9307 = vmul.f32 %v9172, %v9172
  %v9308 = vmul.f32 %v9173, %v9173
  %v9309 = vmul.f32 %v9174, %v9174
  %v9310 = vmul.f32 %v9175, %v9175
  %v9311 = vmul.f32 %v9176, %v9176
  %v9312 = vmul.f32 %v9177, %v9177
  %v9313 = vmul.f32 %v9178, %v9178
  %v9314 = vmul.f32 %v9179, %v9179
  %v9315 = vmul.f32 %v9180, %v9180
  %v9316 = vmul.f32 %v9181, %v9181
  %v9317 = vmul.f32 %v9182, %v9182
  %v9318 = vmul.f32 %v9183, %v9183
  %v9319 = vmul.f32 %v9184, %v9184
  %v9320 = vmul.f32 %v9185, %v9185
  %v9321 = vmul.f32 %v9186, %v9186
  %v9322 = vmul.f32 %v9187, %v9187
  %v9323 = vmul.f32 %v9188, %v9188
  %v9324 = vmul.f32 %v9189, %v9189
  %v9325 = vmul.f32 %v9190, %v9190
  %v9326 = vmul.f32 %v9191, %v9191
  %v9327 = vmul.f32 %v9192, %v9192
  %v9328 = vmul.f32 %v9193, %v9193
  %v9329 = vmul.f32 %v9194, %v9194
  %v9330 = vmul.f32 %v9195, %v9195
  %v9331 = vmul.f32 %v9196, %v9196
  %v9332 = vmul.f32 %v9197, %v9197
  %v9333 = vmul.f32 %v9198, %v9198
  %v9334 = vmul.f32 %v9199, %v9199
  %v9335 = vmul.f32 %v9200, %v9200
  %v9336 = vmul.f32 %v9201, %v9201
  %v9337 = vmul.f32 %v9202, %v9202
  %v9338 = vmul.f32 %v9203, %v9203
  %v9339 = vmul.f32 %v9204, %v9204
  %v9340 = vmul.f32 %v9205, %v9205
  %v9341 = vmul.f32 %v9206, %v9206
  %v9342 = vmul.f32 %v9207, %v9207
  %v9343 = vmul.f32 %v9208, %v9208
  %v9344 = vmul.f32 %v9209, %v9209
  %v9345 = vmul.f32 %v9210, %v9210
  %v9346 = vmul.f32 %v9211, %v9211
  %v9347 = vmul.f32 %v9212, %v9212
  %v9348 = vmul.f32 %v9213, %v9213
  %v9349 = vmul.f32 %v9214, %v9214
  %v9350 = vmul.f32 %v9215, %v9215
  %v9351 = vmul.f32 %v9216, %v9216
  %v9352 = vmul.f32 %v9217, %v9217
  %v9353 = vadd.f32 %v9289, %v9290
  %v9354 = vadd.f32 %v9353, %v9291
  %v9355 = vadd.f32 %v9354, %v9292
  %v9356 = vadd.f32 %v9355, %v9293
  %v9357 = vadd.f32 %v9356, %v9294
  %v9358 = vadd.f32 %v9357, %v9295
  %v9359 = vadd.f32 %v9358, %v9296
  %v9360 = vadd.f32 %v9359, %v9297
  %v9361 = vadd.f32 %v9360, %v9298
  %v9362 = vadd.f32 %v9361, %v9299
  %v9363 = vadd.f32 %v9362, %v9300
  %v9364 = vadd.f32 %v9363, %v9301
  %v9365 = vadd.f32 %v9364, %v9302
  %v9366 = vadd.f32 %v9365, %v9303
  %v9367 = vadd.f32 %v9366, %v9304
  %v9368 = vadd.f32 %v9367, %v9305
  %v9369 = vadd.f32 %v9368, %v9306
  %v9370 = vadd.f32 %v9369, %v9307
  %v9371 = vadd.f32 %v9370, %v9308
  %v9372 = vadd.f32 %v9371, %v9309
  %v9373 = vadd.f32 %v9372, %v9310
  %v9374 = vadd.f32 %v9373, %v9311
  %v9375 = vadd.f32 %v9374, %v9312
  %v9376 = vadd.f32 %v9375, %v9313
  %v9377 = vadd.f32 %v9376, %v9314
  %v9378 = vadd.f32 %v9377, %v9315
  %v9379 = vadd.f32 %v9378, %v9316
  %v9380 = vadd.f32 %v9379, %v9317
  %v9381 = vadd.f32 %v9380, %v9318
  %v9382 = vadd.f32 %v9381, %v9319
  %v9383 = vadd.f32 %v9382, %v9320
  %v9384 = vadd.f32 %v9383, %v9321
  %v9385 = vadd.f32 %v9384, %v9322
  %v9386 = vadd.f32 %v9385, %v9323
  %v9387 = vadd.f32 %v9386, %v9324
  %v9388 = vadd.f32 %v9387, %v9325
  %v9389 = vadd.f32 %v9388, %v9326
  %v9390 = vadd.f32 %v9389, %v9327
  %v9391 = vadd.f32 %v9390, %v9328
  %v9392 = vadd.f32 %v9391, %v9329
  %v9393 = vadd.f32 %v9392, %v9330
  %v9394 = vadd.f32 %v9393, %v9331
  %v9395 = vadd.f32 %v9394, %v9332
  %v9396 = vadd.f32 %v9395, %v9333
  %v9397 = vadd.f32 %v9396, %v9334
  %v9398 = vadd.f32 %v9397, %v9335
  %v9399 = vadd.f32 %v9398, %v9336
  %v9400 = vadd.f32 %v9399, %v9337
  %v9401 = vadd.f32 %v9400, %v9338
  %v9402 = vadd.f32 %v9401, %v9339
  %v9403 = vadd.f32 %v9402, %v9340
  %v9404 = vadd.f32 %v9403, %v9341
  %v9405 = vadd.f32 %v9404, %v9342
  %v9406 = vadd.f32 %v9405, %v9343
  %v9407 = vadd.f32 %v9406, %v9344
  %v9408 = vadd.f32 %v9407, %v9345
  %v9409 = vadd.f32 %v9408, %v9346
  %v9410 = vadd.f32 %v9409, %v9347
  %v9411 = vadd.f32 %v9410, %v9348
  %v9412 = vadd.f32 %v9411, %v9349
  %v9413 = vadd.f32 %v9412, %v9350
  %v9414 = vadd.f32 %v9413, %v9351
  %v9415 = vadd.f32 %v9414, %v9352
  %v9416 = vrot.slane %v9415, 4
  %v9417 = vadd.f32 %v9415, %v9416
  %v9418 = vrot.slane %v9417, 2
  %v9419 = vadd.f32 %v9417, %v9418
  %v9420 = vrot.slane %v9419, 1
  %v9421 = vadd.f32 %v9419, %v9420
  %v9422 = vmul.f32 %v9288, 0.001953125
  %v9423 = vmul.f32 %v9421, 0.001953125
  %v9424 = vmul.f32 %v9422, %v9422
  %v9425 = vsub.f32 %v9423, %v9424
  %v9426 = vadd.f32 %v9425, 1e-05
  %v9427 = vrsqrt.pop %v9426
  %v9428 = vmul.f32 %v9218, %v9427
  %v9429 = vmul.f32 %v9422, %v9428
  %v9430 = vsub.f32 %v9219, %v9429
  %v9432 = vlaneseq
  %v9433 = vshrl.u32 %v9432, 7
  %v9434 = vsub.s32 0, %v9433
  %v9435 = vrot.slane %v9428, %v9434
  %v9437 = vmul.f32 %v9154, %v9435
  %v9438 = vmul.f32 %v9155, %v9435
  %v9439 = vmul.f32 %v9156, %v9435
  %v9440 = vmul.f32 %v9157, %v9435
  %v9441 = vmul.f32 %v9158, %v9435
  %v9442 = vmul.f32 %v9159, %v9435
  %v9443 = vmul.f32 %v9160, %v9435
  %v9444 = vmul.f32 %v9161, %v9435
  %v9445 = vmul.f32 %v9162, %v9435
  %v9446 = vmul.f32 %v9163, %v9435
  %v9447 = vmul.f32 %v9164, %v9435
  %v9448 = vmul.f32 %v9165, %v9435
  %v9449 = vmul.f32 %v9166, %v9435
  %v9450 = vmul.f32 %v9167, %v9435
  %v9451 = vmul.f32 %v9168, %v9435
  %v9452 = vmul.f32 %v9169, %v9435
  %v9453 = vmul.f32 %v9170, %v9435
  %v9454 = vmul.f32 %v9171, %v9435
  %v9455 = vmul.f32 %v9172, %v9435
  %v9456 = vmul.f32 %v9173, %v9435
  %v9457 = vmul.f32 %v9174, %v9435
  %v9458 = vmul.f32 %v9175, %v9435
  %v9459 = vmul.f32 %v9176, %v9435
  %v9460 = vmul.f32 %v9177, %v9435
  %v9461 = vmul.f32 %v9178, %v9435
  %v9462 = vmul.f32 %v9179, %v9435
  %v9463 = vmul.f32 %v9180, %v9435
  %v9464 = vmul.f32 %v9181, %v9435
  %v9465 = vmul.f32 %v9182, %v9435
  %v9466 = vmul.f32 %v9183, %v9435
  %v9467 = vmul.f32 %v9184, %v9435
  %v9468 = vmul.f32 %v9185, %v9435
  %v9469 = vmul.f32 %v9186, %v9435
  %v9470 = vmul.f32 %v9187, %v9435
  %v9471 = vmul.f32 %v9188, %v9435
  %v9472 = vmul.f32 %v9189, %v9435
  %v9473 = vmul.f32 %v9190, %v9435
  %v9474 = vmul.f32 %v9191, %v9435
  %v9475 = vmul.f32 %v9192, %v9435
  %v9476 = vmul.f32 %v9193, %v9435
  %v9477 = vmul.f32 %v9194, %v9435
  %v9478 = vmul.f32 %v9195, %v9435
  %v9479 = vmul.f32 %v9196, %v9435
  %v9480 = vmul.f32 %v9197, %v9435
  %v9481 = vmul.f32 %v9198, %v9435
  %v9482 = vmul.f32 %v9199, %v9435
  %v9483 = vmul.f32 %v9200, %v9435
  %v9484 = vmul.f32 %v9201, %v9435
  %v9485 = vmul.f32 %v9202, %v9435
  %v9486 = vmul.f32 %v9203, %v9435
  %v9487 = vmul.f32 %v9204, %v9435
  %v9488 = vmul.f32 %v9205, %v9435
  %v9489 = vmul.f32 %v9206, %v9435
  %v9490 = vmul.f32 %v9207, %v9435
  %v9491 = vmul.f32 %v9208, %v9435
  %v9492 = vmul.f32 %v9209, %v9435
  %v9493 = vmul.f32 %v9210, %v9435
  %v9494 = vmul.f32 %v9211, %v9435
  %v9495 = vmul.f32 %v9212, %v9435
  %v9496 = vmul.f32 %v9213, %v9435
  %v9497 = vmul.f32 %v9214, %v9435
  %v9498 = vmul.f32 %v9215, %v9435
  %v9499 = vmul.f32 %v9216, %v9435
  %v9500 = vmul.f32 %v9217, %v9435
  %v9502 = vlaneseq
  %v9503 = vshrl.u32 %v9502, 7
  %v9504 = vsub.s32 0, %v9503
  %v9505 = vrot.slane %v9430, %v9504
  %v9507 = vadd.f32 %v9437, %v9505
  %v9508 = vadd.f32 %v9438, %v9505
  %v9509 = vadd.f32 %v9439, %v9505
  %v9510 = vadd.f32 %v9440, %v9505
  %v9511 = vadd.f32 %v9441, %v9505
  %v9512 = vadd.f32 %v9442, %v9505
  %v9513 = vadd.f32 %v9443, %v9505
  %v9514 = vadd.f32 %v9444, %v9505
  %v9515 = vadd.f32 %v9445, %v9505
  %v9516 = vadd.f32 %v9446, %v9505
  %v9517 = vadd.f32 %v9447, %v9505
  %v9518 = vadd.f32 %v9448, %v9505
  %v9519 = vadd.f32 %v9449, %v9505
  %v9520 = vadd.f32 %v9450, %v9505
  %v9521 = vadd.f32 %v9451, %v9505
  %v9522 = vadd.f32 %v9452, %v9505
  %v9523 = vadd.f32 %v9453, %v9505
  %v9524 = vadd.f32 %v9454, %v9505
  %v9525 = vadd.f32 %v9455, %v9505
  %v9526 = vadd.f32 %v9456, %v9505
  %v9527 = vadd.f32 %v9457, %v9505
  %v9528 = vadd.f32 %v9458, %v9505
  %v9529 = vadd.f32 %v9459, %v9505
  %v9530 = vadd.f32 %v9460, %v9505
  %v9531 = vadd.f32 %v9461, %v9505
  %v9532 = vadd.f32 %v9462, %v9505
  %v9533 = vadd.f32 %v9463, %v9505
  %v9534 = vadd.f32 %v9464, %v9505
  %v9535 = vadd.f32 %v9465, %v9505
  %v9536 = vadd.f32 %v9466, %v9505
  %v9537 = vadd.f32 %v9467, %v9505
  %v9538 = vadd.f32 %v9468, %v9505
  %v9539 = vadd.f32 %v9469, %v9505
  %v9540 = vadd.f32 %v9470, %v9505
  %v9541 = vadd.f32 %v9471, %v9505
  %v9542 = vadd.f32 %v9472, %v9505
  %v9543 = vadd.f32 %v9473, %v9505
  %v9544 = vadd.f32 %v9474, %v9505
  %v9545 = vadd.f32 %v9475, %v9505
  %v9546 = vadd.f32 %v9476, %v9505
  %v9547 = vadd.f32 %v9477, %v9505
  %v9548 = vadd.f32 %v9478, %v9505
  %v9549 = vadd.f32 %v9479, %v9505
  %v9550 = vadd.f32 %v9480, %v9505
  %v9551 = vadd.f32 %v9481, %v9505
  %v9552 = vadd.f32 %v9482, %v9505
  %v9553 = vadd.f32 %v9483, %v9505
  %v9554 = vadd.f32 %v9484, %v9505
  %v9555 = vadd.f32 %v9485, %v9505
  %v9556 = vadd.f32 %v9486, %v9505
  %v9557 = vadd.f32 %v9487, %v9505
  %v9558 = vadd.f32 %v9488, %v9505
  %v9559 = vadd.f32 %v9489, %v9505
  %v9560 = vadd.f32 %v9490, %v9505
  %v9561 = vadd.f32 %v9491, %v9505
  %v9562 = vadd.f32 %v9492, %v9505
  %v9563 = vadd.f32 %v9493, %v9505
  %v9564 = vadd.f32 %v9494, %v9505
  %v9565 = vadd.f32 %v9495, %v9505
  %v9566 = vadd.f32 %v9496, %v9505
  %v9567 = vadd.f32 %v9497, %v9505
  %v9568 = vadd.f32 %v9498, %v9505
  %v9569 = vadd.f32 %v9499, %v9505
  %v9570 = vadd.f32 %v9500, %v9505
  %v9571 = vmax.f32 %v9507, 0.0
  %v9572 = vmax.f32 %v9508, 0.0
  %v9573 = vmax.f32 %v9509, 0.0
  %v9574 = vmax.f32 %v9510, 0.0
  %v9575 = vmax.f32 %v9511, 0.0
  %v9576 = vmax.f32 %v9512, 0.0
  %v9577 = vmax.f32 %v9513, 0.0
  %v9578 = vmax.f32 %v9514, 0.0
  %v9579 = vmax.f32 %v9515, 0.0
  %v9580 = vmax.f32 %v9516, 0.0
  %v9581 = vmax.f32 %v9517, 0.0
  %v9582 = vmax.f32 %v9518, 0.0
  %v9583 = vmax.f32 %v9519, 0.0
  %v9584 = vmax.f32 %v9520, 0.0
  %v9585 = vmax.f32 %v9521, 0.0
  %v9586 = vmax.f32 %v9522, 0.0
  %v9587 = vmax.f32 %v9523, 0.0
  %v9588 = vmax.f32 %v9524, 0.0
  %v9589 = vmax.f32 %v9525, 0.0
  %v9590 = vmax.f32 %v9526, 0.0
  %v9591 = vmax.f32 %v9527, 0.0
  %v9592 = vmax.f32 %v9528, 0.0
  %v9593 = vmax.f32 %v9529, 0.0
  %v9594 = vmax.f32 %v9530, 0.0
  %v9595 = vmax.f32 %v9531, 0.0
  %v9596 = vmax.f32 %v9532, 0.0
  %v9597 = vmax.f32 %v9533, 0.0
  %v9598 = vmax.f32 %v9534, 0.0
  %v9599 = vmax.f32 %v9535, 0.0
  %v9600 = vmax.f32 %v9536, 0.0
  %v9601 = vmax.f32 %v9537, 0.0
  %v9602 = vmax.f32 %v9538, 0.0
  %v9603 = vmax.f32 %v9539, 0.0
  %v9604 = vmax.f32 %v9540, 0.0
  %v9605 = vmax.f32 %v9541, 0.0
  %v9606 = vmax.f32 %v9542, 0.0
  %v9607 = vmax.f32 %v9543, 0.0
  %v9608 = vmax.f32 %v9544, 0.0
  %v9609 = vmax.f32 %v9545, 0.0
  %v9610 = vmax.f32 %v9546, 0.0
  %v9611 = vmax.f32 %v9547, 0.0
  %v9612 = vmax.f32 %v9548, 0.0
  %v9613 = vmax.f32 %v9549, 0.0
  %v9614 = vmax.f32 %v9550, 0.0
  %v9615 = vmax.f32 %v9551, 0.0
  %v9616 = vmax.f32 %v9552, 0.0
  %v9617 = vmax.f32 %v9553, 0.0
  %v9618 = vmax.f32 %v9554, 0.0
  %v9619 = vmax.f32 %v9555, 0.0
  %v9620 = vmax.f32 %v9556, 0.0
  %v9621 = vmax.f32 %v9557, 0.0
  %v9622 = vmax.f32 %v9558, 0.0
  %v9623 = vmax.f32 %v9559, 0.0
  %v9624 = vmax.f32 %v9560, 0.0
  %v9625 = vmax.f32 %v9561, 0.0
  %v9626 = vmax.f32 %v9562, 0.0
  %v9627 = vmax.f32 %v9563, 0.0
  %v9628 = vmax.f32 %v9564, 0.0
  %v9629 = vmax.f32 %v9565, 0.0
  %v9630 = vmax.f32 %v9566, 0.0
  %v9631 = vmax.f32 %v9567, 0.0
  %v9632 = vmax.f32 %v9568, 0.0
  %v9633 = vmax.f32 %v9569, 0.0
  %v9634 = vmax.f32 %v9570, 0.0
  %9635 = vst [vmem:[%s7] sm:$0xff] %v9571
  %9636 = vst [vmem:[%s7 + $0x8] sm:$0xff] %v9572
  %9637 = vst [vmem:[%s7 + $0x10] sm:$0xff] %v9573
  %9638 = vst [vmem:[%s7 + $0x18] sm:$0xff] %v9574
  %9639 = vst [vmem:[%s7 + $0x20] sm:$0xff] %v9575
  %9640 = vst [vmem:[%s7 + $0x28] sm:$0xff] %v9576
  %9641 = vst [vmem:[%s7 + $0x30] sm:$0xff] %v9577
  %9642 = vst [vmem:[%s7 + $0x38] sm:$0xff] %v9578
  %9643 = vst [vmem:[%s7 + $0x40] sm:$0xff] %v9579
  %9644 = vst [vmem:[%s7 + $0x48] sm:$0xff] %v9580
  %9645 = vst [vmem:[%s7 + $0x50] sm:$0xff] %v9581
  %9646 = vst [vmem:[%s7 + $0x58] sm:$0xff] %v9582
  %9647 = vst [vmem:[%s7 + $0x60] sm:$0xff] %v9583
  %9648 = vst [vmem:[%s7 + $0x68] sm:$0xff] %v9584
  %9649 = vst [vmem:[%s7 + $0x70] sm:$0xff] %v9585
  %9650 = vst [vmem:[%s7 + $0x78] sm:$0xff] %v9586
  %9651 = vst [vmem:[%s7 + $0x80] sm:$0xff] %v9587
  %9652 = vst [vmem:[%s7 + $0x88] sm:$0xff] %v9588
  %9653 = vst [vmem:[%s7 + $0x90] sm:$0xff] %v9589
  %9654 = vst [vmem:[%s7 + $0x98] sm:$0xff] %v9590
  %9655 = vst [vmem:[%s7 + $0xa0] sm:$0xff] %v9591
  %9656 = vst [vmem:[%s7 + $0xa8] sm:$0xff] %v9592
  %9657 = vst [vmem:[%s7 + $0xb0] sm:$0xff] %v9593
  %9658 = vst [vmem:[%s7 + $0xb8] sm:$0xff] %v9594
  %9659 = vst [vmem:[%s7 + $0xc0] sm:$0xff] %v9595
  %9660 = vst [vmem:[%s7 + $0xc8] sm:$0xff] %v9596
  %9661 = vst [vmem:[%s7 + $0xd0] sm:$0xff] %v9597
  %9662 = vst [vmem:[%s7 + $0xd8] sm:$0xff] %v9598
  %9663 = vst [vmem:[%s7 + $0xe0] sm:$0xff] %v9599
  %9664 = vst [vmem:[%s7 + $0xe8] sm:$0xff] %v9600
  %9665 = vst [vmem:[%s7 + $0xf0] sm:$0xff] %v9601
  %9666 = vst [vmem:[%s7 + $0xf8] sm:$0xff] %v9602
  %9667 = vst [vmem:[%s7 + $0x100] sm:$0xff] %v9603
  %9668 = vst [vmem:[%s7 + $0x108] sm:$0xff] %v9604
  %9669 = vst [vmem:[%s7 + $0x110] sm:$0xff] %v9605
  %9670 = vst [vmem:[%s7 + $0x118] sm:$0xff] %v9606
  %9671 = vst [vmem:[%s7 + $0x120] sm:$0xff] %v9607
  %9672 = vst [vmem:[%s7 + $0x128] sm:$0xff] %v9608
  %9673 = vst [vmem:[%s7 + $0x130] sm:$0xff] %v9609
  %9674 = vst [vmem:[%s7 + $0x138] sm:$0xff] %v9610
  %9675 = vst [vmem:[%s7 + $0x140] sm:$0xff] %v9611
  %9676 = vst [vmem:[%s7 + $0x148] sm:$0xff] %v9612
  %9677 = vst [vmem:[%s7 + $0x150] sm:$0xff] %v9613
  %9678 = vst [vmem:[%s7 + $0x158] sm:$0xff] %v9614
  %9679 = vst [vmem:[%s7 + $0x160] sm:$0xff] %v9615
  %9680 = vst [vmem:[%s7 + $0x168] sm:$0xff] %v9616
  %9681 = vst [vmem:[%s7 + $0x170] sm:$0xff] %v9617
  %9682 = vst [vmem:[%s7 + $0x178] sm:$0xff] %v9618
  %9683 = vst [vmem:[%s7 + $0x180] sm:$0xff] %v9619
  %9684 = vst [vmem:[%s7 + $0x188] sm:$0xff] %v9620
  %9685 = vst [vmem:[%s7 + $0x190] sm:$0xff] %v9621
  %9686 = vst [vmem:[%s7 + $0x198] sm:$0xff] %v9622
  %9687 = vst [vmem:[%s7 + $0x1a0] sm:$0xff] %v9623
  %9688 = vst [vmem:[%s7 + $0x1a8] sm:$0xff] %v9624
  %9689 = vst [vmem:[%s7 + $0x1b0] sm:$0xff] %v9625
  %9690 = vst [vmem:[%s7 + $0x1b8] sm:$0xff] %v9626
  %9691 = vst [vmem:[%s7 + $0x1c0] sm:$0xff] %v9627
  %9692 = vst [vmem:[%s7 + $0x1c8] sm:$0xff] %v9628
  %9693 = vst [vmem:[%s7 + $0x1d0] sm:$0xff] %v9629
  %9694 = vst [vmem:[%s7 + $0x1d8] sm:$0xff] %v9630
  %9695 = vst [vmem:[%s7 + $0x1e0] sm:$0xff] %v9631
  %9696 = vst [vmem:[%s7 + $0x1e8] sm:$0xff] %v9632
  %9697 = vst [vmem:[%s7 + $0x1f0] sm:$0xff] %v9633
  %9698 = vst [vmem:[%s7 + $0x1f8] sm:$0xff] %v9634
  // Predicated region
  $region30: #{double_conv_pallas.1} parent=0 // pred_check
    _
  $region31: #{double_conv_pallas.1} parent=0 // pred_check_branch
    %9700 = sbr.rel (0) target = $region33
  $region32: #{double_conv_pallas.1} parent=0 // pred_region
    _
  $region33: #{double_conv_pallas.1} parent=0 // pred_fallthru
    _
  // Predicated region
  $region34: #{double_conv_pallas.1} parent=0 // pred_check
    _
  $region35: #{double_conv_pallas.1} parent=0 // pred_check_branch
    %9702 = sbr.rel (0) target = $region37
  $region36: #{double_conv_pallas.1} parent=0 // pred_region
    _
  $region37: #{double_conv_pallas.1} parent=0 // pred_fallthru
    _

</llo_original>
